<compile_context>
chip_gen: v7x
topology: tpu7x:2x2x1
jax: 0.10.0
libtpu: 0.0.40
codegen_flags: <defaults>
</compile_context>

<pallas_src>
import math
import functools

import jax
import jax.numpy as jnp
from jax.experimental import pallas as pl
from jax.experimental.pallas import tpu as pltpu


# ----------------------------- in-kernel math helpers ------------------------

def _layernorm_cm(h, g, b, eps=1e-5):
    """LayerNorm over the channel (leading) axis of a channel-major (C, T) tile.

    h: (C, T) float32, g/b: (C, 1) float32.
    """
    mu = jnp.mean(h, axis=0, keepdims=True)                    # (1, T)
    var = jnp.mean(jnp.square(h - mu), axis=0, keepdims=True)  # (1, T)
    return (h - mu) * jax.lax.rsqrt(var + eps) * g + b


def _gelu_new(h):
    return 0.5 * h * (1.0 + jnp.tanh(math.sqrt(2.0 / math.pi) *
                                     (h + 0.044715 * h * h * h)))


def _attention(q, k, v, *, causal):
    """Batched multi-head attention, channel-major K/V, merged-head output.

    q: (H, T, hd), k/v: (H, hd, N)  ->  (H, hd, T) float32.
    Both dots use the same dimension_numbers as the reference flash kernel
    (standard per-head matmul and contract-both-minor-dims), so no operand is
    physically transposed here.
    """
    H, T, hd = q.shape
    N = k.shape[2]

    # att[h, t, n] = sum_d q[h, t, d] * k[h, d, n]
    att = jax.lax.dot_general(
        q, k, (((2,), (1,)), ((0,), (0,))),
        preferred_element_type=jnp.float32)                     # (H, T, N) f32
    att = att * (1.0 / math.sqrt(hd))

    if causal:
        row = jax.lax.broadcasted_iota(jnp.int32, (T, N), 0)
        col = jax.lax.broadcasted_iota(jnp.int32, (T, N), 1)
        att = jnp.where((row >= col)[None, :, :], att, -jnp.inf)

    # numerically-stable exact softmax (stats stay f32)
    m = jnp.max(att, axis=-1, keepdims=True)
    e = jnp.exp(att - m)
    s = jnp.sum(e, axis=-1, keepdims=True)
    p = (e / s).astype(v.dtype)

    # y[h, d, t] = sum_n v[h, d, n] * p[h, t, n]
    y = jax.lax.dot_general(
        v, p, (((2,), (2,)), ((0,), (0,))),
        preferred_element_type=jnp.float32)                     # (H, hd, T) f32
    return y


# --------------------------------- the kernel --------------------------------

def block_kernel(
        x_ref, z_ref,
        ln1_g, ln1_b, sa_w, sa_b, sap_w, sap_b,
        lnc_g, lnc_b, cq_w, cq_b, ckv_w, ckv_b, cp_w, cp_b,
        ln2_g, ln2_b, fc_w, fc_b, pj_w, pj_b,
        o_ref, *, n_head):
    _, T, C = x_ref.shape
    N = z_ref.shape[1]
    hd = C // n_head                    # ideally a multiple of 8 (128 in prod)
    cdt = sa_w.dtype                    # MXU compute dtype (bf16 in prod)

    # One layout for the whole block: channel-major (C, T) residual stream.
    # These two entry transposes (plus one at exit) replace all the per-sub-
    # layer activation / head-merge transposes of the previous version.
    x = x_ref[0].astype(jnp.float32).T                          # (C, T) f32
    z_cm = z_ref[0].T.astype(cdt)                               # (C, N)

    # ---- x = x + self_attn(ln_1(x))  (causal) ----
    h = _layernorm_cm(x, ln1_g[...], ln1_b[...]).astype(cdt)    # (C, T)
    qkv = (jnp.dot(sa_w[...], h, preferred_element_type=jnp.float32)
           + sa_b[...])                                         # (3C, T) f32
    qkv = qkv.astype(cdt).reshape(3 * n_head, hd, T)            # free split
    q = jnp.transpose(qkv[:n_head], (0, 2, 1))                  # (H, T, hd)
    k = qkv[n_head:2 * n_head]                                  # (H, hd, T)
    v = qkv[2 * n_head:]                                        # (H, hd, T)
    y = _attention(q, k, v, causal=True)                        # (H, hd, T) f32
    ym = y.reshape(C, T).astype(cdt)                            # free head merge
    x = x + (jnp.dot(sap_w[...], ym, preferred_element_type=jnp.float32)
             + sap_b[...])

    # ---- x = x + cross_attn(ln_cross_attn(x), z)  (no mask) ----
    h = _layernorm_cm(x, lnc_g[...], lnc_b[...]).astype(cdt)    # (C, T)
    q = (jnp.dot(cq_w[...], h, preferred_element_type=jnp.float32)
         + cq_b[...])                                           # (C, T) f32
    q = jnp.transpose(q.astype(cdt).reshape(n_head, hd, T), (0, 2, 1))
    kv = (jnp.dot(ckv_w[...], z_cm, preferred_element_type=jnp.float32)
          + ckv_b[...])                                         # (2C, N) f32
    kv = kv.astype(cdt).reshape(2 * n_head, hd, N)
    k, v = kv[:n_head], kv[n_head:]
    y = _attention(q, k, v, causal=False)                       # (H, hd, T) f32
    ym = y.reshape(C, T).astype(cdt)
    x = x + (jnp.dot(cp_w[...], ym, preferred_element_type=jnp.float32)
             + cp_b[...])

    # ---- x = x + mlp(ln_2(x)) ----
    h = _layernorm_cm(x, ln2_g[...], ln2_b[...]).astype(cdt)    # (C, T)
    mid = (jnp.dot(fc_w[...], h, preferred_element_type=jnp.float32)
           + fc_b[...])                                         # (4C, T) f32
    mid = _gelu_new(mid).astype(cdt)
    x = x + (jnp.dot(pj_w[...], mid, preferred_element_type=jnp.float32)
             + pj_b[...])

    o_ref[0] = x.T.astype(o_ref.dtype)                          # back to (T, C)


# --------------------------------- wrapper ------------------------------------

def _vmem_limit_bytes():
    # Explicit, generation-aware scoped-VMEM limit (v7x: 64 MiB physical,
    # default scoped limit is only 16/32 MiB).  Falls back to compiler default.
    try:
        cap = pltpu.get_tpu_info().vmem_capacity_bytes
        return min(int(cap) * 3 // 4, 96 * 1024 * 1024)
    except Exception:
        return None


def block_with_cross_attn(x, z, params, n_head, *, compute_dtype=jnp.bfloat16):
    B, T, C = x.shape
    N = z.shape[1]
    assert C % n_head == 0

    wdt = compute_dtype
    # Weights in exactly the layouts the kernel consumes: torch-native (out,in)
    # matmul weights (cast once to the MXU compute dtype -- in a real model they
    # would simply be stored that way) and (out,1) bias / LN columns in f32.
    weights = [
        params["ln1_g"], params["ln1_b"],
        params["sa_w"].astype(wdt), params["sa_b"],
        params["sap_w"].astype(wdt), params["sap_b"],
        params["lnc_g"], params["lnc_b"],
        params["cq_w"].astype(wdt), params["cq_b"],
        params["ckv_w"].astype(wdt), params["ckv_b"],
        params["cp_w"].astype(wdt), params["cp_b"],
        params["ln2_g"], params["ln2_b"],
        params["fc_w"].astype(wdt), params["fc_b"],
        params["pj_w"].astype(wdt), params["pj_b"],
    ]

    vmem_limit = _vmem_limit_bytes()
    cp_kwargs = dict(dimension_semantics=("parallel",))
    if vmem_limit is not None:
        cp_kwargs["vmem_limit_bytes"] = vmem_limit
    compiler_params = pltpu.CompilerParams(**cp_kwargs)

    def make_specs(single_buffer_weights):
        in_specs = [
            pl.BlockSpec((1, T, C), lambda b: (b, 0, 0)),
            pl.BlockSpec((1, N, C), lambda b: (b, 0, 0)),
        ]
        for w in weights:
            idx = lambda b, nd=w.ndim: (0,) * nd
            if single_buffer_weights:
                # Grid-invariant weights: a single VMEM buffer is enough
                # (halves the weight footprint vs. default double buffering).
                in_specs.append(
                    pl.BlockSpec(w.shape, idx, pipeline_mode=pl.Buffered(1)))
            else:
                in_specs.append(pl.BlockSpec(w.shape, idx))
        return in_specs

    def run(single_buffer_weights):
        return pl.pallas_call(
            functools.partial(block_kernel, n_head=n_head),
            out_shape=jax.ShapeDtypeStruct((B, T, C), x.dtype),
            grid=(B,),
            in_specs=make_specs(single_buffer_weights),
            out_specs=pl.BlockSpec((1, T, C), lambda b: (b, 0, 0)),
            compiler_params=compiler_params,
        )(x, z, *weights)

    try:
        return run(True)
    except Exception:
        # This Pallas/Mosaic version does not support single-buffered blocks
        # via pipeline_mode; fall back to default double buffering.
        return run(False)


# ------------------------------ pure-JAX reference ----------------------------

def _ref_forward(x, z, p, n_head):
    def ln(h, g, b):
        mu = h.mean(-1, keepdims=True)
        var = ((h - mu) ** 2).mean(-1, keepdims=True)
        return (h - mu) / jnp.sqrt(var + 1e-5) * g[:, 0] + b[:, 0]

    def mha(q, k, v, causal):
        B, T, C = q.shape
        N = k.shape[1]
        hd = C // n_head
        qh = q.reshape(B, T, n_head, hd).transpose(0, 2, 1, 3)
        kh = k.reshape(B, N, n_head, hd).transpose(0, 2, 1, 3)
        vh = v.reshape(B, N, n_head, hd).transpose(0, 2, 1, 3)
        att = jnp.einsum("bhtd,bhnd->bhtn", qh, kh) / math.sqrt(hd)
        if causal:
            mask = jnp.tril(jnp.ones((T, N), bool))
            att = jnp.where(mask[None, None], att, -jnp.inf)
        att = jax.nn.softmax(att, axis=-1)
        y = jnp.einsum("bhtn,bhnd->bhtd", att, vh)
        return y.transpose(0, 2, 1, 3).reshape(B, T, C)

    C = x.shape[-1]
    h = ln(x, p["ln1_g"], p["ln1_b"])
    qkv = h @ p["sa_w"].T + p["sa_b"][:, 0]
    y = mha(qkv[..., :C], qkv[..., C:2 * C], qkv[..., 2 * C:], causal=True)
    x = x + (y @ p["sap_w"].T + p["sap_b"][:, 0])

    h = ln(x, p["lnc_g"], p["lnc_b"])
    q = h @ p["cq_w"].T + p["cq_b"][:, 0]
    kv = z @ p["ckv_w"].T + p["ckv_b"][:, 0]
    y = mha(q, kv[..., :C], kv[..., C:], causal=False)
    x = x + (y @ p["cp_w"].T + p["cp_b"][:, 0])

    h = ln(x, p["ln2_g"], p["ln2_b"])
    h = h @ p["fc_w"].T + p["fc_b"][:, 0]
    h = 0.5 * h * (1.0 + jnp.tanh(math.sqrt(2.0 / math.pi) *
                                  (h + 0.044715 * h ** 3)))
    x = x + (h @ p["pj_w"].T + p["pj_b"][:, 0])
    return x


# ------------------------------------ main -------------------------------------

if __name__ == "__main__":
    B, T, N, C, n_head = 2, 8, 8, 32, 4

    key = jax.random.PRNGKey(0)
    ks = jax.random.split(key, 16)

    def w(k, shape, scale=0.02):
        return (scale * jax.random.normal(k, shape)).astype(jnp.float32)

    # torch-native (out, in) matmul weights; (out, 1) bias / LayerNorm columns.
    params = {
        "ln1_g": jnp.ones((C, 1), jnp.float32),
        "ln1_b": jnp.zeros((C, 1), jnp.float32),
        "sa_w": w(ks[0], (3 * C, C)),   "sa_b": w(ks[1], (3 * C, 1)),
        "sap_w": w(ks[2], (C, C)),      "sap_b": w(ks[3], (C, 1)),
        "lnc_g": jnp.ones((C, 1), jnp.float32),
        "lnc_b": jnp.zeros((C, 1), jnp.float32),
        "cq_w": w(ks[4], (C, C)),       "cq_b": w(ks[5], (C, 1)),
        "ckv_w": w(ks[6], (2 * C, C)),  "ckv_b": w(ks[7], (2 * C, 1)),
        "cp_w": w(ks[8], (C, C)),       "cp_b": w(ks[9], (C, 1)),
        "ln2_g": jnp.ones((C, 1), jnp.float32),
        "ln2_b": jnp.zeros((C, 1), jnp.float32),
        "fc_w": w(ks[10], (4 * C, C)),  "fc_b": w(ks[11], (4 * C, 1)),
        "pj_w": w(ks[12], (C, 4 * C)),  "pj_b": w(ks[13], (C, 1)),
    }

    x = jax.random.normal(ks[14], (B, T, C), jnp.float32)
    z = jax.random.normal(ks[15], (B, N, C), jnp.float32)

    ref = _ref_forward(x, z, params, n_head)

    # Exactness check: f32 MXU operands.
    out_f32 = jax.block_until_ready(
        block_with_cross_attn(x, z, params, n_head, compute_dtype=jnp.float32))
    assert out_f32.shape == (B, T, C)
    err = float(jnp.max(jnp.abs(out_f32 - ref)))
    assert err < 1e-4, f"f32 compute max err {err}"

    # Production path: bf16 MXU operands, f32 accumulation / stats / residual.
    out_bf16 = jax.block_until_ready(
        block_with_cross_attn(x, z, params, n_head, compute_dtype=jnp.bfloat16))
    assert out_bf16.shape == (B, T, C)
    err = float(jnp.max(jnp.abs(out_bf16 - ref)))
    assert err < 3e-2, f"bf16 compute max err {err}"

    print("KERNEL_OK")
</pallas_src>

<mosaic_0001>
module attributes {stable_mosaic.version = 11 : i64} {
  func.func @block_kernel(%arg0: i32, %arg1: memref<1x8x32xf32, #tpu.memory_space<vmem>>, %arg2: memref<1x8x32xf32, #tpu.memory_space<vmem>>, %arg3: memref<32x1xf32, #tpu.memory_space<vmem>>, %arg4: memref<32x1xf32, #tpu.memory_space<vmem>>, %arg5: memref<96x32xf32, #tpu.memory_space<vmem>>, %arg6: memref<96x1xf32, #tpu.memory_space<vmem>>, %arg7: memref<32x32xf32, #tpu.memory_space<vmem>>, %arg8: memref<32x1xf32, #tpu.memory_space<vmem>>, %arg9: memref<32x1xf32, #tpu.memory_space<vmem>>, %arg10: memref<32x1xf32, #tpu.memory_space<vmem>>, %arg11: memref<32x32xf32, #tpu.memory_space<vmem>>, %arg12: memref<32x1xf32, #tpu.memory_space<vmem>>, %arg13: memref<64x32xf32, #tpu.memory_space<vmem>>, %arg14: memref<64x1xf32, #tpu.memory_space<vmem>>, %arg15: memref<32x32xf32, #tpu.memory_space<vmem>>, %arg16: memref<32x1xf32, #tpu.memory_space<vmem>>, %arg17: memref<32x1xf32, #tpu.memory_space<vmem>>, %arg18: memref<32x1xf32, #tpu.memory_space<vmem>>, %arg19: memref<128x32xf32, #tpu.memory_space<vmem>>, %arg20: memref<128x1xf32, #tpu.memory_space<vmem>>, %arg21: memref<32x128xf32, #tpu.memory_space<vmem>>, %arg22: memref<32x1xf32, #tpu.memory_space<vmem>>, %arg23: memref<1x8x32xf32, #tpu.memory_space<vmem>>) attributes {dimension_semantics = [#tpu.dimension_semantics<parallel>], iteration_bounds = array<i64: 2>, scalar_prefetch = 0 : i64, scratch_operands = 0 : i64, tpu.core_type = #tpu.core_type<tc>, window_params = [{transform_indices = @transform_0, window_bounds = array<i64: 1, 8, 32>}, {transform_indices = @transform_1, window_bounds = array<i64: 1, 8, 32>}, {pipeline_mode = #tpu.pipeline_mode<synchronous>, transform_indices = @transform_2, window_bounds = array<i64: 32, 1>}, {pipeline_mode = #tpu.pipeline_mode<synchronous>, transform_indices = @transform_3, window_bounds = array<i64: 32, 1>}, {pipeline_mode = #tpu.pipeline_mode<synchronous>, transform_indices = @transform_4, window_bounds = array<i64: 96, 32>}, {pipeline_mode = #tpu.pipeline_mode<synchronous>, transform_indices = @transform_5, window_bounds = array<i64: 96, 1>}, {pipeline_mode = #tpu.pipeline_mode<synchronous>, transform_indices = @transform_6, window_bounds = array<i64: 32, 32>}, {pipeline_mode = #tpu.pipeline_mode<synchronous>, transform_indices = @transform_7, window_bounds = array<i64: 32, 1>}, {pipeline_mode = #tpu.pipeline_mode<synchronous>, transform_indices = @transform_8, window_bounds = array<i64: 32, 1>}, {pipeline_mode = #tpu.pipeline_mode<synchronous>, transform_indices = @transform_9, window_bounds = array<i64: 32, 1>}, {pipeline_mode = #tpu.pipeline_mode<synchronous>, transform_indices = @transform_10, window_bounds = array<i64: 32, 32>}, {pipeline_mode = #tpu.pipeline_mode<synchronous>, transform_indices = @transform_11, window_bounds = array<i64: 32, 1>}, {pipeline_mode = #tpu.pipeline_mode<synchronous>, transform_indices = @transform_12, window_bounds = array<i64: 64, 32>}, {pipeline_mode = #tpu.pipeline_mode<synchronous>, transform_indices = @transform_13, window_bounds = array<i64: 64, 1>}, {pipeline_mode = #tpu.pipeline_mode<synchronous>, transform_indices = @transform_14, window_bounds = array<i64: 32, 32>}, {pipeline_mode = #tpu.pipeline_mode<synchronous>, transform_indices = @transform_15, window_bounds = array<i64: 32, 1>}, {pipeline_mode = #tpu.pipeline_mode<synchronous>, transform_indices = @transform_16, window_bounds = array<i64: 32, 1>}, {pipeline_mode = #tpu.pipeline_mode<synchronous>, transform_indices = @transform_17, window_bounds = array<i64: 32, 1>}, {pipeline_mode = #tpu.pipeline_mode<synchronous>, transform_indices = @transform_18, window_bounds = array<i64: 128, 32>}, {pipeline_mode = #tpu.pipeline_mode<synchronous>, transform_indices = @transform_19, window_bounds = array<i64: 128, 1>}, {pipeline_mode = #tpu.pipeline_mode<synchronous>, transform_indices = @transform_20, window_bounds = array<i64: 32, 128>}, {pipeline_mode = #tpu.pipeline_mode<synchronous>, transform_indices = @transform_21, window_bounds = array<i64: 32, 1>}, {transform_indices = @transform_22, window_bounds = array<i64: 1, 8, 32>}]} {
    %c0 = arith.constant 0 : index
    %c0_0 = arith.constant 0 : index
    %c0_1 = arith.constant 0 : index
    %0 = vector.load %arg1[%c0, %c0_0, %c0_1] : memref<1x8x32xf32, #tpu.memory_space<vmem>>, vector<1x8x32xf32>
    %1 = vector.shape_cast %0 : vector<1x8x32xf32> to vector<8x32xf32>
    %2 = tpu.transpose %1, [1, 0] : vector<8x32xf32> -> vector<32x8xf32>
    %c0_2 = arith.constant 0 : index
    %c0_3 = arith.constant 0 : index
    %c0_4 = arith.constant 0 : index
    %3 = vector.load %arg2[%c0_2, %c0_3, %c0_4] : memref<1x8x32xf32, #tpu.memory_space<vmem>>, vector<1x8x32xf32>
    %4 = vector.shape_cast %3 : vector<1x8x32xf32> to vector<8x32xf32>
    %5 = tpu.transpose %4, [1, 0] : vector<8x32xf32> -> vector<32x8xf32>
    %c0_5 = arith.constant 0 : index
    %c0_6 = arith.constant 0 : index
    %6 = vector.load %arg3[%c0_5, %c0_6] : memref<32x1xf32, #tpu.memory_space<vmem>>, vector<32x1xf32>
    %c0_7 = arith.constant 0 : index
    %c0_8 = arith.constant 0 : index
    %7 = vector.load %arg4[%c0_7, %c0_8] : memref<32x1xf32, #tpu.memory_space<vmem>>, vector<32x1xf32>
    %cst = arith.constant dense<0.000000e+00> : vector<8xf32>
    %8 = vector.multi_reduction <add>, %2, %cst [0] : vector<32x8xf32> to vector<8xf32>
    %9 = vector.shape_cast %8 : vector<8xf32> to vector<1x8xf32>
    %cst_9 = arith.constant 3.200000e+01 : f32
    %10 = vector.broadcast %cst_9 : f32 to vector<1x8xf32>
    %11 = arith.divf %9, %10 : vector<1x8xf32>
    %12 = vector.broadcast %11 : vector<1x8xf32> to vector<32x8xf32>
    %13 = arith.subf %2, %12 : vector<32x8xf32>
    %14 = arith.mulf %13, %13 : vector<32x8xf32>
    %cst_10 = arith.constant dense<0.000000e+00> : vector<8xf32>
    %15 = vector.multi_reduction <add>, %14, %cst_10 [0] : vector<32x8xf32> to vector<8xf32>
    %16 = vector.shape_cast %15 : vector<8xf32> to vector<1x8xf32>
    %cst_11 = arith.constant 3.200000e+01 : f32
    %17 = vector.broadcast %cst_11 : f32 to vector<1x8xf32>
    %18 = arith.divf %16, %17 : vector<1x8xf32>
    %19 = vector.broadcast %11 : vector<1x8xf32> to vector<32x8xf32>
    %20 = arith.subf %2, %19 : vector<32x8xf32>
    %cst_12 = arith.constant 9.99999974E-6 : f32
    %21 = vector.broadcast %cst_12 : f32 to vector<1x8xf32>
    %22 = arith.addf %18, %21 : vector<1x8xf32>
    %23 = math.rsqrt %22 : vector<1x8xf32>
    %24 = vector.broadcast %23 : vector<1x8xf32> to vector<32x8xf32>
    %25 = arith.mulf %20, %24 : vector<32x8xf32>
    %26 = vector.broadcast %6 : vector<32x1xf32> to vector<32x8xf32>
    %27 = arith.mulf %25, %26 : vector<32x8xf32>
    %28 = vector.broadcast %7 : vector<32x1xf32> to vector<32x8xf32>
    %29 = arith.addf %27, %28 : vector<32x8xf32>
    %c0_13 = arith.constant 0 : index
    %c0_14 = arith.constant 0 : index
    %30 = vector.load %arg5[%c0_13, %c0_14] : memref<96x32xf32, #tpu.memory_space<vmem>>, vector<96x32xf32>
    %cst_15 = arith.constant dense<0.000000e+00> : vector<96x8xf32>
    %31 = tpu.matmul %30, %29, %cst_15 {dimension_numbers = #tpu.dot_dimension_numbers<[1], [0], [0], [1], [0, 0, 1, 1], [], []>} : vector<96x32xf32>, vector<32x8xf32>, vector<96x8xf32> -> vector<96x8xf32>
    %c0_16 = arith.constant 0 : index
    %c0_17 = arith.constant 0 : index
    %32 = vector.load %arg6[%c0_16, %c0_17] : memref<96x1xf32, #tpu.memory_space<vmem>>, vector<96x1xf32>
    %33 = vector.broadcast %32 : vector<96x1xf32> to vector<96x8xf32>
    %34 = arith.addf %31, %33 : vector<96x8xf32>
    %35 = vector.shape_cast %34 : vector<96x8xf32> to vector<12x8x8xf32>
    %36 = vector.extract_strided_slice %35 {offsets = [0, 0, 0], sizes = [4, 8, 8], strides = [1, 1, 1]} : vector<12x8x8xf32> to vector<4x8x8xf32>
    %37 = tpu.transpose %36, [0, 2, 1] : vector<4x8x8xf32> -> vector<4x8x8xf32>
    %38 = vector.extract_strided_slice %35 {offsets = [4, 0, 0], sizes = [4, 8, 8], strides = [1, 1, 1]} : vector<12x8x8xf32> to vector<4x8x8xf32>
    %39 = vector.extract_strided_slice %35 {offsets = [8, 0, 0], sizes = [4, 8, 8], strides = [1, 1, 1]} : vector<12x8x8xf32> to vector<4x8x8xf32>
    %cst_18 = arith.constant dense<0.000000e+00> : vector<4x8x8xf32>
    %40 = tpu.matmul %37, %38, %cst_18 {dimension_numbers = #tpu.dot_dimension_numbers<[2], [1], [1], [2], [0, 0, 0, 1, 1, 2], [0], [0]>} : vector<4x8x8xf32>, vector<4x8x8xf32>, vector<4x8x8xf32> -> vector<4x8x8xf32>
    %cst_19 = arith.constant 0.353553385 : f32
    %41 = vector.broadcast %cst_19 : f32 to vector<4x8x8xf32>
    %42 = arith.mulf %40, %41 : vector<4x8x8xf32>
    %43 = tpu.iota {dimensions = array<i32: 0>} : vector<8x8xi32>
    %44 = tpu.iota {dimensions = array<i32: 1>} : vector<8x8xi32>
    %45 = arith.cmpi sge, %43, %44 : vector<8x8xi32>
    %46 = vector.shape_cast %45 : vector<8x8xi1> to vector<1x8x8xi1>
    %cst_20 = arith.constant 0xFF800000 : f32
    %47 = vector.shape_cast %46 : vector<1x8x8xi1> to vector<1x8x8xi1>
    %48 = vector.broadcast %47 : vector<1x8x8xi1> to vector<4x8x8xi1>
    %49 = vector.broadcast %cst_20 : f32 to vector<4x8x8xf32>
    %50 = arith.select %48, %42, %49 : vector<4x8x8xi1>, vector<4x8x8xf32>
    %cst_21 = arith.constant dense<0xFF800000> : vector<4x8xf32>
    %51 = vector.multi_reduction <maximumf>, %50, %cst_21 [2] : vector<4x8x8xf32> to vector<4x8xf32>
    %52 = vector.shape_cast %51 : vector<4x8xf32> to vector<4x8x1xf32>
    %53 = vector.broadcast %52 : vector<4x8x1xf32> to vector<4x8x8xf32>
    %54 = arith.subf %50, %53 : vector<4x8x8xf32>
    %55 = math.exp %54 : vector<4x8x8xf32>
    %cst_22 = arith.constant dense<0.000000e+00> : vector<4x8xf32>
    %56 = vector.multi_reduction <add>, %55, %cst_22 [2] : vector<4x8x8xf32> to vector<4x8xf32>
    %57 = vector.shape_cast %56 : vector<4x8xf32> to vector<4x8x1xf32>
    %58 = vector.broadcast %57 : vector<4x8x1xf32> to vector<4x8x8xf32>
    %59 = arith.divf %55, %58 : vector<4x8x8xf32>
    %cst_23 = arith.constant dense<0.000000e+00> : vector<4x8x8xf32>
    %60 = tpu.matmul %39, %59, %cst_23 {dimension_numbers = #tpu.dot_dimension_numbers<[2], [2], [1], [1], [0, 0, 0, 1, 1, 1], [0], [0]>} : vector<4x8x8xf32>, vector<4x8x8xf32>, vector<4x8x8xf32> -> vector<4x8x8xf32>
    %61 = vector.shape_cast %60 : vector<4x8x8xf32> to vector<32x8xf32>
    %c0_24 = arith.constant 0 : index
    %c0_25 = arith.constant 0 : index
    %62 = vector.load %arg7[%c0_24, %c0_25] : memref<32x32xf32, #tpu.memory_space<vmem>>, vector<32x32xf32>
    %cst_26 = arith.constant dense<0.000000e+00> : vector<32x8xf32>
    %63 = tpu.matmul %62, %61, %cst_26 {dimension_numbers = #tpu.dot_dimension_numbers<[1], [0], [0], [1], [0, 0, 1, 1], [], []>} : vector<32x32xf32>, vector<32x8xf32>, vector<32x8xf32> -> vector<32x8xf32>
    %c0_27 = arith.constant 0 : index
    %c0_28 = arith.constant 0 : index
    %64 = vector.load %arg8[%c0_27, %c0_28] : memref<32x1xf32, #tpu.memory_space<vmem>>, vector<32x1xf32>
    %65 = vector.broadcast %64 : vector<32x1xf32> to vector<32x8xf32>
    %66 = arith.addf %63, %65 : vector<32x8xf32>
    %67 = arith.addf %2, %66 : vector<32x8xf32>
    %c0_29 = arith.constant 0 : index
    %c0_30 = arith.constant 0 : index
    %68 = vector.load %arg9[%c0_29, %c0_30] : memref<32x1xf32, #tpu.memory_space<vmem>>, vector<32x1xf32>
    %c0_31 = arith.constant 0 : index
    %c0_32 = arith.constant 0 : index
    %69 = vector.load %arg10[%c0_31, %c0_32] : memref<32x1xf32, #tpu.memory_space<vmem>>, vector<32x1xf32>
    %cst_33 = arith.constant dense<0.000000e+00> : vector<8xf32>
    %70 = vector.multi_reduction <add>, %67, %cst_33 [0] : vector<32x8xf32> to vector<8xf32>
    %71 = vector.shape_cast %70 : vector<8xf32> to vector<1x8xf32>
    %cst_34 = arith.constant 3.200000e+01 : f32
    %72 = vector.broadcast %cst_34 : f32 to vector<1x8xf32>
    %73 = arith.divf %71, %72 : vector<1x8xf32>
    %74 = vector.broadcast %73 : vector<1x8xf32> to vector<32x8xf32>
    %75 = arith.subf %67, %74 : vector<32x8xf32>
    %76 = arith.mulf %75, %75 : vector<32x8xf32>
    %cst_35 = arith.constant dense<0.000000e+00> : vector<8xf32>
    %77 = vector.multi_reduction <add>, %76, %cst_35 [0] : vector<32x8xf32> to vector<8xf32>
    %78 = vector.shape_cast %77 : vector<8xf32> to vector<1x8xf32>
    %cst_36 = arith.constant 3.200000e+01 : f32
    %79 = vector.broadcast %cst_36 : f32 to vector<1x8xf32>
    %80 = arith.divf %78, %79 : vector<1x8xf32>
    %81 = vector.broadcast %73 : vector<1x8xf32> to vector<32x8xf32>
    %82 = arith.subf %67, %81 : vector<32x8xf32>
    %cst_37 = arith.constant 9.99999974E-6 : f32
    %83 = vector.broadcast %cst_37 : f32 to vector<1x8xf32>
    %84 = arith.addf %80, %83 : vector<1x8xf32>
    %85 = math.rsqrt %84 : vector<1x8xf32>
    %86 = vector.broadcast %85 : vector<1x8xf32> to vector<32x8xf32>
    %87 = arith.mulf %82, %86 : vector<32x8xf32>
    %88 = vector.broadcast %68 : vector<32x1xf32> to vector<32x8xf32>
    %89 = arith.mulf %87, %88 : vector<32x8xf32>
    %90 = vector.broadcast %69 : vector<32x1xf32> to vector<32x8xf32>
    %91 = arith.addf %89, %90 : vector<32x8xf32>
    %c0_38 = arith.constant 0 : index
    %c0_39 = arith.constant 0 : index
    %92 = vector.load %arg11[%c0_38, %c0_39] : memref<32x32xf32, #tpu.memory_space<vmem>>, vector<32x32xf32>
    %cst_40 = arith.constant dense<0.000000e+00> : vector<32x8xf32>
    %93 = tpu.matmul %92, %91, %cst_40 {dimension_numbers = #tpu.dot_dimension_numbers<[1], [0], [0], [1], [0, 0, 1, 1], [], []>} : vector<32x32xf32>, vector<32x8xf32>, vector<32x8xf32> -> vector<32x8xf32>
    %c0_41 = arith.constant 0 : index
    %c0_42 = arith.constant 0 : index
    %94 = vector.load %arg12[%c0_41, %c0_42] : memref<32x1xf32, #tpu.memory_space<vmem>>, vector<32x1xf32>
    %95 = vector.broadcast %94 : vector<32x1xf32> to vector<32x8xf32>
    %96 = arith.addf %93, %95 : vector<32x8xf32>
    %97 = vector.shape_cast %96 : vector<32x8xf32> to vector<4x8x8xf32>
    %98 = tpu.transpose %97, [0, 2, 1] : vector<4x8x8xf32> -> vector<4x8x8xf32>
    %c0_43 = arith.constant 0 : index
    %c0_44 = arith.constant 0 : index
    %99 = vector.load %arg13[%c0_43, %c0_44] : memref<64x32xf32, #tpu.memory_space<vmem>>, vector<64x32xf32>
    %cst_45 = arith.constant dense<0.000000e+00> : vector<64x8xf32>
    %100 = tpu.matmul %99, %5, %cst_45 {dimension_numbers = #tpu.dot_dimension_numbers<[1], [0], [0], [1], [0, 0, 1, 1], [], []>} : vector<64x32xf32>, vector<32x8xf32>, vector<64x8xf32> -> vector<64x8xf32>
    %c0_46 = arith.constant 0 : index
    %c0_47 = arith.constant 0 : index
    %101 = vector.load %arg14[%c0_46, %c0_47] : memref<64x1xf32, #tpu.memory_space<vmem>>, vector<64x1xf32>
    %102 = vector.broadcast %101 : vector<64x1xf32> to vector<64x8xf32>
    %103 = arith.addf %100, %102 : vector<64x8xf32>
    %104 = vector.shape_cast %103 : vector<64x8xf32> to vector<8x8x8xf32>
    %105 = vector.extract_strided_slice %104 {offsets = [0, 0, 0], sizes = [4, 8, 8], strides = [1, 1, 1]} : vector<8x8x8xf32> to vector<4x8x8xf32>
    %106 = vector.extract_strided_slice %104 {offsets = [4, 0, 0], sizes = [4, 8, 8], strides = [1, 1, 1]} : vector<8x8x8xf32> to vector<4x8x8xf32>
    %cst_48 = arith.constant dense<0.000000e+00> : vector<4x8x8xf32>
    %107 = tpu.matmul %98, %105, %cst_48 {dimension_numbers = #tpu.dot_dimension_numbers<[2], [1], [1], [2], [0, 0, 0, 1, 1, 2], [0], [0]>} : vector<4x8x8xf32>, vector<4x8x8xf32>, vector<4x8x8xf32> -> vector<4x8x8xf32>
    %cst_49 = arith.constant 0.353553385 : f32
    %108 = vector.broadcast %cst_49 : f32 to vector<4x8x8xf32>
    %109 = arith.mulf %107, %108 : vector<4x8x8xf32>
    %cst_50 = arith.constant dense<0xFF800000> : vector<4x8xf32>
    %110 = vector.multi_reduction <maximumf>, %109, %cst_50 [2] : vector<4x8x8xf32> to vector<4x8xf32>
    %111 = vector.shape_cast %110 : vector<4x8xf32> to vector<4x8x1xf32>
    %112 = vector.broadcast %111 : vector<4x8x1xf32> to vector<4x8x8xf32>
    %113 = arith.subf %109, %112 : vector<4x8x8xf32>
    %114 = math.exp %113 : vector<4x8x8xf32>
    %cst_51 = arith.constant dense<0.000000e+00> : vector<4x8xf32>
    %115 = vector.multi_reduction <add>, %114, %cst_51 [2] : vector<4x8x8xf32> to vector<4x8xf32>
    %116 = vector.shape_cast %115 : vector<4x8xf32> to vector<4x8x1xf32>
    %117 = vector.broadcast %116 : vector<4x8x1xf32> to vector<4x8x8xf32>
    %118 = arith.divf %114, %117 : vector<4x8x8xf32>
    %cst_52 = arith.constant dense<0.000000e+00> : vector<4x8x8xf32>
    %119 = tpu.matmul %106, %118, %cst_52 {dimension_numbers = #tpu.dot_dimension_numbers<[2], [2], [1], [1], [0, 0, 0, 1, 1, 1], [0], [0]>} : vector<4x8x8xf32>, vector<4x8x8xf32>, vector<4x8x8xf32> -> vector<4x8x8xf32>
    %120 = vector.shape_cast %119 : vector<4x8x8xf32> to vector<32x8xf32>
    %c0_53 = arith.constant 0 : index
    %c0_54 = arith.constant 0 : index
    %121 = vector.load %arg15[%c0_53, %c0_54] : memref<32x32xf32, #tpu.memory_space<vmem>>, vector<32x32xf32>
    %cst_55 = arith.constant dense<0.000000e+00> : vector<32x8xf32>
    %122 = tpu.matmul %121, %120, %cst_55 {dimension_numbers = #tpu.dot_dimension_numbers<[1], [0], [0], [1], [0, 0, 1, 1], [], []>} : vector<32x32xf32>, vector<32x8xf32>, vector<32x8xf32> -> vector<32x8xf32>
    %c0_56 = arith.constant 0 : index
    %c0_57 = arith.constant 0 : index
    %123 = vector.load %arg16[%c0_56, %c0_57] : memref<32x1xf32, #tpu.memory_space<vmem>>, vector<32x1xf32>
    %124 = vector.broadcast %123 : vector<32x1xf32> to vector<32x8xf32>
    %125 = arith.addf %122, %124 : vector<32x8xf32>
    %126 = arith.addf %67, %125 : vector<32x8xf32>
    %c0_58 = arith.constant 0 : index
    %c0_59 = arith.constant 0 : index
    %127 = vector.load %arg17[%c0_58, %c0_59] : memref<32x1xf32, #tpu.memory_space<vmem>>, vector<32x1xf32>
    %c0_60 = arith.constant 0 : index
    %c0_61 = arith.constant 0 : index
    %128 = vector.load %arg18[%c0_60, %c0_61] : memref<32x1xf32, #tpu.memory_space<vmem>>, vector<32x1xf32>
    %cst_62 = arith.constant dense<0.000000e+00> : vector<8xf32>
    %129 = vector.multi_reduction <add>, %126, %cst_62 [0] : vector<32x8xf32> to vector<8xf32>
    %130 = vector.shape_cast %129 : vector<8xf32> to vector<1x8xf32>
    %cst_63 = arith.constant 3.200000e+01 : f32
    %131 = vector.broadcast %cst_63 : f32 to vector<1x8xf32>
    %132 = arith.divf %130, %131 : vector<1x8xf32>
    %133 = vector.broadcast %132 : vector<1x8xf32> to vector<32x8xf32>
    %134 = arith.subf %126, %133 : vector<32x8xf32>
    %135 = arith.mulf %134, %134 : vector<32x8xf32>
    %cst_64 = arith.constant dense<0.000000e+00> : vector<8xf32>
    %136 = vector.multi_reduction <add>, %135, %cst_64 [0] : vector<32x8xf32> to vector<8xf32>
    %137 = vector.shape_cast %136 : vector<8xf32> to vector<1x8xf32>
    %cst_65 = arith.constant 3.200000e+01 : f32
    %138 = vector.broadcast %cst_65 : f32 to vector<1x8xf32>
    %139 = arith.divf %137, %138 : vector<1x8xf32>
    %140 = vector.broadcast %132 : vector<1x8xf32> to vector<32x8xf32>
    %141 = arith.subf %126, %140 : vector<32x8xf32>
    %cst_66 = arith.constant 9.99999974E-6 : f32
    %142 = vector.broadcast %cst_66 : f32 to vector<1x8xf32>
    %143 = arith.addf %139, %142 : vector<1x8xf32>
    %144 = math.rsqrt %143 : vector<1x8xf32>
    %145 = vector.broadcast %144 : vector<1x8xf32> to vector<32x8xf32>
    %146 = arith.mulf %141, %145 : vector<32x8xf32>
    %147 = vector.broadcast %127 : vector<32x1xf32> to vector<32x8xf32>
    %148 = arith.mulf %146, %147 : vector<32x8xf32>
    %149 = vector.broadcast %128 : vector<32x1xf32> to vector<32x8xf32>
    %150 = arith.addf %148, %149 : vector<32x8xf32>
    %c0_67 = arith.constant 0 : index
    %c0_68 = arith.constant 0 : index
    %151 = vector.load %arg19[%c0_67, %c0_68] : memref<128x32xf32, #tpu.memory_space<vmem>>, vector<128x32xf32>
    %cst_69 = arith.constant dense<0.000000e+00> : vector<128x8xf32>
    %152 = tpu.matmul %151, %150, %cst_69 {dimension_numbers = #tpu.dot_dimension_numbers<[1], [0], [0], [1], [0, 0, 1, 1], [], []>} : vector<128x32xf32>, vector<32x8xf32>, vector<128x8xf32> -> vector<128x8xf32>
    %c0_70 = arith.constant 0 : index
    %c0_71 = arith.constant 0 : index
    %153 = vector.load %arg20[%c0_70, %c0_71] : memref<128x1xf32, #tpu.memory_space<vmem>>, vector<128x1xf32>
    %154 = vector.broadcast %153 : vector<128x1xf32> to vector<128x8xf32>
    %155 = arith.addf %152, %154 : vector<128x8xf32>
    %cst_72 = arith.constant 5.000000e-01 : f32
    %156 = vector.broadcast %cst_72 : f32 to vector<128x8xf32>
    %157 = arith.mulf %156, %155 : vector<128x8xf32>
    %cst_73 = arith.constant 4.471500e-02 : f32
    %158 = vector.broadcast %cst_73 : f32 to vector<128x8xf32>
    %159 = arith.mulf %158, %155 : vector<128x8xf32>
    %160 = arith.mulf %159, %155 : vector<128x8xf32>
    %161 = arith.mulf %160, %155 : vector<128x8xf32>
    %162 = arith.addf %155, %161 : vector<128x8xf32>
    %cst_74 = arith.constant 0.797884583 : f32
    %163 = vector.broadcast %cst_74 : f32 to vector<128x8xf32>
    %164 = arith.mulf %163, %162 : vector<128x8xf32>
    %165 = math.tanh %164 : vector<128x8xf32>
    %cst_75 = arith.constant 1.000000e+00 : f32
    %166 = vector.broadcast %cst_75 : f32 to vector<128x8xf32>
    %167 = arith.addf %166, %165 : vector<128x8xf32>
    %168 = arith.mulf %157, %167 : vector<128x8xf32>
    %c0_76 = arith.constant 0 : index
    %c0_77 = arith.constant 0 : index
    %169 = vector.load %arg21[%c0_76, %c0_77] : memref<32x128xf32, #tpu.memory_space<vmem>>, vector<32x128xf32>
    %cst_78 = arith.constant dense<0.000000e+00> : vector<32x8xf32>
    %170 = tpu.matmul %169, %168, %cst_78 {dimension_numbers = #tpu.dot_dimension_numbers<[1], [0], [0], [1], [0, 0, 1, 1], [], []>} : vector<32x128xf32>, vector<128x8xf32>, vector<32x8xf32> -> vector<32x8xf32>
    %c0_79 = arith.constant 0 : index
    %c0_80 = arith.constant 0 : index
    %171 = vector.load %arg22[%c0_79, %c0_80] : memref<32x1xf32, #tpu.memory_space<vmem>>, vector<32x1xf32>
    %172 = vector.broadcast %171 : vector<32x1xf32> to vector<32x8xf32>
    %173 = arith.addf %170, %172 : vector<32x8xf32>
    %174 = arith.addf %126, %173 : vector<32x8xf32>
    %175 = tpu.transpose %174, [1, 0] : vector<32x8xf32> -> vector<8x32xf32>
    %c0_81 = arith.constant 0 : index
    %c0_82 = arith.constant 0 : index
    %c0_83 = arith.constant 0 : index
    %176 = vector.load %arg23[%c0_81, %c0_82, %c0_83] : memref<1x8x32xf32, #tpu.memory_space<vmem>>, vector<1x8x32xf32>
    %177 = vector.shape_cast %176 : vector<1x8x32xf32> to vector<8x32xf32>
    %178 = vector.shape_cast %175 : vector<8x32xf32> to vector<1x8x32xf32>
    tpu.vector_store %arg23[%c0_81, %c0_82, %c0_83], %178 {strides = array<i32>} : memref<1x8x32xf32, #tpu.memory_space<vmem>>, vector<1x8x32xf32>,
    return
  }
  func.func @transform_0(%arg0: i32) -> (i32, i32, i32) {
    %c0_i32 = arith.constant 0 : i32
    %c0_i32_0 = arith.constant 0 : i32
    %c0_i32_1 = arith.constant 0 : i32
    return %arg0, %c0_i32, %c0_i32_0 : i32, i32, i32
  }
  func.func @transform_1(%arg0: i32) -> (i32, i32, i32) {
    %c0_i32 = arith.constant 0 : i32
    %c0_i32_0 = arith.constant 0 : i32
    %c0_i32_1 = arith.constant 0 : i32
    return %arg0, %c0_i32, %c0_i32_0 : i32, i32, i32
  }
  func.func @transform_2(%arg0: i32) -> (i32, i32) {
    %c0_i32 = arith.constant 0 : i32
    %c0_i32_0 = arith.constant 0 : i32
    %c0_i32_1 = arith.constant 0 : i32
    return %c0_i32, %c0_i32_0 : i32, i32
  }
  func.func @transform_3(%arg0: i32) -> (i32, i32) {
    %c0_i32 = arith.constant 0 : i32
    %c0_i32_0 = arith.constant 0 : i32
    %c0_i32_1 = arith.constant 0 : i32
    return %c0_i32, %c0_i32_0 : i32, i32
  }
  func.func @transform_4(%arg0: i32) -> (i32, i32) {
    %c0_i32 = arith.constant 0 : i32
    %c0_i32_0 = arith.constant 0 : i32
    %c0_i32_1 = arith.constant 0 : i32
    return %c0_i32, %c0_i32_0 : i32, i32
  }
  func.func @transform_5(%arg0: i32) -> (i32, i32) {
    %c0_i32 = arith.constant 0 : i32
    %c0_i32_0 = arith.constant 0 : i32
    %c0_i32_1 = arith.constant 0 : i32
    return %c0_i32, %c0_i32_0 : i32, i32
  }
  func.func @transform_6(%arg0: i32) -> (i32, i32) {
    %c0_i32 = arith.constant 0 : i32
    %c0_i32_0 = arith.constant 0 : i32
    %c0_i32_1 = arith.constant 0 : i32
    return %c0_i32, %c0_i32_0 : i32, i32
  }
  func.func @transform_7(%arg0: i32) -> (i32, i32) {
    %c0_i32 = arith.constant 0 : i32
    %c0_i32_0 = arith.constant 0 : i32
    %c0_i32_1 = arith.constant 0 : i32
    return %c0_i32, %c0_i32_0 : i32, i32
  }
  func.func @transform_8(%arg0: i32) -> (i32, i32) {
    %c0_i32 = arith.constant 0 : i32
    %c0_i32_0 = arith.constant 0 : i32
    %c0_i32_1 = arith.constant 0 : i32
    return %c0_i32, %c0_i32_0 : i32, i32
  }
  func.func @transform_9(%arg0: i32) -> (i32, i32) {
    %c0_i32 = arith.constant 0 : i32
    %c0_i32_0 = arith.constant 0 : i32
    %c0_i32_1 = arith.constant 0 : i32
    return %c0_i32, %c0_i32_0 : i32, i32
  }
  func.func @transform_10(%arg0: i32) -> (i32, i32) {
    %c0_i32 = arith.constant 0 : i32
    %c0_i32_0 = arith.constant 0 : i32
    %c0_i32_1 = arith.constant 0 : i32
    return %c0_i32, %c0_i32_0 : i32, i32
  }
  func.func @transform_11(%arg0: i32) -> (i32, i32) {
    %c0_i32 = arith.constant 0 : i32
    %c0_i32_0 = arith.constant 0 : i32
    %c0_i32_1 = arith.constant 0 : i32
    return %c0_i32, %c0_i32_0 : i32, i32
  }
  func.func @transform_12(%arg0: i32) -> (i32, i32) {
    %c0_i32 = arith.constant 0 : i32
    %c0_i32_0 = arith.constant 0 : i32
    %c0_i32_1 = arith.constant 0 : i32
    return %c0_i32, %c0_i32_0 : i32, i32
  }
  func.func @transform_13(%arg0: i32) -> (i32, i32) {
    %c0_i32 = arith.constant 0 : i32
    %c0_i32_0 = arith.constant 0 : i32
    %c0_i32_1 = arith.constant 0 : i32
    return %c0_i32, %c0_i32_0 : i32, i32
  }
  func.func @transform_14(%arg0: i32) -> (i32, i32) {
    %c0_i32 = arith.constant 0 : i32
    %c0_i32_0 = arith.constant 0 : i32
    %c0_i32_1 = arith.constant 0 : i32
    return %c0_i32, %c0_i32_0 : i32, i32
  }
  func.func @transform_15(%arg0: i32) -> (i32, i32) {
    %c0_i32 = arith.constant 0 : i32
    %c0_i32_0 = arith.constant 0 : i32
    %c0_i32_1 = arith.constant 0 : i32
    return %c0_i32, %c0_i32_0 : i32, i32
  }
  func.func @transform_16(%arg0: i32) -> (i32, i32) {
    %c0_i32 = arith.constant 0 : i32
    %c0_i32_0 = arith.constant 0 : i32
    %c0_i32_1 = arith.constant 0 : i32
    return %c0_i32, %c0_i32_0 : i32, i32
  }
  func.func @transform_17(%arg0: i32) -> (i32, i32) {
    %c0_i32 = arith.constant 0 : i32
    %c0_i32_0 = arith.constant 0 : i32
    %c0_i32_1 = arith.constant 0 : i32
    return %c0_i32, %c0_i32_0 : i32, i32
  }
  func.func @transform_18(%arg0: i32) -> (i32, i32) {
    %c0_i32 = arith.constant 0 : i32
    %c0_i32_0 = arith.constant 0 : i32
    %c0_i32_1 = arith.constant 0 : i32
    return %c0_i32, %c0_i32_0 : i32, i32
  }
  func.func @transform_19(%arg0: i32) -> (i32, i32) {
    %c0_i32 = arith.constant 0 : i32
    %c0_i32_0 = arith.constant 0 : i32
    %c0_i32_1 = arith.constant 0 : i32
    return %c0_i32, %c0_i32_0 : i32, i32
  }
  func.func @transform_20(%arg0: i32) -> (i32, i32) {
    %c0_i32 = arith.constant 0 : i32
    %c0_i32_0 = arith.constant 0 : i32
    %c0_i32_1 = arith.constant 0 : i32
    return %c0_i32, %c0_i32_0 : i32, i32
  }
  func.func @transform_21(%arg0: i32) -> (i32, i32) {
    %c0_i32 = arith.constant 0 : i32
    %c0_i32_0 = arith.constant 0 : i32
    %c0_i32_1 = arith.constant 0 : i32
    return %c0_i32, %c0_i32_0 : i32, i32
  }
  func.func @transform_22(%arg0: i32) -> (i32, i32, i32) {
    %c0_i32 = arith.constant 0 : i32
    %c0_i32_0 = arith.constant 0 : i32
    %c0_i32_1 = arith.constant 0 : i32
    return %arg0, %c0_i32, %c0_i32_0 : i32, i32, i32
  }
}

module attributes {stable_mosaic.version = 11 : i64} {
  func.func @block_kernel(%arg0: i32, %arg1: memref<1x8x32xf32, #tpu.memory_space<vmem>>, %arg2: memref<1x8x32xf32, #tpu.memory_space<vmem>>, %arg3: memref<32x1xf32, #tpu.memory_space<vmem>>, %arg4: memref<32x1xf32, #tpu.memory_space<vmem>>, %arg5: memref<96x32xf32, #tpu.memory_space<vmem>>, %arg6: memref<96x1xf32, #tpu.memory_space<vmem>>, %arg7: memref<32x32xf32, #tpu.memory_space<vmem>>, %arg8: memref<32x1xf32, #tpu.memory_space<vmem>>, %arg9: memref<32x1xf32, #tpu.memory_space<vmem>>, %arg10: memref<32x1xf32, #tpu.memory_space<vmem>>, %arg11: memref<32x32xf32, #tpu.memory_space<vmem>>, %arg12: memref<32x1xf32, #tpu.memory_space<vmem>>, %arg13: memref<64x32xf32, #tpu.memory_space<vmem>>, %arg14: memref<64x1xf32, #tpu.memory_space<vmem>>, %arg15: memref<32x32xf32, #tpu.memory_space<vmem>>, %arg16: memref<32x1xf32, #tpu.memory_space<vmem>>, %arg17: memref<32x1xf32, #tpu.memory_space<vmem>>, %arg18: memref<32x1xf32, #tpu.memory_space<vmem>>, %arg19: memref<128x32xf32, #tpu.memory_space<vmem>>, %arg20: memref<128x1xf32, #tpu.memory_space<vmem>>, %arg21: memref<32x128xf32, #tpu.memory_space<vmem>>, %arg22: memref<32x1xf32, #tpu.memory_space<vmem>>, %arg23: memref<1x8x32xf32, #tpu.memory_space<vmem>>) attributes {dimension_semantics = [#tpu.dimension_semantics<parallel>], iteration_bounds = array<i64: 2>, scalar_prefetch = 0 : i64, scratch_operands = 0 : i64, tpu.core_type = #tpu.core_type<tc>, window_params = [{transform_indices = @transform_0, window_bounds = array<i64: 1, 8, 32>}, {transform_indices = @transform_1, window_bounds = array<i64: 1, 8, 32>}, {pipeline_mode = #tpu.pipeline_mode<synchronous>, transform_indices = @transform_2, window_bounds = array<i64: 32, 1>}, {pipeline_mode = #tpu.pipeline_mode<synchronous>, transform_indices = @transform_3, window_bounds = array<i64: 32, 1>}, {pipeline_mode = #tpu.pipeline_mode<synchronous>, transform_indices = @transform_4, window_bounds = array<i64: 96, 32>}, {pipeline_mode = #tpu.pipeline_mode<synchronous>, transform_indices = @transform_5, window_bounds = array<i64: 96, 1>}, {pipeline_mode = #tpu.pipeline_mode<synchronous>, transform_indices = @transform_6, window_bounds = array<i64: 32, 32>}, {pipeline_mode = #tpu.pipeline_mode<synchronous>, transform_indices = @transform_7, window_bounds = array<i64: 32, 1>}, {pipeline_mode = #tpu.pipeline_mode<synchronous>, transform_indices = @transform_8, window_bounds = array<i64: 32, 1>}, {pipeline_mode = #tpu.pipeline_mode<synchronous>, transform_indices = @transform_9, window_bounds = array<i64: 32, 1>}, {pipeline_mode = #tpu.pipeline_mode<synchronous>, transform_indices = @transform_10, window_bounds = array<i64: 32, 32>}, {pipeline_mode = #tpu.pipeline_mode<synchronous>, transform_indices = @transform_11, window_bounds = array<i64: 32, 1>}, {pipeline_mode = #tpu.pipeline_mode<synchronous>, transform_indices = @transform_12, window_bounds = array<i64: 64, 32>}, {pipeline_mode = #tpu.pipeline_mode<synchronous>, transform_indices = @transform_13, window_bounds = array<i64: 64, 1>}, {pipeline_mode = #tpu.pipeline_mode<synchronous>, transform_indices = @transform_14, window_bounds = array<i64: 32, 32>}, {pipeline_mode = #tpu.pipeline_mode<synchronous>, transform_indices = @transform_15, window_bounds = array<i64: 32, 1>}, {pipeline_mode = #tpu.pipeline_mode<synchronous>, transform_indices = @transform_16, window_bounds = array<i64: 32, 1>}, {pipeline_mode = #tpu.pipeline_mode<synchronous>, transform_indices = @transform_17, window_bounds = array<i64: 32, 1>}, {pipeline_mode = #tpu.pipeline_mode<synchronous>, transform_indices = @transform_18, window_bounds = array<i64: 128, 32>}, {pipeline_mode = #tpu.pipeline_mode<synchronous>, transform_indices = @transform_19, window_bounds = array<i64: 128, 1>}, {pipeline_mode = #tpu.pipeline_mode<synchronous>, transform_indices = @transform_20, window_bounds = array<i64: 32, 128>}, {pipeline_mode = #tpu.pipeline_mode<synchronous>, transform_indices = @transform_21, window_bounds = array<i64: 32, 1>}, {transform_indices = @transform_22, window_bounds = array<i64: 1, 8, 32>}]} {
    %c0 = arith.constant 0 : index
    %c0_0 = arith.constant 0 : index
    %c0_1 = arith.constant 0 : index
    %0 = vector.load %arg1[%c0, %c0_0, %c0_1] : memref<1x8x32xf32, #tpu.memory_space<vmem>>, vector<1x8x32xf32>
    %1 = vector.shape_cast %0 : vector<1x8x32xf32> to vector<8x32xf32>
    %2 = tpu.transpose %1, [1, 0] : vector<8x32xf32> -> vector<32x8xf32>
    %c0_2 = arith.constant 0 : index
    %c0_3 = arith.constant 0 : index
    %c0_4 = arith.constant 0 : index
    %3 = vector.load %arg2[%c0_2, %c0_3, %c0_4] : memref<1x8x32xf32, #tpu.memory_space<vmem>>, vector<1x8x32xf32>
    %4 = vector.shape_cast %3 : vector<1x8x32xf32> to vector<8x32xf32>
    %5 = tpu.transpose %4, [1, 0] : vector<8x32xf32> -> vector<32x8xf32>
    %c0_5 = arith.constant 0 : index
    %c0_6 = arith.constant 0 : index
    %6 = vector.load %arg3[%c0_5, %c0_6] : memref<32x1xf32, #tpu.memory_space<vmem>>, vector<32x1xf32>
    %c0_7 = arith.constant 0 : index
    %c0_8 = arith.constant 0 : index
    %7 = vector.load %arg4[%c0_7, %c0_8] : memref<32x1xf32, #tpu.memory_space<vmem>>, vector<32x1xf32>
    %cst = arith.constant dense<0.000000e+00> : vector<8xf32>
    %8 = vector.multi_reduction <add>, %2, %cst [0] : vector<32x8xf32> to vector<8xf32>
    %9 = vector.shape_cast %8 : vector<8xf32> to vector<1x8xf32>
    %cst_9 = arith.constant 3.200000e+01 : f32
    %10 = vector.broadcast %cst_9 : f32 to vector<1x8xf32>
    %11 = arith.divf %9, %10 : vector<1x8xf32>
    %12 = vector.broadcast %11 : vector<1x8xf32> to vector<32x8xf32>
    %13 = arith.subf %2, %12 : vector<32x8xf32>
    %14 = arith.mulf %13, %13 : vector<32x8xf32>
    %cst_10 = arith.constant dense<0.000000e+00> : vector<8xf32>
    %15 = vector.multi_reduction <add>, %14, %cst_10 [0] : vector<32x8xf32> to vector<8xf32>
    %16 = vector.shape_cast %15 : vector<8xf32> to vector<1x8xf32>
    %cst_11 = arith.constant 3.200000e+01 : f32
    %17 = vector.broadcast %cst_11 : f32 to vector<1x8xf32>
    %18 = arith.divf %16, %17 : vector<1x8xf32>
    %19 = vector.broadcast %11 : vector<1x8xf32> to vector<32x8xf32>
    %20 = arith.subf %2, %19 : vector<32x8xf32>
    %cst_12 = arith.constant 9.99999974E-6 : f32
    %21 = vector.broadcast %cst_12 : f32 to vector<1x8xf32>
    %22 = arith.addf %18, %21 : vector<1x8xf32>
    %23 = math.rsqrt %22 : vector<1x8xf32>
    %24 = vector.broadcast %23 : vector<1x8xf32> to vector<32x8xf32>
    %25 = arith.mulf %20, %24 : vector<32x8xf32>
    %26 = vector.broadcast %6 : vector<32x1xf32> to vector<32x8xf32>
    %27 = arith.mulf %25, %26 : vector<32x8xf32>
    %28 = vector.broadcast %7 : vector<32x1xf32> to vector<32x8xf32>
    %29 = arith.addf %27, %28 : vector<32x8xf32>
    %c0_13 = arith.constant 0 : index
    %c0_14 = arith.constant 0 : index
    %30 = vector.load %arg5[%c0_13, %c0_14] : memref<96x32xf32, #tpu.memory_space<vmem>>, vector<96x32xf32>
    %cst_15 = arith.constant dense<0.000000e+00> : vector<96x8xf32>
    %31 = tpu.matmul %30, %29, %cst_15 {dimension_numbers = #tpu.dot_dimension_numbers<[1], [0], [0], [1], [0, 0, 1, 1], [], []>} : vector<96x32xf32>, vector<32x8xf32>, vector<96x8xf32> -> vector<96x8xf32>
    %c0_16 = arith.constant 0 : index
    %c0_17 = arith.constant 0 : index
    %32 = vector.load %arg6[%c0_16, %c0_17] : memref<96x1xf32, #tpu.memory_space<vmem>>, vector<96x1xf32>
    %33 = vector.broadcast %32 : vector<96x1xf32> to vector<96x8xf32>
    %34 = arith.addf %31, %33 : vector<96x8xf32>
    %35 = vector.shape_cast %34 : vector<96x8xf32> to vector<12x8x8xf32>
    %36 = vector.extract_strided_slice %35 {offsets = [0, 0, 0], sizes = [4, 8, 8], strides = [1, 1, 1]} : vector<12x8x8xf32> to vector<4x8x8xf32>
    %37 = tpu.transpose %36, [0, 2, 1] : vector<4x8x8xf32> -> vector<4x8x8xf32>
    %38 = vector.extract_strided_slice %35 {offsets = [4, 0, 0], sizes = [4, 8, 8], strides = [1, 1, 1]} : vector<12x8x8xf32> to vector<4x8x8xf32>
    %39 = vector.extract_strided_slice %35 {offsets = [8, 0, 0], sizes = [4, 8, 8], strides = [1, 1, 1]} : vector<12x8x8xf32> to vector<4x8x8xf32>
    %cst_18 = arith.constant dense<0.000000e+00> : vector<4x8x8xf32>
    %40 = tpu.matmul %37, %38, %cst_18 {dimension_numbers = #tpu.dot_dimension_numbers<[2], [1], [1], [2], [0, 0, 0, 1, 1, 2], [0], [0]>} : vector<4x8x8xf32>, vector<4x8x8xf32>, vector<4x8x8xf32> -> vector<4x8x8xf32>
    %cst_19 = arith.constant 0.353553385 : f32
    %41 = vector.broadcast %cst_19 : f32 to vector<4x8x8xf32>
    %42 = arith.mulf %40, %41 : vector<4x8x8xf32>
    %43 = tpu.iota {dimensions = array<i32: 0>} : vector<8x8xi32>
    %44 = tpu.iota {dimensions = array<i32: 1>} : vector<8x8xi32>
    %45 = arith.cmpi sge, %43, %44 : vector<8x8xi32>
    %46 = vector.shape_cast %45 : vector<8x8xi1> to vector<1x8x8xi1>
    %cst_20 = arith.constant 0xFF800000 : f32
    %47 = vector.shape_cast %46 : vector<1x8x8xi1> to vector<1x8x8xi1>
    %48 = vector.broadcast %47 : vector<1x8x8xi1> to vector<4x8x8xi1>
    %49 = vector.broadcast %cst_20 : f32 to vector<4x8x8xf32>
    %50 = arith.select %48, %42, %49 : vector<4x8x8xi1>, vector<4x8x8xf32>
    %cst_21 = arith.constant dense<0xFF800000> : vector<4x8xf32>
    %51 = vector.multi_reduction <maximumf>, %50, %cst_21 [2] : vector<4x8x8xf32> to vector<4x8xf32>
    %52 = vector.shape_cast %51 : vector<4x8xf32> to vector<4x8x1xf32>
    %53 = vector.broadcast %52 : vector<4x8x1xf32> to vector<4x8x8xf32>
    %54 = arith.subf %50, %53 : vector<4x8x8xf32>
    %55 = math.exp %54 : vector<4x8x8xf32>
    %cst_22 = arith.constant dense<0.000000e+00> : vector<4x8xf32>
    %56 = vector.multi_reduction <add>, %55, %cst_22 [2] : vector<4x8x8xf32> to vector<4x8xf32>
    %57 = vector.shape_cast %56 : vector<4x8xf32> to vector<4x8x1xf32>
    %58 = vector.broadcast %57 : vector<4x8x1xf32> to vector<4x8x8xf32>
    %59 = arith.divf %55, %58 : vector<4x8x8xf32>
    %cst_23 = arith.constant dense<0.000000e+00> : vector<4x8x8xf32>
    %60 = tpu.matmul %39, %59, %cst_23 {dimension_numbers = #tpu.dot_dimension_numbers<[2], [2], [1], [1], [0, 0, 0, 1, 1, 1], [0], [0]>} : vector<4x8x8xf32>, vector<4x8x8xf32>, vector<4x8x8xf32> -> vector<4x8x8xf32>
    %61 = vector.shape_cast %60 : vector<4x8x8xf32> to vector<32x8xf32>
    %c0_24 = arith.constant 0 : index
    %c0_25 = arith.constant 0 : index
    %62 = vector.load %arg7[%c0_24, %c0_25] : memref<32x32xf32, #tpu.memory_space<vmem>>, vector<32x32xf32>
    %cst_26 = arith.constant dense<0.000000e+00> : vector<32x8xf32>
    %63 = tpu.matmul %62, %61, %cst_26 {dimension_numbers = #tpu.dot_dimension_numbers<[1], [0], [0], [1], [0, 0, 1, 1], [], []>} : vector<32x32xf32>, vector<32x8xf32>, vector<32x8xf32> -> vector<32x8xf32>
    %c0_27 = arith.constant 0 : index
    %c0_28 = arith.constant 0 : index
    %64 = vector.load %arg8[%c0_27, %c0_28] : memref<32x1xf32, #tpu.memory_space<vmem>>, vector<32x1xf32>
    %65 = vector.broadcast %64 : vector<32x1xf32> to vector<32x8xf32>
    %66 = arith.addf %63, %65 : vector<32x8xf32>
    %67 = arith.addf %2, %66 : vector<32x8xf32>
    %c0_29 = arith.constant 0 : index
    %c0_30 = arith.constant 0 : index
    %68 = vector.load %arg9[%c0_29, %c0_30] : memref<32x1xf32, #tpu.memory_space<vmem>>, vector<32x1xf32>
    %c0_31 = arith.constant 0 : index
    %c0_32 = arith.constant 0 : index
    %69 = vector.load %arg10[%c0_31, %c0_32] : memref<32x1xf32, #tpu.memory_space<vmem>>, vector<32x1xf32>
    %cst_33 = arith.constant dense<0.000000e+00> : vector<8xf32>
    %70 = vector.multi_reduction <add>, %67, %cst_33 [0] : vector<32x8xf32> to vector<8xf32>
    %71 = vector.shape_cast %70 : vector<8xf32> to vector<1x8xf32>
    %cst_34 = arith.constant 3.200000e+01 : f32
    %72 = vector.broadcast %cst_34 : f32 to vector<1x8xf32>
    %73 = arith.divf %71, %72 : vector<1x8xf32>
    %74 = vector.broadcast %73 : vector<1x8xf32> to vector<32x8xf32>
    %75 = arith.subf %67, %74 : vector<32x8xf32>
    %76 = arith.mulf %75, %75 : vector<32x8xf32>
    %cst_35 = arith.constant dense<0.000000e+00> : vector<8xf32>
    %77 = vector.multi_reduction <add>, %76, %cst_35 [0] : vector<32x8xf32> to vector<8xf32>
    %78 = vector.shape_cast %77 : vector<8xf32> to vector<1x8xf32>
    %cst_36 = arith.constant 3.200000e+01 : f32
    %79 = vector.broadcast %cst_36 : f32 to vector<1x8xf32>
    %80 = arith.divf %78, %79 : vector<1x8xf32>
    %81 = vector.broadcast %73 : vector<1x8xf32> to vector<32x8xf32>
    %82 = arith.subf %67, %81 : vector<32x8xf32>
    %cst_37 = arith.constant 9.99999974E-6 : f32
    %83 = vector.broadcast %cst_37 : f32 to vector<1x8xf32>
    %84 = arith.addf %80, %83 : vector<1x8xf32>
    %85 = math.rsqrt %84 : vector<1x8xf32>
    %86 = vector.broadcast %85 : vector<1x8xf32> to vector<32x8xf32>
    %87 = arith.mulf %82, %86 : vector<32x8xf32>
    %88 = vector.broadcast %68 : vector<32x1xf32> to vector<32x8xf32>
    %89 = arith.mulf %87, %88 : vector<32x8xf32>
    %90 = vector.broadcast %69 : vector<32x1xf32> to vector<32x8xf32>
    %91 = arith.addf %89, %90 : vector<32x8xf32>
    %c0_38 = arith.constant 0 : index
    %c0_39 = arith.constant 0 : index
    %92 = vector.load %arg11[%c0_38, %c0_39] : memref<32x32xf32, #tpu.memory_space<vmem>>, vector<32x32xf32>
    %cst_40 = arith.constant dense<0.000000e+00> : vector<32x8xf32>
    %93 = tpu.matmul %92, %91, %cst_40 {dimension_numbers = #tpu.dot_dimension_numbers<[1], [0], [0], [1], [0, 0, 1, 1], [], []>} : vector<32x32xf32>, vector<32x8xf32>, vector<32x8xf32> -> vector<32x8xf32>
    %c0_41 = arith.constant 0 : index
    %c0_42 = arith.constant 0 : index
    %94 = vector.load %arg12[%c0_41, %c0_42] : memref<32x1xf32, #tpu.memory_space<vmem>>, vector<32x1xf32>
    %95 = vector.broadcast %94 : vector<32x1xf32> to vector<32x8xf32>
    %96 = arith.addf %93, %95 : vector<32x8xf32>
    %97 = vector.shape_cast %96 : vector<32x8xf32> to vector<4x8x8xf32>
    %98 = tpu.transpose %97, [0, 2, 1] : vector<4x8x8xf32> -> vector<4x8x8xf32>
    %c0_43 = arith.constant 0 : index
    %c0_44 = arith.constant 0 : index
    %99 = vector.load %arg13[%c0_43, %c0_44] : memref<64x32xf32, #tpu.memory_space<vmem>>, vector<64x32xf32>
    %cst_45 = arith.constant dense<0.000000e+00> : vector<64x8xf32>
    %100 = tpu.matmul %99, %5, %cst_45 {dimension_numbers = #tpu.dot_dimension_numbers<[1], [0], [0], [1], [0, 0, 1, 1], [], []>} : vector<64x32xf32>, vector<32x8xf32>, vector<64x8xf32> -> vector<64x8xf32>
    %c0_46 = arith.constant 0 : index
    %c0_47 = arith.constant 0 : index
    %101 = vector.load %arg14[%c0_46, %c0_47] : memref<64x1xf32, #tpu.memory_space<vmem>>, vector<64x1xf32>
    %102 = vector.broadcast %101 : vector<64x1xf32> to vector<64x8xf32>
    %103 = arith.addf %100, %102 : vector<64x8xf32>
    %104 = vector.shape_cast %103 : vector<64x8xf32> to vector<8x8x8xf32>
    %105 = vector.extract_strided_slice %104 {offsets = [0, 0, 0], sizes = [4, 8, 8], strides = [1, 1, 1]} : vector<8x8x8xf32> to vector<4x8x8xf32>
    %106 = vector.extract_strided_slice %104 {offsets = [4, 0, 0], sizes = [4, 8, 8], strides = [1, 1, 1]} : vector<8x8x8xf32> to vector<4x8x8xf32>
    %cst_48 = arith.constant dense<0.000000e+00> : vector<4x8x8xf32>
    %107 = tpu.matmul %98, %105, %cst_48 {dimension_numbers = #tpu.dot_dimension_numbers<[2], [1], [1], [2], [0, 0, 0, 1, 1, 2], [0], [0]>} : vector<4x8x8xf32>, vector<4x8x8xf32>, vector<4x8x8xf32> -> vector<4x8x8xf32>
    %cst_49 = arith.constant 0.353553385 : f32
    %108 = vector.broadcast %cst_49 : f32 to vector<4x8x8xf32>
    %109 = arith.mulf %107, %108 : vector<4x8x8xf32>
    %cst_50 = arith.constant dense<0xFF800000> : vector<4x8xf32>
    %110 = vector.multi_reduction <maximumf>, %109, %cst_50 [2] : vector<4x8x8xf32> to vector<4x8xf32>
    %111 = vector.shape_cast %110 : vector<4x8xf32> to vector<4x8x1xf32>
    %112 = vector.broadcast %111 : vector<4x8x1xf32> to vector<4x8x8xf32>
    %113 = arith.subf %109, %112 : vector<4x8x8xf32>
    %114 = math.exp %113 : vector<4x8x8xf32>
    %cst_51 = arith.constant dense<0.000000e+00> : vector<4x8xf32>
    %115 = vector.multi_reduction <add>, %114, %cst_51 [2] : vector<4x8x8xf32> to vector<4x8xf32>
    %116 = vector.shape_cast %115 : vector<4x8xf32> to vector<4x8x1xf32>
    %117 = vector.broadcast %116 : vector<4x8x1xf32> to vector<4x8x8xf32>
    %118 = arith.divf %114, %117 : vector<4x8x8xf32>
    %cst_52 = arith.constant dense<0.000000e+00> : vector<4x8x8xf32>
    %119 = tpu.matmul %106, %118, %cst_52 {dimension_numbers = #tpu.dot_dimension_numbers<[2], [2], [1], [1], [0, 0, 0, 1, 1, 1], [0], [0]>} : vector<4x8x8xf32>, vector<4x8x8xf32>, vector<4x8x8xf32> -> vector<4x8x8xf32>
    %120 = vector.shape_cast %119 : vector<4x8x8xf32> to vector<32x8xf32>
    %c0_53 = arith.constant 0 : index
    %c0_54 = arith.constant 0 : index
    %121 = vector.load %arg15[%c0_53, %c0_54] : memref<32x32xf32, #tpu.memory_space<vmem>>, vector<32x32xf32>
    %cst_55 = arith.constant dense<0.000000e+00> : vector<32x8xf32>
    %122 = tpu.matmul %121, %120, %cst_55 {dimension_numbers = #tpu.dot_dimension_numbers<[1], [0], [0], [1], [0, 0, 1, 1], [], []>} : vector<32x32xf32>, vector<32x8xf32>, vector<32x8xf32> -> vector<32x8xf32>
    %c0_56 = arith.constant 0 : index
    %c0_57 = arith.constant 0 : index
    %123 = vector.load %arg16[%c0_56, %c0_57] : memref<32x1xf32, #tpu.memory_space<vmem>>, vector<32x1xf32>
    %124 = vector.broadcast %123 : vector<32x1xf32> to vector<32x8xf32>
    %125 = arith.addf %122, %124 : vector<32x8xf32>
    %126 = arith.addf %67, %125 : vector<32x8xf32>
    %c0_58 = arith.constant 0 : index
    %c0_59 = arith.constant 0 : index
    %127 = vector.load %arg17[%c0_58, %c0_59] : memref<32x1xf32, #tpu.memory_space<vmem>>, vector<32x1xf32>
    %c0_60 = arith.constant 0 : index
    %c0_61 = arith.constant 0 : index
    %128 = vector.load %arg18[%c0_60, %c0_61] : memref<32x1xf32, #tpu.memory_space<vmem>>, vector<32x1xf32>
    %cst_62 = arith.constant dense<0.000000e+00> : vector<8xf32>
    %129 = vector.multi_reduction <add>, %126, %cst_62 [0] : vector<32x8xf32> to vector<8xf32>
    %130 = vector.shape_cast %129 : vector<8xf32> to vector<1x8xf32>
    %cst_63 = arith.constant 3.200000e+01 : f32
    %131 = vector.broadcast %cst_63 : f32 to vector<1x8xf32>
    %132 = arith.divf %130, %131 : vector<1x8xf32>
    %133 = vector.broadcast %132 : vector<1x8xf32> to vector<32x8xf32>
    %134 = arith.subf %126, %133 : vector<32x8xf32>
    %135 = arith.mulf %134, %134 : vector<32x8xf32>
    %cst_64 = arith.constant dense<0.000000e+00> : vector<8xf32>
    %136 = vector.multi_reduction <add>, %135, %cst_64 [0] : vector<32x8xf32> to vector<8xf32>
    %137 = vector.shape_cast %136 : vector<8xf32> to vector<1x8xf32>
    %cst_65 = arith.constant 3.200000e+01 : f32
    %138 = vector.broadcast %cst_65 : f32 to vector<1x8xf32>
    %139 = arith.divf %137, %138 : vector<1x8xf32>
    %140 = vector.broadcast %132 : vector<1x8xf32> to vector<32x8xf32>
    %141 = arith.subf %126, %140 : vector<32x8xf32>
    %cst_66 = arith.constant 9.99999974E-6 : f32
    %142 = vector.broadcast %cst_66 : f32 to vector<1x8xf32>
    %143 = arith.addf %139, %142 : vector<1x8xf32>
    %144 = math.rsqrt %143 : vector<1x8xf32>
    %145 = vector.broadcast %144 : vector<1x8xf32> to vector<32x8xf32>
    %146 = arith.mulf %141, %145 : vector<32x8xf32>
    %147 = vector.broadcast %127 : vector<32x1xf32> to vector<32x8xf32>
    %148 = arith.mulf %146, %147 : vector<32x8xf32>
    %149 = vector.broadcast %128 : vector<32x1xf32> to vector<32x8xf32>
    %150 = arith.addf %148, %149 : vector<32x8xf32>
    %c0_67 = arith.constant 0 : index
    %c0_68 = arith.constant 0 : index
    %151 = vector.load %arg19[%c0_67, %c0_68] : memref<128x32xf32, #tpu.memory_space<vmem>>, vector<128x32xf32>
    %cst_69 = arith.constant dense<0.000000e+00> : vector<128x8xf32>
    %152 = tpu.matmul %151, %150, %cst_69 {dimension_numbers = #tpu.dot_dimension_numbers<[1], [0], [0], [1], [0, 0, 1, 1], [], []>} : vector<128x32xf32>, vector<32x8xf32>, vector<128x8xf32> -> vector<128x8xf32>
    %c0_70 = arith.constant 0 : index
    %c0_71 = arith.constant 0 : index
    %153 = vector.load %arg20[%c0_70, %c0_71] : memref<128x1xf32, #tpu.memory_space<vmem>>, vector<128x1xf32>
    %154 = vector.broadcast %153 : vector<128x1xf32> to vector<128x8xf32>
    %155 = arith.addf %152, %154 : vector<128x8xf32>
    %cst_72 = arith.constant 5.000000e-01 : f32
    %156 = vector.broadcast %cst_72 : f32 to vector<128x8xf32>
    %157 = arith.mulf %156, %155 : vector<128x8xf32>
    %cst_73 = arith.constant 4.471500e-02 : f32
    %158 = vector.broadcast %cst_73 : f32 to vector<128x8xf32>
    %159 = arith.mulf %158, %155 : vector<128x8xf32>
    %160 = arith.mulf %159, %155 : vector<128x8xf32>
    %161 = arith.mulf %160, %155 : vector<128x8xf32>
    %162 = arith.addf %155, %161 : vector<128x8xf32>
    %cst_74 = arith.constant 0.797884583 : f32
    %163 = vector.broadcast %cst_74 : f32 to vector<128x8xf32>
    %164 = arith.mulf %163, %162 : vector<128x8xf32>
    %165 = math.tanh %164 : vector<128x8xf32>
    %cst_75 = arith.constant 1.000000e+00 : f32
    %166 = vector.broadcast %cst_75 : f32 to vector<128x8xf32>
    %167 = arith.addf %166, %165 : vector<128x8xf32>
    %168 = arith.mulf %157, %167 : vector<128x8xf32>
    %c0_76 = arith.constant 0 : index
    %c0_77 = arith.constant 0 : index
    %169 = vector.load %arg21[%c0_76, %c0_77] : memref<32x128xf32, #tpu.memory_space<vmem>>, vector<32x128xf32>
    %cst_78 = arith.constant dense<0.000000e+00> : vector<32x8xf32>
    %170 = tpu.matmul %169, %168, %cst_78 {dimension_numbers = #tpu.dot_dimension_numbers<[1], [0], [0], [1], [0, 0, 1, 1], [], []>} : vector<32x128xf32>, vector<128x8xf32>, vector<32x8xf32> -> vector<32x8xf32>
    %c0_79 = arith.constant 0 : index
    %c0_80 = arith.constant 0 : index
    %171 = vector.load %arg22[%c0_79, %c0_80] : memref<32x1xf32, #tpu.memory_space<vmem>>, vector<32x1xf32>
    %172 = vector.broadcast %171 : vector<32x1xf32> to vector<32x8xf32>
    %173 = arith.addf %170, %172 : vector<32x8xf32>
    %174 = arith.addf %126, %173 : vector<32x8xf32>
    %175 = tpu.transpose %174, [1, 0] : vector<32x8xf32> -> vector<8x32xf32>
    %c0_81 = arith.constant 0 : index
    %c0_82 = arith.constant 0 : index
    %c0_83 = arith.constant 0 : index
    %176 = vector.load %arg23[%c0_81, %c0_82, %c0_83] : memref<1x8x32xf32, #tpu.memory_space<vmem>>, vector<1x8x32xf32>
    %177 = vector.shape_cast %176 : vector<1x8x32xf32> to vector<8x32xf32>
    %178 = vector.shape_cast %175 : vector<8x32xf32> to vector<1x8x32xf32>
    tpu.vector_store %arg23[%c0_81, %c0_82, %c0_83], %178 {strides = array<i32>} : memref<1x8x32xf32, #tpu.memory_space<vmem>>, vector<1x8x32xf32>,
    return
  }
  func.func @transform_0(%arg0: i32) -> (i32, i32, i32) {
    %c0_i32 = arith.constant 0 : i32
    %c0_i32_0 = arith.constant 0 : i32
    %c0_i32_1 = arith.constant 0 : i32
    return %arg0, %c0_i32, %c0_i32_0 : i32, i32, i32
  }
  func.func @transform_1(%arg0: i32) -> (i32, i32, i32) {
    %c0_i32 = arith.constant 0 : i32
    %c0_i32_0 = arith.constant 0 : i32
    %c0_i32_1 = arith.constant 0 : i32
    return %arg0, %c0_i32, %c0_i32_0 : i32, i32, i32
  }
  func.func @transform_2(%arg0: i32) -> (i32, i32) {
    %c0_i32 = arith.constant 0 : i32
    %c0_i32_0 = arith.constant 0 : i32
    %c0_i32_1 = arith.constant 0 : i32
    return %c0_i32, %c0_i32_0 : i32, i32
  }
  func.func @transform_3(%arg0: i32) -> (i32, i32) {
    %c0_i32 = arith.constant 0 : i32
    %c0_i32_0 = arith.constant 0 : i32
    %c0_i32_1 = arith.constant 0 : i32
    return %c0_i32, %c0_i32_0 : i32, i32
  }
  func.func @transform_4(%arg0: i32) -> (i32, i32) {
    %c0_i32 = arith.constant 0 : i32
    %c0_i32_0 = arith.constant 0 : i32
    %c0_i32_1 = arith.constant 0 : i32
    return %c0_i32, %c0_i32_0 : i32, i32
  }
  func.func @transform_5(%arg0: i32) -> (i32, i32) {
    %c0_i32 = arith.constant 0 : i32
    %c0_i32_0 = arith.constant 0 : i32
    %c0_i32_1 = arith.constant 0 : i32
    return %c0_i32, %c0_i32_0 : i32, i32
  }
  func.func @transform_6(%arg0: i32) -> (i32, i32) {
    %c0_i32 = arith.constant 0 : i32
    %c0_i32_0 = arith.constant 0 : i32
    %c0_i32_1 = arith.constant 0 : i32
    return %c0_i32, %c0_i32_0 : i32, i32
  }
  func.func @transform_7(%arg0: i32) -> (i32, i32) {
    %c0_i32 = arith.constant 0 : i32
    %c0_i32_0 = arith.constant 0 : i32
    %c0_i32_1 = arith.constant 0 : i32
    return %c0_i32, %c0_i32_0 : i32, i32
  }
  func.func @transform_8(%arg0: i32) -> (i32, i32) {
    %c0_i32 = arith.constant 0 : i32
    %c0_i32_0 = arith.constant 0 : i32
    %c0_i32_1 = arith.constant 0 : i32
    return %c0_i32, %c0_i32_0 : i32, i32
  }
  func.func @transform_9(%arg0: i32) -> (i32, i32) {
    %c0_i32 = arith.constant 0 : i32
    %c0_i32_0 = arith.constant 0 : i32
    %c0_i32_1 = arith.constant 0 : i32
    return %c0_i32, %c0_i32_0 : i32, i32
  }
  func.func @transform_10(%arg0: i32) -> (i32, i32) {
    %c0_i32 = arith.constant 0 : i32
    %c0_i32_0 = arith.constant 0 : i32
    %c0_i32_1 = arith.constant 0 : i32
    return %c0_i32, %c0_i32_0 : i32, i32
  }
  func.func @transform_11(%arg0: i32) -> (i32, i32) {
    %c0_i32 = arith.constant 0 : i32
    %c0_i32_0 = arith.constant 0 : i32
    %c0_i32_1 = arith.constant 0 : i32
    return %c0_i32, %c0_i32_0 : i32, i32
  }
  func.func @transform_12(%arg0: i32) -> (i32, i32) {
    %c0_i32 = arith.constant 0 : i32
    %c0_i32_0 = arith.constant 0 : i32
    %c0_i32_1 = arith.constant 0 : i32
    return %c0_i32, %c0_i32_0 : i32, i32
  }
  func.func @transform_13(%arg0: i32) -> (i32, i32) {
    %c0_i32 = arith.constant 0 : i32
    %c0_i32_0 = arith.constant 0 : i32
    %c0_i32_1 = arith.constant 0 : i32
    return %c0_i32, %c0_i32_0 : i32, i32
  }
  func.func @transform_14(%arg0: i32) -> (i32, i32) {
    %c0_i32 = arith.constant 0 : i32
    %c0_i32_0 = arith.constant 0 : i32
    %c0_i32_1 = arith.constant 0 : i32
    return %c0_i32, %c0_i32_0 : i32, i32
  }
  func.func @transform_15(%arg0: i32) -> (i32, i32) {
    %c0_i32 = arith.constant 0 : i32
    %c0_i32_0 = arith.constant 0 : i32
    %c0_i32_1 = arith.constant 0 : i32
    return %c0_i32, %c0_i32_0 : i32, i32
  }
  func.func @transform_16(%arg0: i32) -> (i32, i32) {
    %c0_i32 = arith.constant 0 : i32
    %c0_i32_0 = arith.constant 0 : i32
    %c0_i32_1 = arith.constant 0 : i32
    return %c0_i32, %c0_i32_0 : i32, i32
  }
  func.func @transform_17(%arg0: i32) -> (i32, i32) {
    %c0_i32 = arith.constant 0 : i32
    %c0_i32_0 = arith.constant 0 : i32
    %c0_i32_1 = arith.constant 0 : i32
    return %c0_i32, %c0_i32_0 : i32, i32
  }
  func.func @transform_18(%arg0: i32) -> (i32, i32) {
    %c0_i32 = arith.constant 0 : i32
    %c0_i32_0 = arith.constant 0 : i32
    %c0_i32_1 = arith.constant 0 : i32
    return %c0_i32, %c0_i32_0 : i32, i32
  }
  func.func @transform_19(%arg0: i32) -> (i32, i32) {
    %c0_i32 = arith.constant 0 : i32
    %c0_i32_0 = arith.constant 0 : i32
    %c0_i32_1 = arith.constant 0 : i32
    return %c0_i32, %c0_i32_0 : i32, i32
  }
  func.func @transform_20(%arg0: i32) -> (i32, i32) {
    %c0_i32 = arith.constant 0 : i32
    %c0_i32_0 = arith.constant 0 : i32
    %c0_i32_1 = arith.constant 0 : i32
    return %c0_i32, %c0_i32_0 : i32, i32
  }
  func.func @transform_21(%arg0: i32) -> (i32, i32) {
    %c0_i32 = arith.constant 0 : i32
    %c0_i32_0 = arith.constant 0 : i32
    %c0_i32_1 = arith.constant 0 : i32
    return %c0_i32, %c0_i32_0 : i32, i32
  }
  func.func @transform_22(%arg0: i32) -> (i32, i32, i32) {
    %c0_i32 = arith.constant 0 : i32
    %c0_i32_0 = arith.constant 0 : i32
    %c0_i32_1 = arith.constant 0 : i32
    return %arg0, %c0_i32, %c0_i32_0 : i32, i32, i32
  }
}

</mosaic_0001>

<llo_original>
// kernel: tpu_custom_call.1
$region0: #{tpu_custom_call.1}
  #allocation0 [shape = 'u32[]', space=smem, size = 0x4, offset = 0x4, fixed_abs, tag = 'smem constant byte address 0x4 - core index']
  #allocation1 [shape = 'u32[144,128]{1,0:T(1,128)}', space=vmem, size = 0x12000, scoped, tag = 'internal scratch']
  %s0 = inlined_call_operand.vmem [shape: f32[2,8,32], index: 0, kind: input, shape index: {}]
  %s1 = inlined_call_operand.vmem [shape: f32[2,8,32], index: 1, kind: input, shape index: {}]
  %s2 = inlined_call_operand.vmem [shape: f32[32,1], index: 2, kind: input, shape index: {}]
  %s3 = inlined_call_operand.vmem [shape: f32[32,1], index: 3, kind: input, shape index: {}]
  %s4 = inlined_call_operand.vmem [shape: f32[96,32], index: 4, kind: input, shape index: {}]
  %s5 = inlined_call_operand.vmem [shape: f32[96,1], index: 5, kind: input, shape index: {}]
  %s6 = inlined_call_operand.vmem [shape: f32[32,32], index: 6, kind: input, shape index: {}]
  %s7 = inlined_call_operand.vmem [shape: f32[32,1], index: 7, kind: input, shape index: {}]
  %s8 = inlined_call_operand.vmem [shape: f32[32,1], index: 8, kind: input, shape index: {}]
  %s9 = inlined_call_operand.vmem [shape: f32[32,1], index: 9, kind: input, shape index: {}]
  %s10 = inlined_call_operand.vmem [shape: f32[32,32], index: 10, kind: input, shape index: {}]
  %s11 = inlined_call_operand.vmem [shape: f32[32,1], index: 11, kind: input, shape index: {}]
  %s12 = inlined_call_operand.vmem [shape: f32[64,32], index: 12, kind: input, shape index: {}]
  %s13 = inlined_call_operand.vmem [shape: f32[64,1], index: 13, kind: input, shape index: {}]
  %s14 = inlined_call_operand.vmem [shape: f32[32,32], index: 14, kind: input, shape index: {}]
  %s15 = inlined_call_operand.vmem [shape: f32[32,1], index: 15, kind: input, shape index: {}]
  %s16 = inlined_call_operand.vmem [shape: f32[32,1], index: 16, kind: input, shape index: {}]
  %s17 = inlined_call_operand.vmem [shape: f32[32,1], index: 17, kind: input, shape index: {}]
  %s18 = inlined_call_operand.vmem [shape: f32[128,32], index: 18, kind: input, shape index: {}]
  %s19 = inlined_call_operand.vmem [shape: f32[128,1], index: 19, kind: input, shape index: {}]
  %s20 = inlined_call_operand.vmem [shape: f32[32,128], index: 20, kind: input, shape index: {}]
  %s21 = inlined_call_operand.vmem [shape: f32[32,1], index: 21, kind: input, shape index: {}]
  %s22 = inlined_call_operand.hbm [shape: f32[2,8,32], index: 22, kind: output, shape index: {}]
  %s23 = sld [smem:[#allocation0]]
  $region121: #{tpu_custom_call.1} parent=0
    _
  %s25 = ssub.s32 1, %s23
  %s26 = scalar_select 0, %s25, %s23
  $region1: #{tpu_custom_call.1} parent=0
    #allocation2 [shape = 'u8[8192]{0}', space=vmem, size = 0x2000, scoped, tag = 'output window, operand 0']
    #allocation3 [shape = 's32[2]{0}', space=sflag, size = 0x8, scoped, tag = 'scoped memory for tpu_custom_call.1']
    %27 = vsyncpa [#allocation3], 0
    %s28 = scalar_lea.sflag [#allocation3], 1
    %29 = vsyncpa %s28, 0
    loop: start=0, step=1, limit=4
    $region2: #{tpu_custom_call.1} parent=1 // loop_pre_header
      _
    $region3: #{tpu_custom_call.1} parent=1 // loop_header
      %s31 = sphi 0, %s35
      %p32 = scmp.ge.s32.totalorder %s31, 4
      %s41 = sphi 0, %s43
      %s44 = sphi 0, %s41
      %s45 = sphi 0, %s44
      %s61 = sphi 0, %s45
      %s67 = sphi 0, %s69
      %s70 = sphi 0, %s67
      %s71 = sphi 0, %s70
      %s87 = sphi 0, %s71
      %s91 = sphi 0, %s91
      %s93 = sphi 0, %s91
      %s94 = sphi 0, %s93
      %s108 = sphi 0, %s94
      %s112 = sphi 0, %s112
      %s114 = sphi 0, %s112
      %s115 = sphi 0, %s114
      %s129 = sphi 0, %s115
      %s133 = sphi 0, %s133
      %s135 = sphi 0, %s133
      %s136 = sphi 0, %s135
      %s150 = sphi 0, %s136
      %s154 = sphi 0, %s154
      %s156 = sphi 0, %s154
      %s157 = sphi 0, %s156
      %s171 = sphi 0, %s157
      %s175 = sphi 0, %s175
      %s177 = sphi 0, %s175
      %s178 = sphi 0, %s177
      %s192 = sphi 0, %s178
      %s196 = sphi 0, %s196
      %s198 = sphi 0, %s196
      %s199 = sphi 0, %s198
      %s213 = sphi 0, %s199
      %s217 = sphi 0, %s217
      %s219 = sphi 0, %s217
      %s220 = sphi 0, %s219
      %s234 = sphi 0, %s220
      %s238 = sphi 0, %s238
      %s240 = sphi 0, %s238
      %s241 = sphi 0, %s240
      %s255 = sphi 0, %s241
      %s259 = sphi 0, %s259
      %s261 = sphi 0, %s259
      %s262 = sphi 0, %s261
      %s276 = sphi 0, %s262
      %s280 = sphi 0, %s280
      %s282 = sphi 0, %s280
      %s283 = sphi 0, %s282
      %s297 = sphi 0, %s283
      %s301 = sphi 0, %s301
      %s303 = sphi 0, %s301
      %s304 = sphi 0, %s303
      %s318 = sphi 0, %s304
      %s322 = sphi 0, %s322
      %s324 = sphi 0, %s322
      %s325 = sphi 0, %s324
      %s339 = sphi 0, %s325
      %s343 = sphi 0, %s343
      %s345 = sphi 0, %s343
      %s346 = sphi 0, %s345
      %s360 = sphi 0, %s346
      %s364 = sphi 0, %s364
      %s366 = sphi 0, %s364
      %s367 = sphi 0, %s366
      %s381 = sphi 0, %s367
      %s385 = sphi 0, %s385
      %s387 = sphi 0, %s385
      %s388 = sphi 0, %s387
      %s402 = sphi 0, %s388
      %s406 = sphi 0, %s406
      %s408 = sphi 0, %s406
      %s409 = sphi 0, %s408
      %s423 = sphi 0, %s409
      %s427 = sphi 0, %s427
      %s429 = sphi 0, %s427
      %s430 = sphi 0, %s429
      %s444 = sphi 0, %s430
      %s448 = sphi 0, %s448
      %s450 = sphi 0, %s448
      %s451 = sphi 0, %s450
      %s465 = sphi 0, %s451
      %s469 = sphi 0, %s469
      %s471 = sphi 0, %s469
      %s472 = sphi 0, %s471
      %s486 = sphi 0, %s472
      %s490 = sphi 0, %s490
      %s492 = sphi 0, %s490
      %s493 = sphi 0, %s492
      %s507 = sphi 0, %s493
      %s513 = sphi 0, %s515
      %s516 = sphi 0, %s513
      %s517 = sphi 0, %s516
      %s533 = sphi 0, %s517
    $region4: #{tpu_custom_call.1} parent=1 // loop_header_branch
      %34 = sbr.rel (%p32) target = $region8
    $region5: #{tpu_custom_call.1} parent=1 // loop_body
      %s36 = ssub.s32 %s31, 1
      %s37 = ssub.s32 %s31, 2
      %s38 = sadd.s32 %s31, 1
      %s39 = ssub.s32 %s31, %s38
      %p40 = scmp.eq.s32.totalorder %s39, 0
      %s42 = sadd.s32 %s41, 1
      %s43 = scalar_select %p40, %s41, %s42
      %p46 = pneg %p40
      %p47 = scmp.eq.s32.totalorder %s31, 1
      %p48 = por %p46, %p47
      %p49 = scmp.ne.s32.totalorder %s41, %s44
      %p50 = scmp.eq.s32.totalorder %s31, 0
      %p51 = por %p49, %p50
      %p52 = scmp.ne.s32.totalorder %s41, %s44
      %p53 = scmp.eq.s32.totalorder %s36, 1
      %p54 = por %p52, %p53
      %p55 = scmp.ne.s32.totalorder %s44, %s45
      %p56 = scmp.eq.s32.totalorder %s36, 0
      %p57 = por %p55, %p56
      %p58 = scmp.ne.s32.totalorder %s44, %s45
      %p59 = scmp.eq.s32.totalorder %s37, 1
      %p60 = por %p58, %p59
      %p62 = scmp.ne.s32.totalorder %s45, %s61
      %p63 = scmp.eq.s32.totalorder %s37, 0
      %p64 = por %p62, %p63
      %s65 = ssub.s32 %s31, %s38
      %p66 = scmp.eq.s32.totalorder %s65, 0
      %s68 = sadd.s32 %s67, 1
      %s69 = scalar_select %p66, %s67, %s68
      %p72 = pneg %p66
      %p73 = scmp.eq.s32.totalorder %s31, 1
      %p74 = por %p72, %p73
      %p75 = scmp.ne.s32.totalorder %s67, %s70
      %p76 = scmp.eq.s32.totalorder %s31, 0
      %p77 = por %p75, %p76
      %p78 = scmp.ne.s32.totalorder %s67, %s70
      %p79 = scmp.eq.s32.totalorder %s36, 1
      %p80 = por %p78, %p79
      %p81 = scmp.ne.s32.totalorder %s70, %s71
      %p82 = scmp.eq.s32.totalorder %s36, 0
      %p83 = por %p81, %p82
      %p84 = scmp.ne.s32.totalorder %s70, %s71
      %p85 = scmp.eq.s32.totalorder %s37, 1
      %p86 = por %p84, %p85
      %p88 = scmp.ne.s32.totalorder %s71, %s87
      %p89 = scmp.eq.s32.totalorder %s37, 0
      %p90 = por %p88, %p89
      %s92 = sadd.s32 %s91, 1
      %p95 = scmp.eq.s32.totalorder %s31, 1
      %p96 = scmp.ne.s32.totalorder %s91, %s93
      %p97 = scmp.eq.s32.totalorder %s31, 0
      %p98 = por %p96, %p97
      %p99 = scmp.ne.s32.totalorder %s91, %s93
      %p100 = scmp.eq.s32.totalorder %s36, 1
      %p101 = por %p99, %p100
      %p102 = scmp.ne.s32.totalorder %s93, %s94
      %p103 = scmp.eq.s32.totalorder %s36, 0
      %p104 = por %p102, %p103
      %p105 = scmp.ne.s32.totalorder %s93, %s94
      %p106 = scmp.eq.s32.totalorder %s37, 1
      %p107 = por %p105, %p106
      %p109 = scmp.ne.s32.totalorder %s94, %s108
      %p110 = scmp.eq.s32.totalorder %s37, 0
      %p111 = por %p109, %p110
      %s113 = sadd.s32 %s112, 1
      %p116 = scmp.eq.s32.totalorder %s31, 1
      %p117 = scmp.ne.s32.totalorder %s112, %s114
      %p118 = scmp.eq.s32.totalorder %s31, 0
      %p119 = por %p117, %p118
      %p120 = scmp.ne.s32.totalorder %s112, %s114
      %p121 = scmp.eq.s32.totalorder %s36, 1
      %p122 = por %p120, %p121
      %p123 = scmp.ne.s32.totalorder %s114, %s115
      %p124 = scmp.eq.s32.totalorder %s36, 0
      %p125 = por %p123, %p124
      %p126 = scmp.ne.s32.totalorder %s114, %s115
      %p127 = scmp.eq.s32.totalorder %s37, 1
      %p128 = por %p126, %p127
      %p130 = scmp.ne.s32.totalorder %s115, %s129
      %p131 = scmp.eq.s32.totalorder %s37, 0
      %p132 = por %p130, %p131
      %s134 = sadd.s32 %s133, 1
      %p137 = scmp.eq.s32.totalorder %s31, 1
      %p138 = scmp.ne.s32.totalorder %s133, %s135
      %p139 = scmp.eq.s32.totalorder %s31, 0
      %p140 = por %p138, %p139
      %p141 = scmp.ne.s32.totalorder %s133, %s135
      %p142 = scmp.eq.s32.totalorder %s36, 1
      %p143 = por %p141, %p142
      %p144 = scmp.ne.s32.totalorder %s135, %s136
      %p145 = scmp.eq.s32.totalorder %s36, 0
      %p146 = por %p144, %p145
      %p147 = scmp.ne.s32.totalorder %s135, %s136
      %p148 = scmp.eq.s32.totalorder %s37, 1
      %p149 = por %p147, %p148
      %p151 = scmp.ne.s32.totalorder %s136, %s150
      %p152 = scmp.eq.s32.totalorder %s37, 0
      %p153 = por %p151, %p152
      %s155 = sadd.s32 %s154, 1
      %p158 = scmp.eq.s32.totalorder %s31, 1
      %p159 = scmp.ne.s32.totalorder %s154, %s156
      %p160 = scmp.eq.s32.totalorder %s31, 0
      %p161 = por %p159, %p160
      %p162 = scmp.ne.s32.totalorder %s154, %s156
      %p163 = scmp.eq.s32.totalorder %s36, 1
      %p164 = por %p162, %p163
      %p165 = scmp.ne.s32.totalorder %s156, %s157
      %p166 = scmp.eq.s32.totalorder %s36, 0
      %p167 = por %p165, %p166
      %p168 = scmp.ne.s32.totalorder %s156, %s157
      %p169 = scmp.eq.s32.totalorder %s37, 1
      %p170 = por %p168, %p169
      %p172 = scmp.ne.s32.totalorder %s157, %s171
      %p173 = scmp.eq.s32.totalorder %s37, 0
      %p174 = por %p172, %p173
      %s176 = sadd.s32 %s175, 1
      %p179 = scmp.eq.s32.totalorder %s31, 1
      %p180 = scmp.ne.s32.totalorder %s175, %s177
      %p181 = scmp.eq.s32.totalorder %s31, 0
      %p182 = por %p180, %p181
      %p183 = scmp.ne.s32.totalorder %s175, %s177
      %p184 = scmp.eq.s32.totalorder %s36, 1
      %p185 = por %p183, %p184
      %p186 = scmp.ne.s32.totalorder %s177, %s178
      %p187 = scmp.eq.s32.totalorder %s36, 0
      %p188 = por %p186, %p187
      %p189 = scmp.ne.s32.totalorder %s177, %s178
      %p190 = scmp.eq.s32.totalorder %s37, 1
      %p191 = por %p189, %p190
      %p193 = scmp.ne.s32.totalorder %s178, %s192
      %p194 = scmp.eq.s32.totalorder %s37, 0
      %p195 = por %p193, %p194
      %s197 = sadd.s32 %s196, 1
      %p200 = scmp.eq.s32.totalorder %s31, 1
      %p201 = scmp.ne.s32.totalorder %s196, %s198
      %p202 = scmp.eq.s32.totalorder %s31, 0
      %p203 = por %p201, %p202
      %p204 = scmp.ne.s32.totalorder %s196, %s198
      %p205 = scmp.eq.s32.totalorder %s36, 1
      %p206 = por %p204, %p205
      %p207 = scmp.ne.s32.totalorder %s198, %s199
      %p208 = scmp.eq.s32.totalorder %s36, 0
      %p209 = por %p207, %p208
      %p210 = scmp.ne.s32.totalorder %s198, %s199
      %p211 = scmp.eq.s32.totalorder %s37, 1
      %p212 = por %p210, %p211
      %p214 = scmp.ne.s32.totalorder %s199, %s213
      %p215 = scmp.eq.s32.totalorder %s37, 0
      %p216 = por %p214, %p215
      %s218 = sadd.s32 %s217, 1
      %p221 = scmp.eq.s32.totalorder %s31, 1
      %p222 = scmp.ne.s32.totalorder %s217, %s219
      %p223 = scmp.eq.s32.totalorder %s31, 0
      %p224 = por %p222, %p223
      %p225 = scmp.ne.s32.totalorder %s217, %s219
      %p226 = scmp.eq.s32.totalorder %s36, 1
      %p227 = por %p225, %p226
      %p228 = scmp.ne.s32.totalorder %s219, %s220
      %p229 = scmp.eq.s32.totalorder %s36, 0
      %p230 = por %p228, %p229
      %p231 = scmp.ne.s32.totalorder %s219, %s220
      %p232 = scmp.eq.s32.totalorder %s37, 1
      %p233 = por %p231, %p232
      %p235 = scmp.ne.s32.totalorder %s220, %s234
      %p236 = scmp.eq.s32.totalorder %s37, 0
      %p237 = por %p235, %p236
      %s239 = sadd.s32 %s238, 1
      %p242 = scmp.eq.s32.totalorder %s31, 1
      %p243 = scmp.ne.s32.totalorder %s238, %s240
      %p244 = scmp.eq.s32.totalorder %s31, 0
      %p245 = por %p243, %p244
      %p246 = scmp.ne.s32.totalorder %s238, %s240
      %p247 = scmp.eq.s32.totalorder %s36, 1
      %p248 = por %p246, %p247
      %p249 = scmp.ne.s32.totalorder %s240, %s241
      %p250 = scmp.eq.s32.totalorder %s36, 0
      %p251 = por %p249, %p250
      %p252 = scmp.ne.s32.totalorder %s240, %s241
      %p253 = scmp.eq.s32.totalorder %s37, 1
      %p254 = por %p252, %p253
      %p256 = scmp.ne.s32.totalorder %s241, %s255
      %p257 = scmp.eq.s32.totalorder %s37, 0
      %p258 = por %p256, %p257
      %s260 = sadd.s32 %s259, 1
      %p263 = scmp.eq.s32.totalorder %s31, 1
      %p264 = scmp.ne.s32.totalorder %s259, %s261
      %p265 = scmp.eq.s32.totalorder %s31, 0
      %p266 = por %p264, %p265
      %p267 = scmp.ne.s32.totalorder %s259, %s261
      %p268 = scmp.eq.s32.totalorder %s36, 1
      %p269 = por %p267, %p268
      %p270 = scmp.ne.s32.totalorder %s261, %s262
      %p271 = scmp.eq.s32.totalorder %s36, 0
      %p272 = por %p270, %p271
      %p273 = scmp.ne.s32.totalorder %s261, %s262
      %p274 = scmp.eq.s32.totalorder %s37, 1
      %p275 = por %p273, %p274
      %p277 = scmp.ne.s32.totalorder %s262, %s276
      %p278 = scmp.eq.s32.totalorder %s37, 0
      %p279 = por %p277, %p278
      %s281 = sadd.s32 %s280, 1
      %p284 = scmp.eq.s32.totalorder %s31, 1
      %p285 = scmp.ne.s32.totalorder %s280, %s282
      %p286 = scmp.eq.s32.totalorder %s31, 0
      %p287 = por %p285, %p286
      %p288 = scmp.ne.s32.totalorder %s280, %s282
      %p289 = scmp.eq.s32.totalorder %s36, 1
      %p290 = por %p288, %p289
      %p291 = scmp.ne.s32.totalorder %s282, %s283
      %p292 = scmp.eq.s32.totalorder %s36, 0
      %p293 = por %p291, %p292
      %p294 = scmp.ne.s32.totalorder %s282, %s283
      %p295 = scmp.eq.s32.totalorder %s37, 1
      %p296 = por %p294, %p295
      %p298 = scmp.ne.s32.totalorder %s283, %s297
      %p299 = scmp.eq.s32.totalorder %s37, 0
      %p300 = por %p298, %p299
      %s302 = sadd.s32 %s301, 1
      %p305 = scmp.eq.s32.totalorder %s31, 1
      %p306 = scmp.ne.s32.totalorder %s301, %s303
      %p307 = scmp.eq.s32.totalorder %s31, 0
      %p308 = por %p306, %p307
      %p309 = scmp.ne.s32.totalorder %s301, %s303
      %p310 = scmp.eq.s32.totalorder %s36, 1
      %p311 = por %p309, %p310
      %p312 = scmp.ne.s32.totalorder %s303, %s304
      %p313 = scmp.eq.s32.totalorder %s36, 0
      %p314 = por %p312, %p313
      %p315 = scmp.ne.s32.totalorder %s303, %s304
      %p316 = scmp.eq.s32.totalorder %s37, 1
      %p317 = por %p315, %p316
      %p319 = scmp.ne.s32.totalorder %s304, %s318
      %p320 = scmp.eq.s32.totalorder %s37, 0
      %p321 = por %p319, %p320
      %s323 = sadd.s32 %s322, 1
      %p326 = scmp.eq.s32.totalorder %s31, 1
      %p327 = scmp.ne.s32.totalorder %s322, %s324
      %p328 = scmp.eq.s32.totalorder %s31, 0
      %p329 = por %p327, %p328
      %p330 = scmp.ne.s32.totalorder %s322, %s324
      %p331 = scmp.eq.s32.totalorder %s36, 1
      %p332 = por %p330, %p331
      %p333 = scmp.ne.s32.totalorder %s324, %s325
      %p334 = scmp.eq.s32.totalorder %s36, 0
      %p335 = por %p333, %p334
      %p336 = scmp.ne.s32.totalorder %s324, %s325
      %p337 = scmp.eq.s32.totalorder %s37, 1
      %p338 = por %p336, %p337
      %p340 = scmp.ne.s32.totalorder %s325, %s339
      %p341 = scmp.eq.s32.totalorder %s37, 0
      %p342 = por %p340, %p341
      %s344 = sadd.s32 %s343, 1
      %p347 = scmp.eq.s32.totalorder %s31, 1
      %p348 = scmp.ne.s32.totalorder %s343, %s345
      %p349 = scmp.eq.s32.totalorder %s31, 0
      %p350 = por %p348, %p349
      %p351 = scmp.ne.s32.totalorder %s343, %s345
      %p352 = scmp.eq.s32.totalorder %s36, 1
      %p353 = por %p351, %p352
      %p354 = scmp.ne.s32.totalorder %s345, %s346
      %p355 = scmp.eq.s32.totalorder %s36, 0
      %p356 = por %p354, %p355
      %p357 = scmp.ne.s32.totalorder %s345, %s346
      %p358 = scmp.eq.s32.totalorder %s37, 1
      %p359 = por %p357, %p358
      %p361 = scmp.ne.s32.totalorder %s346, %s360
      %p362 = scmp.eq.s32.totalorder %s37, 0
      %p363 = por %p361, %p362
      %s365 = sadd.s32 %s364, 1
      %p368 = scmp.eq.s32.totalorder %s31, 1
      %p369 = scmp.ne.s32.totalorder %s364, %s366
      %p370 = scmp.eq.s32.totalorder %s31, 0
      %p371 = por %p369, %p370
      %p372 = scmp.ne.s32.totalorder %s364, %s366
      %p373 = scmp.eq.s32.totalorder %s36, 1
      %p374 = por %p372, %p373
      %p375 = scmp.ne.s32.totalorder %s366, %s367
      %p376 = scmp.eq.s32.totalorder %s36, 0
      %p377 = por %p375, %p376
      %p378 = scmp.ne.s32.totalorder %s366, %s367
      %p379 = scmp.eq.s32.totalorder %s37, 1
      %p380 = por %p378, %p379
      %p382 = scmp.ne.s32.totalorder %s367, %s381
      %p383 = scmp.eq.s32.totalorder %s37, 0
      %p384 = por %p382, %p383
      %s386 = sadd.s32 %s385, 1
      %p389 = scmp.eq.s32.totalorder %s31, 1
      %p390 = scmp.ne.s32.totalorder %s385, %s387
      %p391 = scmp.eq.s32.totalorder %s31, 0
      %p392 = por %p390, %p391
      %p393 = scmp.ne.s32.totalorder %s385, %s387
      %p394 = scmp.eq.s32.totalorder %s36, 1
      %p395 = por %p393, %p394
      %p396 = scmp.ne.s32.totalorder %s387, %s388
      %p397 = scmp.eq.s32.totalorder %s36, 0
      %p398 = por %p396, %p397
      %p399 = scmp.ne.s32.totalorder %s387, %s388
      %p400 = scmp.eq.s32.totalorder %s37, 1
      %p401 = por %p399, %p400
      %p403 = scmp.ne.s32.totalorder %s388, %s402
      %p404 = scmp.eq.s32.totalorder %s37, 0
      %p405 = por %p403, %p404
      %s407 = sadd.s32 %s406, 1
      %p410 = scmp.eq.s32.totalorder %s31, 1
      %p411 = scmp.ne.s32.totalorder %s406, %s408
      %p412 = scmp.eq.s32.totalorder %s31, 0
      %p413 = por %p411, %p412
      %p414 = scmp.ne.s32.totalorder %s406, %s408
      %p415 = scmp.eq.s32.totalorder %s36, 1
      %p416 = por %p414, %p415
      %p417 = scmp.ne.s32.totalorder %s408, %s409
      %p418 = scmp.eq.s32.totalorder %s36, 0
      %p419 = por %p417, %p418
      %p420 = scmp.ne.s32.totalorder %s408, %s409
      %p421 = scmp.eq.s32.totalorder %s37, 1
      %p422 = por %p420, %p421
      %p424 = scmp.ne.s32.totalorder %s409, %s423
      %p425 = scmp.eq.s32.totalorder %s37, 0
      %p426 = por %p424, %p425
      %s428 = sadd.s32 %s427, 1
      %p431 = scmp.eq.s32.totalorder %s31, 1
      %p432 = scmp.ne.s32.totalorder %s427, %s429
      %p433 = scmp.eq.s32.totalorder %s31, 0
      %p434 = por %p432, %p433
      %p435 = scmp.ne.s32.totalorder %s427, %s429
      %p436 = scmp.eq.s32.totalorder %s36, 1
      %p437 = por %p435, %p436
      %p438 = scmp.ne.s32.totalorder %s429, %s430
      %p439 = scmp.eq.s32.totalorder %s36, 0
      %p440 = por %p438, %p439
      %p441 = scmp.ne.s32.totalorder %s429, %s430
      %p442 = scmp.eq.s32.totalorder %s37, 1
      %p443 = por %p441, %p442
      %p445 = scmp.ne.s32.totalorder %s430, %s444
      %p446 = scmp.eq.s32.totalorder %s37, 0
      %p447 = por %p445, %p446
      %s449 = sadd.s32 %s448, 1
      %p452 = scmp.eq.s32.totalorder %s31, 1
      %p453 = scmp.ne.s32.totalorder %s448, %s450
      %p454 = scmp.eq.s32.totalorder %s31, 0
      %p455 = por %p453, %p454
      %p456 = scmp.ne.s32.totalorder %s448, %s450
      %p457 = scmp.eq.s32.totalorder %s36, 1
      %p458 = por %p456, %p457
      %p459 = scmp.ne.s32.totalorder %s450, %s451
      %p460 = scmp.eq.s32.totalorder %s36, 0
      %p461 = por %p459, %p460
      %p462 = scmp.ne.s32.totalorder %s450, %s451
      %p463 = scmp.eq.s32.totalorder %s37, 1
      %p464 = por %p462, %p463
      %p466 = scmp.ne.s32.totalorder %s451, %s465
      %p467 = scmp.eq.s32.totalorder %s37, 0
      %p468 = por %p466, %p467
      %s470 = sadd.s32 %s469, 1
      %p473 = scmp.eq.s32.totalorder %s31, 1
      %p474 = scmp.ne.s32.totalorder %s469, %s471
      %p475 = scmp.eq.s32.totalorder %s31, 0
      %p476 = por %p474, %p475
      %p477 = scmp.ne.s32.totalorder %s469, %s471
      %p478 = scmp.eq.s32.totalorder %s36, 1
      %p479 = por %p477, %p478
      %p480 = scmp.ne.s32.totalorder %s471, %s472
      %p481 = scmp.eq.s32.totalorder %s36, 0
      %p482 = por %p480, %p481
      %p483 = scmp.ne.s32.totalorder %s471, %s472
      %p484 = scmp.eq.s32.totalorder %s37, 1
      %p485 = por %p483, %p484
      %p487 = scmp.ne.s32.totalorder %s472, %s486
      %p488 = scmp.eq.s32.totalorder %s37, 0
      %p489 = por %p487, %p488
      %s491 = sadd.s32 %s490, 1
      %p494 = scmp.eq.s32.totalorder %s31, 1
      %p495 = scmp.ne.s32.totalorder %s490, %s492
      %p496 = scmp.eq.s32.totalorder %s31, 0
      %p497 = por %p495, %p496
      %p498 = scmp.ne.s32.totalorder %s490, %s492
      %p499 = scmp.eq.s32.totalorder %s36, 1
      %p500 = por %p498, %p499
      %p501 = scmp.ne.s32.totalorder %s492, %s493
      %p502 = scmp.eq.s32.totalorder %s36, 0
      %p503 = por %p501, %p502
      %p504 = scmp.ne.s32.totalorder %s492, %s493
      %p505 = scmp.eq.s32.totalorder %s37, 1
      %p506 = por %p504, %p505
      %p508 = scmp.ne.s32.totalorder %s493, %s507
      %p509 = scmp.eq.s32.totalorder %s37, 0
      %p510 = por %p508, %p509
      %s511 = ssub.s32 %s31, %s38
      %p512 = scmp.eq.s32.totalorder %s511, 0
      %s514 = sadd.s32 %s513, 1
      %s515 = scalar_select %p512, %s513, %s514
      %p518 = pneg %p512
      %p519 = scmp.eq.s32.totalorder %s31, 1
      %p520 = por %p518, %p519
      %p521 = scmp.ne.s32.totalorder %s513, %s516
      %p522 = scmp.eq.s32.totalorder %s31, 0
      %p523 = por %p521, %p522
      %p524 = scmp.ne.s32.totalorder %s513, %s516
      %p525 = scmp.eq.s32.totalorder %s36, 1
      %p526 = por %p524, %p525
      %p527 = scmp.ne.s32.totalorder %s516, %s517
      %p528 = scmp.eq.s32.totalorder %s36, 0
      %p529 = por %p527, %p528
      %p530 = scmp.ne.s32.totalorder %s516, %s517
      %p531 = scmp.eq.s32.totalorder %s37, 1
      %p532 = por %p530, %p531
      %p534 = scmp.ne.s32.totalorder %s517, %s533
      %p535 = scmp.eq.s32.totalorder %s37, 0
      %p536 = por %p534, %p535
      %p537 = scmp.le.s32.totalorder 1, %s31
      %p538 = scmp.lt.s32.totalorder %s31, 3
      %p539 = pnand %p537, %p538
      %p540 = pneg %p539
      // Predicated region
      $region9: #{tpu_custom_call.1} parent=5 // pred_check
        _
      $region10: #{tpu_custom_call.1} parent=5 // pred_check_branch
        %542 = sbr.rel (%p539) target = $region12
      $region11: #{tpu_custom_call.1} parent=5 // pred_region
        %s543 = ssub.s32 %s31, 1
        // Predicated region
        $region13: #{tpu_custom_call.1} parent=11 // pred_check
          %p544 = pneg %p104
        $region14: #{tpu_custom_call.1} parent=11 // pred_check_branch
          %546 = sbr.rel (%p544) target = $region16
        $region15: #{tpu_custom_call.1} parent=11 // pred_region
          _
        $region16: #{tpu_custom_call.1} parent=11 // pred_fallthru
          _
        // Predicated region
        $region17: #{tpu_custom_call.1} parent=11 // pred_check
          %p547 = pneg %p125
        $region18: #{tpu_custom_call.1} parent=11 // pred_check_branch
          %549 = sbr.rel (%p547) target = $region20
        $region19: #{tpu_custom_call.1} parent=11 // pred_region
          _
        $region20: #{tpu_custom_call.1} parent=11 // pred_fallthru
          _
        // Predicated region
        $region21: #{tpu_custom_call.1} parent=11 // pred_check
          %p550 = pneg %p146
        $region22: #{tpu_custom_call.1} parent=11 // pred_check_branch
          %552 = sbr.rel (%p550) target = $region24
        $region23: #{tpu_custom_call.1} parent=11 // pred_region
          _
        $region24: #{tpu_custom_call.1} parent=11 // pred_fallthru
          _
        // Predicated region
        $region25: #{tpu_custom_call.1} parent=11 // pred_check
          %p553 = pneg %p167
        $region26: #{tpu_custom_call.1} parent=11 // pred_check_branch
          %555 = sbr.rel (%p553) target = $region28
        $region27: #{tpu_custom_call.1} parent=11 // pred_region
          _
        $region28: #{tpu_custom_call.1} parent=11 // pred_fallthru
          _
        // Predicated region
        $region29: #{tpu_custom_call.1} parent=11 // pred_check
          %p556 = pneg %p188
        $region30: #{tpu_custom_call.1} parent=11 // pred_check_branch
          %558 = sbr.rel (%p556) target = $region32
        $region31: #{tpu_custom_call.1} parent=11 // pred_region
          _
        $region32: #{tpu_custom_call.1} parent=11 // pred_fallthru
          _
        // Predicated region
        $region33: #{tpu_custom_call.1} parent=11 // pred_check
          %p559 = pneg %p209
        $region34: #{tpu_custom_call.1} parent=11 // pred_check_branch
          %561 = sbr.rel (%p559) target = $region36
        $region35: #{tpu_custom_call.1} parent=11 // pred_region
          _
        $region36: #{tpu_custom_call.1} parent=11 // pred_fallthru
          _
        // Predicated region
        $region37: #{tpu_custom_call.1} parent=11 // pred_check
          %p562 = pneg %p230
        $region38: #{tpu_custom_call.1} parent=11 // pred_check_branch
          %564 = sbr.rel (%p562) target = $region40
        $region39: #{tpu_custom_call.1} parent=11 // pred_region
          _
        $region40: #{tpu_custom_call.1} parent=11 // pred_fallthru
          _
        // Predicated region
        $region41: #{tpu_custom_call.1} parent=11 // pred_check
          %p565 = pneg %p251
        $region42: #{tpu_custom_call.1} parent=11 // pred_check_branch
          %567 = sbr.rel (%p565) target = $region44
        $region43: #{tpu_custom_call.1} parent=11 // pred_region
          _
        $region44: #{tpu_custom_call.1} parent=11 // pred_fallthru
          _
        // Predicated region
        $region45: #{tpu_custom_call.1} parent=11 // pred_check
          %p568 = pneg %p272
        $region46: #{tpu_custom_call.1} parent=11 // pred_check_branch
          %570 = sbr.rel (%p568) target = $region48
        $region47: #{tpu_custom_call.1} parent=11 // pred_region
          _
        $region48: #{tpu_custom_call.1} parent=11 // pred_fallthru
          _
        // Predicated region
        $region49: #{tpu_custom_call.1} parent=11 // pred_check
          %p571 = pneg %p293
        $region50: #{tpu_custom_call.1} parent=11 // pred_check_branch
          %573 = sbr.rel (%p571) target = $region52
        $region51: #{tpu_custom_call.1} parent=11 // pred_region
          _
        $region52: #{tpu_custom_call.1} parent=11 // pred_fallthru
          _
        // Predicated region
        $region53: #{tpu_custom_call.1} parent=11 // pred_check
          %p574 = pneg %p314
        $region54: #{tpu_custom_call.1} parent=11 // pred_check_branch
          %576 = sbr.rel (%p574) target = $region56
        $region55: #{tpu_custom_call.1} parent=11 // pred_region
          _
        $region56: #{tpu_custom_call.1} parent=11 // pred_fallthru
          _
        // Predicated region
        $region57: #{tpu_custom_call.1} parent=11 // pred_check
          %p577 = pneg %p335
        $region58: #{tpu_custom_call.1} parent=11 // pred_check_branch
          %579 = sbr.rel (%p577) target = $region60
        $region59: #{tpu_custom_call.1} parent=11 // pred_region
          _
        $region60: #{tpu_custom_call.1} parent=11 // pred_fallthru
          _
        // Predicated region
        $region61: #{tpu_custom_call.1} parent=11 // pred_check
          %p580 = pneg %p356
        $region62: #{tpu_custom_call.1} parent=11 // pred_check_branch
          %582 = sbr.rel (%p580) target = $region64
        $region63: #{tpu_custom_call.1} parent=11 // pred_region
          _
        $region64: #{tpu_custom_call.1} parent=11 // pred_fallthru
          _
        // Predicated region
        $region65: #{tpu_custom_call.1} parent=11 // pred_check
          %p583 = pneg %p377
        $region66: #{tpu_custom_call.1} parent=11 // pred_check_branch
          %585 = sbr.rel (%p583) target = $region68
        $region67: #{tpu_custom_call.1} parent=11 // pred_region
          _
        $region68: #{tpu_custom_call.1} parent=11 // pred_fallthru
          _
        // Predicated region
        $region69: #{tpu_custom_call.1} parent=11 // pred_check
          %p586 = pneg %p398
        $region70: #{tpu_custom_call.1} parent=11 // pred_check_branch
          %588 = sbr.rel (%p586) target = $region72
        $region71: #{tpu_custom_call.1} parent=11 // pred_region
          _
        $region72: #{tpu_custom_call.1} parent=11 // pred_fallthru
          _
        // Predicated region
        $region73: #{tpu_custom_call.1} parent=11 // pred_check
          %p589 = pneg %p419
        $region74: #{tpu_custom_call.1} parent=11 // pred_check_branch
          %591 = sbr.rel (%p589) target = $region76
        $region75: #{tpu_custom_call.1} parent=11 // pred_region
          _
        $region76: #{tpu_custom_call.1} parent=11 // pred_fallthru
          _
        // Predicated region
        $region77: #{tpu_custom_call.1} parent=11 // pred_check
          %p592 = pneg %p440
        $region78: #{tpu_custom_call.1} parent=11 // pred_check_branch
          %594 = sbr.rel (%p592) target = $region80
        $region79: #{tpu_custom_call.1} parent=11 // pred_region
          _
        $region80: #{tpu_custom_call.1} parent=11 // pred_fallthru
          _
        // Predicated region
        $region81: #{tpu_custom_call.1} parent=11 // pred_check
          %p595 = pneg %p461
        $region82: #{tpu_custom_call.1} parent=11 // pred_check_branch
          %597 = sbr.rel (%p595) target = $region84
        $region83: #{tpu_custom_call.1} parent=11 // pred_region
          _
        $region84: #{tpu_custom_call.1} parent=11 // pred_fallthru
          _
        // Predicated region
        $region85: #{tpu_custom_call.1} parent=11 // pred_check
          %p598 = pneg %p482
        $region86: #{tpu_custom_call.1} parent=11 // pred_check_branch
          %600 = sbr.rel (%p598) target = $region88
        $region87: #{tpu_custom_call.1} parent=11 // pred_region
          _
        $region88: #{tpu_custom_call.1} parent=11 // pred_fallthru
          _
        // Predicated region
        $region89: #{tpu_custom_call.1} parent=11 // pred_check
          %p601 = pneg %p503
        $region90: #{tpu_custom_call.1} parent=11 // pred_check_branch
          %603 = sbr.rel (%p601) target = $region92
        $region91: #{tpu_custom_call.1} parent=11 // pred_region
          _
        $region92: #{tpu_custom_call.1} parent=11 // pred_fallthru
          _
      $region12: #{tpu_custom_call.1} parent=5 // pred_fallthru
        _
      %p604 = scmp.lt.s32.totalorder %s31, 2
      // Predicated region
      $region93: #{tpu_custom_call.1} parent=5 // pred_check
        %p605 = pneg %p604
      $region94: #{tpu_custom_call.1} parent=5 // pred_check_branch
        %607 = sbr.rel (%p605) target = $region96
      $region95: #{tpu_custom_call.1} parent=5 // pred_region
        // Predicated region
        $region97: #{tpu_custom_call.1} parent=95 // pred_check
          %p608 = pneg %p51
        $region98: #{tpu_custom_call.1} parent=95 // pred_check_branch
          %610 = sbr.rel (%p608) target = $region100
        $region99: #{tpu_custom_call.1} parent=95 // pred_region
          %p611 = scmp.lt.s32.totalorder %s31, 1
          %s612 = scalar_select %p611, %s31, 1
          %s613 = smul.addr %s612, 8
          %s614 = scalar_lea.vmem %s0, %s613
        $region100: #{tpu_custom_call.1} parent=95 // pred_fallthru
          _
        // Predicated region
        $region101: #{tpu_custom_call.1} parent=95 // pred_check
          %p615 = pneg %p77
        $region102: #{tpu_custom_call.1} parent=95 // pred_check_branch
          %617 = sbr.rel (%p615) target = $region104
        $region103: #{tpu_custom_call.1} parent=95 // pred_region
          %p618 = scmp.lt.s32.totalorder %s31, 1
          %s619 = scalar_select %p618, %s31, 1
          %s620 = smul.addr %s619, 8
          %s621 = scalar_lea.vmem %s1, %s620
        $region104: #{tpu_custom_call.1} parent=95 // pred_fallthru
          _
      $region96: #{tpu_custom_call.1} parent=5 // pred_fallthru
        _
      %p622 = scmp.le.s32.totalorder 1, %s31
      %p623 = scmp.lt.s32.totalorder %s31, 3
      %p624 = pnand %p622, %p623
      %p625 = pneg %p624
      // Predicated region
      $region105: #{tpu_custom_call.1} parent=5 // pred_check
        _
      $region106: #{tpu_custom_call.1} parent=5 // pred_check_branch
        %627 = sbr.rel (%p624) target = $region108
      $region107: #{tpu_custom_call.1} parent=5 // pred_region
        %s628 = ssub.s32 %s31, 1
        %p629 = scmp.lt.s32.totalorder %s36, 1
        %s630 = scalar_select %p629, %s36, 1
        %s631 = smul.addr %s630, 8
        %s632 = scalar_lea.vmem %s0, %s631
        %p633 = pneg %p57
        %p634 = pneg %p54
        %p635 = scmp.lt.s32.totalorder %s36, 1
        %s636 = scalar_select %p635, %s36, 1
        %s637 = smul.addr %s636, 8
        %s638 = scalar_lea.vmem %s1, %s637
        %p639 = pneg %p83
        %p640 = pneg %p80
        %p641 = pneg %p104
        %p642 = pneg %p101
        %p643 = pneg %p125
        %p644 = pneg %p122
        %p645 = pneg %p146
        %p646 = pneg %p143
        %p647 = pneg %p167
        %p648 = pneg %p164
        %p649 = pneg %p188
        %p650 = pneg %p185
        %p651 = pneg %p209
        %p652 = pneg %p206
        %p653 = pneg %p230
        %p654 = pneg %p227
        %p655 = pneg %p251
        %p656 = pneg %p248
        %p657 = pneg %p272
        %p658 = pneg %p269
        %p659 = pneg %p293
        %p660 = pneg %p290
        %p661 = pneg %p314
        %p662 = pneg %p311
        %p663 = pneg %p335
        %p664 = pneg %p332
        %p665 = pneg %p356
        %p666 = pneg %p353
        %p667 = pneg %p377
        %p668 = pneg %p374
        %p669 = pneg %p398
        %p670 = pneg %p395
        %p671 = pneg %p419
        %p672 = pneg %p416
        %p673 = pneg %p440
        %p674 = pneg %p437
        %p675 = pneg %p461
        %p676 = pneg %p458
        %p677 = pneg %p482
        %p678 = pneg %p479
        %p679 = pneg %p503
        %p680 = pneg %p500
        %p681 = pneg %p529
        %p682 = pneg %p526
        %s683 = sand.u32 %s516, 1
        %s684 = scalar_lea.sflag [#allocation3], %s683
        %s685 = sand.u32 %s516, 1
        %s686 = smul.addr %s685, 8
        %s687 = scalar_lea.vmem [#allocation2], %s686
        %p688 = scmp.lt.s32.totalorder %s36, 1
        %s689 = scalar_select %p688, %s36, 1
        %s690 = smul.addr %s689, 8
        %s691 = scalar_lea.vmem %s0, %s690
        %p692 = scmp.lt.s32.totalorder %s36, 1
        %s693 = scalar_select %p692, %s36, 1
        %s694 = smul.addr %s693, 8
        %s695 = scalar_lea.vmem %s1, %s694
        %v696 = vld [vmem:[%s691] sm:$0xff]
        %697 = vxpose.xlu0.b32.start [1/16] %v696, 128
        %698 = vxpose.xlu0.b32.cont [2/16] 0.0, 128
        %699 = vxpose.xlu0.b32.cont [3/16] 0.0, 128
        %700 = vxpose.xlu0.b32.cont [4/16] 0.0, 128
        %701 = vxpose.xlu0.b32.cont [5/16] 0.0, 128
        %702 = vxpose.xlu0.b32.cont [6/16] 0.0, 128
        %703 = vxpose.xlu0.b32.cont [7/16] 0.0, 128
        %704 = vxpose.xlu0.b32.cont [8/16] 0.0, 128
        %705 = vxpose.xlu0.b32.cont [9/16] 0.0, 128
        %706 = vxpose.xlu0.b32.cont [10/16] 0.0, 128
        %707 = vxpose.xlu0.b32.cont [11/16] 0.0, 128
        %708 = vxpose.xlu0.b32.cont [12/16] 0.0, 128
        %709 = vxpose.xlu0.b32.cont [13/16] 0.0, 128
        %710 = vxpose.xlu0.b32.cont [14/16] 0.0, 128
        %711 = vxpose.xlu0.b32.cont [15/16] 0.0, 128
        %712 = vxpose.xlu0.b32.end [16/16] 0.0, 128
        %v713 = vpop.trf.xlu0
        %v714 = vpop.trf.xlu0
        %v715 = vpop.trf.xlu0
        %v716 = vpop.trf.xlu0
        %v717 = vpop.trf.xlu0
        %v718 = vpop.trf.xlu0
        %v719 = vpop.trf.xlu0
        %v720 = vpop.trf.xlu0
        %v721 = vpop.trf.xlu0
        %v722 = vpop.trf.xlu0
        %v723 = vpop.trf.xlu0
        %v724 = vpop.trf.xlu0
        %v725 = vpop.trf.xlu0
        %v726 = vpop.trf.xlu0
        %v727 = vpop.trf.xlu0
        %v728 = vpop.trf.xlu0
        %v729 = vld [vmem:[%s695] sm:$0xff]
        %v730 = vld [vmem:[%s2] sm:$0xff]
        %v731 = vld [vmem:[%s2 + $0x8] sm:$0xff]
        %v732 = vld [vmem:[%s2 + $0x10] sm:$0xff]
        %v733 = vld [vmem:[%s2 + $0x18] sm:$0xff]
        %v734 = vld [vmem:[%s3] sm:$0xff]
        %v735 = vld [vmem:[%s3 + $0x8] sm:$0xff]
        %v736 = vld [vmem:[%s3 + $0x10] sm:$0xff]
        %v737 = vld [vmem:[%s3 + $0x18] sm:$0xff]
        %vm738 = vcmask 64512
        %v739 = vsel %vm738, %v713, 0.0
        %v740 = vsel %vm738, %v714, 0.0
        %v741 = vadd.f32 %v739, %v740
        %v742 = vsel %vm738, %v715, 0.0
        %v743 = vadd.f32 %v741, %v742
        %v744 = vsel %vm738, %v716, 0.0
        %v745 = vadd.f32 %v743, %v744
        %v746 = vrot.slane %v745, 4
        %v747 = vadd.f32 %v745, %v746
        %v748 = vrot.slane %v747, 2
        %v749 = vadd.f32 %v747, %v748
        %v750 = vrot.slane %v749, 1
        %v751 = vadd.f32 %v749, %v750
        %v752 = vrcp.pop 32.0
        %v753 = vmul.f32 %v751, %v752
        %v754 = vsub.f32 %v713, %v753
        %v755 = vsub.f32 %v714, %v753
        %v756 = vsub.f32 %v715, %v753
        %v757 = vsub.f32 %v716, %v753
        %v758 = vmul.f32 %v754, %v754
        %v759 = vmul.f32 %v755, %v755
        %v760 = vmul.f32 %v756, %v756
        %v761 = vmul.f32 %v757, %v757
        %v762 = vsel %vm738, %v758, 0.0
        %v763 = vsel %vm738, %v759, 0.0
        %v764 = vadd.f32 %v762, %v763
        %v765 = vsel %vm738, %v760, 0.0
        %v766 = vadd.f32 %v764, %v765
        %v767 = vsel %vm738, %v761, 0.0
        %v768 = vadd.f32 %v766, %v767
        %v769 = vrot.slane %v768, 4
        %v770 = vadd.f32 %v768, %v769
        %v771 = vrot.slane %v770, 2
        %v772 = vadd.f32 %v770, %v771
        %v773 = vrot.slane %v772, 1
        %v774 = vadd.f32 %v772, %v773
        %v775 = vmul.f32 %v774, %v752
        %v776 = vadd.f32 %v775, 1e-05
        %v777 = vrsqrt.pop %v776
        %v778 = vmul.f32 %v754, %v777
        %v779 = vmul.f32 %v755, %v777
        %v780 = vmul.f32 %v756, %v777
        %v781 = vmul.f32 %v757, %v777
        %783 = vset.pattern.permute.xlu0 0
        %784 = vperm.xlu0 %783, %v730
        %v785 = vpop.permute.xlu0 %784
        %788 = vset.pattern.permute.xlu0 0
        %789 = vperm.xlu0 %788, %v731
        %v790 = vpop.permute.xlu0 %789
        %793 = vset.pattern.permute.xlu0 0
        %794 = vperm.xlu0 %793, %v732
        %v795 = vpop.permute.xlu0 %794
        %798 = vset.pattern.permute.xlu0 0
        %799 = vperm.xlu0 %798, %v733
        %v800 = vpop.permute.xlu0 %799
        %v802 = vmul.f32 %v778, %v785
        %v803 = vmul.f32 %v779, %v790
        %v804 = vmul.f32 %v780, %v795
        %v805 = vmul.f32 %v781, %v800
        %807 = vset.pattern.permute.xlu0 0
        %808 = vperm.xlu0 %807, %v734
        %v809 = vpop.permute.xlu0 %808
        %812 = vset.pattern.permute.xlu0 0
        %813 = vperm.xlu0 %812, %v735
        %v814 = vpop.permute.xlu0 %813
        %817 = vset.pattern.permute.xlu0 0
        %818 = vperm.xlu0 %817, %v736
        %v819 = vpop.permute.xlu0 %818
        %822 = vset.pattern.permute.xlu0 0
        %823 = vperm.xlu0 %822, %v737
        %v824 = vpop.permute.xlu0 %823
        %v826 = vadd.f32 %v802, %v809
        %v827 = vadd.f32 %v803, %v814
        %v828 = vadd.f32 %v804, %v819
        %v829 = vadd.f32 %v805, %v824
        %v830 = vld [vmem:[%s4] sm:$0xff]
        %v831 = vld [vmem:[%s4 + $0x8] sm:$0xff]
        %v832 = vld [vmem:[%s4 + $0x10] sm:$0xff]
        %v833 = vld [vmem:[%s4 + $0x18] sm:$0xff]
        %v834 = vld [vmem:[%s4 + $0x20] sm:$0xff]
        %v835 = vld [vmem:[%s4 + $0x28] sm:$0xff]
        %v836 = vld [vmem:[%s4 + $0x30] sm:$0xff]
        %v837 = vld [vmem:[%s4 + $0x38] sm:$0xff]
        %v838 = vld [vmem:[%s4 + $0x40] sm:$0xff]
        %v839 = vld [vmem:[%s4 + $0x48] sm:$0xff]
        %v840 = vld [vmem:[%s4 + $0x50] sm:$0xff]
        %v841 = vld [vmem:[%s4 + $0x58] sm:$0xff]
        %v842 = vld [vmem:[%s5] sm:$0xff]
        %v843 = vld [vmem:[%s5 + $0x8] sm:$0xff]
        %v844 = vld [vmem:[%s5 + $0x10] sm:$0xff]
        %v845 = vld [vmem:[%s5 + $0x18] sm:$0xff]
        %v846 = vld [vmem:[%s5 + $0x20] sm:$0xff]
        %v847 = vld [vmem:[%s5 + $0x28] sm:$0xff]
        %v848 = vld [vmem:[%s5 + $0x30] sm:$0xff]
        %v849 = vld [vmem:[%s5 + $0x38] sm:$0xff]
        %v850 = vld [vmem:[%s5 + $0x40] sm:$0xff]
        %v851 = vld [vmem:[%s5 + $0x48] sm:$0xff]
        %v852 = vld [vmem:[%s5 + $0x50] sm:$0xff]
        %v853 = vld [vmem:[%s5 + $0x58] sm:$0xff]
        %855 = vset.pattern.permute.xlu0 0
        %856 = vperm.xlu0 %855, %v842
        %v857 = vpop.permute.xlu0 %856
        %860 = vset.pattern.permute.xlu0 0
        %861 = vperm.xlu0 %860, %v843
        %v862 = vpop.permute.xlu0 %861
        %865 = vset.pattern.permute.xlu0 0
        %866 = vperm.xlu0 %865, %v844
        %v867 = vpop.permute.xlu0 %866
        %870 = vset.pattern.permute.xlu0 0
        %871 = vperm.xlu0 %870, %v845
        %v872 = vpop.permute.xlu0 %871
        %875 = vset.pattern.permute.xlu0 0
        %876 = vperm.xlu0 %875, %v846
        %v877 = vpop.permute.xlu0 %876
        %880 = vset.pattern.permute.xlu0 0
        %881 = vperm.xlu0 %880, %v847
        %v882 = vpop.permute.xlu0 %881
        %885 = vset.pattern.permute.xlu0 0
        %886 = vperm.xlu0 %885, %v848
        %v887 = vpop.permute.xlu0 %886
        %890 = vset.pattern.permute.xlu0 0
        %891 = vperm.xlu0 %890, %v849
        %v892 = vpop.permute.xlu0 %891
        %895 = vset.pattern.permute.xlu0 0
        %896 = vperm.xlu0 %895, %v850
        %v897 = vpop.permute.xlu0 %896
        %900 = vset.pattern.permute.xlu0 0
        %901 = vperm.xlu0 %900, %v851
        %v902 = vpop.permute.xlu0 %901
        %905 = vset.pattern.permute.xlu0 0
        %906 = vperm.xlu0 %905, %v852
        %v907 = vpop.permute.xlu0 %906
        %910 = vset.pattern.permute.xlu0 0
        %911 = vperm.xlu0 %910, %v853
        %v912 = vpop.permute.xlu0 %911
        %vm914 = vcmask 261120
        %v916 = vsel %vm914, %v830, 0
        %v919 = vsel %vm914, %v831, 0
        %v922 = vsel %vm914, %v832, 0
        %v925 = vsel %vm914, %v833, 0
        %v928 = vsel %vm914, %v834, 0
        %v931 = vsel %vm914, %v835, 0
        %v934 = vsel %vm914, %v836, 0
        %v937 = vsel %vm914, %v837, 0
        %v940 = vsel %vm914, %v838, 0
        %v943 = vsel %vm914, %v839, 0
        %v946 = vsel %vm914, %v840, 0
        %v949 = vsel %vm914, %v841, 0
        %951 = vmatprep.subr.mxu0 0.0
        %952 = vmatpush1.msra.mxu0 %v826
        %953 = vmatprep.subr.mxu0 0.0
        %954 = vmatpush1.msra.mxu0 %v827
        %955 = vmatprep.subr.mxu0 0.0
        %956 = vmatpush1.msra.mxu0 %v828
        %957 = vmatprep.subr.mxu0 0.0
        %958 = vmatpush1.msra.mxu0 %v829
        %959 = vmatprep.subr.mxu0 0.0
        %960 = vmatpush1.msra.mxu0 0.0
        %961 = vmatprep.subr.mxu0 0.0
        %962 = vmatpush1.msra.mxu0 0.0
        %963 = vmatprep.subr.mxu0 0.0
        %964 = vmatpush1.msra.mxu0 0.0
        %965 = vmatprep.subr.mxu0 0.0
        %966 = vmatpush1.msra.mxu0 0.0
        %967 = vmatprep.subr.mxu0 0.0
        %968 = vmatpush1.msra.mxu0 0.0
        %969 = vmatprep.subr.mxu0 0.0
        %970 = vmatpush1.msra.mxu0 0.0
        %971 = vmatprep.subr.mxu0 0.0
        %972 = vmatpush1.msra.mxu0 0.0
        %973 = vmatprep.subr.mxu0 0.0
        %974 = vmatpush1.msra.mxu0 0.0
        %975 = vmatprep.subr.mxu0 0.0
        %976 = vmatpush1.msra.mxu0 0.0
        %977 = vmatprep.subr.mxu0 0.0
        %978 = vmatpush1.msra.mxu0 0.0
        %979 = vmatprep.subr.mxu0 0.0
        %980 = vmatpush1.msra.mxu0 0.0
        %981 = vmatprep.subr.mxu0 0.0
        %982 = vmatpush1.msra.mxu0 0.0
        %983 = vmatprep.subr.mxu0 0.0
        %984 = vmatpush1.msra.mxu0 0.0
        %985 = vmatprep.subr.mxu0 0.0
        %986 = vmatpush1.msra.mxu0 0.0
        %987 = vmatprep.subr.mxu0 0.0
        %988 = vmatpush1.msra.mxu0 0.0
        %989 = vmatprep.subr.mxu0 0.0
        %990 = vmatpush1.msra.mxu0 0.0
        %991 = vmatprep.subr.mxu0 0.0
        %992 = vmatpush1.msra.mxu0 0.0
        %993 = vmatprep.subr.mxu0 0.0
        %994 = vmatpush1.msra.mxu0 0.0
        %995 = vmatprep.subr.mxu0 0.0
        %996 = vmatpush1.msra.mxu0 0.0
        %997 = vmatprep.subr.mxu0 0.0
        %998 = vmatpush1.msra.mxu0 0.0
        %999 = vmatprep.subr.mxu0 0.0
        %1000 = vmatpush1.msra.mxu0 0.0
        %1001 = vmatprep.subr.mxu0 0.0
        %1002 = vmatpush1.msra.mxu0 0.0
        %1003 = vmatprep.subr.mxu0 0.0
        %1004 = vmatpush1.msra.mxu0 0.0
        %1005 = vmatprep.subr.mxu0 0.0
        %1006 = vmatpush1.msra.mxu0 0.0
        %1007 = vmatprep.subr.mxu0 0.0
        %1008 = vmatpush1.msra.mxu0 0.0
        %1009 = vmatprep.subr.mxu0 0.0
        %1010 = vmatpush1.msra.mxu0 0.0
        %1011 = vmatprep.subr.mxu0 0.0
        %1012 = vmatpush1.msra.mxu0 0.0
        %1013 = vmatprep.subr.mxu0 0.0
        %1014 = vmatpush1.msra.mxu0 0.0
        %1015 = vmatprep.mubr.f32.mxu0 0.0
        %1016 = vmatmul.mubr.f32.gmra.mrb[0].mxu0 %v916
        %v1017 = vpop.f32.mrb[0].mxu0
        %v1018 = vadd.f32 %v857, %v1017
        %v1019 = vpop.f32.mrb[0].mxu0
        %1020 = vmatprep.mubr.f32.mxu0 0.0
        %1021 = vmatmul.mubr.f32.gmra.mrb[0].mxu0 %v919
        %v1022 = vpop.f32.mrb[0].mxu0
        %v1023 = vadd.f32 %v862, %v1022
        %v1024 = vpop.f32.mrb[0].mxu0
        %1025 = vmatprep.mubr.f32.mxu0 0.0
        %1026 = vmatmul.mubr.f32.gmra.mrb[0].mxu0 %v922
        %v1027 = vpop.f32.mrb[0].mxu0
        %v1028 = vadd.f32 %v867, %v1027
        %v1029 = vpop.f32.mrb[0].mxu0
        %1030 = vmatprep.mubr.f32.mxu0 0.0
        %1031 = vmatmul.mubr.f32.gmra.mrb[0].mxu0 %v925
        %v1032 = vpop.f32.mrb[0].mxu0
        %v1033 = vadd.f32 %v872, %v1032
        %v1034 = vpop.f32.mrb[0].mxu0
        %1035 = vmatprep.mubr.f32.mxu0 0.0
        %1036 = vmatmul.mubr.f32.gmra.mrb[0].mxu0 %v928
        %v1037 = vpop.f32.mrb[0].mxu0
        %v1038 = vadd.f32 %v877, %v1037
        %v1039 = vpop.f32.mrb[0].mxu0
        %1040 = vmatprep.mubr.f32.mxu0 0.0
        %1041 = vmatmul.mubr.f32.gmra.mrb[0].mxu0 %v931
        %v1042 = vpop.f32.mrb[0].mxu0
        %v1043 = vadd.f32 %v882, %v1042
        %v1044 = vpop.f32.mrb[0].mxu0
        %1045 = vmatprep.mubr.f32.mxu0 0.0
        %1046 = vmatmul.mubr.f32.gmra.mrb[0].mxu0 %v934
        %v1047 = vpop.f32.mrb[0].mxu0
        %v1048 = vadd.f32 %v887, %v1047
        %v1049 = vpop.f32.mrb[0].mxu0
        %1050 = vmatprep.mubr.f32.mxu0 0.0
        %1051 = vmatmul.mubr.f32.gmra.mrb[0].mxu0 %v937
        %v1052 = vpop.f32.mrb[0].mxu0
        %v1053 = vadd.f32 %v892, %v1052
        %v1054 = vpop.f32.mrb[0].mxu0
        %1055 = vmatprep.mubr.f32.mxu0 0.0
        %1056 = vmatmul.mubr.f32.gmra.mrb[0].mxu0 %v940
        %v1057 = vpop.f32.mrb[0].mxu0
        %v1058 = vadd.f32 %v897, %v1057
        %v1059 = vpop.f32.mrb[0].mxu0
        %1060 = vmatprep.mubr.f32.mxu0 0.0
        %1061 = vmatmul.mubr.f32.gmra.mrb[0].mxu0 %v943
        %v1062 = vpop.f32.mrb[0].mxu0
        %v1063 = vadd.f32 %v902, %v1062
        %v1064 = vpop.f32.mrb[0].mxu0
        %1065 = vmatprep.mubr.f32.mxu0 0.0
        %1066 = vmatmul.mubr.f32.gmra.mrb[0].mxu0 %v946
        %v1067 = vpop.f32.mrb[0].mxu0
        %v1068 = vadd.f32 %v907, %v1067
        %v1069 = vpop.f32.mrb[0].mxu0
        %1070 = vmatprep.mubr.f32.mxu0 0.0
        %1071 = vmatmul.mubr.f32.gmra.mrb[0].mxu0 %v949
        %v1072 = vpop.f32.mrb[0].mxu0
        %v1073 = vadd.f32 %v912, %v1072
        %v1074 = vpop.f32.mrb[0].mxu0
        %1075 = vdwg.mxu0
        %1076 = vxpose.xlu0.b32.start [1/16] %v1018, 128
        %1077 = vxpose.xlu0.b32.cont [2/16] 0.0, 128
        %1078 = vxpose.xlu0.b32.cont [3/16] 0.0, 128
        %1079 = vxpose.xlu0.b32.cont [4/16] 0.0, 128
        %1080 = vxpose.xlu0.b32.cont [5/16] 0.0, 128
        %1081 = vxpose.xlu0.b32.cont [6/16] 0.0, 128
        %1082 = vxpose.xlu0.b32.cont [7/16] 0.0, 128
        %1083 = vxpose.xlu0.b32.cont [8/16] 0.0, 128
        %1084 = vxpose.xlu0.b32.cont [9/16] 0.0, 128
        %1085 = vxpose.xlu0.b32.cont [10/16] 0.0, 128
        %1086 = vxpose.xlu0.b32.cont [11/16] 0.0, 128
        %1087 = vxpose.xlu0.b32.cont [12/16] 0.0, 128
        %1088 = vxpose.xlu0.b32.cont [13/16] 0.0, 128
        %1089 = vxpose.xlu0.b32.cont [14/16] 0.0, 128
        %1090 = vxpose.xlu0.b32.cont [15/16] 0.0, 128
        %1091 = vxpose.xlu0.b32.end [16/16] 0.0, 128
        %v1092 = vpop.trf.xlu0
        %v1093 = vpop.trf.xlu0
        %v1094 = vpop.trf.xlu0
        %v1095 = vpop.trf.xlu0
        %v1096 = vpop.trf.xlu0
        %v1097 = vpop.trf.xlu0
        %v1098 = vpop.trf.xlu0
        %v1099 = vpop.trf.xlu0
        %v1100 = vpop.trf.xlu0
        %v1101 = vpop.trf.xlu0
        %v1102 = vpop.trf.xlu0
        %v1103 = vpop.trf.xlu0
        %v1104 = vpop.trf.xlu0
        %v1105 = vpop.trf.xlu0
        %v1106 = vpop.trf.xlu0
        %v1107 = vpop.trf.xlu0
        %1108 = vxpose.xlu0.b32.start [1/16] %v1023, 128
        %1109 = vxpose.xlu0.b32.cont [2/16] 0.0, 128
        %1110 = vxpose.xlu0.b32.cont [3/16] 0.0, 128
        %1111 = vxpose.xlu0.b32.cont [4/16] 0.0, 128
        %1112 = vxpose.xlu0.b32.cont [5/16] 0.0, 128
        %1113 = vxpose.xlu0.b32.cont [6/16] 0.0, 128
        %1114 = vxpose.xlu0.b32.cont [7/16] 0.0, 128
        %1115 = vxpose.xlu0.b32.cont [8/16] 0.0, 128
        %1116 = vxpose.xlu0.b32.cont [9/16] 0.0, 128
        %1117 = vxpose.xlu0.b32.cont [10/16] 0.0, 128
        %1118 = vxpose.xlu0.b32.cont [11/16] 0.0, 128
        %1119 = vxpose.xlu0.b32.cont [12/16] 0.0, 128
        %1120 = vxpose.xlu0.b32.cont [13/16] 0.0, 128
        %1121 = vxpose.xlu0.b32.cont [14/16] 0.0, 128
        %1122 = vxpose.xlu0.b32.cont [15/16] 0.0, 128
        %1123 = vxpose.xlu0.b32.end [16/16] 0.0, 128
        %v1124 = vpop.trf.xlu0
        %v1125 = vpop.trf.xlu0
        %v1126 = vpop.trf.xlu0
        %v1127 = vpop.trf.xlu0
        %v1128 = vpop.trf.xlu0
        %v1129 = vpop.trf.xlu0
        %v1130 = vpop.trf.xlu0
        %v1131 = vpop.trf.xlu0
        %v1132 = vpop.trf.xlu0
        %v1133 = vpop.trf.xlu0
        %v1134 = vpop.trf.xlu0
        %v1135 = vpop.trf.xlu0
        %v1136 = vpop.trf.xlu0
        %v1137 = vpop.trf.xlu0
        %v1138 = vpop.trf.xlu0
        %v1139 = vpop.trf.xlu0
        %1140 = vxpose.xlu0.b32.start [1/16] %v1028, 128
        %1141 = vxpose.xlu0.b32.cont [2/16] 0.0, 128
        %1142 = vxpose.xlu0.b32.cont [3/16] 0.0, 128
        %1143 = vxpose.xlu0.b32.cont [4/16] 0.0, 128
        %1144 = vxpose.xlu0.b32.cont [5/16] 0.0, 128
        %1145 = vxpose.xlu0.b32.cont [6/16] 0.0, 128
        %1146 = vxpose.xlu0.b32.cont [7/16] 0.0, 128
        %1147 = vxpose.xlu0.b32.cont [8/16] 0.0, 128
        %1148 = vxpose.xlu0.b32.cont [9/16] 0.0, 128
        %1149 = vxpose.xlu0.b32.cont [10/16] 0.0, 128
        %1150 = vxpose.xlu0.b32.cont [11/16] 0.0, 128
        %1151 = vxpose.xlu0.b32.cont [12/16] 0.0, 128
        %1152 = vxpose.xlu0.b32.cont [13/16] 0.0, 128
        %1153 = vxpose.xlu0.b32.cont [14/16] 0.0, 128
        %1154 = vxpose.xlu0.b32.cont [15/16] 0.0, 128
        %1155 = vxpose.xlu0.b32.end [16/16] 0.0, 128
        %v1156 = vpop.trf.xlu0
        %v1157 = vpop.trf.xlu0
        %v1158 = vpop.trf.xlu0
        %v1159 = vpop.trf.xlu0
        %v1160 = vpop.trf.xlu0
        %v1161 = vpop.trf.xlu0
        %v1162 = vpop.trf.xlu0
        %v1163 = vpop.trf.xlu0
        %v1164 = vpop.trf.xlu0
        %v1165 = vpop.trf.xlu0
        %v1166 = vpop.trf.xlu0
        %v1167 = vpop.trf.xlu0
        %v1168 = vpop.trf.xlu0
        %v1169 = vpop.trf.xlu0
        %v1170 = vpop.trf.xlu0
        %v1171 = vpop.trf.xlu0
        %1172 = vxpose.xlu0.b32.start [1/16] %v1033, 128
        %1173 = vxpose.xlu0.b32.cont [2/16] 0.0, 128
        %1174 = vxpose.xlu0.b32.cont [3/16] 0.0, 128
        %1175 = vxpose.xlu0.b32.cont [4/16] 0.0, 128
        %1176 = vxpose.xlu0.b32.cont [5/16] 0.0, 128
        %1177 = vxpose.xlu0.b32.cont [6/16] 0.0, 128
        %1178 = vxpose.xlu0.b32.cont [7/16] 0.0, 128
        %1179 = vxpose.xlu0.b32.cont [8/16] 0.0, 128
        %1180 = vxpose.xlu0.b32.cont [9/16] 0.0, 128
        %1181 = vxpose.xlu0.b32.cont [10/16] 0.0, 128
        %1182 = vxpose.xlu0.b32.cont [11/16] 0.0, 128
        %1183 = vxpose.xlu0.b32.cont [12/16] 0.0, 128
        %1184 = vxpose.xlu0.b32.cont [13/16] 0.0, 128
        %1185 = vxpose.xlu0.b32.cont [14/16] 0.0, 128
        %1186 = vxpose.xlu0.b32.cont [15/16] 0.0, 128
        %1187 = vxpose.xlu0.b32.end [16/16] 0.0, 128
        %v1188 = vpop.trf.xlu0
        %v1189 = vpop.trf.xlu0
        %v1190 = vpop.trf.xlu0
        %v1191 = vpop.trf.xlu0
        %v1192 = vpop.trf.xlu0
        %v1193 = vpop.trf.xlu0
        %v1194 = vpop.trf.xlu0
        %v1195 = vpop.trf.xlu0
        %v1196 = vpop.trf.xlu0
        %v1197 = vpop.trf.xlu0
        %v1198 = vpop.trf.xlu0
        %v1199 = vpop.trf.xlu0
        %v1200 = vpop.trf.xlu0
        %v1201 = vpop.trf.xlu0
        %v1202 = vpop.trf.xlu0
        %v1203 = vpop.trf.xlu0
        %v1205 = vsel %vm738, %v1092, 0
        %1207 = vmatprep.subr.mxu0 0.0
        %1208 = vmatpush1.msra.mxu0 %v1038
        %1209 = vmatprep.subr.mxu0 0.0
        %1210 = vmatpush1.msra.mxu0 0.0
        %1211 = vmatprep.subr.mxu0 0.0
        %1212 = vmatpush1.msra.mxu0 0.0
        %1213 = vmatprep.subr.mxu0 0.0
        %1214 = vmatpush1.msra.mxu0 0.0
        %1215 = vmatprep.subr.mxu0 0.0
        %1216 = vmatpush1.msra.mxu0 0.0
        %1217 = vmatprep.subr.mxu0 0.0
        %1218 = vmatpush1.msra.mxu0 0.0
        %1219 = vmatprep.subr.mxu0 0.0
        %1220 = vmatpush1.msra.mxu0 0.0
        %1221 = vmatprep.subr.mxu0 0.0
        %1222 = vmatpush1.msra.mxu0 0.0
        %1223 = vmatprep.subr.mxu0 0.0
        %1224 = vmatpush1.msra.mxu0 0.0
        %1225 = vmatprep.subr.mxu0 0.0
        %1226 = vmatpush1.msra.mxu0 0.0
        %1227 = vmatprep.subr.mxu0 0.0
        %1228 = vmatpush1.msra.mxu0 0.0
        %1229 = vmatprep.subr.mxu0 0.0
        %1230 = vmatpush1.msra.mxu0 0.0
        %1231 = vmatprep.subr.mxu0 0.0
        %1232 = vmatpush1.msra.mxu0 0.0
        %1233 = vmatprep.subr.mxu0 0.0
        %1234 = vmatpush1.msra.mxu0 0.0
        %1235 = vmatprep.subr.mxu0 0.0
        %1236 = vmatpush1.msra.mxu0 0.0
        %1237 = vmatprep.subr.mxu0 0.0
        %1238 = vmatpush1.msra.mxu0 0.0
        %1239 = vmatprep.subr.mxu0 0.0
        %1240 = vmatpush1.msra.mxu0 0.0
        %1241 = vmatprep.subr.mxu0 0.0
        %1242 = vmatpush1.msra.mxu0 0.0
        %1243 = vmatprep.subr.mxu0 0.0
        %1244 = vmatpush1.msra.mxu0 0.0
        %1245 = vmatprep.subr.mxu0 0.0
        %1246 = vmatpush1.msra.mxu0 0.0
        %1247 = vmatprep.subr.mxu0 0.0
        %1248 = vmatpush1.msra.mxu0 0.0
        %1249 = vmatprep.subr.mxu0 0.0
        %1250 = vmatpush1.msra.mxu0 0.0
        %1251 = vmatprep.subr.mxu0 0.0
        %1252 = vmatpush1.msra.mxu0 0.0
        %1253 = vmatprep.subr.mxu0 0.0
        %1254 = vmatpush1.msra.mxu0 0.0
        %1255 = vmatprep.subr.mxu0 0.0
        %1256 = vmatpush1.msra.mxu0 0.0
        %1257 = vmatprep.subr.mxu0 0.0
        %1258 = vmatpush1.msra.mxu0 0.0
        %1259 = vmatprep.subr.mxu0 0.0
        %1260 = vmatpush1.msra.mxu0 0.0
        %1261 = vmatprep.subr.mxu0 0.0
        %1262 = vmatpush1.msra.mxu0 0.0
        %1263 = vmatprep.subr.mxu0 0.0
        %1264 = vmatpush1.msra.mxu0 0.0
        %1265 = vmatprep.subr.mxu0 0.0
        %1266 = vmatpush1.msra.mxu0 0.0
        %1267 = vmatprep.subr.mxu0 0.0
        %1268 = vmatpush1.msra.mxu0 0.0
        %1269 = vmatprep.subr.mxu0 0.0
        %1270 = vmatpush1.msra.mxu0 0.0
        %1271 = vmatprep.mubr.f32.mxu0 0.0
        %1272 = vmatmul.mubr.f32.gmra.mrb[0].mxu0 %v1205
        %v1273 = vpop.f32.mrb[0].mxu0
        %v1274 = vadd.f32 0.0, %v1273
        %v1275 = vpop.f32.mrb[0].mxu0
        %1276 = vdwg.mxu0
        %v1278 = vsel %vm738, %v1124, 0
        %1280 = vmatprep.subr.mxu0 0.0
        %1281 = vmatpush1.msra.mxu0 %v1043
        %1282 = vmatprep.subr.mxu0 0.0
        %1283 = vmatpush1.msra.mxu0 0.0
        %1284 = vmatprep.subr.mxu0 0.0
        %1285 = vmatpush1.msra.mxu0 0.0
        %1286 = vmatprep.subr.mxu0 0.0
        %1287 = vmatpush1.msra.mxu0 0.0
        %1288 = vmatprep.subr.mxu0 0.0
        %1289 = vmatpush1.msra.mxu0 0.0
        %1290 = vmatprep.subr.mxu0 0.0
        %1291 = vmatpush1.msra.mxu0 0.0
        %1292 = vmatprep.subr.mxu0 0.0
        %1293 = vmatpush1.msra.mxu0 0.0
        %1294 = vmatprep.subr.mxu0 0.0
        %1295 = vmatpush1.msra.mxu0 0.0
        %1296 = vmatprep.subr.mxu0 0.0
        %1297 = vmatpush1.msra.mxu0 0.0
        %1298 = vmatprep.subr.mxu0 0.0
        %1299 = vmatpush1.msra.mxu0 0.0
        %1300 = vmatprep.subr.mxu0 0.0
        %1301 = vmatpush1.msra.mxu0 0.0
        %1302 = vmatprep.subr.mxu0 0.0
        %1303 = vmatpush1.msra.mxu0 0.0
        %1304 = vmatprep.subr.mxu0 0.0
        %1305 = vmatpush1.msra.mxu0 0.0
        %1306 = vmatprep.subr.mxu0 0.0
        %1307 = vmatpush1.msra.mxu0 0.0
        %1308 = vmatprep.subr.mxu0 0.0
        %1309 = vmatpush1.msra.mxu0 0.0
        %1310 = vmatprep.subr.mxu0 0.0
        %1311 = vmatpush1.msra.mxu0 0.0
        %1312 = vmatprep.subr.mxu0 0.0
        %1313 = vmatpush1.msra.mxu0 0.0
        %1314 = vmatprep.subr.mxu0 0.0
        %1315 = vmatpush1.msra.mxu0 0.0
        %1316 = vmatprep.subr.mxu0 0.0
        %1317 = vmatpush1.msra.mxu0 0.0
        %1318 = vmatprep.subr.mxu0 0.0
        %1319 = vmatpush1.msra.mxu0 0.0
        %1320 = vmatprep.subr.mxu0 0.0
        %1321 = vmatpush1.msra.mxu0 0.0
        %1322 = vmatprep.subr.mxu0 0.0
        %1323 = vmatpush1.msra.mxu0 0.0
        %1324 = vmatprep.subr.mxu0 0.0
        %1325 = vmatpush1.msra.mxu0 0.0
        %1326 = vmatprep.subr.mxu0 0.0
        %1327 = vmatpush1.msra.mxu0 0.0
        %1328 = vmatprep.subr.mxu0 0.0
        %1329 = vmatpush1.msra.mxu0 0.0
        %1330 = vmatprep.subr.mxu0 0.0
        %1331 = vmatpush1.msra.mxu0 0.0
        %1332 = vmatprep.subr.mxu0 0.0
        %1333 = vmatpush1.msra.mxu0 0.0
        %1334 = vmatprep.subr.mxu0 0.0
        %1335 = vmatpush1.msra.mxu0 0.0
        %1336 = vmatprep.subr.mxu0 0.0
        %1337 = vmatpush1.msra.mxu0 0.0
        %1338 = vmatprep.subr.mxu0 0.0
        %1339 = vmatpush1.msra.mxu0 0.0
        %1340 = vmatprep.subr.mxu0 0.0
        %1341 = vmatpush1.msra.mxu0 0.0
        %1342 = vmatprep.subr.mxu0 0.0
        %1343 = vmatpush1.msra.mxu0 0.0
        %1344 = vmatprep.mubr.f32.mxu0 0.0
        %1345 = vmatmul.mubr.f32.gmra.mrb[0].mxu0 %v1278
        %v1346 = vpop.f32.mrb[0].mxu0
        %v1347 = vadd.f32 0.0, %v1346
        %v1348 = vpop.f32.mrb[0].mxu0
        %1349 = vdwg.mxu0
        %v1351 = vsel %vm738, %v1156, 0
        %1353 = vmatprep.subr.mxu0 0.0
        %1354 = vmatpush1.msra.mxu0 %v1048
        %1355 = vmatprep.subr.mxu0 0.0
        %1356 = vmatpush1.msra.mxu0 0.0
        %1357 = vmatprep.subr.mxu0 0.0
        %1358 = vmatpush1.msra.mxu0 0.0
        %1359 = vmatprep.subr.mxu0 0.0
        %1360 = vmatpush1.msra.mxu0 0.0
        %1361 = vmatprep.subr.mxu0 0.0
        %1362 = vmatpush1.msra.mxu0 0.0
        %1363 = vmatprep.subr.mxu0 0.0
        %1364 = vmatpush1.msra.mxu0 0.0
        %1365 = vmatprep.subr.mxu0 0.0
        %1366 = vmatpush1.msra.mxu0 0.0
        %1367 = vmatprep.subr.mxu0 0.0
        %1368 = vmatpush1.msra.mxu0 0.0
        %1369 = vmatprep.subr.mxu0 0.0
        %1370 = vmatpush1.msra.mxu0 0.0
        %1371 = vmatprep.subr.mxu0 0.0
        %1372 = vmatpush1.msra.mxu0 0.0
        %1373 = vmatprep.subr.mxu0 0.0
        %1374 = vmatpush1.msra.mxu0 0.0
        %1375 = vmatprep.subr.mxu0 0.0
        %1376 = vmatpush1.msra.mxu0 0.0
        %1377 = vmatprep.subr.mxu0 0.0
        %1378 = vmatpush1.msra.mxu0 0.0
        %1379 = vmatprep.subr.mxu0 0.0
        %1380 = vmatpush1.msra.mxu0 0.0
        %1381 = vmatprep.subr.mxu0 0.0
        %1382 = vmatpush1.msra.mxu0 0.0
        %1383 = vmatprep.subr.mxu0 0.0
        %1384 = vmatpush1.msra.mxu0 0.0
        %1385 = vmatprep.subr.mxu0 0.0
        %1386 = vmatpush1.msra.mxu0 0.0
        %1387 = vmatprep.subr.mxu0 0.0
        %1388 = vmatpush1.msra.mxu0 0.0
        %1389 = vmatprep.subr.mxu0 0.0
        %1390 = vmatpush1.msra.mxu0 0.0
        %1391 = vmatprep.subr.mxu0 0.0
        %1392 = vmatpush1.msra.mxu0 0.0
        %1393 = vmatprep.subr.mxu0 0.0
        %1394 = vmatpush1.msra.mxu0 0.0
        %1395 = vmatprep.subr.mxu0 0.0
        %1396 = vmatpush1.msra.mxu0 0.0
        %1397 = vmatprep.subr.mxu0 0.0
        %1398 = vmatpush1.msra.mxu0 0.0
        %1399 = vmatprep.subr.mxu0 0.0
        %1400 = vmatpush1.msra.mxu0 0.0
        %1401 = vmatprep.subr.mxu0 0.0
        %1402 = vmatpush1.msra.mxu0 0.0
        %1403 = vmatprep.subr.mxu0 0.0
        %1404 = vmatpush1.msra.mxu0 0.0
        %1405 = vmatprep.subr.mxu0 0.0
        %1406 = vmatpush1.msra.mxu0 0.0
        %1407 = vmatprep.subr.mxu0 0.0
        %1408 = vmatpush1.msra.mxu0 0.0
        %1409 = vmatprep.subr.mxu0 0.0
        %1410 = vmatpush1.msra.mxu0 0.0
        %1411 = vmatprep.subr.mxu0 0.0
        %1412 = vmatpush1.msra.mxu0 0.0
        %1413 = vmatprep.subr.mxu0 0.0
        %1414 = vmatpush1.msra.mxu0 0.0
        %1415 = vmatprep.subr.mxu0 0.0
        %1416 = vmatpush1.msra.mxu0 0.0
        %1417 = vmatprep.mubr.f32.mxu0 0.0
        %1418 = vmatmul.mubr.f32.gmra.mrb[0].mxu0 %v1351
        %v1419 = vpop.f32.mrb[0].mxu0
        %v1420 = vadd.f32 0.0, %v1419
        %v1421 = vpop.f32.mrb[0].mxu0
        %1422 = vdwg.mxu0
        %v1424 = vsel %vm738, %v1188, 0
        %1426 = vmatprep.subr.mxu0 0.0
        %1427 = vmatpush1.msra.mxu0 %v1053
        %1428 = vmatprep.subr.mxu0 0.0
        %1429 = vmatpush1.msra.mxu0 0.0
        %1430 = vmatprep.subr.mxu0 0.0
        %1431 = vmatpush1.msra.mxu0 0.0
        %1432 = vmatprep.subr.mxu0 0.0
        %1433 = vmatpush1.msra.mxu0 0.0
        %1434 = vmatprep.subr.mxu0 0.0
        %1435 = vmatpush1.msra.mxu0 0.0
        %1436 = vmatprep.subr.mxu0 0.0
        %1437 = vmatpush1.msra.mxu0 0.0
        %1438 = vmatprep.subr.mxu0 0.0
        %1439 = vmatpush1.msra.mxu0 0.0
        %1440 = vmatprep.subr.mxu0 0.0
        %1441 = vmatpush1.msra.mxu0 0.0
        %1442 = vmatprep.subr.mxu0 0.0
        %1443 = vmatpush1.msra.mxu0 0.0
        %1444 = vmatprep.subr.mxu0 0.0
        %1445 = vmatpush1.msra.mxu0 0.0
        %1446 = vmatprep.subr.mxu0 0.0
        %1447 = vmatpush1.msra.mxu0 0.0
        %1448 = vmatprep.subr.mxu0 0.0
        %1449 = vmatpush1.msra.mxu0 0.0
        %1450 = vmatprep.subr.mxu0 0.0
        %1451 = vmatpush1.msra.mxu0 0.0
        %1452 = vmatprep.subr.mxu0 0.0
        %1453 = vmatpush1.msra.mxu0 0.0
        %1454 = vmatprep.subr.mxu0 0.0
        %1455 = vmatpush1.msra.mxu0 0.0
        %1456 = vmatprep.subr.mxu0 0.0
        %1457 = vmatpush1.msra.mxu0 0.0
        %1458 = vmatprep.subr.mxu0 0.0
        %1459 = vmatpush1.msra.mxu0 0.0
        %1460 = vmatprep.subr.mxu0 0.0
        %1461 = vmatpush1.msra.mxu0 0.0
        %1462 = vmatprep.subr.mxu0 0.0
        %1463 = vmatpush1.msra.mxu0 0.0
        %1464 = vmatprep.subr.mxu0 0.0
        %1465 = vmatpush1.msra.mxu0 0.0
        %1466 = vmatprep.subr.mxu0 0.0
        %1467 = vmatpush1.msra.mxu0 0.0
        %1468 = vmatprep.subr.mxu0 0.0
        %1469 = vmatpush1.msra.mxu0 0.0
        %1470 = vmatprep.subr.mxu0 0.0
        %1471 = vmatpush1.msra.mxu0 0.0
        %1472 = vmatprep.subr.mxu0 0.0
        %1473 = vmatpush1.msra.mxu0 0.0
        %1474 = vmatprep.subr.mxu0 0.0
        %1475 = vmatpush1.msra.mxu0 0.0
        %1476 = vmatprep.subr.mxu0 0.0
        %1477 = vmatpush1.msra.mxu0 0.0
        %1478 = vmatprep.subr.mxu0 0.0
        %1479 = vmatpush1.msra.mxu0 0.0
        %1480 = vmatprep.subr.mxu0 0.0
        %1481 = vmatpush1.msra.mxu0 0.0
        %1482 = vmatprep.subr.mxu0 0.0
        %1483 = vmatpush1.msra.mxu0 0.0
        %1484 = vmatprep.subr.mxu0 0.0
        %1485 = vmatpush1.msra.mxu0 0.0
        %1486 = vmatprep.subr.mxu0 0.0
        %1487 = vmatpush1.msra.mxu0 0.0
        %1488 = vmatprep.subr.mxu0 0.0
        %1489 = vmatpush1.msra.mxu0 0.0
        %1490 = vmatprep.mubr.f32.mxu0 0.0
        %1491 = vmatmul.mubr.f32.gmra.mrb[0].mxu0 %v1424
        %v1492 = vpop.f32.mrb[0].mxu0
        %v1493 = vadd.f32 0.0, %v1492
        %v1494 = vpop.f32.mrb[0].mxu0
        %1495 = vdwg.mxu0
        %v1496 = vmul.f32 %v1274, 0.35355338
        %v1497 = vmul.f32 %v1347, 0.35355338
        %v1498 = vmul.f32 %v1420, 0.35355338
        %v1499 = vmul.f32 %v1493, 0.35355338
        %v1500 = vlaneseq
        %v1501 = vshrl.u32 %v1500, 7
        %v1502 = vlaneseq
        %v1503 = vand.u32 %v1502, 127
        %vm1504 = vcmp.ge.s32.totalorder %v1501, %v1503
        %v1505 = vsel %vm1504, 1, 0
        %vm1506 = vcmp.eq.s32.totalorder %v1505, 1
        %v1507 = vsel %vm1506, %v1496, -inf
        %v1508 = vsel %vm1506, %v1497, -inf
        %v1509 = vsel %vm1506, %v1498, -inf
        %v1510 = vsel %vm1506, %v1499, -inf
        %v1511 = vsel %vm738, %v1507, -inf
        %1512 = vmax.xlane.f32.xlu0 %v1511
        %v1513 = vpop.xlane.xlu0 %1512
        %v1514 = vsel %vm738, %v1508, -inf
        %1515 = vmax.xlane.f32.xlu0 %v1514
        %v1516 = vpop.xlane.xlu0 %1515
        %v1517 = vsel %vm738, %v1509, -inf
        %1518 = vmax.xlane.f32.xlu0 %v1517
        %v1519 = vpop.xlane.xlu0 %1518
        %v1520 = vsel %vm738, %v1510, -inf
        %1521 = vmax.xlane.f32.xlu0 %v1520
        %v1522 = vpop.xlane.xlu0 %1521
        %v1523 = vsub.f32 %v1507, %v1513
        %v1524 = vsub.f32 %v1508, %v1516
        %v1525 = vsub.f32 %v1509, %v1519
        %v1526 = vsub.f32 %v1510, %v1522
        %v1527 = vmul.f32 %v1523, 1.442695
        %v1528 = vpow.pop %v1527
        %v1529 = vmul.f32 %v1524, 1.442695
        %v1530 = vpow.pop %v1529
        %v1531 = vmul.f32 %v1525, 1.442695
        %v1532 = vpow.pop %v1531
        %v1533 = vmul.f32 %v1526, 1.442695
        %v1534 = vpow.pop %v1533
        %v1535 = vsel %vm738, %v1528, 0.0
        %1536 = vadd.xlane.f32.xlu0 %v1535
        %v1537 = vpop.xlane.xlu0 %1536
        %v1538 = vsel %vm738, %v1530, 0.0
        %1539 = vadd.xlane.f32.xlu0 %v1538
        %v1540 = vpop.xlane.xlu0 %1539
        %v1541 = vsel %vm738, %v1532, 0.0
        %1542 = vadd.xlane.f32.xlu0 %v1541
        %v1543 = vpop.xlane.xlu0 %1542
        %v1544 = vsel %vm738, %v1534, 0.0
        %1545 = vadd.xlane.f32.xlu0 %v1544
        %v1546 = vpop.xlane.xlu0 %1545
        %v1547 = vrcp.pop %v1537
        %v1548 = vmul.f32 %v1528, %v1547
        %v1549 = vrcp.pop %v1540
        %v1550 = vmul.f32 %v1530, %v1549
        %v1551 = vrcp.pop %v1543
        %v1552 = vmul.f32 %v1532, %v1551
        %v1553 = vrcp.pop %v1546
        %v1554 = vmul.f32 %v1534, %v1553
        %v1556 = vsel %vm738, %v1058, 0
        %v1559 = vsel %vm738, %v1548, 0
        %1561 = vmatprep.subr.mxu0 0.0
        %1562 = vmatpush1.xpose.msra.mxu0 %v1559
        %1563 = vmatprep.subr.mxu0 0.0
        %1564 = vmatpush1.xpose.msra.mxu0 0.0
        %1565 = vmatprep.subr.mxu0 0.0
        %1566 = vmatpush1.xpose.msra.mxu0 0.0
        %1567 = vmatprep.subr.mxu0 0.0
        %1568 = vmatpush1.xpose.msra.mxu0 0.0
        %1569 = vmatprep.subr.mxu0 0.0
        %1570 = vmatpush1.xpose.msra.mxu0 0.0
        %1571 = vmatprep.subr.mxu0 0.0
        %1572 = vmatpush1.xpose.msra.mxu0 0.0
        %1573 = vmatprep.subr.mxu0 0.0
        %1574 = vmatpush1.xpose.msra.mxu0 0.0
        %1575 = vmatprep.subr.mxu0 0.0
        %1576 = vmatpush1.xpose.msra.mxu0 0.0
        %1577 = vmatprep.subr.mxu0 0.0
        %1578 = vmatpush1.xpose.msra.mxu0 0.0
        %1579 = vmatprep.subr.mxu0 0.0
        %1580 = vmatpush1.xpose.msra.mxu0 0.0
        %1581 = vmatprep.subr.mxu0 0.0
        %1582 = vmatpush1.xpose.msra.mxu0 0.0
        %1583 = vmatprep.subr.mxu0 0.0
        %1584 = vmatpush1.xpose.msra.mxu0 0.0
        %1585 = vmatprep.subr.mxu0 0.0
        %1586 = vmatpush1.xpose.msra.mxu0 0.0
        %1587 = vmatprep.subr.mxu0 0.0
        %1588 = vmatpush1.xpose.msra.mxu0 0.0
        %1589 = vmatprep.subr.mxu0 0.0
        %1590 = vmatpush1.xpose.msra.mxu0 0.0
        %1591 = vmatprep.subr.mxu0 0.0
        %1592 = vmatpush1.xpose.msra.mxu0 0.0
        %1593 = vmatprep.subr.mxu0 0.0
        %1594 = vmatpush1.xpose.msra.mxu0 0.0
        %1595 = vmatprep.subr.mxu0 0.0
        %1596 = vmatpush1.xpose.msra.mxu0 0.0
        %1597 = vmatprep.subr.mxu0 0.0
        %1598 = vmatpush1.xpose.msra.mxu0 0.0
        %1599 = vmatprep.subr.mxu0 0.0
        %1600 = vmatpush1.xpose.msra.mxu0 0.0
        %1601 = vmatprep.subr.mxu0 0.0
        %1602 = vmatpush1.xpose.msra.mxu0 0.0
        %1603 = vmatprep.subr.mxu0 0.0
        %1604 = vmatpush1.xpose.msra.mxu0 0.0
        %1605 = vmatprep.subr.mxu0 0.0
        %1606 = vmatpush1.xpose.msra.mxu0 0.0
        %1607 = vmatprep.subr.mxu0 0.0
        %1608 = vmatpush1.xpose.msra.mxu0 0.0
        %1609 = vmatprep.subr.mxu0 0.0
        %1610 = vmatpush1.xpose.msra.mxu0 0.0
        %1611 = vmatprep.subr.mxu0 0.0
        %1612 = vmatpush1.xpose.msra.mxu0 0.0
        %1613 = vmatprep.subr.mxu0 0.0
        %1614 = vmatpush1.xpose.msra.mxu0 0.0
        %1615 = vmatprep.subr.mxu0 0.0
        %1616 = vmatpush1.xpose.msra.mxu0 0.0
        %1617 = vmatprep.subr.mxu0 0.0
        %1618 = vmatpush1.xpose.msra.mxu0 0.0
        %1619 = vmatprep.subr.mxu0 0.0
        %1620 = vmatpush1.xpose.msra.mxu0 0.0
        %1621 = vmatprep.subr.mxu0 0.0
        %1622 = vmatpush1.xpose.msra.mxu0 0.0
        %1623 = vmatprep.subr.mxu0 0.0
        %1624 = vmatpush1.xpose.msra.mxu0 0.0
        %1625 = vmatprep.mubr.f32.mxu0 0.0
        %1626 = vmatmul.mubr.f32.gmra.mrb[0].mxu0 %v1556
        %v1627 = vpop.f32.mrb[0].mxu0
        %v1628 = vadd.f32 0.0, %v1627
        %v1629 = vpop.f32.mrb[0].mxu0
        %1630 = vdwg.mxu0
        %v1632 = vsel %vm738, %v1063, 0
        %v1635 = vsel %vm738, %v1550, 0
        %1637 = vmatprep.subr.mxu0 0.0
        %1638 = vmatpush1.xpose.msra.mxu0 %v1635
        %1639 = vmatprep.subr.mxu0 0.0
        %1640 = vmatpush1.xpose.msra.mxu0 0.0
        %1641 = vmatprep.subr.mxu0 0.0
        %1642 = vmatpush1.xpose.msra.mxu0 0.0
        %1643 = vmatprep.subr.mxu0 0.0
        %1644 = vmatpush1.xpose.msra.mxu0 0.0
        %1645 = vmatprep.subr.mxu0 0.0
        %1646 = vmatpush1.xpose.msra.mxu0 0.0
        %1647 = vmatprep.subr.mxu0 0.0
        %1648 = vmatpush1.xpose.msra.mxu0 0.0
        %1649 = vmatprep.subr.mxu0 0.0
        %1650 = vmatpush1.xpose.msra.mxu0 0.0
        %1651 = vmatprep.subr.mxu0 0.0
        %1652 = vmatpush1.xpose.msra.mxu0 0.0
        %1653 = vmatprep.subr.mxu0 0.0
        %1654 = vmatpush1.xpose.msra.mxu0 0.0
        %1655 = vmatprep.subr.mxu0 0.0
        %1656 = vmatpush1.xpose.msra.mxu0 0.0
        %1657 = vmatprep.subr.mxu0 0.0
        %1658 = vmatpush1.xpose.msra.mxu0 0.0
        %1659 = vmatprep.subr.mxu0 0.0
        %1660 = vmatpush1.xpose.msra.mxu0 0.0
        %1661 = vmatprep.subr.mxu0 0.0
        %1662 = vmatpush1.xpose.msra.mxu0 0.0
        %1663 = vmatprep.subr.mxu0 0.0
        %1664 = vmatpush1.xpose.msra.mxu0 0.0
        %1665 = vmatprep.subr.mxu0 0.0
        %1666 = vmatpush1.xpose.msra.mxu0 0.0
        %1667 = vmatprep.subr.mxu0 0.0
        %1668 = vmatpush1.xpose.msra.mxu0 0.0
        %1669 = vmatprep.subr.mxu0 0.0
        %1670 = vmatpush1.xpose.msra.mxu0 0.0
        %1671 = vmatprep.subr.mxu0 0.0
        %1672 = vmatpush1.xpose.msra.mxu0 0.0
        %1673 = vmatprep.subr.mxu0 0.0
        %1674 = vmatpush1.xpose.msra.mxu0 0.0
        %1675 = vmatprep.subr.mxu0 0.0
        %1676 = vmatpush1.xpose.msra.mxu0 0.0
        %1677 = vmatprep.subr.mxu0 0.0
        %1678 = vmatpush1.xpose.msra.mxu0 0.0
        %1679 = vmatprep.subr.mxu0 0.0
        %1680 = vmatpush1.xpose.msra.mxu0 0.0
        %1681 = vmatprep.subr.mxu0 0.0
        %1682 = vmatpush1.xpose.msra.mxu0 0.0
        %1683 = vmatprep.subr.mxu0 0.0
        %1684 = vmatpush1.xpose.msra.mxu0 0.0
        %1685 = vmatprep.subr.mxu0 0.0
        %1686 = vmatpush1.xpose.msra.mxu0 0.0
        %1687 = vmatprep.subr.mxu0 0.0
        %1688 = vmatpush1.xpose.msra.mxu0 0.0
        %1689 = vmatprep.subr.mxu0 0.0
        %1690 = vmatpush1.xpose.msra.mxu0 0.0
        %1691 = vmatprep.subr.mxu0 0.0
        %1692 = vmatpush1.xpose.msra.mxu0 0.0
        %1693 = vmatprep.subr.mxu0 0.0
        %1694 = vmatpush1.xpose.msra.mxu0 0.0
        %1695 = vmatprep.subr.mxu0 0.0
        %1696 = vmatpush1.xpose.msra.mxu0 0.0
        %1697 = vmatprep.subr.mxu0 0.0
        %1698 = vmatpush1.xpose.msra.mxu0 0.0
        %1699 = vmatprep.subr.mxu0 0.0
        %1700 = vmatpush1.xpose.msra.mxu0 0.0
        %1701 = vmatprep.mubr.f32.mxu0 0.0
        %1702 = vmatmul.mubr.f32.gmra.mrb[0].mxu0 %v1632
        %v1703 = vpop.f32.mrb[0].mxu0
        %v1704 = vadd.f32 0.0, %v1703
        %v1705 = vpop.f32.mrb[0].mxu0
        %1706 = vdwg.mxu0
        %v1708 = vsel %vm738, %v1068, 0
        %v1711 = vsel %vm738, %v1552, 0
        %1713 = vmatprep.subr.mxu0 0.0
        %1714 = vmatpush1.xpose.msra.mxu0 %v1711
        %1715 = vmatprep.subr.mxu0 0.0
        %1716 = vmatpush1.xpose.msra.mxu0 0.0
        %1717 = vmatprep.subr.mxu0 0.0
        %1718 = vmatpush1.xpose.msra.mxu0 0.0
        %1719 = vmatprep.subr.mxu0 0.0
        %1720 = vmatpush1.xpose.msra.mxu0 0.0
        %1721 = vmatprep.subr.mxu0 0.0
        %1722 = vmatpush1.xpose.msra.mxu0 0.0
        %1723 = vmatprep.subr.mxu0 0.0
        %1724 = vmatpush1.xpose.msra.mxu0 0.0
        %1725 = vmatprep.subr.mxu0 0.0
        %1726 = vmatpush1.xpose.msra.mxu0 0.0
        %1727 = vmatprep.subr.mxu0 0.0
        %1728 = vmatpush1.xpose.msra.mxu0 0.0
        %1729 = vmatprep.subr.mxu0 0.0
        %1730 = vmatpush1.xpose.msra.mxu0 0.0
        %1731 = vmatprep.subr.mxu0 0.0
        %1732 = vmatpush1.xpose.msra.mxu0 0.0
        %1733 = vmatprep.subr.mxu0 0.0
        %1734 = vmatpush1.xpose.msra.mxu0 0.0
        %1735 = vmatprep.subr.mxu0 0.0
        %1736 = vmatpush1.xpose.msra.mxu0 0.0
        %1737 = vmatprep.subr.mxu0 0.0
        %1738 = vmatpush1.xpose.msra.mxu0 0.0
        %1739 = vmatprep.subr.mxu0 0.0
        %1740 = vmatpush1.xpose.msra.mxu0 0.0
        %1741 = vmatprep.subr.mxu0 0.0
        %1742 = vmatpush1.xpose.msra.mxu0 0.0
        %1743 = vmatprep.subr.mxu0 0.0
        %1744 = vmatpush1.xpose.msra.mxu0 0.0
        %1745 = vmatprep.subr.mxu0 0.0
        %1746 = vmatpush1.xpose.msra.mxu0 0.0
        %1747 = vmatprep.subr.mxu0 0.0
        %1748 = vmatpush1.xpose.msra.mxu0 0.0
        %1749 = vmatprep.subr.mxu0 0.0
        %1750 = vmatpush1.xpose.msra.mxu0 0.0
        %1751 = vmatprep.subr.mxu0 0.0
        %1752 = vmatpush1.xpose.msra.mxu0 0.0
        %1753 = vmatprep.subr.mxu0 0.0
        %1754 = vmatpush1.xpose.msra.mxu0 0.0
        %1755 = vmatprep.subr.mxu0 0.0
        %1756 = vmatpush1.xpose.msra.mxu0 0.0
        %1757 = vmatprep.subr.mxu0 0.0
        %1758 = vmatpush1.xpose.msra.mxu0 0.0
        %1759 = vmatprep.subr.mxu0 0.0
        %1760 = vmatpush1.xpose.msra.mxu0 0.0
        %1761 = vmatprep.subr.mxu0 0.0
        %1762 = vmatpush1.xpose.msra.mxu0 0.0
        %1763 = vmatprep.subr.mxu0 0.0
        %1764 = vmatpush1.xpose.msra.mxu0 0.0
        %1765 = vmatprep.subr.mxu0 0.0
        %1766 = vmatpush1.xpose.msra.mxu0 0.0
        %1767 = vmatprep.subr.mxu0 0.0
        %1768 = vmatpush1.xpose.msra.mxu0 0.0
        %1769 = vmatprep.subr.mxu0 0.0
        %1770 = vmatpush1.xpose.msra.mxu0 0.0
        %1771 = vmatprep.subr.mxu0 0.0
        %1772 = vmatpush1.xpose.msra.mxu0 0.0
        %1773 = vmatprep.subr.mxu0 0.0
        %1774 = vmatpush1.xpose.msra.mxu0 0.0
        %1775 = vmatprep.subr.mxu0 0.0
        %1776 = vmatpush1.xpose.msra.mxu0 0.0
        %1777 = vmatprep.mubr.f32.mxu0 0.0
        %1778 = vmatmul.mubr.f32.gmra.mrb[0].mxu0 %v1708
        %v1779 = vpop.f32.mrb[0].mxu0
        %v1780 = vadd.f32 0.0, %v1779
        %v1781 = vpop.f32.mrb[0].mxu0
        %1782 = vdwg.mxu0
        %v1784 = vsel %vm738, %v1073, 0
        %v1787 = vsel %vm738, %v1554, 0
        %1789 = vmatprep.subr.mxu0 0.0
        %1790 = vmatpush1.xpose.msra.mxu0 %v1787
        %1791 = vmatprep.subr.mxu0 0.0
        %1792 = vmatpush1.xpose.msra.mxu0 0.0
        %1793 = vmatprep.subr.mxu0 0.0
        %1794 = vmatpush1.xpose.msra.mxu0 0.0
        %1795 = vmatprep.subr.mxu0 0.0
        %1796 = vmatpush1.xpose.msra.mxu0 0.0
        %1797 = vmatprep.subr.mxu0 0.0
        %1798 = vmatpush1.xpose.msra.mxu0 0.0
        %1799 = vmatprep.subr.mxu0 0.0
        %1800 = vmatpush1.xpose.msra.mxu0 0.0
        %1801 = vmatprep.subr.mxu0 0.0
        %1802 = vmatpush1.xpose.msra.mxu0 0.0
        %1803 = vmatprep.subr.mxu0 0.0
        %1804 = vmatpush1.xpose.msra.mxu0 0.0
        %1805 = vmatprep.subr.mxu0 0.0
        %1806 = vmatpush1.xpose.msra.mxu0 0.0
        %1807 = vmatprep.subr.mxu0 0.0
        %1808 = vmatpush1.xpose.msra.mxu0 0.0
        %1809 = vmatprep.subr.mxu0 0.0
        %1810 = vmatpush1.xpose.msra.mxu0 0.0
        %1811 = vmatprep.subr.mxu0 0.0
        %1812 = vmatpush1.xpose.msra.mxu0 0.0
        %1813 = vmatprep.subr.mxu0 0.0
        %1814 = vmatpush1.xpose.msra.mxu0 0.0
        %1815 = vmatprep.subr.mxu0 0.0
        %1816 = vmatpush1.xpose.msra.mxu0 0.0
        %1817 = vmatprep.subr.mxu0 0.0
        %1818 = vmatpush1.xpose.msra.mxu0 0.0
        %1819 = vmatprep.subr.mxu0 0.0
        %1820 = vmatpush1.xpose.msra.mxu0 0.0
        %1821 = vmatprep.subr.mxu0 0.0
        %1822 = vmatpush1.xpose.msra.mxu0 0.0
        %1823 = vmatprep.subr.mxu0 0.0
        %1824 = vmatpush1.xpose.msra.mxu0 0.0
        %1825 = vmatprep.subr.mxu0 0.0
        %1826 = vmatpush1.xpose.msra.mxu0 0.0
        %1827 = vmatprep.subr.mxu0 0.0
        %1828 = vmatpush1.xpose.msra.mxu0 0.0
        %1829 = vmatprep.subr.mxu0 0.0
        %1830 = vmatpush1.xpose.msra.mxu0 0.0
        %1831 = vmatprep.subr.mxu0 0.0
        %1832 = vmatpush1.xpose.msra.mxu0 0.0
        %1833 = vmatprep.subr.mxu0 0.0
        %1834 = vmatpush1.xpose.msra.mxu0 0.0
        %1835 = vmatprep.subr.mxu0 0.0
        %1836 = vmatpush1.xpose.msra.mxu0 0.0
        %1837 = vmatprep.subr.mxu0 0.0
        %1838 = vmatpush1.xpose.msra.mxu0 0.0
        %1839 = vmatprep.subr.mxu0 0.0
        %1840 = vmatpush1.xpose.msra.mxu0 0.0
        %1841 = vmatprep.subr.mxu0 0.0
        %1842 = vmatpush1.xpose.msra.mxu0 0.0
        %1843 = vmatprep.subr.mxu0 0.0
        %1844 = vmatpush1.xpose.msra.mxu0 0.0
        %1845 = vmatprep.subr.mxu0 0.0
        %1846 = vmatpush1.xpose.msra.mxu0 0.0
        %1847 = vmatprep.subr.mxu0 0.0
        %1848 = vmatpush1.xpose.msra.mxu0 0.0
        %1849 = vmatprep.subr.mxu0 0.0
        %1850 = vmatpush1.xpose.msra.mxu0 0.0
        %1851 = vmatprep.subr.mxu0 0.0
        %1852 = vmatpush1.xpose.msra.mxu0 0.0
        %1853 = vmatprep.mubr.f32.mxu0 0.0
        %1854 = vmatmul.mubr.f32.gmra.mrb[0].mxu0 %v1784
        %v1855 = vpop.f32.mrb[0].mxu0
        %v1856 = vadd.f32 0.0, %v1855
        %v1857 = vpop.f32.mrb[0].mxu0
        %1858 = vdwg.mxu0
        %v1859 = vld [vmem:[%s6] sm:$0xff]
        %v1860 = vld [vmem:[%s6 + $0x8] sm:$0xff]
        %v1861 = vld [vmem:[%s6 + $0x10] sm:$0xff]
        %v1862 = vld [vmem:[%s6 + $0x18] sm:$0xff]
        %v1863 = vld [vmem:[%s7] sm:$0xff]
        %v1864 = vld [vmem:[%s7 + $0x8] sm:$0xff]
        %v1865 = vld [vmem:[%s7 + $0x10] sm:$0xff]
        %v1866 = vld [vmem:[%s7 + $0x18] sm:$0xff]
        %1868 = vset.pattern.permute.xlu0 0
        %1869 = vperm.xlu0 %1868, %v1863
        %v1870 = vpop.permute.xlu0 %1869
        %1873 = vset.pattern.permute.xlu0 0
        %1874 = vperm.xlu0 %1873, %v1864
        %v1875 = vpop.permute.xlu0 %1874
        %1878 = vset.pattern.permute.xlu0 0
        %1879 = vperm.xlu0 %1878, %v1865
        %v1880 = vpop.permute.xlu0 %1879
        %1883 = vset.pattern.permute.xlu0 0
        %1884 = vperm.xlu0 %1883, %v1866
        %v1885 = vpop.permute.xlu0 %1884
        %v1888 = vsel %vm914, %v1859, 0
        %v1891 = vsel %vm914, %v1860, 0
        %v1894 = vsel %vm914, %v1861, 0
        %v1897 = vsel %vm914, %v1862, 0
        %1899 = vmatprep.subr.mxu0 0.0
        %1900 = vmatpush1.msra.mxu0 %v1628
        %1901 = vmatprep.subr.mxu0 0.0
        %1902 = vmatpush1.msra.mxu0 %v1704
        %1903 = vmatprep.subr.mxu0 0.0
        %1904 = vmatpush1.msra.mxu0 %v1780
        %1905 = vmatprep.subr.mxu0 0.0
        %1906 = vmatpush1.msra.mxu0 %v1856
        %1907 = vmatprep.subr.mxu0 0.0
        %1908 = vmatpush1.msra.mxu0 0.0
        %1909 = vmatprep.subr.mxu0 0.0
        %1910 = vmatpush1.msra.mxu0 0.0
        %1911 = vmatprep.subr.mxu0 0.0
        %1912 = vmatpush1.msra.mxu0 0.0
        %1913 = vmatprep.subr.mxu0 0.0
        %1914 = vmatpush1.msra.mxu0 0.0
        %1915 = vmatprep.subr.mxu0 0.0
        %1916 = vmatpush1.msra.mxu0 0.0
        %1917 = vmatprep.subr.mxu0 0.0
        %1918 = vmatpush1.msra.mxu0 0.0
        %1919 = vmatprep.subr.mxu0 0.0
        %1920 = vmatpush1.msra.mxu0 0.0
        %1921 = vmatprep.subr.mxu0 0.0
        %1922 = vmatpush1.msra.mxu0 0.0
        %1923 = vmatprep.subr.mxu0 0.0
        %1924 = vmatpush1.msra.mxu0 0.0
        %1925 = vmatprep.subr.mxu0 0.0
        %1926 = vmatpush1.msra.mxu0 0.0
        %1927 = vmatprep.subr.mxu0 0.0
        %1928 = vmatpush1.msra.mxu0 0.0
        %1929 = vmatprep.subr.mxu0 0.0
        %1930 = vmatpush1.msra.mxu0 0.0
        %1931 = vmatprep.subr.mxu0 0.0
        %1932 = vmatpush1.msra.mxu0 0.0
        %1933 = vmatprep.subr.mxu0 0.0
        %1934 = vmatpush1.msra.mxu0 0.0
        %1935 = vmatprep.subr.mxu0 0.0
        %1936 = vmatpush1.msra.mxu0 0.0
        %1937 = vmatprep.subr.mxu0 0.0
        %1938 = vmatpush1.msra.mxu0 0.0
        %1939 = vmatprep.subr.mxu0 0.0
        %1940 = vmatpush1.msra.mxu0 0.0
        %1941 = vmatprep.subr.mxu0 0.0
        %1942 = vmatpush1.msra.mxu0 0.0
        %1943 = vmatprep.subr.mxu0 0.0
        %1944 = vmatpush1.msra.mxu0 0.0
        %1945 = vmatprep.subr.mxu0 0.0
        %1946 = vmatpush1.msra.mxu0 0.0
        %1947 = vmatprep.subr.mxu0 0.0
        %1948 = vmatpush1.msra.mxu0 0.0
        %1949 = vmatprep.subr.mxu0 0.0
        %1950 = vmatpush1.msra.mxu0 0.0
        %1951 = vmatprep.subr.mxu0 0.0
        %1952 = vmatpush1.msra.mxu0 0.0
        %1953 = vmatprep.subr.mxu0 0.0
        %1954 = vmatpush1.msra.mxu0 0.0
        %1955 = vmatprep.subr.mxu0 0.0
        %1956 = vmatpush1.msra.mxu0 0.0
        %1957 = vmatprep.subr.mxu0 0.0
        %1958 = vmatpush1.msra.mxu0 0.0
        %1959 = vmatprep.subr.mxu0 0.0
        %1960 = vmatpush1.msra.mxu0 0.0
        %1961 = vmatprep.subr.mxu0 0.0
        %1962 = vmatpush1.msra.mxu0 0.0
        %1963 = vmatprep.mubr.f32.mxu0 0.0
        %1964 = vmatmul.mubr.f32.gmra.mrb[0].mxu0 %v1888
        %v1965 = vpop.f32.mrb[0].mxu0
        %v1966 = vadd.f32 %v1870, %v1965
        %v1967 = vpop.f32.mrb[0].mxu0
        %1968 = vmatprep.mubr.f32.mxu0 0.0
        %1969 = vmatmul.mubr.f32.gmra.mrb[0].mxu0 %v1891
        %v1970 = vpop.f32.mrb[0].mxu0
        %v1971 = vadd.f32 %v1875, %v1970
        %v1972 = vpop.f32.mrb[0].mxu0
        %1973 = vmatprep.mubr.f32.mxu0 0.0
        %1974 = vmatmul.mubr.f32.gmra.mrb[0].mxu0 %v1894
        %v1975 = vpop.f32.mrb[0].mxu0
        %v1976 = vadd.f32 %v1880, %v1975
        %v1977 = vpop.f32.mrb[0].mxu0
        %1978 = vmatprep.mubr.f32.mxu0 0.0
        %1979 = vmatmul.mubr.f32.gmra.mrb[0].mxu0 %v1897
        %v1980 = vpop.f32.mrb[0].mxu0
        %v1981 = vadd.f32 %v1885, %v1980
        %v1982 = vpop.f32.mrb[0].mxu0
        %1983 = vdwg.mxu0
        %v1984 = vadd.f32 %v713, %v1966
        %v1985 = vadd.f32 %v714, %v1971
        %v1986 = vadd.f32 %v715, %v1976
        %v1987 = vadd.f32 %v716, %v1981
        %v1988 = vld [vmem:[%s8] sm:$0xff]
        %v1989 = vld [vmem:[%s8 + $0x8] sm:$0xff]
        %v1990 = vld [vmem:[%s8 + $0x10] sm:$0xff]
        %v1991 = vld [vmem:[%s8 + $0x18] sm:$0xff]
        %v1992 = vld [vmem:[%s9] sm:$0xff]
        %v1993 = vld [vmem:[%s9 + $0x8] sm:$0xff]
        %v1994 = vld [vmem:[%s9 + $0x10] sm:$0xff]
        %v1995 = vld [vmem:[%s9 + $0x18] sm:$0xff]
        %v1996 = vsel %vm738, %v1984, 0.0
        %v1997 = vsel %vm738, %v1985, 0.0
        %v1998 = vadd.f32 %v1996, %v1997
        %v1999 = vsel %vm738, %v1986, 0.0
        %v2000 = vadd.f32 %v1998, %v1999
        %v2001 = vsel %vm738, %v1987, 0.0
        %v2002 = vadd.f32 %v2000, %v2001
        %v2003 = vrot.slane %v2002, 4
        %v2004 = vadd.f32 %v2002, %v2003
        %v2005 = vrot.slane %v2004, 2
        %v2006 = vadd.f32 %v2004, %v2005
        %v2007 = vrot.slane %v2006, 1
        %v2008 = vadd.f32 %v2006, %v2007
        %v2009 = vmul.f32 %v2008, %v752
        %v2010 = vsub.f32 %v1984, %v2009
        %v2011 = vsub.f32 %v1985, %v2009
        %v2012 = vsub.f32 %v1986, %v2009
        %v2013 = vsub.f32 %v1987, %v2009
        %v2014 = vmul.f32 %v2010, %v2010
        %v2015 = vmul.f32 %v2011, %v2011
        %v2016 = vmul.f32 %v2012, %v2012
        %v2017 = vmul.f32 %v2013, %v2013
        %v2018 = vsel %vm738, %v2014, 0.0
        %v2019 = vsel %vm738, %v2015, 0.0
        %v2020 = vadd.f32 %v2018, %v2019
        %v2021 = vsel %vm738, %v2016, 0.0
        %v2022 = vadd.f32 %v2020, %v2021
        %v2023 = vsel %vm738, %v2017, 0.0
        %v2024 = vadd.f32 %v2022, %v2023
        %v2025 = vrot.slane %v2024, 4
        %v2026 = vadd.f32 %v2024, %v2025
        %v2027 = vrot.slane %v2026, 2
        %v2028 = vadd.f32 %v2026, %v2027
        %v2029 = vrot.slane %v2028, 1
        %v2030 = vadd.f32 %v2028, %v2029
        %v2031 = vmul.f32 %v2030, %v752
        %v2032 = vadd.f32 %v2031, 1e-05
        %v2033 = vrsqrt.pop %v2032
        %v2034 = vmul.f32 %v2010, %v2033
        %v2035 = vmul.f32 %v2011, %v2033
        %v2036 = vmul.f32 %v2012, %v2033
        %v2037 = vmul.f32 %v2013, %v2033
        %2039 = vset.pattern.permute.xlu0 0
        %2040 = vperm.xlu0 %2039, %v1988
        %v2041 = vpop.permute.xlu0 %2040
        %2044 = vset.pattern.permute.xlu0 0
        %2045 = vperm.xlu0 %2044, %v1989
        %v2046 = vpop.permute.xlu0 %2045
        %2049 = vset.pattern.permute.xlu0 0
        %2050 = vperm.xlu0 %2049, %v1990
        %v2051 = vpop.permute.xlu0 %2050
        %2054 = vset.pattern.permute.xlu0 0
        %2055 = vperm.xlu0 %2054, %v1991
        %v2056 = vpop.permute.xlu0 %2055
        %v2058 = vmul.f32 %v2034, %v2041
        %v2059 = vmul.f32 %v2035, %v2046
        %v2060 = vmul.f32 %v2036, %v2051
        %v2061 = vmul.f32 %v2037, %v2056
        %2063 = vset.pattern.permute.xlu0 0
        %2064 = vperm.xlu0 %2063, %v1992
        %v2065 = vpop.permute.xlu0 %2064
        %2068 = vset.pattern.permute.xlu0 0
        %2069 = vperm.xlu0 %2068, %v1993
        %v2070 = vpop.permute.xlu0 %2069
        %2073 = vset.pattern.permute.xlu0 0
        %2074 = vperm.xlu0 %2073, %v1994
        %v2075 = vpop.permute.xlu0 %2074
        %2078 = vset.pattern.permute.xlu0 0
        %2079 = vperm.xlu0 %2078, %v1995
        %v2080 = vpop.permute.xlu0 %2079
        %v2082 = vadd.f32 %v2058, %v2065
        %v2083 = vadd.f32 %v2059, %v2070
        %v2084 = vadd.f32 %v2060, %v2075
        %v2085 = vadd.f32 %v2061, %v2080
        %v2086 = vld [vmem:[%s10] sm:$0xff]
        %v2087 = vld [vmem:[%s10 + $0x8] sm:$0xff]
        %v2088 = vld [vmem:[%s10 + $0x10] sm:$0xff]
        %v2089 = vld [vmem:[%s10 + $0x18] sm:$0xff]
        %v2090 = vld [vmem:[%s11] sm:$0xff]
        %v2091 = vld [vmem:[%s11 + $0x8] sm:$0xff]
        %v2092 = vld [vmem:[%s11 + $0x10] sm:$0xff]
        %v2093 = vld [vmem:[%s11 + $0x18] sm:$0xff]
        %2095 = vset.pattern.permute.xlu0 0
        %2096 = vperm.xlu0 %2095, %v2090
        %v2097 = vpop.permute.xlu0 %2096
        %2100 = vset.pattern.permute.xlu0 0
        %2101 = vperm.xlu0 %2100, %v2091
        %v2102 = vpop.permute.xlu0 %2101
        %2105 = vset.pattern.permute.xlu0 0
        %2106 = vperm.xlu0 %2105, %v2092
        %v2107 = vpop.permute.xlu0 %2106
        %2110 = vset.pattern.permute.xlu0 0
        %2111 = vperm.xlu0 %2110, %v2093
        %v2112 = vpop.permute.xlu0 %2111
        %v2115 = vsel %vm914, %v2086, 0
        %v2118 = vsel %vm914, %v2087, 0
        %v2121 = vsel %vm914, %v2088, 0
        %v2124 = vsel %vm914, %v2089, 0
        %2126 = vmatprep.subr.mxu0 0.0
        %2127 = vmatpush1.msra.mxu0 %v2082
        %2128 = vmatprep.subr.mxu0 0.0
        %2129 = vmatpush1.msra.mxu0 %v2083
        %2130 = vmatprep.subr.mxu0 0.0
        %2131 = vmatpush1.msra.mxu0 %v2084
        %2132 = vmatprep.subr.mxu0 0.0
        %2133 = vmatpush1.msra.mxu0 %v2085
        %2134 = vmatprep.subr.mxu0 0.0
        %2135 = vmatpush1.msra.mxu0 0.0
        %2136 = vmatprep.subr.mxu0 0.0
        %2137 = vmatpush1.msra.mxu0 0.0
        %2138 = vmatprep.subr.mxu0 0.0
        %2139 = vmatpush1.msra.mxu0 0.0
        %2140 = vmatprep.subr.mxu0 0.0
        %2141 = vmatpush1.msra.mxu0 0.0
        %2142 = vmatprep.subr.mxu0 0.0
        %2143 = vmatpush1.msra.mxu0 0.0
        %2144 = vmatprep.subr.mxu0 0.0
        %2145 = vmatpush1.msra.mxu0 0.0
        %2146 = vmatprep.subr.mxu0 0.0
        %2147 = vmatpush1.msra.mxu0 0.0
        %2148 = vmatprep.subr.mxu0 0.0
        %2149 = vmatpush1.msra.mxu0 0.0
        %2150 = vmatprep.subr.mxu0 0.0
        %2151 = vmatpush1.msra.mxu0 0.0
        %2152 = vmatprep.subr.mxu0 0.0
        %2153 = vmatpush1.msra.mxu0 0.0
        %2154 = vmatprep.subr.mxu0 0.0
        %2155 = vmatpush1.msra.mxu0 0.0
        %2156 = vmatprep.subr.mxu0 0.0
        %2157 = vmatpush1.msra.mxu0 0.0
        %2158 = vmatprep.subr.mxu0 0.0
        %2159 = vmatpush1.msra.mxu0 0.0
        %2160 = vmatprep.subr.mxu0 0.0
        %2161 = vmatpush1.msra.mxu0 0.0
        %2162 = vmatprep.subr.mxu0 0.0
        %2163 = vmatpush1.msra.mxu0 0.0
        %2164 = vmatprep.subr.mxu0 0.0
        %2165 = vmatpush1.msra.mxu0 0.0
        %2166 = vmatprep.subr.mxu0 0.0
        %2167 = vmatpush1.msra.mxu0 0.0
        %2168 = vmatprep.subr.mxu0 0.0
        %2169 = vmatpush1.msra.mxu0 0.0
        %2170 = vmatprep.subr.mxu0 0.0
        %2171 = vmatpush1.msra.mxu0 0.0
        %2172 = vmatprep.subr.mxu0 0.0
        %2173 = vmatpush1.msra.mxu0 0.0
        %2174 = vmatprep.subr.mxu0 0.0
        %2175 = vmatpush1.msra.mxu0 0.0
        %2176 = vmatprep.subr.mxu0 0.0
        %2177 = vmatpush1.msra.mxu0 0.0
        %2178 = vmatprep.subr.mxu0 0.0
        %2179 = vmatpush1.msra.mxu0 0.0
        %2180 = vmatprep.subr.mxu0 0.0
        %2181 = vmatpush1.msra.mxu0 0.0
        %2182 = vmatprep.subr.mxu0 0.0
        %2183 = vmatpush1.msra.mxu0 0.0
        %2184 = vmatprep.subr.mxu0 0.0
        %2185 = vmatpush1.msra.mxu0 0.0
        %2186 = vmatprep.subr.mxu0 0.0
        %2187 = vmatpush1.msra.mxu0 0.0
        %2188 = vmatprep.subr.mxu0 0.0
        %2189 = vmatpush1.msra.mxu0 0.0
        %2190 = vmatprep.mubr.f32.mxu0 0.0
        %2191 = vmatmul.mubr.f32.gmra.mrb[0].mxu0 %v2115
        %v2192 = vpop.f32.mrb[0].mxu0
        %v2193 = vadd.f32 %v2097, %v2192
        %v2194 = vpop.f32.mrb[0].mxu0
        %2195 = vmatprep.mubr.f32.mxu0 0.0
        %2196 = vmatmul.mubr.f32.gmra.mrb[0].mxu0 %v2118
        %v2197 = vpop.f32.mrb[0].mxu0
        %v2198 = vadd.f32 %v2102, %v2197
        %v2199 = vpop.f32.mrb[0].mxu0
        %2200 = vmatprep.mubr.f32.mxu0 0.0
        %2201 = vmatmul.mubr.f32.gmra.mrb[0].mxu0 %v2121
        %v2202 = vpop.f32.mrb[0].mxu0
        %v2203 = vadd.f32 %v2107, %v2202
        %v2204 = vpop.f32.mrb[0].mxu0
        %2205 = vmatprep.mubr.f32.mxu0 0.0
        %2206 = vmatmul.mubr.f32.gmra.mrb[0].mxu0 %v2124
        %v2207 = vpop.f32.mrb[0].mxu0
        %v2208 = vadd.f32 %v2112, %v2207
        %v2209 = vpop.f32.mrb[0].mxu0
        %2210 = vdwg.mxu0
        %2211 = vxpose.xlu0.b32.start [1/16] %v2193, 128
        %2212 = vxpose.xlu0.b32.cont [2/16] 0.0, 128
        %2213 = vxpose.xlu0.b32.cont [3/16] 0.0, 128
        %2214 = vxpose.xlu0.b32.cont [4/16] 0.0, 128
        %2215 = vxpose.xlu0.b32.cont [5/16] 0.0, 128
        %2216 = vxpose.xlu0.b32.cont [6/16] 0.0, 128
        %2217 = vxpose.xlu0.b32.cont [7/16] 0.0, 128
        %2218 = vxpose.xlu0.b32.cont [8/16] 0.0, 128
        %2219 = vxpose.xlu0.b32.cont [9/16] 0.0, 128
        %2220 = vxpose.xlu0.b32.cont [10/16] 0.0, 128
        %2221 = vxpose.xlu0.b32.cont [11/16] 0.0, 128
        %2222 = vxpose.xlu0.b32.cont [12/16] 0.0, 128
        %2223 = vxpose.xlu0.b32.cont [13/16] 0.0, 128
        %2224 = vxpose.xlu0.b32.cont [14/16] 0.0, 128
        %2225 = vxpose.xlu0.b32.cont [15/16] 0.0, 128
        %2226 = vxpose.xlu0.b32.end [16/16] 0.0, 128
        %v2227 = vpop.trf.xlu0
        %v2228 = vpop.trf.xlu0
        %v2229 = vpop.trf.xlu0
        %v2230 = vpop.trf.xlu0
        %v2231 = vpop.trf.xlu0
        %v2232 = vpop.trf.xlu0
        %v2233 = vpop.trf.xlu0
        %v2234 = vpop.trf.xlu0
        %v2235 = vpop.trf.xlu0
        %v2236 = vpop.trf.xlu0
        %v2237 = vpop.trf.xlu0
        %v2238 = vpop.trf.xlu0
        %v2239 = vpop.trf.xlu0
        %v2240 = vpop.trf.xlu0
        %v2241 = vpop.trf.xlu0
        %v2242 = vpop.trf.xlu0
        %2243 = vxpose.xlu0.b32.start [1/16] %v2198, 128
        %2244 = vxpose.xlu0.b32.cont [2/16] 0.0, 128
        %2245 = vxpose.xlu0.b32.cont [3/16] 0.0, 128
        %2246 = vxpose.xlu0.b32.cont [4/16] 0.0, 128
        %2247 = vxpose.xlu0.b32.cont [5/16] 0.0, 128
        %2248 = vxpose.xlu0.b32.cont [6/16] 0.0, 128
        %2249 = vxpose.xlu0.b32.cont [7/16] 0.0, 128
        %2250 = vxpose.xlu0.b32.cont [8/16] 0.0, 128
        %2251 = vxpose.xlu0.b32.cont [9/16] 0.0, 128
        %2252 = vxpose.xlu0.b32.cont [10/16] 0.0, 128
        %2253 = vxpose.xlu0.b32.cont [11/16] 0.0, 128
        %2254 = vxpose.xlu0.b32.cont [12/16] 0.0, 128
        %2255 = vxpose.xlu0.b32.cont [13/16] 0.0, 128
        %2256 = vxpose.xlu0.b32.cont [14/16] 0.0, 128
        %2257 = vxpose.xlu0.b32.cont [15/16] 0.0, 128
        %2258 = vxpose.xlu0.b32.end [16/16] 0.0, 128
        %v2259 = vpop.trf.xlu0
        %v2260 = vpop.trf.xlu0
        %v2261 = vpop.trf.xlu0
        %v2262 = vpop.trf.xlu0
        %v2263 = vpop.trf.xlu0
        %v2264 = vpop.trf.xlu0
        %v2265 = vpop.trf.xlu0
        %v2266 = vpop.trf.xlu0
        %v2267 = vpop.trf.xlu0
        %v2268 = vpop.trf.xlu0
        %v2269 = vpop.trf.xlu0
        %v2270 = vpop.trf.xlu0
        %v2271 = vpop.trf.xlu0
        %v2272 = vpop.trf.xlu0
        %v2273 = vpop.trf.xlu0
        %v2274 = vpop.trf.xlu0
        %2275 = vxpose.xlu0.b32.start [1/16] %v2203, 128
        %2276 = vxpose.xlu0.b32.cont [2/16] 0.0, 128
        %2277 = vxpose.xlu0.b32.cont [3/16] 0.0, 128
        %2278 = vxpose.xlu0.b32.cont [4/16] 0.0, 128
        %2279 = vxpose.xlu0.b32.cont [5/16] 0.0, 128
        %2280 = vxpose.xlu0.b32.cont [6/16] 0.0, 128
        %2281 = vxpose.xlu0.b32.cont [7/16] 0.0, 128
        %2282 = vxpose.xlu0.b32.cont [8/16] 0.0, 128
        %2283 = vxpose.xlu0.b32.cont [9/16] 0.0, 128
        %2284 = vxpose.xlu0.b32.cont [10/16] 0.0, 128
        %2285 = vxpose.xlu0.b32.cont [11/16] 0.0, 128
        %2286 = vxpose.xlu0.b32.cont [12/16] 0.0, 128
        %2287 = vxpose.xlu0.b32.cont [13/16] 0.0, 128
        %2288 = vxpose.xlu0.b32.cont [14/16] 0.0, 128
        %2289 = vxpose.xlu0.b32.cont [15/16] 0.0, 128
        %2290 = vxpose.xlu0.b32.end [16/16] 0.0, 128
        %v2291 = vpop.trf.xlu0
        %v2292 = vpop.trf.xlu0
        %v2293 = vpop.trf.xlu0
        %v2294 = vpop.trf.xlu0
        %v2295 = vpop.trf.xlu0
        %v2296 = vpop.trf.xlu0
        %v2297 = vpop.trf.xlu0
        %v2298 = vpop.trf.xlu0
        %v2299 = vpop.trf.xlu0
        %v2300 = vpop.trf.xlu0
        %v2301 = vpop.trf.xlu0
        %v2302 = vpop.trf.xlu0
        %v2303 = vpop.trf.xlu0
        %v2304 = vpop.trf.xlu0
        %v2305 = vpop.trf.xlu0
        %v2306 = vpop.trf.xlu0
        %2307 = vxpose.xlu0.b32.start [1/16] %v2208, 128
        %2308 = vxpose.xlu0.b32.cont [2/16] 0.0, 128
        %2309 = vxpose.xlu0.b32.cont [3/16] 0.0, 128
        %2310 = vxpose.xlu0.b32.cont [4/16] 0.0, 128
        %2311 = vxpose.xlu0.b32.cont [5/16] 0.0, 128
        %2312 = vxpose.xlu0.b32.cont [6/16] 0.0, 128
        %2313 = vxpose.xlu0.b32.cont [7/16] 0.0, 128
        %2314 = vxpose.xlu0.b32.cont [8/16] 0.0, 128
        %2315 = vxpose.xlu0.b32.cont [9/16] 0.0, 128
        %2316 = vxpose.xlu0.b32.cont [10/16] 0.0, 128
        %2317 = vxpose.xlu0.b32.cont [11/16] 0.0, 128
        %2318 = vxpose.xlu0.b32.cont [12/16] 0.0, 128
        %2319 = vxpose.xlu0.b32.cont [13/16] 0.0, 128
        %2320 = vxpose.xlu0.b32.cont [14/16] 0.0, 128
        %2321 = vxpose.xlu0.b32.cont [15/16] 0.0, 128
        %2322 = vxpose.xlu0.b32.end [16/16] 0.0, 128
        %v2323 = vpop.trf.xlu0
        %v2324 = vpop.trf.xlu0
        %v2325 = vpop.trf.xlu0
        %v2326 = vpop.trf.xlu0
        %v2327 = vpop.trf.xlu0
        %v2328 = vpop.trf.xlu0
        %v2329 = vpop.trf.xlu0
        %v2330 = vpop.trf.xlu0
        %v2331 = vpop.trf.xlu0
        %v2332 = vpop.trf.xlu0
        %v2333 = vpop.trf.xlu0
        %v2334 = vpop.trf.xlu0
        %v2335 = vpop.trf.xlu0
        %v2336 = vpop.trf.xlu0
        %v2337 = vpop.trf.xlu0
        %v2338 = vpop.trf.xlu0
        %v2339 = vld [vmem:[%s12] sm:$0xff]
        %v2340 = vld [vmem:[%s12 + $0x8] sm:$0xff]
        %v2341 = vld [vmem:[%s12 + $0x10] sm:$0xff]
        %v2342 = vld [vmem:[%s12 + $0x18] sm:$0xff]
        %v2343 = vld [vmem:[%s12 + $0x20] sm:$0xff]
        %v2344 = vld [vmem:[%s12 + $0x28] sm:$0xff]
        %v2345 = vld [vmem:[%s12 + $0x30] sm:$0xff]
        %v2346 = vld [vmem:[%s12 + $0x38] sm:$0xff]
        %v2347 = vld [vmem:[%s13] sm:$0xff]
        %v2348 = vld [vmem:[%s13 + $0x8] sm:$0xff]
        %v2349 = vld [vmem:[%s13 + $0x10] sm:$0xff]
        %v2350 = vld [vmem:[%s13 + $0x18] sm:$0xff]
        %v2351 = vld [vmem:[%s13 + $0x20] sm:$0xff]
        %v2352 = vld [vmem:[%s13 + $0x28] sm:$0xff]
        %v2353 = vld [vmem:[%s13 + $0x30] sm:$0xff]
        %v2354 = vld [vmem:[%s13 + $0x38] sm:$0xff]
        %2356 = vset.pattern.permute.xlu0 0
        %2357 = vperm.xlu0 %2356, %v2347
        %v2358 = vpop.permute.xlu0 %2357
        %2361 = vset.pattern.permute.xlu0 0
        %2362 = vperm.xlu0 %2361, %v2348
        %v2363 = vpop.permute.xlu0 %2362
        %2366 = vset.pattern.permute.xlu0 0
        %2367 = vperm.xlu0 %2366, %v2349
        %v2368 = vpop.permute.xlu0 %2367
        %2371 = vset.pattern.permute.xlu0 0
        %2372 = vperm.xlu0 %2371, %v2350
        %v2373 = vpop.permute.xlu0 %2372
        %2376 = vset.pattern.permute.xlu0 0
        %2377 = vperm.xlu0 %2376, %v2351
        %v2378 = vpop.permute.xlu0 %2377
        %2381 = vset.pattern.permute.xlu0 0
        %2382 = vperm.xlu0 %2381, %v2352
        %v2383 = vpop.permute.xlu0 %2382
        %2386 = vset.pattern.permute.xlu0 0
        %2387 = vperm.xlu0 %2386, %v2353
        %v2388 = vpop.permute.xlu0 %2387
        %2391 = vset.pattern.permute.xlu0 0
        %2392 = vperm.xlu0 %2391, %v2354
        %v2393 = vpop.permute.xlu0 %2392
        %v2396 = vsel %vm914, %v2339, 0
        %v2399 = vsel %vm914, %v2340, 0
        %v2402 = vsel %vm914, %v2341, 0
        %v2405 = vsel %vm914, %v2342, 0
        %v2408 = vsel %vm914, %v2343, 0
        %v2411 = vsel %vm914, %v2344, 0
        %v2414 = vsel %vm914, %v2345, 0
        %v2417 = vsel %vm914, %v2346, 0
        %v2420 = vsel %vm914, %v729, 0
        %2422 = vmatprep.subr.mxu0 0.0
        %2423 = vmatpush1.xpose.msra.mxu0 %v2420
        %2424 = vmatprep.subr.mxu0 0.0
        %2425 = vmatpush1.xpose.msra.mxu0 0.0
        %2426 = vmatprep.subr.mxu0 0.0
        %2427 = vmatpush1.xpose.msra.mxu0 0.0
        %2428 = vmatprep.subr.mxu0 0.0
        %2429 = vmatpush1.xpose.msra.mxu0 0.0
        %2430 = vmatprep.subr.mxu0 0.0
        %2431 = vmatpush1.xpose.msra.mxu0 0.0
        %2432 = vmatprep.subr.mxu0 0.0
        %2433 = vmatpush1.xpose.msra.mxu0 0.0
        %2434 = vmatprep.subr.mxu0 0.0
        %2435 = vmatpush1.xpose.msra.mxu0 0.0
        %2436 = vmatprep.subr.mxu0 0.0
        %2437 = vmatpush1.xpose.msra.mxu0 0.0
        %2438 = vmatprep.subr.mxu0 0.0
        %2439 = vmatpush1.xpose.msra.mxu0 0.0
        %2440 = vmatprep.subr.mxu0 0.0
        %2441 = vmatpush1.xpose.msra.mxu0 0.0
        %2442 = vmatprep.subr.mxu0 0.0
        %2443 = vmatpush1.xpose.msra.mxu0 0.0
        %2444 = vmatprep.subr.mxu0 0.0
        %2445 = vmatpush1.xpose.msra.mxu0 0.0
        %2446 = vmatprep.subr.mxu0 0.0
        %2447 = vmatpush1.xpose.msra.mxu0 0.0
        %2448 = vmatprep.subr.mxu0 0.0
        %2449 = vmatpush1.xpose.msra.mxu0 0.0
        %2450 = vmatprep.subr.mxu0 0.0
        %2451 = vmatpush1.xpose.msra.mxu0 0.0
        %2452 = vmatprep.subr.mxu0 0.0
        %2453 = vmatpush1.xpose.msra.mxu0 0.0
        %2454 = vmatprep.subr.mxu0 0.0
        %2455 = vmatpush1.xpose.msra.mxu0 0.0
        %2456 = vmatprep.subr.mxu0 0.0
        %2457 = vmatpush1.xpose.msra.mxu0 0.0
        %2458 = vmatprep.subr.mxu0 0.0
        %2459 = vmatpush1.xpose.msra.mxu0 0.0
        %2460 = vmatprep.subr.mxu0 0.0
        %2461 = vmatpush1.xpose.msra.mxu0 0.0
        %2462 = vmatprep.subr.mxu0 0.0
        %2463 = vmatpush1.xpose.msra.mxu0 0.0
        %2464 = vmatprep.subr.mxu0 0.0
        %2465 = vmatpush1.xpose.msra.mxu0 0.0
        %2466 = vmatprep.subr.mxu0 0.0
        %2467 = vmatpush1.xpose.msra.mxu0 0.0
        %2468 = vmatprep.subr.mxu0 0.0
        %2469 = vmatpush1.xpose.msra.mxu0 0.0
        %2470 = vmatprep.subr.mxu0 0.0
        %2471 = vmatpush1.xpose.msra.mxu0 0.0
        %2472 = vmatprep.subr.mxu0 0.0
        %2473 = vmatpush1.xpose.msra.mxu0 0.0
        %2474 = vmatprep.subr.mxu0 0.0
        %2475 = vmatpush1.xpose.msra.mxu0 0.0
        %2476 = vmatprep.subr.mxu0 0.0
        %2477 = vmatpush1.xpose.msra.mxu0 0.0
        %2478 = vmatprep.subr.mxu0 0.0
        %2479 = vmatpush1.xpose.msra.mxu0 0.0
        %2480 = vmatprep.subr.mxu0 0.0
        %2481 = vmatpush1.xpose.msra.mxu0 0.0
        %2482 = vmatprep.subr.mxu0 0.0
        %2483 = vmatpush1.xpose.msra.mxu0 0.0
        %2484 = vmatprep.subr.mxu0 0.0
        %2485 = vmatpush1.xpose.msra.mxu0 0.0
        %2486 = vmatprep.mubr.f32.mxu0 0.0
        %2487 = vmatmul.mubr.f32.gmra.mrb[0].mxu0 %v2396
        %v2488 = vpop.f32.mrb[0].mxu0
        %v2489 = vadd.f32 %v2358, %v2488
        %v2490 = vpop.f32.mrb[0].mxu0
        %2491 = vmatprep.mubr.f32.mxu0 0.0
        %2492 = vmatmul.mubr.f32.gmra.mrb[0].mxu0 %v2399
        %v2493 = vpop.f32.mrb[0].mxu0
        %v2494 = vadd.f32 %v2363, %v2493
        %v2495 = vpop.f32.mrb[0].mxu0
        %2496 = vmatprep.mubr.f32.mxu0 0.0
        %2497 = vmatmul.mubr.f32.gmra.mrb[0].mxu0 %v2402
        %v2498 = vpop.f32.mrb[0].mxu0
        %v2499 = vadd.f32 %v2368, %v2498
        %v2500 = vpop.f32.mrb[0].mxu0
        %2501 = vmatprep.mubr.f32.mxu0 0.0
        %2502 = vmatmul.mubr.f32.gmra.mrb[0].mxu0 %v2405
        %v2503 = vpop.f32.mrb[0].mxu0
        %v2504 = vadd.f32 %v2373, %v2503
        %v2505 = vpop.f32.mrb[0].mxu0
        %2506 = vmatprep.mubr.f32.mxu0 0.0
        %2507 = vmatmul.mubr.f32.gmra.mrb[0].mxu0 %v2408
        %v2508 = vpop.f32.mrb[0].mxu0
        %v2509 = vadd.f32 %v2378, %v2508
        %v2510 = vpop.f32.mrb[0].mxu0
        %2511 = vmatprep.mubr.f32.mxu0 0.0
        %2512 = vmatmul.mubr.f32.gmra.mrb[0].mxu0 %v2411
        %v2513 = vpop.f32.mrb[0].mxu0
        %v2514 = vadd.f32 %v2383, %v2513
        %v2515 = vpop.f32.mrb[0].mxu0
        %2516 = vmatprep.mubr.f32.mxu0 0.0
        %2517 = vmatmul.mubr.f32.gmra.mrb[0].mxu0 %v2414
        %v2518 = vpop.f32.mrb[0].mxu0
        %v2519 = vadd.f32 %v2388, %v2518
        %v2520 = vpop.f32.mrb[0].mxu0
        %2521 = vmatprep.mubr.f32.mxu0 0.0
        %2522 = vmatmul.mubr.f32.gmra.mrb[0].mxu0 %v2417
        %v2523 = vpop.f32.mrb[0].mxu0
        %v2524 = vadd.f32 %v2393, %v2523
        %v2525 = vpop.f32.mrb[0].mxu0
        %2526 = vdwg.mxu0
        %v2528 = vsel %vm738, %v2227, 0
        %2530 = vmatprep.subr.mxu0 0.0
        %2531 = vmatpush1.msra.mxu0 %v2489
        %2532 = vmatprep.subr.mxu0 0.0
        %2533 = vmatpush1.msra.mxu0 0.0
        %2534 = vmatprep.subr.mxu0 0.0
        %2535 = vmatpush1.msra.mxu0 0.0
        %2536 = vmatprep.subr.mxu0 0.0
        %2537 = vmatpush1.msra.mxu0 0.0
        %2538 = vmatprep.subr.mxu0 0.0
        %2539 = vmatpush1.msra.mxu0 0.0
        %2540 = vmatprep.subr.mxu0 0.0
        %2541 = vmatpush1.msra.mxu0 0.0
        %2542 = vmatprep.subr.mxu0 0.0
        %2543 = vmatpush1.msra.mxu0 0.0
        %2544 = vmatprep.subr.mxu0 0.0
        %2545 = vmatpush1.msra.mxu0 0.0
        %2546 = vmatprep.subr.mxu0 0.0
        %2547 = vmatpush1.msra.mxu0 0.0
        %2548 = vmatprep.subr.mxu0 0.0
        %2549 = vmatpush1.msra.mxu0 0.0
        %2550 = vmatprep.subr.mxu0 0.0
        %2551 = vmatpush1.msra.mxu0 0.0
        %2552 = vmatprep.subr.mxu0 0.0
        %2553 = vmatpush1.msra.mxu0 0.0
        %2554 = vmatprep.subr.mxu0 0.0
        %2555 = vmatpush1.msra.mxu0 0.0
        %2556 = vmatprep.subr.mxu0 0.0
        %2557 = vmatpush1.msra.mxu0 0.0
        %2558 = vmatprep.subr.mxu0 0.0
        %2559 = vmatpush1.msra.mxu0 0.0
        %2560 = vmatprep.subr.mxu0 0.0
        %2561 = vmatpush1.msra.mxu0 0.0
        %2562 = vmatprep.subr.mxu0 0.0
        %2563 = vmatpush1.msra.mxu0 0.0
        %2564 = vmatprep.subr.mxu0 0.0
        %2565 = vmatpush1.msra.mxu0 0.0
        %2566 = vmatprep.subr.mxu0 0.0
        %2567 = vmatpush1.msra.mxu0 0.0
        %2568 = vmatprep.subr.mxu0 0.0
        %2569 = vmatpush1.msra.mxu0 0.0
        %2570 = vmatprep.subr.mxu0 0.0
        %2571 = vmatpush1.msra.mxu0 0.0
        %2572 = vmatprep.subr.mxu0 0.0
        %2573 = vmatpush1.msra.mxu0 0.0
        %2574 = vmatprep.subr.mxu0 0.0
        %2575 = vmatpush1.msra.mxu0 0.0
        %2576 = vmatprep.subr.mxu0 0.0
        %2577 = vmatpush1.msra.mxu0 0.0
        %2578 = vmatprep.subr.mxu0 0.0
        %2579 = vmatpush1.msra.mxu0 0.0
        %2580 = vmatprep.subr.mxu0 0.0
        %2581 = vmatpush1.msra.mxu0 0.0
        %2582 = vmatprep.subr.mxu0 0.0
        %2583 = vmatpush1.msra.mxu0 0.0
        %2584 = vmatprep.subr.mxu0 0.0
        %2585 = vmatpush1.msra.mxu0 0.0
        %2586 = vmatprep.subr.mxu0 0.0
        %2587 = vmatpush1.msra.mxu0 0.0
        %2588 = vmatprep.subr.mxu0 0.0
        %2589 = vmatpush1.msra.mxu0 0.0
        %2590 = vmatprep.subr.mxu0 0.0
        %2591 = vmatpush1.msra.mxu0 0.0
        %2592 = vmatprep.subr.mxu0 0.0
        %2593 = vmatpush1.msra.mxu0 0.0
        %2594 = vmatprep.mubr.f32.mxu0 0.0
        %2595 = vmatmul.mubr.f32.gmra.mrb[0].mxu0 %v2528
        %v2596 = vpop.f32.mrb[0].mxu0
        %v2597 = vadd.f32 0.0, %v2596
        %v2598 = vpop.f32.mrb[0].mxu0
        %2599 = vdwg.mxu0
        %v2601 = vsel %vm738, %v2259, 0
        %2603 = vmatprep.subr.mxu0 0.0
        %2604 = vmatpush1.msra.mxu0 %v2494
        %2605 = vmatprep.subr.mxu0 0.0
        %2606 = vmatpush1.msra.mxu0 0.0
        %2607 = vmatprep.subr.mxu0 0.0
        %2608 = vmatpush1.msra.mxu0 0.0
        %2609 = vmatprep.subr.mxu0 0.0
        %2610 = vmatpush1.msra.mxu0 0.0
        %2611 = vmatprep.subr.mxu0 0.0
        %2612 = vmatpush1.msra.mxu0 0.0
        %2613 = vmatprep.subr.mxu0 0.0
        %2614 = vmatpush1.msra.mxu0 0.0
        %2615 = vmatprep.subr.mxu0 0.0
        %2616 = vmatpush1.msra.mxu0 0.0
        %2617 = vmatprep.subr.mxu0 0.0
        %2618 = vmatpush1.msra.mxu0 0.0
        %2619 = vmatprep.subr.mxu0 0.0
        %2620 = vmatpush1.msra.mxu0 0.0
        %2621 = vmatprep.subr.mxu0 0.0
        %2622 = vmatpush1.msra.mxu0 0.0
        %2623 = vmatprep.subr.mxu0 0.0
        %2624 = vmatpush1.msra.mxu0 0.0
        %2625 = vmatprep.subr.mxu0 0.0
        %2626 = vmatpush1.msra.mxu0 0.0
        %2627 = vmatprep.subr.mxu0 0.0
        %2628 = vmatpush1.msra.mxu0 0.0
        %2629 = vmatprep.subr.mxu0 0.0
        %2630 = vmatpush1.msra.mxu0 0.0
        %2631 = vmatprep.subr.mxu0 0.0
        %2632 = vmatpush1.msra.mxu0 0.0
        %2633 = vmatprep.subr.mxu0 0.0
        %2634 = vmatpush1.msra.mxu0 0.0
        %2635 = vmatprep.subr.mxu0 0.0
        %2636 = vmatpush1.msra.mxu0 0.0
        %2637 = vmatprep.subr.mxu0 0.0
        %2638 = vmatpush1.msra.mxu0 0.0
        %2639 = vmatprep.subr.mxu0 0.0
        %2640 = vmatpush1.msra.mxu0 0.0
        %2641 = vmatprep.subr.mxu0 0.0
        %2642 = vmatpush1.msra.mxu0 0.0
        %2643 = vmatprep.subr.mxu0 0.0
        %2644 = vmatpush1.msra.mxu0 0.0
        %2645 = vmatprep.subr.mxu0 0.0
        %2646 = vmatpush1.msra.mxu0 0.0
        %2647 = vmatprep.subr.mxu0 0.0
        %2648 = vmatpush1.msra.mxu0 0.0
        %2649 = vmatprep.subr.mxu0 0.0
        %2650 = vmatpush1.msra.mxu0 0.0
        %2651 = vmatprep.subr.mxu0 0.0
        %2652 = vmatpush1.msra.mxu0 0.0
        %2653 = vmatprep.subr.mxu0 0.0
        %2654 = vmatpush1.msra.mxu0 0.0
        %2655 = vmatprep.subr.mxu0 0.0
        %2656 = vmatpush1.msra.mxu0 0.0
        %2657 = vmatprep.subr.mxu0 0.0
        %2658 = vmatpush1.msra.mxu0 0.0
        %2659 = vmatprep.subr.mxu0 0.0
        %2660 = vmatpush1.msra.mxu0 0.0
        %2661 = vmatprep.subr.mxu0 0.0
        %2662 = vmatpush1.msra.mxu0 0.0
        %2663 = vmatprep.subr.mxu0 0.0
        %2664 = vmatpush1.msra.mxu0 0.0
        %2665 = vmatprep.subr.mxu0 0.0
        %2666 = vmatpush1.msra.mxu0 0.0
        %2667 = vmatprep.mubr.f32.mxu0 0.0
        %2668 = vmatmul.mubr.f32.gmra.mrb[0].mxu0 %v2601
        %v2669 = vpop.f32.mrb[0].mxu0
        %v2670 = vadd.f32 0.0, %v2669
        %v2671 = vpop.f32.mrb[0].mxu0
        %2672 = vdwg.mxu0
        %v2674 = vsel %vm738, %v2291, 0
        %2676 = vmatprep.subr.mxu0 0.0
        %2677 = vmatpush1.msra.mxu0 %v2499
        %2678 = vmatprep.subr.mxu0 0.0
        %2679 = vmatpush1.msra.mxu0 0.0
        %2680 = vmatprep.subr.mxu0 0.0
        %2681 = vmatpush1.msra.mxu0 0.0
        %2682 = vmatprep.subr.mxu0 0.0
        %2683 = vmatpush1.msra.mxu0 0.0
        %2684 = vmatprep.subr.mxu0 0.0
        %2685 = vmatpush1.msra.mxu0 0.0
        %2686 = vmatprep.subr.mxu0 0.0
        %2687 = vmatpush1.msra.mxu0 0.0
        %2688 = vmatprep.subr.mxu0 0.0
        %2689 = vmatpush1.msra.mxu0 0.0
        %2690 = vmatprep.subr.mxu0 0.0
        %2691 = vmatpush1.msra.mxu0 0.0
        %2692 = vmatprep.subr.mxu0 0.0
        %2693 = vmatpush1.msra.mxu0 0.0
        %2694 = vmatprep.subr.mxu0 0.0
        %2695 = vmatpush1.msra.mxu0 0.0
        %2696 = vmatprep.subr.mxu0 0.0
        %2697 = vmatpush1.msra.mxu0 0.0
        %2698 = vmatprep.subr.mxu0 0.0
        %2699 = vmatpush1.msra.mxu0 0.0
        %2700 = vmatprep.subr.mxu0 0.0
        %2701 = vmatpush1.msra.mxu0 0.0
        %2702 = vmatprep.subr.mxu0 0.0
        %2703 = vmatpush1.msra.mxu0 0.0
        %2704 = vmatprep.subr.mxu0 0.0
        %2705 = vmatpush1.msra.mxu0 0.0
        %2706 = vmatprep.subr.mxu0 0.0
        %2707 = vmatpush1.msra.mxu0 0.0
        %2708 = vmatprep.subr.mxu0 0.0
        %2709 = vmatpush1.msra.mxu0 0.0
        %2710 = vmatprep.subr.mxu0 0.0
        %2711 = vmatpush1.msra.mxu0 0.0
        %2712 = vmatprep.subr.mxu0 0.0
        %2713 = vmatpush1.msra.mxu0 0.0
        %2714 = vmatprep.subr.mxu0 0.0
        %2715 = vmatpush1.msra.mxu0 0.0
        %2716 = vmatprep.subr.mxu0 0.0
        %2717 = vmatpush1.msra.mxu0 0.0
        %2718 = vmatprep.subr.mxu0 0.0
        %2719 = vmatpush1.msra.mxu0 0.0
        %2720 = vmatprep.subr.mxu0 0.0
        %2721 = vmatpush1.msra.mxu0 0.0
        %2722 = vmatprep.subr.mxu0 0.0
        %2723 = vmatpush1.msra.mxu0 0.0
        %2724 = vmatprep.subr.mxu0 0.0
        %2725 = vmatpush1.msra.mxu0 0.0
        %2726 = vmatprep.subr.mxu0 0.0
        %2727 = vmatpush1.msra.mxu0 0.0
        %2728 = vmatprep.subr.mxu0 0.0
        %2729 = vmatpush1.msra.mxu0 0.0
        %2730 = vmatprep.subr.mxu0 0.0
        %2731 = vmatpush1.msra.mxu0 0.0
        %2732 = vmatprep.subr.mxu0 0.0
        %2733 = vmatpush1.msra.mxu0 0.0
        %2734 = vmatprep.subr.mxu0 0.0
        %2735 = vmatpush1.msra.mxu0 0.0
        %2736 = vmatprep.subr.mxu0 0.0
        %2737 = vmatpush1.msra.mxu0 0.0
        %2738 = vmatprep.subr.mxu0 0.0
        %2739 = vmatpush1.msra.mxu0 0.0
        %2740 = vmatprep.mubr.f32.mxu0 0.0
        %2741 = vmatmul.mubr.f32.gmra.mrb[0].mxu0 %v2674
        %v2742 = vpop.f32.mrb[0].mxu0
        %v2743 = vadd.f32 0.0, %v2742
        %v2744 = vpop.f32.mrb[0].mxu0
        %2745 = vdwg.mxu0
        %v2747 = vsel %vm738, %v2323, 0
        %2749 = vmatprep.subr.mxu0 0.0
        %2750 = vmatpush1.msra.mxu0 %v2504
        %2751 = vmatprep.subr.mxu0 0.0
        %2752 = vmatpush1.msra.mxu0 0.0
        %2753 = vmatprep.subr.mxu0 0.0
        %2754 = vmatpush1.msra.mxu0 0.0
        %2755 = vmatprep.subr.mxu0 0.0
        %2756 = vmatpush1.msra.mxu0 0.0
        %2757 = vmatprep.subr.mxu0 0.0
        %2758 = vmatpush1.msra.mxu0 0.0
        %2759 = vmatprep.subr.mxu0 0.0
        %2760 = vmatpush1.msra.mxu0 0.0
        %2761 = vmatprep.subr.mxu0 0.0
        %2762 = vmatpush1.msra.mxu0 0.0
        %2763 = vmatprep.subr.mxu0 0.0
        %2764 = vmatpush1.msra.mxu0 0.0
        %2765 = vmatprep.subr.mxu0 0.0
        %2766 = vmatpush1.msra.mxu0 0.0
        %2767 = vmatprep.subr.mxu0 0.0
        %2768 = vmatpush1.msra.mxu0 0.0
        %2769 = vmatprep.subr.mxu0 0.0
        %2770 = vmatpush1.msra.mxu0 0.0
        %2771 = vmatprep.subr.mxu0 0.0
        %2772 = vmatpush1.msra.mxu0 0.0
        %2773 = vmatprep.subr.mxu0 0.0
        %2774 = vmatpush1.msra.mxu0 0.0
        %2775 = vmatprep.subr.mxu0 0.0
        %2776 = vmatpush1.msra.mxu0 0.0
        %2777 = vmatprep.subr.mxu0 0.0
        %2778 = vmatpush1.msra.mxu0 0.0
        %2779 = vmatprep.subr.mxu0 0.0
        %2780 = vmatpush1.msra.mxu0 0.0
        %2781 = vmatprep.subr.mxu0 0.0
        %2782 = vmatpush1.msra.mxu0 0.0
        %2783 = vmatprep.subr.mxu0 0.0
        %2784 = vmatpush1.msra.mxu0 0.0
        %2785 = vmatprep.subr.mxu0 0.0
        %2786 = vmatpush1.msra.mxu0 0.0
        %2787 = vmatprep.subr.mxu0 0.0
        %2788 = vmatpush1.msra.mxu0 0.0
        %2789 = vmatprep.subr.mxu0 0.0
        %2790 = vmatpush1.msra.mxu0 0.0
        %2791 = vmatprep.subr.mxu0 0.0
        %2792 = vmatpush1.msra.mxu0 0.0
        %2793 = vmatprep.subr.mxu0 0.0
        %2794 = vmatpush1.msra.mxu0 0.0
        %2795 = vmatprep.subr.mxu0 0.0
        %2796 = vmatpush1.msra.mxu0 0.0
        %2797 = vmatprep.subr.mxu0 0.0
        %2798 = vmatpush1.msra.mxu0 0.0
        %2799 = vmatprep.subr.mxu0 0.0
        %2800 = vmatpush1.msra.mxu0 0.0
        %2801 = vmatprep.subr.mxu0 0.0
        %2802 = vmatpush1.msra.mxu0 0.0
        %2803 = vmatprep.subr.mxu0 0.0
        %2804 = vmatpush1.msra.mxu0 0.0
        %2805 = vmatprep.subr.mxu0 0.0
        %2806 = vmatpush1.msra.mxu0 0.0
        %2807 = vmatprep.subr.mxu0 0.0
        %2808 = vmatpush1.msra.mxu0 0.0
        %2809 = vmatprep.subr.mxu0 0.0
        %2810 = vmatpush1.msra.mxu0 0.0
        %2811 = vmatprep.subr.mxu0 0.0
        %2812 = vmatpush1.msra.mxu0 0.0
        %2813 = vmatprep.mubr.f32.mxu0 0.0
        %2814 = vmatmul.mubr.f32.gmra.mrb[0].mxu0 %v2747
        %v2815 = vpop.f32.mrb[0].mxu0
        %v2816 = vadd.f32 0.0, %v2815
        %v2817 = vpop.f32.mrb[0].mxu0
        %2818 = vdwg.mxu0
        %v2819 = vmul.f32 %v2597, 0.35355338
        %v2820 = vmul.f32 %v2670, 0.35355338
        %v2821 = vmul.f32 %v2743, 0.35355338
        %v2822 = vmul.f32 %v2816, 0.35355338
        %v2823 = vsel %vm738, %v2819, -inf
        %2824 = vmax.xlane.f32.xlu0 %v2823
        %v2825 = vpop.xlane.xlu0 %2824
        %v2826 = vsel %vm738, %v2820, -inf
        %2827 = vmax.xlane.f32.xlu0 %v2826
        %v2828 = vpop.xlane.xlu0 %2827
        %v2829 = vsel %vm738, %v2821, -inf
        %2830 = vmax.xlane.f32.xlu0 %v2829
        %v2831 = vpop.xlane.xlu0 %2830
        %v2832 = vsel %vm738, %v2822, -inf
        %2833 = vmax.xlane.f32.xlu0 %v2832
        %v2834 = vpop.xlane.xlu0 %2833
        %v2835 = vsub.f32 %v2819, %v2825
        %v2836 = vsub.f32 %v2820, %v2828
        %v2837 = vsub.f32 %v2821, %v2831
        %v2838 = vsub.f32 %v2822, %v2834
        %v2839 = vmul.f32 %v2835, 1.442695
        %v2840 = vpow.pop %v2839
        %v2841 = vmul.f32 %v2836, 1.442695
        %v2842 = vpow.pop %v2841
        %v2843 = vmul.f32 %v2837, 1.442695
        %v2844 = vpow.pop %v2843
        %v2845 = vmul.f32 %v2838, 1.442695
        %v2846 = vpow.pop %v2845
        %v2847 = vsel %vm738, %v2840, 0.0
        %2848 = vadd.xlane.f32.xlu0 %v2847
        %v2849 = vpop.xlane.xlu0 %2848
        %v2850 = vsel %vm738, %v2842, 0.0
        %2851 = vadd.xlane.f32.xlu0 %v2850
        %v2852 = vpop.xlane.xlu0 %2851
        %v2853 = vsel %vm738, %v2844, 0.0
        %2854 = vadd.xlane.f32.xlu0 %v2853
        %v2855 = vpop.xlane.xlu0 %2854
        %v2856 = vsel %vm738, %v2846, 0.0
        %2857 = vadd.xlane.f32.xlu0 %v2856
        %v2858 = vpop.xlane.xlu0 %2857
        %v2859 = vrcp.pop %v2849
        %v2860 = vmul.f32 %v2840, %v2859
        %v2861 = vrcp.pop %v2852
        %v2862 = vmul.f32 %v2842, %v2861
        %v2863 = vrcp.pop %v2855
        %v2864 = vmul.f32 %v2844, %v2863
        %v2865 = vrcp.pop %v2858
        %v2866 = vmul.f32 %v2846, %v2865
        %v2868 = vsel %vm738, %v2509, 0
        %v2871 = vsel %vm738, %v2860, 0
        %2873 = vmatprep.subr.mxu0 0.0
        %2874 = vmatpush1.xpose.msra.mxu0 %v2871
        %2875 = vmatprep.subr.mxu0 0.0
        %2876 = vmatpush1.xpose.msra.mxu0 0.0
        %2877 = vmatprep.subr.mxu0 0.0
        %2878 = vmatpush1.xpose.msra.mxu0 0.0
        %2879 = vmatprep.subr.mxu0 0.0
        %2880 = vmatpush1.xpose.msra.mxu0 0.0
        %2881 = vmatprep.subr.mxu0 0.0
        %2882 = vmatpush1.xpose.msra.mxu0 0.0
        %2883 = vmatprep.subr.mxu0 0.0
        %2884 = vmatpush1.xpose.msra.mxu0 0.0
        %2885 = vmatprep.subr.mxu0 0.0
        %2886 = vmatpush1.xpose.msra.mxu0 0.0
        %2887 = vmatprep.subr.mxu0 0.0
        %2888 = vmatpush1.xpose.msra.mxu0 0.0
        %2889 = vmatprep.subr.mxu0 0.0
        %2890 = vmatpush1.xpose.msra.mxu0 0.0
        %2891 = vmatprep.subr.mxu0 0.0
        %2892 = vmatpush1.xpose.msra.mxu0 0.0
        %2893 = vmatprep.subr.mxu0 0.0
        %2894 = vmatpush1.xpose.msra.mxu0 0.0
        %2895 = vmatprep.subr.mxu0 0.0
        %2896 = vmatpush1.xpose.msra.mxu0 0.0
        %2897 = vmatprep.subr.mxu0 0.0
        %2898 = vmatpush1.xpose.msra.mxu0 0.0
        %2899 = vmatprep.subr.mxu0 0.0
        %2900 = vmatpush1.xpose.msra.mxu0 0.0
        %2901 = vmatprep.subr.mxu0 0.0
        %2902 = vmatpush1.xpose.msra.mxu0 0.0
        %2903 = vmatprep.subr.mxu0 0.0
        %2904 = vmatpush1.xpose.msra.mxu0 0.0
        %2905 = vmatprep.subr.mxu0 0.0
        %2906 = vmatpush1.xpose.msra.mxu0 0.0
        %2907 = vmatprep.subr.mxu0 0.0
        %2908 = vmatpush1.xpose.msra.mxu0 0.0
        %2909 = vmatprep.subr.mxu0 0.0
        %2910 = vmatpush1.xpose.msra.mxu0 0.0
        %2911 = vmatprep.subr.mxu0 0.0
        %2912 = vmatpush1.xpose.msra.mxu0 0.0
        %2913 = vmatprep.subr.mxu0 0.0
        %2914 = vmatpush1.xpose.msra.mxu0 0.0
        %2915 = vmatprep.subr.mxu0 0.0
        %2916 = vmatpush1.xpose.msra.mxu0 0.0
        %2917 = vmatprep.subr.mxu0 0.0
        %2918 = vmatpush1.xpose.msra.mxu0 0.0
        %2919 = vmatprep.subr.mxu0 0.0
        %2920 = vmatpush1.xpose.msra.mxu0 0.0
        %2921 = vmatprep.subr.mxu0 0.0
        %2922 = vmatpush1.xpose.msra.mxu0 0.0
        %2923 = vmatprep.subr.mxu0 0.0
        %2924 = vmatpush1.xpose.msra.mxu0 0.0
        %2925 = vmatprep.subr.mxu0 0.0
        %2926 = vmatpush1.xpose.msra.mxu0 0.0
        %2927 = vmatprep.subr.mxu0 0.0
        %2928 = vmatpush1.xpose.msra.mxu0 0.0
        %2929 = vmatprep.subr.mxu0 0.0
        %2930 = vmatpush1.xpose.msra.mxu0 0.0
        %2931 = vmatprep.subr.mxu0 0.0
        %2932 = vmatpush1.xpose.msra.mxu0 0.0
        %2933 = vmatprep.subr.mxu0 0.0
        %2934 = vmatpush1.xpose.msra.mxu0 0.0
        %2935 = vmatprep.subr.mxu0 0.0
        %2936 = vmatpush1.xpose.msra.mxu0 0.0
        %2937 = vmatprep.mubr.f32.mxu0 0.0
        %2938 = vmatmul.mubr.f32.gmra.mrb[0].mxu0 %v2868
        %v2939 = vpop.f32.mrb[0].mxu0
        %v2940 = vadd.f32 0.0, %v2939
        %v2941 = vpop.f32.mrb[0].mxu0
        %2942 = vdwg.mxu0
        %v2944 = vsel %vm738, %v2514, 0
        %v2947 = vsel %vm738, %v2862, 0
        %2949 = vmatprep.subr.mxu0 0.0
        %2950 = vmatpush1.xpose.msra.mxu0 %v2947
        %2951 = vmatprep.subr.mxu0 0.0
        %2952 = vmatpush1.xpose.msra.mxu0 0.0
        %2953 = vmatprep.subr.mxu0 0.0
        %2954 = vmatpush1.xpose.msra.mxu0 0.0
        %2955 = vmatprep.subr.mxu0 0.0
        %2956 = vmatpush1.xpose.msra.mxu0 0.0
        %2957 = vmatprep.subr.mxu0 0.0
        %2958 = vmatpush1.xpose.msra.mxu0 0.0
        %2959 = vmatprep.subr.mxu0 0.0
        %2960 = vmatpush1.xpose.msra.mxu0 0.0
        %2961 = vmatprep.subr.mxu0 0.0
        %2962 = vmatpush1.xpose.msra.mxu0 0.0
        %2963 = vmatprep.subr.mxu0 0.0
        %2964 = vmatpush1.xpose.msra.mxu0 0.0
        %2965 = vmatprep.subr.mxu0 0.0
        %2966 = vmatpush1.xpose.msra.mxu0 0.0
        %2967 = vmatprep.subr.mxu0 0.0
        %2968 = vmatpush1.xpose.msra.mxu0 0.0
        %2969 = vmatprep.subr.mxu0 0.0
        %2970 = vmatpush1.xpose.msra.mxu0 0.0
        %2971 = vmatprep.subr.mxu0 0.0
        %2972 = vmatpush1.xpose.msra.mxu0 0.0
        %2973 = vmatprep.subr.mxu0 0.0
        %2974 = vmatpush1.xpose.msra.mxu0 0.0
        %2975 = vmatprep.subr.mxu0 0.0
        %2976 = vmatpush1.xpose.msra.mxu0 0.0
        %2977 = vmatprep.subr.mxu0 0.0
        %2978 = vmatpush1.xpose.msra.mxu0 0.0
        %2979 = vmatprep.subr.mxu0 0.0
        %2980 = vmatpush1.xpose.msra.mxu0 0.0
        %2981 = vmatprep.subr.mxu0 0.0
        %2982 = vmatpush1.xpose.msra.mxu0 0.0
        %2983 = vmatprep.subr.mxu0 0.0
        %2984 = vmatpush1.xpose.msra.mxu0 0.0
        %2985 = vmatprep.subr.mxu0 0.0
        %2986 = vmatpush1.xpose.msra.mxu0 0.0
        %2987 = vmatprep.subr.mxu0 0.0
        %2988 = vmatpush1.xpose.msra.mxu0 0.0
        %2989 = vmatprep.subr.mxu0 0.0
        %2990 = vmatpush1.xpose.msra.mxu0 0.0
        %2991 = vmatprep.subr.mxu0 0.0
        %2992 = vmatpush1.xpose.msra.mxu0 0.0
        %2993 = vmatprep.subr.mxu0 0.0
        %2994 = vmatpush1.xpose.msra.mxu0 0.0
        %2995 = vmatprep.subr.mxu0 0.0
        %2996 = vmatpush1.xpose.msra.mxu0 0.0
        %2997 = vmatprep.subr.mxu0 0.0
        %2998 = vmatpush1.xpose.msra.mxu0 0.0
        %2999 = vmatprep.subr.mxu0 0.0
        %3000 = vmatpush1.xpose.msra.mxu0 0.0
        %3001 = vmatprep.subr.mxu0 0.0
        %3002 = vmatpush1.xpose.msra.mxu0 0.0
        %3003 = vmatprep.subr.mxu0 0.0
        %3004 = vmatpush1.xpose.msra.mxu0 0.0
        %3005 = vmatprep.subr.mxu0 0.0
        %3006 = vmatpush1.xpose.msra.mxu0 0.0
        %3007 = vmatprep.subr.mxu0 0.0
        %3008 = vmatpush1.xpose.msra.mxu0 0.0
        %3009 = vmatprep.subr.mxu0 0.0
        %3010 = vmatpush1.xpose.msra.mxu0 0.0
        %3011 = vmatprep.subr.mxu0 0.0
        %3012 = vmatpush1.xpose.msra.mxu0 0.0
        %3013 = vmatprep.mubr.f32.mxu0 0.0
        %3014 = vmatmul.mubr.f32.gmra.mrb[0].mxu0 %v2944
        %v3015 = vpop.f32.mrb[0].mxu0
        %v3016 = vadd.f32 0.0, %v3015
        %v3017 = vpop.f32.mrb[0].mxu0
        %3018 = vdwg.mxu0
        %v3020 = vsel %vm738, %v2519, 0
        %v3023 = vsel %vm738, %v2864, 0
        %3025 = vmatprep.subr.mxu0 0.0
        %3026 = vmatpush1.xpose.msra.mxu0 %v3023
        %3027 = vmatprep.subr.mxu0 0.0
        %3028 = vmatpush1.xpose.msra.mxu0 0.0
        %3029 = vmatprep.subr.mxu0 0.0
        %3030 = vmatpush1.xpose.msra.mxu0 0.0
        %3031 = vmatprep.subr.mxu0 0.0
        %3032 = vmatpush1.xpose.msra.mxu0 0.0
        %3033 = vmatprep.subr.mxu0 0.0
        %3034 = vmatpush1.xpose.msra.mxu0 0.0
        %3035 = vmatprep.subr.mxu0 0.0
        %3036 = vmatpush1.xpose.msra.mxu0 0.0
        %3037 = vmatprep.subr.mxu0 0.0
        %3038 = vmatpush1.xpose.msra.mxu0 0.0
        %3039 = vmatprep.subr.mxu0 0.0
        %3040 = vmatpush1.xpose.msra.mxu0 0.0
        %3041 = vmatprep.subr.mxu0 0.0
        %3042 = vmatpush1.xpose.msra.mxu0 0.0
        %3043 = vmatprep.subr.mxu0 0.0
        %3044 = vmatpush1.xpose.msra.mxu0 0.0
        %3045 = vmatprep.subr.mxu0 0.0
        %3046 = vmatpush1.xpose.msra.mxu0 0.0
        %3047 = vmatprep.subr.mxu0 0.0
        %3048 = vmatpush1.xpose.msra.mxu0 0.0
        %3049 = vmatprep.subr.mxu0 0.0
        %3050 = vmatpush1.xpose.msra.mxu0 0.0
        %3051 = vmatprep.subr.mxu0 0.0
        %3052 = vmatpush1.xpose.msra.mxu0 0.0
        %3053 = vmatprep.subr.mxu0 0.0
        %3054 = vmatpush1.xpose.msra.mxu0 0.0
        %3055 = vmatprep.subr.mxu0 0.0
        %3056 = vmatpush1.xpose.msra.mxu0 0.0
        %3057 = vmatprep.subr.mxu0 0.0
        %3058 = vmatpush1.xpose.msra.mxu0 0.0
        %3059 = vmatprep.subr.mxu0 0.0
        %3060 = vmatpush1.xpose.msra.mxu0 0.0
        %3061 = vmatprep.subr.mxu0 0.0
        %3062 = vmatpush1.xpose.msra.mxu0 0.0
        %3063 = vmatprep.subr.mxu0 0.0
        %3064 = vmatpush1.xpose.msra.mxu0 0.0
        %3065 = vmatprep.subr.mxu0 0.0
        %3066 = vmatpush1.xpose.msra.mxu0 0.0
        %3067 = vmatprep.subr.mxu0 0.0
        %3068 = vmatpush1.xpose.msra.mxu0 0.0
        %3069 = vmatprep.subr.mxu0 0.0
        %3070 = vmatpush1.xpose.msra.mxu0 0.0
        %3071 = vmatprep.subr.mxu0 0.0
        %3072 = vmatpush1.xpose.msra.mxu0 0.0
        %3073 = vmatprep.subr.mxu0 0.0
        %3074 = vmatpush1.xpose.msra.mxu0 0.0
        %3075 = vmatprep.subr.mxu0 0.0
        %3076 = vmatpush1.xpose.msra.mxu0 0.0
        %3077 = vmatprep.subr.mxu0 0.0
        %3078 = vmatpush1.xpose.msra.mxu0 0.0
        %3079 = vmatprep.subr.mxu0 0.0
        %3080 = vmatpush1.xpose.msra.mxu0 0.0
        %3081 = vmatprep.subr.mxu0 0.0
        %3082 = vmatpush1.xpose.msra.mxu0 0.0
        %3083 = vmatprep.subr.mxu0 0.0
        %3084 = vmatpush1.xpose.msra.mxu0 0.0
        %3085 = vmatprep.subr.mxu0 0.0
        %3086 = vmatpush1.xpose.msra.mxu0 0.0
        %3087 = vmatprep.subr.mxu0 0.0
        %3088 = vmatpush1.xpose.msra.mxu0 0.0
        %3089 = vmatprep.mubr.f32.mxu0 0.0
        %3090 = vmatmul.mubr.f32.gmra.mrb[0].mxu0 %v3020
        %v3091 = vpop.f32.mrb[0].mxu0
        %v3092 = vadd.f32 0.0, %v3091
        %v3093 = vpop.f32.mrb[0].mxu0
        %3094 = vdwg.mxu0
        %v3096 = vsel %vm738, %v2524, 0
        %v3099 = vsel %vm738, %v2866, 0
        %3101 = vmatprep.subr.mxu0 0.0
        %3102 = vmatpush1.xpose.msra.mxu0 %v3099
        %3103 = vmatprep.subr.mxu0 0.0
        %3104 = vmatpush1.xpose.msra.mxu0 0.0
        %3105 = vmatprep.subr.mxu0 0.0
        %3106 = vmatpush1.xpose.msra.mxu0 0.0
        %3107 = vmatprep.subr.mxu0 0.0
        %3108 = vmatpush1.xpose.msra.mxu0 0.0
        %3109 = vmatprep.subr.mxu0 0.0
        %3110 = vmatpush1.xpose.msra.mxu0 0.0
        %3111 = vmatprep.subr.mxu0 0.0
        %3112 = vmatpush1.xpose.msra.mxu0 0.0
        %3113 = vmatprep.subr.mxu0 0.0
        %3114 = vmatpush1.xpose.msra.mxu0 0.0
        %3115 = vmatprep.subr.mxu0 0.0
        %3116 = vmatpush1.xpose.msra.mxu0 0.0
        %3117 = vmatprep.subr.mxu0 0.0
        %3118 = vmatpush1.xpose.msra.mxu0 0.0
        %3119 = vmatprep.subr.mxu0 0.0
        %3120 = vmatpush1.xpose.msra.mxu0 0.0
        %3121 = vmatprep.subr.mxu0 0.0
        %3122 = vmatpush1.xpose.msra.mxu0 0.0
        %3123 = vmatprep.subr.mxu0 0.0
        %3124 = vmatpush1.xpose.msra.mxu0 0.0
        %3125 = vmatprep.subr.mxu0 0.0
        %3126 = vmatpush1.xpose.msra.mxu0 0.0
        %3127 = vmatprep.subr.mxu0 0.0
        %3128 = vmatpush1.xpose.msra.mxu0 0.0
        %3129 = vmatprep.subr.mxu0 0.0
        %3130 = vmatpush1.xpose.msra.mxu0 0.0
        %3131 = vmatprep.subr.mxu0 0.0
        %3132 = vmatpush1.xpose.msra.mxu0 0.0
        %3133 = vmatprep.subr.mxu0 0.0
        %3134 = vmatpush1.xpose.msra.mxu0 0.0
        %3135 = vmatprep.subr.mxu0 0.0
        %3136 = vmatpush1.xpose.msra.mxu0 0.0
        %3137 = vmatprep.subr.mxu0 0.0
        %3138 = vmatpush1.xpose.msra.mxu0 0.0
        %3139 = vmatprep.subr.mxu0 0.0
        %3140 = vmatpush1.xpose.msra.mxu0 0.0
        %3141 = vmatprep.subr.mxu0 0.0
        %3142 = vmatpush1.xpose.msra.mxu0 0.0
        %3143 = vmatprep.subr.mxu0 0.0
        %3144 = vmatpush1.xpose.msra.mxu0 0.0
        %3145 = vmatprep.subr.mxu0 0.0
        %3146 = vmatpush1.xpose.msra.mxu0 0.0
        %3147 = vmatprep.subr.mxu0 0.0
        %3148 = vmatpush1.xpose.msra.mxu0 0.0
        %3149 = vmatprep.subr.mxu0 0.0
        %3150 = vmatpush1.xpose.msra.mxu0 0.0
        %3151 = vmatprep.subr.mxu0 0.0
        %3152 = vmatpush1.xpose.msra.mxu0 0.0
        %3153 = vmatprep.subr.mxu0 0.0
        %3154 = vmatpush1.xpose.msra.mxu0 0.0
        %3155 = vmatprep.subr.mxu0 0.0
        %3156 = vmatpush1.xpose.msra.mxu0 0.0
        %3157 = vmatprep.subr.mxu0 0.0
        %3158 = vmatpush1.xpose.msra.mxu0 0.0
        %3159 = vmatprep.subr.mxu0 0.0
        %3160 = vmatpush1.xpose.msra.mxu0 0.0
        %3161 = vmatprep.subr.mxu0 0.0
        %3162 = vmatpush1.xpose.msra.mxu0 0.0
        %3163 = vmatprep.subr.mxu0 0.0
        %3164 = vmatpush1.xpose.msra.mxu0 0.0
        %3165 = vmatprep.mubr.f32.mxu0 0.0
        %3166 = vmatmul.mubr.f32.gmra.mrb[0].mxu0 %v3096
        %v3167 = vpop.f32.mrb[0].mxu0
        %v3168 = vadd.f32 0.0, %v3167
        %v3169 = vpop.f32.mrb[0].mxu0
        %3170 = vdwg.mxu0
        %v3171 = vld [vmem:[%s14] sm:$0xff]
        %v3172 = vld [vmem:[%s14 + $0x8] sm:$0xff]
        %v3173 = vld [vmem:[%s14 + $0x10] sm:$0xff]
        %v3174 = vld [vmem:[%s14 + $0x18] sm:$0xff]
        %v3175 = vld [vmem:[%s15] sm:$0xff]
        %v3176 = vld [vmem:[%s15 + $0x8] sm:$0xff]
        %v3177 = vld [vmem:[%s15 + $0x10] sm:$0xff]
        %v3178 = vld [vmem:[%s15 + $0x18] sm:$0xff]
        %3180 = vset.pattern.permute.xlu0 0
        %3181 = vperm.xlu0 %3180, %v3175
        %v3182 = vpop.permute.xlu0 %3181
        %3185 = vset.pattern.permute.xlu0 0
        %3186 = vperm.xlu0 %3185, %v3176
        %v3187 = vpop.permute.xlu0 %3186
        %3190 = vset.pattern.permute.xlu0 0
        %3191 = vperm.xlu0 %3190, %v3177
        %v3192 = vpop.permute.xlu0 %3191
        %3195 = vset.pattern.permute.xlu0 0
        %3196 = vperm.xlu0 %3195, %v3178
        %v3197 = vpop.permute.xlu0 %3196
        %v3200 = vsel %vm914, %v3171, 0
        %v3203 = vsel %vm914, %v3172, 0
        %v3206 = vsel %vm914, %v3173, 0
        %v3209 = vsel %vm914, %v3174, 0
        %3211 = vmatprep.subr.mxu0 0.0
        %3212 = vmatpush1.msra.mxu0 %v2940
        %3213 = vmatprep.subr.mxu0 0.0
        %3214 = vmatpush1.msra.mxu0 %v3016
        %3215 = vmatprep.subr.mxu0 0.0
        %3216 = vmatpush1.msra.mxu0 %v3092
        %3217 = vmatprep.subr.mxu0 0.0
        %3218 = vmatpush1.msra.mxu0 %v3168
        %3219 = vmatprep.subr.mxu0 0.0
        %3220 = vmatpush1.msra.mxu0 0.0
        %3221 = vmatprep.subr.mxu0 0.0
        %3222 = vmatpush1.msra.mxu0 0.0
        %3223 = vmatprep.subr.mxu0 0.0
        %3224 = vmatpush1.msra.mxu0 0.0
        %3225 = vmatprep.subr.mxu0 0.0
        %3226 = vmatpush1.msra.mxu0 0.0
        %3227 = vmatprep.subr.mxu0 0.0
        %3228 = vmatpush1.msra.mxu0 0.0
        %3229 = vmatprep.subr.mxu0 0.0
        %3230 = vmatpush1.msra.mxu0 0.0
        %3231 = vmatprep.subr.mxu0 0.0
        %3232 = vmatpush1.msra.mxu0 0.0
        %3233 = vmatprep.subr.mxu0 0.0
        %3234 = vmatpush1.msra.mxu0 0.0
        %3235 = vmatprep.subr.mxu0 0.0
        %3236 = vmatpush1.msra.mxu0 0.0
        %3237 = vmatprep.subr.mxu0 0.0
        %3238 = vmatpush1.msra.mxu0 0.0
        %3239 = vmatprep.subr.mxu0 0.0
        %3240 = vmatpush1.msra.mxu0 0.0
        %3241 = vmatprep.subr.mxu0 0.0
        %3242 = vmatpush1.msra.mxu0 0.0
        %3243 = vmatprep.subr.mxu0 0.0
        %3244 = vmatpush1.msra.mxu0 0.0
        %3245 = vmatprep.subr.mxu0 0.0
        %3246 = vmatpush1.msra.mxu0 0.0
        %3247 = vmatprep.subr.mxu0 0.0
        %3248 = vmatpush1.msra.mxu0 0.0
        %3249 = vmatprep.subr.mxu0 0.0
        %3250 = vmatpush1.msra.mxu0 0.0
        %3251 = vmatprep.subr.mxu0 0.0
        %3252 = vmatpush1.msra.mxu0 0.0
        %3253 = vmatprep.subr.mxu0 0.0
        %3254 = vmatpush1.msra.mxu0 0.0
        %3255 = vmatprep.subr.mxu0 0.0
        %3256 = vmatpush1.msra.mxu0 0.0
        %3257 = vmatprep.subr.mxu0 0.0
        %3258 = vmatpush1.msra.mxu0 0.0
        %3259 = vmatprep.subr.mxu0 0.0
        %3260 = vmatpush1.msra.mxu0 0.0
        %3261 = vmatprep.subr.mxu0 0.0
        %3262 = vmatpush1.msra.mxu0 0.0
        %3263 = vmatprep.subr.mxu0 0.0
        %3264 = vmatpush1.msra.mxu0 0.0
        %3265 = vmatprep.subr.mxu0 0.0
        %3266 = vmatpush1.msra.mxu0 0.0
        %3267 = vmatprep.subr.mxu0 0.0
        %3268 = vmatpush1.msra.mxu0 0.0
        %3269 = vmatprep.subr.mxu0 0.0
        %3270 = vmatpush1.msra.mxu0 0.0
        %3271 = vmatprep.subr.mxu0 0.0
        %3272 = vmatpush1.msra.mxu0 0.0
        %3273 = vmatprep.subr.mxu0 0.0
        %3274 = vmatpush1.msra.mxu0 0.0
        %3275 = vmatprep.mubr.f32.mxu0 0.0
        %3276 = vmatmul.mubr.f32.gmra.mrb[0].mxu0 %v3200
        %v3277 = vpop.f32.mrb[0].mxu0
        %v3278 = vadd.f32 %v3182, %v3277
        %v3279 = vpop.f32.mrb[0].mxu0
        %3280 = vmatprep.mubr.f32.mxu0 0.0
        %3281 = vmatmul.mubr.f32.gmra.mrb[0].mxu0 %v3203
        %v3282 = vpop.f32.mrb[0].mxu0
        %v3283 = vadd.f32 %v3187, %v3282
        %v3284 = vpop.f32.mrb[0].mxu0
        %3285 = vmatprep.mubr.f32.mxu0 0.0
        %3286 = vmatmul.mubr.f32.gmra.mrb[0].mxu0 %v3206
        %v3287 = vpop.f32.mrb[0].mxu0
        %v3288 = vadd.f32 %v3192, %v3287
        %v3289 = vpop.f32.mrb[0].mxu0
        %3290 = vmatprep.mubr.f32.mxu0 0.0
        %3291 = vmatmul.mubr.f32.gmra.mrb[0].mxu0 %v3209
        %v3292 = vpop.f32.mrb[0].mxu0
        %v3293 = vadd.f32 %v3197, %v3292
        %v3294 = vpop.f32.mrb[0].mxu0
        %3295 = vdwg.mxu0
        %v3296 = vadd.f32 %v1984, %v3278
        %v3297 = vadd.f32 %v1985, %v3283
        %v3298 = vadd.f32 %v1986, %v3288
        %v3299 = vadd.f32 %v1987, %v3293
        %v3300 = vld [vmem:[%s16] sm:$0xff]
        %v3301 = vld [vmem:[%s16 + $0x8] sm:$0xff]
        %v3302 = vld [vmem:[%s16 + $0x10] sm:$0xff]
        %v3303 = vld [vmem:[%s16 + $0x18] sm:$0xff]
        %v3304 = vld [vmem:[%s17] sm:$0xff]
        %v3305 = vld [vmem:[%s17 + $0x8] sm:$0xff]
        %v3306 = vld [vmem:[%s17 + $0x10] sm:$0xff]
        %v3307 = vld [vmem:[%s17 + $0x18] sm:$0xff]
        %v3308 = vsel %vm738, %v3296, 0.0
        %v3309 = vsel %vm738, %v3297, 0.0
        %v3310 = vadd.f32 %v3308, %v3309
        %v3311 = vsel %vm738, %v3298, 0.0
        %v3312 = vadd.f32 %v3310, %v3311
        %v3313 = vsel %vm738, %v3299, 0.0
        %v3314 = vadd.f32 %v3312, %v3313
        %v3315 = vrot.slane %v3314, 4
        %v3316 = vadd.f32 %v3314, %v3315
        %v3317 = vrot.slane %v3316, 2
        %v3318 = vadd.f32 %v3316, %v3317
        %v3319 = vrot.slane %v3318, 1
        %v3320 = vadd.f32 %v3318, %v3319
        %v3321 = vmul.f32 %v3320, %v752
        %v3322 = vsub.f32 %v3296, %v3321
        %v3323 = vsub.f32 %v3297, %v3321
        %v3324 = vsub.f32 %v3298, %v3321
        %v3325 = vsub.f32 %v3299, %v3321
        %v3326 = vmul.f32 %v3322, %v3322
        %v3327 = vmul.f32 %v3323, %v3323
        %v3328 = vmul.f32 %v3324, %v3324
        %v3329 = vmul.f32 %v3325, %v3325
        %v3330 = vsel %vm738, %v3326, 0.0
        %v3331 = vsel %vm738, %v3327, 0.0
        %v3332 = vadd.f32 %v3330, %v3331
        %v3333 = vsel %vm738, %v3328, 0.0
        %v3334 = vadd.f32 %v3332, %v3333
        %v3335 = vsel %vm738, %v3329, 0.0
        %v3336 = vadd.f32 %v3334, %v3335
        %v3337 = vrot.slane %v3336, 4
        %v3338 = vadd.f32 %v3336, %v3337
        %v3339 = vrot.slane %v3338, 2
        %v3340 = vadd.f32 %v3338, %v3339
        %v3341 = vrot.slane %v3340, 1
        %v3342 = vadd.f32 %v3340, %v3341
        %v3343 = vmul.f32 %v3342, %v752
        %v3344 = vadd.f32 %v3343, 1e-05
        %v3345 = vrsqrt.pop %v3344
        %v3346 = vmul.f32 %v3322, %v3345
        %v3347 = vmul.f32 %v3323, %v3345
        %v3348 = vmul.f32 %v3324, %v3345
        %v3349 = vmul.f32 %v3325, %v3345
        %3351 = vset.pattern.permute.xlu0 0
        %3352 = vperm.xlu0 %3351, %v3300
        %v3353 = vpop.permute.xlu0 %3352
        %3356 = vset.pattern.permute.xlu0 0
        %3357 = vperm.xlu0 %3356, %v3301
        %v3358 = vpop.permute.xlu0 %3357
        %3361 = vset.pattern.permute.xlu0 0
        %3362 = vperm.xlu0 %3361, %v3302
        %v3363 = vpop.permute.xlu0 %3362
        %3366 = vset.pattern.permute.xlu0 0
        %3367 = vperm.xlu0 %3366, %v3303
        %v3368 = vpop.permute.xlu0 %3367
        %v3370 = vmul.f32 %v3346, %v3353
        %v3371 = vmul.f32 %v3347, %v3358
        %v3372 = vmul.f32 %v3348, %v3363
        %v3373 = vmul.f32 %v3349, %v3368
        %3375 = vset.pattern.permute.xlu0 0
        %3376 = vperm.xlu0 %3375, %v3304
        %v3377 = vpop.permute.xlu0 %3376
        %3380 = vset.pattern.permute.xlu0 0
        %3381 = vperm.xlu0 %3380, %v3305
        %v3382 = vpop.permute.xlu0 %3381
        %3385 = vset.pattern.permute.xlu0 0
        %3386 = vperm.xlu0 %3385, %v3306
        %v3387 = vpop.permute.xlu0 %3386
        %3390 = vset.pattern.permute.xlu0 0
        %3391 = vperm.xlu0 %3390, %v3307
        %v3392 = vpop.permute.xlu0 %3391
        %v3394 = vadd.f32 %v3370, %v3377
        %v3395 = vadd.f32 %v3371, %v3382
        %v3396 = vadd.f32 %v3372, %v3387
        %v3397 = vadd.f32 %v3373, %v3392
        %v3398 = vld [vmem:[%s18] sm:$0xff]
        %v3399 = vld [vmem:[%s18 + $0x8] sm:$0xff]
        %v3400 = vld [vmem:[%s18 + $0x10] sm:$0xff]
        %v3401 = vld [vmem:[%s18 + $0x18] sm:$0xff]
        %v3402 = vld [vmem:[%s18 + $0x20] sm:$0xff]
        %v3403 = vld [vmem:[%s18 + $0x28] sm:$0xff]
        %v3404 = vld [vmem:[%s18 + $0x30] sm:$0xff]
        %v3405 = vld [vmem:[%s18 + $0x38] sm:$0xff]
        %v3406 = vld [vmem:[%s18 + $0x40] sm:$0xff]
        %v3407 = vld [vmem:[%s18 + $0x48] sm:$0xff]
        %v3408 = vld [vmem:[%s18 + $0x50] sm:$0xff]
        %v3409 = vld [vmem:[%s18 + $0x58] sm:$0xff]
        %v3410 = vld [vmem:[%s18 + $0x60] sm:$0xff]
        %v3411 = vld [vmem:[%s18 + $0x68] sm:$0xff]
        %v3412 = vld [vmem:[%s18 + $0x70] sm:$0xff]
        %v3413 = vld [vmem:[%s18 + $0x78] sm:$0xff]
        %v3414 = vld [vmem:[%s19] sm:$0xff]
        %v3415 = vld [vmem:[%s19 + $0x8] sm:$0xff]
        %v3416 = vld [vmem:[%s19 + $0x10] sm:$0xff]
        %v3417 = vld [vmem:[%s19 + $0x18] sm:$0xff]
        %v3418 = vld [vmem:[%s19 + $0x20] sm:$0xff]
        %v3419 = vld [vmem:[%s19 + $0x28] sm:$0xff]
        %v3420 = vld [vmem:[%s19 + $0x30] sm:$0xff]
        %v3421 = vld [vmem:[%s19 + $0x38] sm:$0xff]
        %v3422 = vld [vmem:[%s19 + $0x40] sm:$0xff]
        %v3423 = vld [vmem:[%s19 + $0x48] sm:$0xff]
        %v3424 = vld [vmem:[%s19 + $0x50] sm:$0xff]
        %v3425 = vld [vmem:[%s19 + $0x58] sm:$0xff]
        %v3426 = vld [vmem:[%s19 + $0x60] sm:$0xff]
        %v3427 = vld [vmem:[%s19 + $0x68] sm:$0xff]
        %v3428 = vld [vmem:[%s19 + $0x70] sm:$0xff]
        %v3429 = vld [vmem:[%s19 + $0x78] sm:$0xff]
        %3431 = vset.pattern.permute.xlu0 0
        %3432 = vperm.xlu0 %3431, %v3414
        %v3433 = vpop.permute.xlu0 %3432
        %3436 = vset.pattern.permute.xlu0 0
        %3437 = vperm.xlu0 %3436, %v3415
        %v3438 = vpop.permute.xlu0 %3437
        %3441 = vset.pattern.permute.xlu0 0
        %3442 = vperm.xlu0 %3441, %v3416
        %v3443 = vpop.permute.xlu0 %3442
        %3446 = vset.pattern.permute.xlu0 0
        %3447 = vperm.xlu0 %3446, %v3417
        %v3448 = vpop.permute.xlu0 %3447
        %3451 = vset.pattern.permute.xlu0 0
        %3452 = vperm.xlu0 %3451, %v3418
        %v3453 = vpop.permute.xlu0 %3452
        %3456 = vset.pattern.permute.xlu0 0
        %3457 = vperm.xlu0 %3456, %v3419
        %v3458 = vpop.permute.xlu0 %3457
        %3461 = vset.pattern.permute.xlu0 0
        %3462 = vperm.xlu0 %3461, %v3420
        %v3463 = vpop.permute.xlu0 %3462
        %3466 = vset.pattern.permute.xlu0 0
        %3467 = vperm.xlu0 %3466, %v3421
        %v3468 = vpop.permute.xlu0 %3467
        %3471 = vset.pattern.permute.xlu0 0
        %3472 = vperm.xlu0 %3471, %v3422
        %v3473 = vpop.permute.xlu0 %3472
        %3476 = vset.pattern.permute.xlu0 0
        %3477 = vperm.xlu0 %3476, %v3423
        %v3478 = vpop.permute.xlu0 %3477
        %3481 = vset.pattern.permute.xlu0 0
        %3482 = vperm.xlu0 %3481, %v3424
        %v3483 = vpop.permute.xlu0 %3482
        %3486 = vset.pattern.permute.xlu0 0
        %3487 = vperm.xlu0 %3486, %v3425
        %v3488 = vpop.permute.xlu0 %3487
        %3491 = vset.pattern.permute.xlu0 0
        %3492 = vperm.xlu0 %3491, %v3426
        %v3493 = vpop.permute.xlu0 %3492
        %3496 = vset.pattern.permute.xlu0 0
        %3497 = vperm.xlu0 %3496, %v3427
        %v3498 = vpop.permute.xlu0 %3497
        %3501 = vset.pattern.permute.xlu0 0
        %3502 = vperm.xlu0 %3501, %v3428
        %v3503 = vpop.permute.xlu0 %3502
        %3506 = vset.pattern.permute.xlu0 0
        %3507 = vperm.xlu0 %3506, %v3429
        %v3508 = vpop.permute.xlu0 %3507
        %v3511 = vsel %vm914, %v3398, 0
        %v3514 = vsel %vm914, %v3399, 0
        %v3517 = vsel %vm914, %v3400, 0
        %v3520 = vsel %vm914, %v3401, 0
        %v3523 = vsel %vm914, %v3402, 0
        %v3526 = vsel %vm914, %v3403, 0
        %v3529 = vsel %vm914, %v3404, 0
        %v3532 = vsel %vm914, %v3405, 0
        %v3535 = vsel %vm914, %v3406, 0
        %v3538 = vsel %vm914, %v3407, 0
        %v3541 = vsel %vm914, %v3408, 0
        %v3544 = vsel %vm914, %v3409, 0
        %v3547 = vsel %vm914, %v3410, 0
        %v3550 = vsel %vm914, %v3411, 0
        %v3553 = vsel %vm914, %v3412, 0
        %v3556 = vsel %vm914, %v3413, 0
        %3558 = vmatprep.subr.mxu0 0.0
        %3559 = vmatpush1.msra.mxu0 %v3394
        %3560 = vmatprep.subr.mxu0 0.0
        %3561 = vmatpush1.msra.mxu0 %v3395
        %3562 = vmatprep.subr.mxu0 0.0
        %3563 = vmatpush1.msra.mxu0 %v3396
        %3564 = vmatprep.subr.mxu0 0.0
        %3565 = vmatpush1.msra.mxu0 %v3397
        %3566 = vmatprep.subr.mxu0 0.0
        %3567 = vmatpush1.msra.mxu0 0.0
        %3568 = vmatprep.subr.mxu0 0.0
        %3569 = vmatpush1.msra.mxu0 0.0
        %3570 = vmatprep.subr.mxu0 0.0
        %3571 = vmatpush1.msra.mxu0 0.0
        %3572 = vmatprep.subr.mxu0 0.0
        %3573 = vmatpush1.msra.mxu0 0.0
        %3574 = vmatprep.subr.mxu0 0.0
        %3575 = vmatpush1.msra.mxu0 0.0
        %3576 = vmatprep.subr.mxu0 0.0
        %3577 = vmatpush1.msra.mxu0 0.0
        %3578 = vmatprep.subr.mxu0 0.0
        %3579 = vmatpush1.msra.mxu0 0.0
        %3580 = vmatprep.subr.mxu0 0.0
        %3581 = vmatpush1.msra.mxu0 0.0
        %3582 = vmatprep.subr.mxu0 0.0
        %3583 = vmatpush1.msra.mxu0 0.0
        %3584 = vmatprep.subr.mxu0 0.0
        %3585 = vmatpush1.msra.mxu0 0.0
        %3586 = vmatprep.subr.mxu0 0.0
        %3587 = vmatpush1.msra.mxu0 0.0
        %3588 = vmatprep.subr.mxu0 0.0
        %3589 = vmatpush1.msra.mxu0 0.0
        %3590 = vmatprep.subr.mxu0 0.0
        %3591 = vmatpush1.msra.mxu0 0.0
        %3592 = vmatprep.subr.mxu0 0.0
        %3593 = vmatpush1.msra.mxu0 0.0
        %3594 = vmatprep.subr.mxu0 0.0
        %3595 = vmatpush1.msra.mxu0 0.0
        %3596 = vmatprep.subr.mxu0 0.0
        %3597 = vmatpush1.msra.mxu0 0.0
        %3598 = vmatprep.subr.mxu0 0.0
        %3599 = vmatpush1.msra.mxu0 0.0
        %3600 = vmatprep.subr.mxu0 0.0
        %3601 = vmatpush1.msra.mxu0 0.0
        %3602 = vmatprep.subr.mxu0 0.0
        %3603 = vmatpush1.msra.mxu0 0.0
        %3604 = vmatprep.subr.mxu0 0.0
        %3605 = vmatpush1.msra.mxu0 0.0
        %3606 = vmatprep.subr.mxu0 0.0
        %3607 = vmatpush1.msra.mxu0 0.0
        %3608 = vmatprep.subr.mxu0 0.0
        %3609 = vmatpush1.msra.mxu0 0.0
        %3610 = vmatprep.subr.mxu0 0.0
        %3611 = vmatpush1.msra.mxu0 0.0
        %3612 = vmatprep.subr.mxu0 0.0
        %3613 = vmatpush1.msra.mxu0 0.0
        %3614 = vmatprep.subr.mxu0 0.0
        %3615 = vmatpush1.msra.mxu0 0.0
        %3616 = vmatprep.subr.mxu0 0.0
        %3617 = vmatpush1.msra.mxu0 0.0
        %3618 = vmatprep.subr.mxu0 0.0
        %3619 = vmatpush1.msra.mxu0 0.0
        %3620 = vmatprep.subr.mxu0 0.0
        %3621 = vmatpush1.msra.mxu0 0.0
        %3622 = vmatprep.mubr.f32.mxu0 0.0
        %3623 = vmatmul.mubr.f32.gmra.mrb[0].mxu0 %v3511
        %v3624 = vpop.f32.mrb[0].mxu0
        %v3625 = vadd.f32 %v3433, %v3624
        %v3626 = vpop.f32.mrb[0].mxu0
        %3627 = vmatprep.mubr.f32.mxu0 0.0
        %3628 = vmatmul.mubr.f32.gmra.mrb[0].mxu0 %v3514
        %v3629 = vpop.f32.mrb[0].mxu0
        %v3630 = vadd.f32 %v3438, %v3629
        %v3631 = vpop.f32.mrb[0].mxu0
        %3632 = vmatprep.mubr.f32.mxu0 0.0
        %3633 = vmatmul.mubr.f32.gmra.mrb[0].mxu0 %v3517
        %v3634 = vpop.f32.mrb[0].mxu0
        %v3635 = vadd.f32 %v3443, %v3634
        %v3636 = vpop.f32.mrb[0].mxu0
        %3637 = vmatprep.mubr.f32.mxu0 0.0
        %3638 = vmatmul.mubr.f32.gmra.mrb[0].mxu0 %v3520
        %v3639 = vpop.f32.mrb[0].mxu0
        %v3640 = vadd.f32 %v3448, %v3639
        %v3641 = vpop.f32.mrb[0].mxu0
        %3642 = vmatprep.mubr.f32.mxu0 0.0
        %3643 = vmatmul.mubr.f32.gmra.mrb[0].mxu0 %v3523
        %v3644 = vpop.f32.mrb[0].mxu0
        %v3645 = vadd.f32 %v3453, %v3644
        %v3646 = vpop.f32.mrb[0].mxu0
        %3647 = vmatprep.mubr.f32.mxu0 0.0
        %3648 = vmatmul.mubr.f32.gmra.mrb[0].mxu0 %v3526
        %v3649 = vpop.f32.mrb[0].mxu0
        %v3650 = vadd.f32 %v3458, %v3649
        %v3651 = vpop.f32.mrb[0].mxu0
        %3652 = vmatprep.mubr.f32.mxu0 0.0
        %3653 = vmatmul.mubr.f32.gmra.mrb[0].mxu0 %v3529
        %v3654 = vpop.f32.mrb[0].mxu0
        %v3655 = vadd.f32 %v3463, %v3654
        %v3656 = vpop.f32.mrb[0].mxu0
        %3657 = vmatprep.mubr.f32.mxu0 0.0
        %3658 = vmatmul.mubr.f32.gmra.mrb[0].mxu0 %v3532
        %v3659 = vpop.f32.mrb[0].mxu0
        %v3660 = vadd.f32 %v3468, %v3659
        %v3661 = vpop.f32.mrb[0].mxu0
        %3662 = vmatprep.mubr.f32.mxu0 0.0
        %3663 = vmatmul.mubr.f32.gmra.mrb[0].mxu0 %v3535
        %v3664 = vpop.f32.mrb[0].mxu0
        %v3665 = vadd.f32 %v3473, %v3664
        %v3666 = vpop.f32.mrb[0].mxu0
        %3667 = vmatprep.mubr.f32.mxu0 0.0
        %3668 = vmatmul.mubr.f32.gmra.mrb[0].mxu0 %v3538
        %v3669 = vpop.f32.mrb[0].mxu0
        %v3670 = vadd.f32 %v3478, %v3669
        %v3671 = vpop.f32.mrb[0].mxu0
        %3672 = vmatprep.mubr.f32.mxu0 0.0
        %3673 = vmatmul.mubr.f32.gmra.mrb[0].mxu0 %v3541
        %v3674 = vpop.f32.mrb[0].mxu0
        %v3675 = vadd.f32 %v3483, %v3674
        %v3676 = vpop.f32.mrb[0].mxu0
        %3677 = vmatprep.mubr.f32.mxu0 0.0
        %3678 = vmatmul.mubr.f32.gmra.mrb[0].mxu0 %v3544
        %v3679 = vpop.f32.mrb[0].mxu0
        %v3680 = vadd.f32 %v3488, %v3679
        %v3681 = vpop.f32.mrb[0].mxu0
        %3682 = vmatprep.mubr.f32.mxu0 0.0
        %3683 = vmatmul.mubr.f32.gmra.mrb[0].mxu0 %v3547
        %v3684 = vpop.f32.mrb[0].mxu0
        %v3685 = vadd.f32 %v3493, %v3684
        %v3686 = vpop.f32.mrb[0].mxu0
        %3687 = vmatprep.mubr.f32.mxu0 0.0
        %3688 = vmatmul.mubr.f32.gmra.mrb[0].mxu0 %v3550
        %v3689 = vpop.f32.mrb[0].mxu0
        %v3690 = vadd.f32 %v3498, %v3689
        %v3691 = vpop.f32.mrb[0].mxu0
        %3692 = vmatprep.mubr.f32.mxu0 0.0
        %3693 = vmatmul.mubr.f32.gmra.mrb[0].mxu0 %v3553
        %v3694 = vpop.f32.mrb[0].mxu0
        %v3695 = vadd.f32 %v3503, %v3694
        %v3696 = vpop.f32.mrb[0].mxu0
        %3697 = vmatprep.mubr.f32.mxu0 0.0
        %3698 = vmatmul.mubr.f32.gmra.mrb[0].mxu0 %v3556
        %v3699 = vpop.f32.mrb[0].mxu0
        %v3700 = vadd.f32 %v3508, %v3699
        %v3701 = vpop.f32.mrb[0].mxu0
        %3702 = vdwg.mxu0
        %v3703 = vmul.f32 %v3625, 0.5
        %v3704 = vmul.f32 %v3630, 0.5
        %v3705 = vmul.f32 %v3635, 0.5
        %v3706 = vmul.f32 %v3640, 0.5
        %v3707 = vmul.f32 %v3645, 0.5
        %v3708 = vmul.f32 %v3650, 0.5
        %v3709 = vmul.f32 %v3655, 0.5
        %v3710 = vmul.f32 %v3660, 0.5
        %v3711 = vmul.f32 %v3665, 0.5
        %v3712 = vmul.f32 %v3670, 0.5
        %v3713 = vmul.f32 %v3675, 0.5
        %v3714 = vmul.f32 %v3680, 0.5
        %v3715 = vmul.f32 %v3685, 0.5
        %v3716 = vmul.f32 %v3690, 0.5
        %v3717 = vmul.f32 %v3695, 0.5
        %v3718 = vmul.f32 %v3700, 0.5
        %v3719 = vmul.f32 %v3625, 0.044715
        %v3720 = vmul.f32 %v3630, 0.044715
        %v3721 = vmul.f32 %v3635, 0.044715
        %v3722 = vmul.f32 %v3640, 0.044715
        %v3723 = vmul.f32 %v3645, 0.044715
        %v3724 = vmul.f32 %v3650, 0.044715
        %v3725 = vmul.f32 %v3655, 0.044715
        %v3726 = vmul.f32 %v3660, 0.044715
        %v3727 = vmul.f32 %v3665, 0.044715
        %v3728 = vmul.f32 %v3670, 0.044715
        %v3729 = vmul.f32 %v3675, 0.044715
        %v3730 = vmul.f32 %v3680, 0.044715
        %v3731 = vmul.f32 %v3685, 0.044715
        %v3732 = vmul.f32 %v3690, 0.044715
        %v3733 = vmul.f32 %v3695, 0.044715
        %v3734 = vmul.f32 %v3700, 0.044715
        %v3735 = vmul.f32 %v3719, %v3625
        %v3736 = vmul.f32 %v3720, %v3630
        %v3737 = vmul.f32 %v3721, %v3635
        %v3738 = vmul.f32 %v3722, %v3640
        %v3739 = vmul.f32 %v3723, %v3645
        %v3740 = vmul.f32 %v3724, %v3650
        %v3741 = vmul.f32 %v3725, %v3655
        %v3742 = vmul.f32 %v3726, %v3660
        %v3743 = vmul.f32 %v3727, %v3665
        %v3744 = vmul.f32 %v3728, %v3670
        %v3745 = vmul.f32 %v3729, %v3675
        %v3746 = vmul.f32 %v3730, %v3680
        %v3747 = vmul.f32 %v3731, %v3685
        %v3748 = vmul.f32 %v3732, %v3690
        %v3749 = vmul.f32 %v3733, %v3695
        %v3750 = vmul.f32 %v3734, %v3700
        %v3751 = vmul.f32 %v3735, %v3625
        %v3752 = vmul.f32 %v3736, %v3630
        %v3753 = vmul.f32 %v3737, %v3635
        %v3754 = vmul.f32 %v3738, %v3640
        %v3755 = vmul.f32 %v3739, %v3645
        %v3756 = vmul.f32 %v3740, %v3650
        %v3757 = vmul.f32 %v3741, %v3655
        %v3758 = vmul.f32 %v3742, %v3660
        %v3759 = vmul.f32 %v3743, %v3665
        %v3760 = vmul.f32 %v3744, %v3670
        %v3761 = vmul.f32 %v3745, %v3675
        %v3762 = vmul.f32 %v3746, %v3680
        %v3763 = vmul.f32 %v3747, %v3685
        %v3764 = vmul.f32 %v3748, %v3690
        %v3765 = vmul.f32 %v3749, %v3695
        %v3766 = vmul.f32 %v3750, %v3700
        %v3767 = vadd.f32 %v3625, %v3751
        %v3768 = vadd.f32 %v3630, %v3752
        %v3769 = vadd.f32 %v3635, %v3753
        %v3770 = vadd.f32 %v3640, %v3754
        %v3771 = vadd.f32 %v3645, %v3755
        %v3772 = vadd.f32 %v3650, %v3756
        %v3773 = vadd.f32 %v3655, %v3757
        %v3774 = vadd.f32 %v3660, %v3758
        %v3775 = vadd.f32 %v3665, %v3759
        %v3776 = vadd.f32 %v3670, %v3760
        %v3777 = vadd.f32 %v3675, %v3761
        %v3778 = vadd.f32 %v3680, %v3762
        %v3779 = vadd.f32 %v3685, %v3763
        %v3780 = vadd.f32 %v3690, %v3764
        %v3781 = vadd.f32 %v3695, %v3765
        %v3782 = vadd.f32 %v3700, %v3766
        %v3783 = vmul.f32 %v3767, 0.7978846
        %v3784 = vmul.f32 %v3768, 0.7978846
        %v3785 = vmul.f32 %v3769, 0.7978846
        %v3786 = vmul.f32 %v3770, 0.7978846
        %v3787 = vmul.f32 %v3771, 0.7978846
        %v3788 = vmul.f32 %v3772, 0.7978846
        %v3789 = vmul.f32 %v3773, 0.7978846
        %v3790 = vmul.f32 %v3774, 0.7978846
        %v3791 = vmul.f32 %v3775, 0.7978846
        %v3792 = vmul.f32 %v3776, 0.7978846
        %v3793 = vmul.f32 %v3777, 0.7978846
        %v3794 = vmul.f32 %v3778, 0.7978846
        %v3795 = vmul.f32 %v3779, 0.7978846
        %v3796 = vmul.f32 %v3780, 0.7978846
        %v3797 = vmul.f32 %v3781, 0.7978846
        %v3798 = vmul.f32 %v3782, 0.7978846
        %v3799 = vtanh.pop %v3783
        %v3800 = vtanh.pop %v3784
        %v3801 = vtanh.pop %v3785
        %v3802 = vtanh.pop %v3786
        %v3803 = vtanh.pop %v3787
        %v3804 = vtanh.pop %v3788
        %v3805 = vtanh.pop %v3789
        %v3806 = vtanh.pop %v3790
        %v3807 = vtanh.pop %v3791
        %v3808 = vtanh.pop %v3792
        %v3809 = vtanh.pop %v3793
        %v3810 = vtanh.pop %v3794
        %v3811 = vtanh.pop %v3795
        %v3812 = vtanh.pop %v3796
        %v3813 = vtanh.pop %v3797
        %v3814 = vtanh.pop %v3798
        %v3815 = vadd.f32 %v3799, 1.0
        %v3816 = vadd.f32 %v3800, 1.0
        %v3817 = vadd.f32 %v3801, 1.0
        %v3818 = vadd.f32 %v3802, 1.0
        %v3819 = vadd.f32 %v3803, 1.0
        %v3820 = vadd.f32 %v3804, 1.0
        %v3821 = vadd.f32 %v3805, 1.0
        %v3822 = vadd.f32 %v3806, 1.0
        %v3823 = vadd.f32 %v3807, 1.0
        %v3824 = vadd.f32 %v3808, 1.0
        %v3825 = vadd.f32 %v3809, 1.0
        %v3826 = vadd.f32 %v3810, 1.0
        %v3827 = vadd.f32 %v3811, 1.0
        %v3828 = vadd.f32 %v3812, 1.0
        %v3829 = vadd.f32 %v3813, 1.0
        %v3830 = vadd.f32 %v3814, 1.0
        %v3831 = vmul.f32 %v3703, %v3815
        %v3832 = vmul.f32 %v3704, %v3816
        %v3833 = vmul.f32 %v3705, %v3817
        %v3834 = vmul.f32 %v3706, %v3818
        %v3835 = vmul.f32 %v3707, %v3819
        %v3836 = vmul.f32 %v3708, %v3820
        %v3837 = vmul.f32 %v3709, %v3821
        %v3838 = vmul.f32 %v3710, %v3822
        %v3839 = vmul.f32 %v3711, %v3823
        %v3840 = vmul.f32 %v3712, %v3824
        %v3841 = vmul.f32 %v3713, %v3825
        %v3842 = vmul.f32 %v3714, %v3826
        %v3843 = vmul.f32 %v3715, %v3827
        %v3844 = vmul.f32 %v3716, %v3828
        %v3845 = vmul.f32 %v3717, %v3829
        %v3846 = vmul.f32 %v3718, %v3830
        %v3847 = vld [vmem:[%s20] sm:$0xff]
        %v3848 = vld [vmem:[%s20 + $0x8] sm:$0xff]
        %v3849 = vld [vmem:[%s20 + $0x10] sm:$0xff]
        %v3850 = vld [vmem:[%s20 + $0x18] sm:$0xff]
        %v3851 = vld [vmem:[%s21] sm:$0xff]
        %v3852 = vld [vmem:[%s21 + $0x8] sm:$0xff]
        %v3853 = vld [vmem:[%s21 + $0x10] sm:$0xff]
        %v3854 = vld [vmem:[%s21 + $0x18] sm:$0xff]
        %3856 = vset.pattern.permute.xlu0 0
        %3857 = vperm.xlu0 %3856, %v3851
        %v3858 = vpop.permute.xlu0 %3857
        %3861 = vset.pattern.permute.xlu0 0
        %3862 = vperm.xlu0 %3861, %v3852
        %v3863 = vpop.permute.xlu0 %3862
        %3866 = vset.pattern.permute.xlu0 0
        %3867 = vperm.xlu0 %3866, %v3853
        %v3868 = vpop.permute.xlu0 %3867
        %3871 = vset.pattern.permute.xlu0 0
        %3872 = vperm.xlu0 %3871, %v3854
        %v3873 = vpop.permute.xlu0 %3872
        %3875 = vmatprep.subr.mxu0 0.0
        %3876 = vmatpush1.msra.mxu0 %v3831
        %3877 = vmatprep.subr.mxu0 0.0
        %3878 = vmatpush1.msra.mxu0 %v3832
        %3879 = vmatprep.subr.mxu0 0.0
        %3880 = vmatpush1.msra.mxu0 %v3833
        %3881 = vmatprep.subr.mxu0 0.0
        %3882 = vmatpush1.msra.mxu0 %v3834
        %3883 = vmatprep.subr.mxu0 0.0
        %3884 = vmatpush1.msra.mxu0 %v3835
        %3885 = vmatprep.subr.mxu0 0.0
        %3886 = vmatpush1.msra.mxu0 %v3836
        %3887 = vmatprep.subr.mxu0 0.0
        %3888 = vmatpush1.msra.mxu0 %v3837
        %3889 = vmatprep.subr.mxu0 0.0
        %3890 = vmatpush1.msra.mxu0 %v3838
        %3891 = vmatprep.subr.mxu0 0.0
        %3892 = vmatpush1.msra.mxu0 %v3839
        %3893 = vmatprep.subr.mxu0 0.0
        %3894 = vmatpush1.msra.mxu0 %v3840
        %3895 = vmatprep.subr.mxu0 0.0
        %3896 = vmatpush1.msra.mxu0 %v3841
        %3897 = vmatprep.subr.mxu0 0.0
        %3898 = vmatpush1.msra.mxu0 %v3842
        %3899 = vmatprep.subr.mxu0 0.0
        %3900 = vmatpush1.msra.mxu0 %v3843
        %3901 = vmatprep.subr.mxu0 0.0
        %3902 = vmatpush1.msra.mxu0 %v3844
        %3903 = vmatprep.subr.mxu0 0.0
        %3904 = vmatpush1.msra.mxu0 %v3845
        %3905 = vmatprep.subr.mxu0 0.0
        %3906 = vmatpush1.msra.mxu0 %v3846
        %3907 = vmatprep.subr.mxu0 0.0
        %3908 = vmatpush1.msra.mxu0 0.0
        %3909 = vmatprep.subr.mxu0 0.0
        %3910 = vmatpush1.msra.mxu0 0.0
        %3911 = vmatprep.subr.mxu0 0.0
        %3912 = vmatpush1.msra.mxu0 0.0
        %3913 = vmatprep.subr.mxu0 0.0
        %3914 = vmatpush1.msra.mxu0 0.0
        %3915 = vmatprep.subr.mxu0 0.0
        %3916 = vmatpush1.msra.mxu0 0.0
        %3917 = vmatprep.subr.mxu0 0.0
        %3918 = vmatpush1.msra.mxu0 0.0
        %3919 = vmatprep.subr.mxu0 0.0
        %3920 = vmatpush1.msra.mxu0 0.0
        %3921 = vmatprep.subr.mxu0 0.0
        %3922 = vmatpush1.msra.mxu0 0.0
        %3923 = vmatprep.subr.mxu0 0.0
        %3924 = vmatpush1.msra.mxu0 0.0
        %3925 = vmatprep.subr.mxu0 0.0
        %3926 = vmatpush1.msra.mxu0 0.0
        %3927 = vmatprep.subr.mxu0 0.0
        %3928 = vmatpush1.msra.mxu0 0.0
        %3929 = vmatprep.subr.mxu0 0.0
        %3930 = vmatpush1.msra.mxu0 0.0
        %3931 = vmatprep.subr.mxu0 0.0
        %3932 = vmatpush1.msra.mxu0 0.0
        %3933 = vmatprep.subr.mxu0 0.0
        %3934 = vmatpush1.msra.mxu0 0.0
        %3935 = vmatprep.subr.mxu0 0.0
        %3936 = vmatpush1.msra.mxu0 0.0
        %3937 = vmatprep.subr.mxu0 0.0
        %3938 = vmatpush1.msra.mxu0 0.0
        %3939 = vmatprep.mubr.f32.mxu0 0.0
        %3940 = vmatmul.mubr.f32.gmra.mrb[0].mxu0 %v3847
        %v3941 = vpop.f32.mrb[0].mxu0
        %v3942 = vadd.f32 %v3858, %v3941
        %v3943 = vpop.f32.mrb[0].mxu0
        %3944 = vmatprep.mubr.f32.mxu0 0.0
        %3945 = vmatmul.mubr.f32.gmra.mrb[0].mxu0 %v3848
        %v3946 = vpop.f32.mrb[0].mxu0
        %v3947 = vadd.f32 %v3863, %v3946
        %v3948 = vpop.f32.mrb[0].mxu0
        %3949 = vmatprep.mubr.f32.mxu0 0.0
        %3950 = vmatmul.mubr.f32.gmra.mrb[0].mxu0 %v3849
        %v3951 = vpop.f32.mrb[0].mxu0
        %v3952 = vadd.f32 %v3868, %v3951
        %v3953 = vpop.f32.mrb[0].mxu0
        %3954 = vmatprep.mubr.f32.mxu0 0.0
        %3955 = vmatmul.mubr.f32.gmra.mrb[0].mxu0 %v3850
        %v3956 = vpop.f32.mrb[0].mxu0
        %v3957 = vadd.f32 %v3873, %v3956
        %v3958 = vpop.f32.mrb[0].mxu0
        %3959 = vdwg.mxu0
        %v3960 = vadd.f32 %v3296, %v3942
        %v3961 = vadd.f32 %v3297, %v3947
        %v3962 = vadd.f32 %v3298, %v3952
        %v3963 = vadd.f32 %v3299, %v3957
        %3964 = vxpose.xlu0.b32.start [1/16] %v3960, 128
        %3965 = vxpose.xlu0.b32.cont [2/16] %v3961, 128
        %3966 = vxpose.xlu0.b32.cont [3/16] %v3962, 128
        %3967 = vxpose.xlu0.b32.cont [4/16] %v3963, 128
        %3968 = vxpose.xlu0.b32.cont [5/16] 0.0, 128
        %3969 = vxpose.xlu0.b32.cont [6/16] 0.0, 128
        %3970 = vxpose.xlu0.b32.cont [7/16] 0.0, 128
        %3971 = vxpose.xlu0.b32.cont [8/16] 0.0, 128
        %3972 = vxpose.xlu0.b32.cont [9/16] 0.0, 128
        %3973 = vxpose.xlu0.b32.cont [10/16] 0.0, 128
        %3974 = vxpose.xlu0.b32.cont [11/16] 0.0, 128
        %3975 = vxpose.xlu0.b32.cont [12/16] 0.0, 128
        %3976 = vxpose.xlu0.b32.cont [13/16] 0.0, 128
        %3977 = vxpose.xlu0.b32.cont [14/16] 0.0, 128
        %3978 = vxpose.xlu0.b32.cont [15/16] 0.0, 128
        %3979 = vxpose.xlu0.b32.end [16/16] 0.0, 128
        %v3980 = vpop.trf.xlu0
        %v3981 = vpop.trf.xlu0
        %v3982 = vpop.trf.xlu0
        %v3983 = vpop.trf.xlu0
        %v3984 = vpop.trf.xlu0
        %v3985 = vpop.trf.xlu0
        %v3986 = vpop.trf.xlu0
        %v3987 = vpop.trf.xlu0
        %v3988 = vpop.trf.xlu0
        %v3989 = vpop.trf.xlu0
        %v3990 = vpop.trf.xlu0
        %v3991 = vpop.trf.xlu0
        %v3992 = vpop.trf.xlu0
        %v3993 = vpop.trf.xlu0
        %v3994 = vpop.trf.xlu0
        %v3995 = vpop.trf.xlu0
        %3996 = vst.msk [vmem:[%s687] sm:$0xff] %vm914, %v3980
        %s3997 = sand.u32 %s516, 1
        %s3998 = scalar_lea.sflag [#allocation3], %s3997
        %s3999 = sand.u32 %s516, 1
        %s4000 = smul.addr %s3999, 8
        %s4001 = scalar_lea.vmem [#allocation2], %s4000
        // Predicated region
        $region109: #{tpu_custom_call.1} parent=107 // pred_check
          %p4002 = pneg %p526
        $region110: #{tpu_custom_call.1} parent=107 // pred_check_branch
          %4004 = sbr.rel (%p4002) target = $region112
        $region111: #{tpu_custom_call.1} parent=107 // pred_region
          %s4006 = ssub.s32 128, 128
          %4007 = vsyncadd %s3998, %s4006
          %s4008 = smul.addr %s36, 128
          %s4009 = scalar_lea.hbm %s22, %s4008
          %s4011 = sshll.u32 %s4001, 4
          %s4012 = int_to_ptr.vmem [resolvable:$true] %s4011
          %4014 = dma.vmem_to_hbm [thread:$0]  %s4012, 128, %s4009, %s3998
        $region112: #{tpu_custom_call.1} parent=107 // pred_fallthru
          _
      $region108: #{tpu_custom_call.1} parent=5 // pred_fallthru
        _
      %p4015 = scmp.le.s32.totalorder 2, %s31
      // Predicated region
      $region113: #{tpu_custom_call.1} parent=5 // pred_check
        %p4016 = pneg %p4015
      $region114: #{tpu_custom_call.1} parent=5 // pred_check_branch
        %4018 = sbr.rel (%p4016) target = $region116
      $region115: #{tpu_custom_call.1} parent=5 // pred_region
        %s4019 = ssub.s32 %s31, 2
        // Predicated region
        $region117: #{tpu_custom_call.1} parent=115 // pred_check
          %p4020 = pneg %p532
        $region118: #{tpu_custom_call.1} parent=115 // pred_check_branch
          %4022 = sbr.rel (%p4020) target = $region120
        $region119: #{tpu_custom_call.1} parent=115 // pred_region
          %s4023 = sand.u32 %s517, 1
          %s4024 = scalar_lea.sflag [#allocation3], %s4023
          %s4025 = sand.u32 %s517, 1
          %s4026 = smul.addr %s4025, 8
          %s4027 = scalar_lea.vmem [#allocation2], %s4026
          %4028 = dma.done %s4024, 128
        $region120: #{tpu_custom_call.1} parent=115 // pred_fallthru
          _
      $region116: #{tpu_custom_call.1} parent=5 // pred_fallthru
        _
    $region6: #{tpu_custom_call.1} parent=1 // loop_footer
      %s35 = sadd.s32 1, %s31
    $region7: #{tpu_custom_call.1} parent=1 // loop_footer_branch
      %30 = sbr.rel target = $region3
    $region8: #{tpu_custom_call.1} parent=1 // loop_exit
      _
    %4029 = vsyncpa [#allocation3], 1
    %s4030 = scalar_lea.sflag [#allocation3], 1
    %4031 = vsyncpa %s4030, 1

// kernel: tpu_custom_call.1
$region0: #{tpu_custom_call.1}
  #allocation0 [shape = 'u32[]', space=smem, size = 0x4, offset = 0x4, fixed_abs, tag = 'smem constant byte address 0x4 - core index']
  #allocation1 [shape = 'u32[144,128]{1,0:T(1,128)}', space=vmem, size = 0x12000, scoped, tag = 'internal scratch']
  %s0 = inlined_call_operand.vmem [shape: f32[2,8,32], index: 0, kind: input, shape index: {}]
  %s1 = inlined_call_operand.vmem [shape: f32[2,8,32], index: 1, kind: input, shape index: {}]
  %s2 = inlined_call_operand.vmem [shape: f32[32,1], index: 2, kind: input, shape index: {}]
  %s3 = inlined_call_operand.vmem [shape: f32[32,1], index: 3, kind: input, shape index: {}]
  %s4 = inlined_call_operand.vmem [shape: f32[96,32], index: 4, kind: input, shape index: {}]
  %s5 = inlined_call_operand.vmem [shape: f32[96,1], index: 5, kind: input, shape index: {}]
  %s6 = inlined_call_operand.vmem [shape: f32[32,32], index: 6, kind: input, shape index: {}]
  %s7 = inlined_call_operand.vmem [shape: f32[32,1], index: 7, kind: input, shape index: {}]
  %s8 = inlined_call_operand.vmem [shape: f32[32,1], index: 8, kind: input, shape index: {}]
  %s9 = inlined_call_operand.vmem [shape: f32[32,1], index: 9, kind: input, shape index: {}]
  %s10 = inlined_call_operand.vmem [shape: f32[32,32], index: 10, kind: input, shape index: {}]
  %s11 = inlined_call_operand.vmem [shape: f32[32,1], index: 11, kind: input, shape index: {}]
  %s12 = inlined_call_operand.vmem [shape: f32[64,32], index: 12, kind: input, shape index: {}]
  %s13 = inlined_call_operand.vmem [shape: f32[64,1], index: 13, kind: input, shape index: {}]
  %s14 = inlined_call_operand.vmem [shape: f32[32,32], index: 14, kind: input, shape index: {}]
  %s15 = inlined_call_operand.vmem [shape: f32[32,1], index: 15, kind: input, shape index: {}]
  %s16 = inlined_call_operand.vmem [shape: f32[32,1], index: 16, kind: input, shape index: {}]
  %s17 = inlined_call_operand.vmem [shape: f32[32,1], index: 17, kind: input, shape index: {}]
  %s18 = inlined_call_operand.vmem [shape: f32[128,32], index: 18, kind: input, shape index: {}]
  %s19 = inlined_call_operand.vmem [shape: f32[128,1], index: 19, kind: input, shape index: {}]
  %s20 = inlined_call_operand.vmem [shape: f32[32,128], index: 20, kind: input, shape index: {}]
  %s21 = inlined_call_operand.vmem [shape: f32[32,1], index: 21, kind: input, shape index: {}]
  %s22 = inlined_call_operand.hbm [shape: f32[2,8,32], index: 22, kind: output, shape index: {}]
  %s23 = sld [smem:[#allocation0]]
  $region121: #{tpu_custom_call.1} parent=0
    _
  %s25 = ssub.s32 1, %s23
  %s26 = scalar_select 0, %s25, %s23
  $region1: #{tpu_custom_call.1} parent=0
    #allocation2 [shape = 'u8[8192]{0}', space=vmem, size = 0x2000, scoped, tag = 'output window, operand 0']
    #allocation3 [shape = 's32[2]{0}', space=sflag, size = 0x8, scoped, tag = 'scoped memory for tpu_custom_call.1']
    %27 = vsyncpa [#allocation3], 0
    %s28 = scalar_lea.sflag [#allocation3], 1
    %29 = vsyncpa %s28, 0
    loop: start=0, step=1, limit=4
    $region2: #{tpu_custom_call.1} parent=1 // loop_pre_header
      _
    $region3: #{tpu_custom_call.1} parent=1 // loop_header
      %s31 = sphi 0, %s35
      %p32 = scmp.ge.s32.totalorder %s31, 4
      %s41 = sphi 0, %s43
      %s44 = sphi 0, %s41
      %s45 = sphi 0, %s44
      %s61 = sphi 0, %s45
      %s67 = sphi 0, %s69
      %s70 = sphi 0, %s67
      %s71 = sphi 0, %s70
      %s87 = sphi 0, %s71
      %s91 = sphi 0, %s91
      %s93 = sphi 0, %s91
      %s94 = sphi 0, %s93
      %s108 = sphi 0, %s94
      %s112 = sphi 0, %s112
      %s114 = sphi 0, %s112
      %s115 = sphi 0, %s114
      %s129 = sphi 0, %s115
      %s133 = sphi 0, %s133
      %s135 = sphi 0, %s133
      %s136 = sphi 0, %s135
      %s150 = sphi 0, %s136
      %s154 = sphi 0, %s154
      %s156 = sphi 0, %s154
      %s157 = sphi 0, %s156
      %s171 = sphi 0, %s157
      %s175 = sphi 0, %s175
      %s177 = sphi 0, %s175
      %s178 = sphi 0, %s177
      %s192 = sphi 0, %s178
      %s196 = sphi 0, %s196
      %s198 = sphi 0, %s196
      %s199 = sphi 0, %s198
      %s213 = sphi 0, %s199
      %s217 = sphi 0, %s217
      %s219 = sphi 0, %s217
      %s220 = sphi 0, %s219
      %s234 = sphi 0, %s220
      %s238 = sphi 0, %s238
      %s240 = sphi 0, %s238
      %s241 = sphi 0, %s240
      %s255 = sphi 0, %s241
      %s259 = sphi 0, %s259
      %s261 = sphi 0, %s259
      %s262 = sphi 0, %s261
      %s276 = sphi 0, %s262
      %s280 = sphi 0, %s280
      %s282 = sphi 0, %s280
      %s283 = sphi 0, %s282
      %s297 = sphi 0, %s283
      %s301 = sphi 0, %s301
      %s303 = sphi 0, %s301
      %s304 = sphi 0, %s303
      %s318 = sphi 0, %s304
      %s322 = sphi 0, %s322
      %s324 = sphi 0, %s322
      %s325 = sphi 0, %s324
      %s339 = sphi 0, %s325
      %s343 = sphi 0, %s343
      %s345 = sphi 0, %s343
      %s346 = sphi 0, %s345
      %s360 = sphi 0, %s346
      %s364 = sphi 0, %s364
      %s366 = sphi 0, %s364
      %s367 = sphi 0, %s366
      %s381 = sphi 0, %s367
      %s385 = sphi 0, %s385
      %s387 = sphi 0, %s385
      %s388 = sphi 0, %s387
      %s402 = sphi 0, %s388
      %s406 = sphi 0, %s406
      %s408 = sphi 0, %s406
      %s409 = sphi 0, %s408
      %s423 = sphi 0, %s409
      %s427 = sphi 0, %s427
      %s429 = sphi 0, %s427
      %s430 = sphi 0, %s429
      %s444 = sphi 0, %s430
      %s448 = sphi 0, %s448
      %s450 = sphi 0, %s448
      %s451 = sphi 0, %s450
      %s465 = sphi 0, %s451
      %s469 = sphi 0, %s469
      %s471 = sphi 0, %s469
      %s472 = sphi 0, %s471
      %s486 = sphi 0, %s472
      %s490 = sphi 0, %s490
      %s492 = sphi 0, %s490
      %s493 = sphi 0, %s492
      %s507 = sphi 0, %s493
      %s513 = sphi 0, %s515
      %s516 = sphi 0, %s513
      %s517 = sphi 0, %s516
      %s533 = sphi 0, %s517
    $region4: #{tpu_custom_call.1} parent=1 // loop_header_branch
      %34 = sbr.rel (%p32) target = $region8
    $region5: #{tpu_custom_call.1} parent=1 // loop_body
      %s36 = ssub.s32 %s31, 1
      %s37 = ssub.s32 %s31, 2
      %s38 = sadd.s32 %s31, 1
      %s39 = ssub.s32 %s31, %s38
      %p40 = scmp.eq.s32.totalorder %s39, 0
      %s42 = sadd.s32 %s41, 1
      %s43 = scalar_select %p40, %s41, %s42
      %p46 = pneg %p40
      %p47 = scmp.eq.s32.totalorder %s31, 1
      %p48 = por %p46, %p47
      %p49 = scmp.ne.s32.totalorder %s41, %s44
      %p50 = scmp.eq.s32.totalorder %s31, 0
      %p51 = por %p49, %p50
      %p52 = scmp.ne.s32.totalorder %s41, %s44
      %p53 = scmp.eq.s32.totalorder %s36, 1
      %p54 = por %p52, %p53
      %p55 = scmp.ne.s32.totalorder %s44, %s45
      %p56 = scmp.eq.s32.totalorder %s36, 0
      %p57 = por %p55, %p56
      %p58 = scmp.ne.s32.totalorder %s44, %s45
      %p59 = scmp.eq.s32.totalorder %s37, 1
      %p60 = por %p58, %p59
      %p62 = scmp.ne.s32.totalorder %s45, %s61
      %p63 = scmp.eq.s32.totalorder %s37, 0
      %p64 = por %p62, %p63
      %s65 = ssub.s32 %s31, %s38
      %p66 = scmp.eq.s32.totalorder %s65, 0
      %s68 = sadd.s32 %s67, 1
      %s69 = scalar_select %p66, %s67, %s68
      %p72 = pneg %p66
      %p73 = scmp.eq.s32.totalorder %s31, 1
      %p74 = por %p72, %p73
      %p75 = scmp.ne.s32.totalorder %s67, %s70
      %p76 = scmp.eq.s32.totalorder %s31, 0
      %p77 = por %p75, %p76
      %p78 = scmp.ne.s32.totalorder %s67, %s70
      %p79 = scmp.eq.s32.totalorder %s36, 1
      %p80 = por %p78, %p79
      %p81 = scmp.ne.s32.totalorder %s70, %s71
      %p82 = scmp.eq.s32.totalorder %s36, 0
      %p83 = por %p81, %p82
      %p84 = scmp.ne.s32.totalorder %s70, %s71
      %p85 = scmp.eq.s32.totalorder %s37, 1
      %p86 = por %p84, %p85
      %p88 = scmp.ne.s32.totalorder %s71, %s87
      %p89 = scmp.eq.s32.totalorder %s37, 0
      %p90 = por %p88, %p89
      %s92 = sadd.s32 %s91, 1
      %p95 = scmp.eq.s32.totalorder %s31, 1
      %p96 = scmp.ne.s32.totalorder %s91, %s93
      %p97 = scmp.eq.s32.totalorder %s31, 0
      %p98 = por %p96, %p97
      %p99 = scmp.ne.s32.totalorder %s91, %s93
      %p100 = scmp.eq.s32.totalorder %s36, 1
      %p101 = por %p99, %p100
      %p102 = scmp.ne.s32.totalorder %s93, %s94
      %p103 = scmp.eq.s32.totalorder %s36, 0
      %p104 = por %p102, %p103
      %p105 = scmp.ne.s32.totalorder %s93, %s94
      %p106 = scmp.eq.s32.totalorder %s37, 1
      %p107 = por %p105, %p106
      %p109 = scmp.ne.s32.totalorder %s94, %s108
      %p110 = scmp.eq.s32.totalorder %s37, 0
      %p111 = por %p109, %p110
      %s113 = sadd.s32 %s112, 1
      %p116 = scmp.eq.s32.totalorder %s31, 1
      %p117 = scmp.ne.s32.totalorder %s112, %s114
      %p118 = scmp.eq.s32.totalorder %s31, 0
      %p119 = por %p117, %p118
      %p120 = scmp.ne.s32.totalorder %s112, %s114
      %p121 = scmp.eq.s32.totalorder %s36, 1
      %p122 = por %p120, %p121
      %p123 = scmp.ne.s32.totalorder %s114, %s115
      %p124 = scmp.eq.s32.totalorder %s36, 0
      %p125 = por %p123, %p124
      %p126 = scmp.ne.s32.totalorder %s114, %s115
      %p127 = scmp.eq.s32.totalorder %s37, 1
      %p128 = por %p126, %p127
      %p130 = scmp.ne.s32.totalorder %s115, %s129
      %p131 = scmp.eq.s32.totalorder %s37, 0
      %p132 = por %p130, %p131
      %s134 = sadd.s32 %s133, 1
      %p137 = scmp.eq.s32.totalorder %s31, 1
      %p138 = scmp.ne.s32.totalorder %s133, %s135
      %p139 = scmp.eq.s32.totalorder %s31, 0
      %p140 = por %p138, %p139
      %p141 = scmp.ne.s32.totalorder %s133, %s135
      %p142 = scmp.eq.s32.totalorder %s36, 1
      %p143 = por %p141, %p142
      %p144 = scmp.ne.s32.totalorder %s135, %s136
      %p145 = scmp.eq.s32.totalorder %s36, 0
      %p146 = por %p144, %p145
      %p147 = scmp.ne.s32.totalorder %s135, %s136
      %p148 = scmp.eq.s32.totalorder %s37, 1
      %p149 = por %p147, %p148
      %p151 = scmp.ne.s32.totalorder %s136, %s150
      %p152 = scmp.eq.s32.totalorder %s37, 0
      %p153 = por %p151, %p152
      %s155 = sadd.s32 %s154, 1
      %p158 = scmp.eq.s32.totalorder %s31, 1
      %p159 = scmp.ne.s32.totalorder %s154, %s156
      %p160 = scmp.eq.s32.totalorder %s31, 0
      %p161 = por %p159, %p160
      %p162 = scmp.ne.s32.totalorder %s154, %s156
      %p163 = scmp.eq.s32.totalorder %s36, 1
      %p164 = por %p162, %p163
      %p165 = scmp.ne.s32.totalorder %s156, %s157
      %p166 = scmp.eq.s32.totalorder %s36, 0
      %p167 = por %p165, %p166
      %p168 = scmp.ne.s32.totalorder %s156, %s157
      %p169 = scmp.eq.s32.totalorder %s37, 1
      %p170 = por %p168, %p169
      %p172 = scmp.ne.s32.totalorder %s157, %s171
      %p173 = scmp.eq.s32.totalorder %s37, 0
      %p174 = por %p172, %p173
      %s176 = sadd.s32 %s175, 1
      %p179 = scmp.eq.s32.totalorder %s31, 1
      %p180 = scmp.ne.s32.totalorder %s175, %s177
      %p181 = scmp.eq.s32.totalorder %s31, 0
      %p182 = por %p180, %p181
      %p183 = scmp.ne.s32.totalorder %s175, %s177
      %p184 = scmp.eq.s32.totalorder %s36, 1
      %p185 = por %p183, %p184
      %p186 = scmp.ne.s32.totalorder %s177, %s178
      %p187 = scmp.eq.s32.totalorder %s36, 0
      %p188 = por %p186, %p187
      %p189 = scmp.ne.s32.totalorder %s177, %s178
      %p190 = scmp.eq.s32.totalorder %s37, 1
      %p191 = por %p189, %p190
      %p193 = scmp.ne.s32.totalorder %s178, %s192
      %p194 = scmp.eq.s32.totalorder %s37, 0
      %p195 = por %p193, %p194
      %s197 = sadd.s32 %s196, 1
      %p200 = scmp.eq.s32.totalorder %s31, 1
      %p201 = scmp.ne.s32.totalorder %s196, %s198
      %p202 = scmp.eq.s32.totalorder %s31, 0
      %p203 = por %p201, %p202
      %p204 = scmp.ne.s32.totalorder %s196, %s198
      %p205 = scmp.eq.s32.totalorder %s36, 1
      %p206 = por %p204, %p205
      %p207 = scmp.ne.s32.totalorder %s198, %s199
      %p208 = scmp.eq.s32.totalorder %s36, 0
      %p209 = por %p207, %p208
      %p210 = scmp.ne.s32.totalorder %s198, %s199
      %p211 = scmp.eq.s32.totalorder %s37, 1
      %p212 = por %p210, %p211
      %p214 = scmp.ne.s32.totalorder %s199, %s213
      %p215 = scmp.eq.s32.totalorder %s37, 0
      %p216 = por %p214, %p215
      %s218 = sadd.s32 %s217, 1
      %p221 = scmp.eq.s32.totalorder %s31, 1
      %p222 = scmp.ne.s32.totalorder %s217, %s219
      %p223 = scmp.eq.s32.totalorder %s31, 0
      %p224 = por %p222, %p223
      %p225 = scmp.ne.s32.totalorder %s217, %s219
      %p226 = scmp.eq.s32.totalorder %s36, 1
      %p227 = por %p225, %p226
      %p228 = scmp.ne.s32.totalorder %s219, %s220
      %p229 = scmp.eq.s32.totalorder %s36, 0
      %p230 = por %p228, %p229
      %p231 = scmp.ne.s32.totalorder %s219, %s220
      %p232 = scmp.eq.s32.totalorder %s37, 1
      %p233 = por %p231, %p232
      %p235 = scmp.ne.s32.totalorder %s220, %s234
      %p236 = scmp.eq.s32.totalorder %s37, 0
      %p237 = por %p235, %p236
      %s239 = sadd.s32 %s238, 1
      %p242 = scmp.eq.s32.totalorder %s31, 1
      %p243 = scmp.ne.s32.totalorder %s238, %s240
      %p244 = scmp.eq.s32.totalorder %s31, 0
      %p245 = por %p243, %p244
      %p246 = scmp.ne.s32.totalorder %s238, %s240
      %p247 = scmp.eq.s32.totalorder %s36, 1
      %p248 = por %p246, %p247
      %p249 = scmp.ne.s32.totalorder %s240, %s241
      %p250 = scmp.eq.s32.totalorder %s36, 0
      %p251 = por %p249, %p250
      %p252 = scmp.ne.s32.totalorder %s240, %s241
      %p253 = scmp.eq.s32.totalorder %s37, 1
      %p254 = por %p252, %p253
      %p256 = scmp.ne.s32.totalorder %s241, %s255
      %p257 = scmp.eq.s32.totalorder %s37, 0
      %p258 = por %p256, %p257
      %s260 = sadd.s32 %s259, 1
      %p263 = scmp.eq.s32.totalorder %s31, 1
      %p264 = scmp.ne.s32.totalorder %s259, %s261
      %p265 = scmp.eq.s32.totalorder %s31, 0
      %p266 = por %p264, %p265
      %p267 = scmp.ne.s32.totalorder %s259, %s261
      %p268 = scmp.eq.s32.totalorder %s36, 1
      %p269 = por %p267, %p268
      %p270 = scmp.ne.s32.totalorder %s261, %s262
      %p271 = scmp.eq.s32.totalorder %s36, 0
      %p272 = por %p270, %p271
      %p273 = scmp.ne.s32.totalorder %s261, %s262
      %p274 = scmp.eq.s32.totalorder %s37, 1
      %p275 = por %p273, %p274
      %p277 = scmp.ne.s32.totalorder %s262, %s276
      %p278 = scmp.eq.s32.totalorder %s37, 0
      %p279 = por %p277, %p278
      %s281 = sadd.s32 %s280, 1
      %p284 = scmp.eq.s32.totalorder %s31, 1
      %p285 = scmp.ne.s32.totalorder %s280, %s282
      %p286 = scmp.eq.s32.totalorder %s31, 0
      %p287 = por %p285, %p286
      %p288 = scmp.ne.s32.totalorder %s280, %s282
      %p289 = scmp.eq.s32.totalorder %s36, 1
      %p290 = por %p288, %p289
      %p291 = scmp.ne.s32.totalorder %s282, %s283
      %p292 = scmp.eq.s32.totalorder %s36, 0
      %p293 = por %p291, %p292
      %p294 = scmp.ne.s32.totalorder %s282, %s283
      %p295 = scmp.eq.s32.totalorder %s37, 1
      %p296 = por %p294, %p295
      %p298 = scmp.ne.s32.totalorder %s283, %s297
      %p299 = scmp.eq.s32.totalorder %s37, 0
      %p300 = por %p298, %p299
      %s302 = sadd.s32 %s301, 1
      %p305 = scmp.eq.s32.totalorder %s31, 1
      %p306 = scmp.ne.s32.totalorder %s301, %s303
      %p307 = scmp.eq.s32.totalorder %s31, 0
      %p308 = por %p306, %p307
      %p309 = scmp.ne.s32.totalorder %s301, %s303
      %p310 = scmp.eq.s32.totalorder %s36, 1
      %p311 = por %p309, %p310
      %p312 = scmp.ne.s32.totalorder %s303, %s304
      %p313 = scmp.eq.s32.totalorder %s36, 0
      %p314 = por %p312, %p313
      %p315 = scmp.ne.s32.totalorder %s303, %s304
      %p316 = scmp.eq.s32.totalorder %s37, 1
      %p317 = por %p315, %p316
      %p319 = scmp.ne.s32.totalorder %s304, %s318
      %p320 = scmp.eq.s32.totalorder %s37, 0
      %p321 = por %p319, %p320
      %s323 = sadd.s32 %s322, 1
      %p326 = scmp.eq.s32.totalorder %s31, 1
      %p327 = scmp.ne.s32.totalorder %s322, %s324
      %p328 = scmp.eq.s32.totalorder %s31, 0
      %p329 = por %p327, %p328
      %p330 = scmp.ne.s32.totalorder %s322, %s324
      %p331 = scmp.eq.s32.totalorder %s36, 1
      %p332 = por %p330, %p331
      %p333 = scmp.ne.s32.totalorder %s324, %s325
      %p334 = scmp.eq.s32.totalorder %s36, 0
      %p335 = por %p333, %p334
      %p336 = scmp.ne.s32.totalorder %s324, %s325
      %p337 = scmp.eq.s32.totalorder %s37, 1
      %p338 = por %p336, %p337
      %p340 = scmp.ne.s32.totalorder %s325, %s339
      %p341 = scmp.eq.s32.totalorder %s37, 0
      %p342 = por %p340, %p341
      %s344 = sadd.s32 %s343, 1
      %p347 = scmp.eq.s32.totalorder %s31, 1
      %p348 = scmp.ne.s32.totalorder %s343, %s345
      %p349 = scmp.eq.s32.totalorder %s31, 0
      %p350 = por %p348, %p349
      %p351 = scmp.ne.s32.totalorder %s343, %s345
      %p352 = scmp.eq.s32.totalorder %s36, 1
      %p353 = por %p351, %p352
      %p354 = scmp.ne.s32.totalorder %s345, %s346
      %p355 = scmp.eq.s32.totalorder %s36, 0
      %p356 = por %p354, %p355
      %p357 = scmp.ne.s32.totalorder %s345, %s346
      %p358 = scmp.eq.s32.totalorder %s37, 1
      %p359 = por %p357, %p358
      %p361 = scmp.ne.s32.totalorder %s346, %s360
      %p362 = scmp.eq.s32.totalorder %s37, 0
      %p363 = por %p361, %p362
      %s365 = sadd.s32 %s364, 1
      %p368 = scmp.eq.s32.totalorder %s31, 1
      %p369 = scmp.ne.s32.totalorder %s364, %s366
      %p370 = scmp.eq.s32.totalorder %s31, 0
      %p371 = por %p369, %p370
      %p372 = scmp.ne.s32.totalorder %s364, %s366
      %p373 = scmp.eq.s32.totalorder %s36, 1
      %p374 = por %p372, %p373
      %p375 = scmp.ne.s32.totalorder %s366, %s367
      %p376 = scmp.eq.s32.totalorder %s36, 0
      %p377 = por %p375, %p376
      %p378 = scmp.ne.s32.totalorder %s366, %s367
      %p379 = scmp.eq.s32.totalorder %s37, 1
      %p380 = por %p378, %p379
      %p382 = scmp.ne.s32.totalorder %s367, %s381
      %p383 = scmp.eq.s32.totalorder %s37, 0
      %p384 = por %p382, %p383
      %s386 = sadd.s32 %s385, 1
      %p389 = scmp.eq.s32.totalorder %s31, 1
      %p390 = scmp.ne.s32.totalorder %s385, %s387
      %p391 = scmp.eq.s32.totalorder %s31, 0
      %p392 = por %p390, %p391
      %p393 = scmp.ne.s32.totalorder %s385, %s387
      %p394 = scmp.eq.s32.totalorder %s36, 1
      %p395 = por %p393, %p394
      %p396 = scmp.ne.s32.totalorder %s387, %s388
      %p397 = scmp.eq.s32.totalorder %s36, 0
      %p398 = por %p396, %p397
      %p399 = scmp.ne.s32.totalorder %s387, %s388
      %p400 = scmp.eq.s32.totalorder %s37, 1
      %p401 = por %p399, %p400
      %p403 = scmp.ne.s32.totalorder %s388, %s402
      %p404 = scmp.eq.s32.totalorder %s37, 0
      %p405 = por %p403, %p404
      %s407 = sadd.s32 %s406, 1
      %p410 = scmp.eq.s32.totalorder %s31, 1
      %p411 = scmp.ne.s32.totalorder %s406, %s408
      %p412 = scmp.eq.s32.totalorder %s31, 0
      %p413 = por %p411, %p412
      %p414 = scmp.ne.s32.totalorder %s406, %s408
      %p415 = scmp.eq.s32.totalorder %s36, 1
      %p416 = por %p414, %p415
      %p417 = scmp.ne.s32.totalorder %s408, %s409
      %p418 = scmp.eq.s32.totalorder %s36, 0
      %p419 = por %p417, %p418
      %p420 = scmp.ne.s32.totalorder %s408, %s409
      %p421 = scmp.eq.s32.totalorder %s37, 1
      %p422 = por %p420, %p421
      %p424 = scmp.ne.s32.totalorder %s409, %s423
      %p425 = scmp.eq.s32.totalorder %s37, 0
      %p426 = por %p424, %p425
      %s428 = sadd.s32 %s427, 1
      %p431 = scmp.eq.s32.totalorder %s31, 1
      %p432 = scmp.ne.s32.totalorder %s427, %s429
      %p433 = scmp.eq.s32.totalorder %s31, 0
      %p434 = por %p432, %p433
      %p435 = scmp.ne.s32.totalorder %s427, %s429
      %p436 = scmp.eq.s32.totalorder %s36, 1
      %p437 = por %p435, %p436
      %p438 = scmp.ne.s32.totalorder %s429, %s430
      %p439 = scmp.eq.s32.totalorder %s36, 0
      %p440 = por %p438, %p439
      %p441 = scmp.ne.s32.totalorder %s429, %s430
      %p442 = scmp.eq.s32.totalorder %s37, 1
      %p443 = por %p441, %p442
      %p445 = scmp.ne.s32.totalorder %s430, %s444
      %p446 = scmp.eq.s32.totalorder %s37, 0
      %p447 = por %p445, %p446
      %s449 = sadd.s32 %s448, 1
      %p452 = scmp.eq.s32.totalorder %s31, 1
      %p453 = scmp.ne.s32.totalorder %s448, %s450
      %p454 = scmp.eq.s32.totalorder %s31, 0
      %p455 = por %p453, %p454
      %p456 = scmp.ne.s32.totalorder %s448, %s450
      %p457 = scmp.eq.s32.totalorder %s36, 1
      %p458 = por %p456, %p457
      %p459 = scmp.ne.s32.totalorder %s450, %s451
      %p460 = scmp.eq.s32.totalorder %s36, 0
      %p461 = por %p459, %p460
      %p462 = scmp.ne.s32.totalorder %s450, %s451
      %p463 = scmp.eq.s32.totalorder %s37, 1
      %p464 = por %p462, %p463
      %p466 = scmp.ne.s32.totalorder %s451, %s465
      %p467 = scmp.eq.s32.totalorder %s37, 0
      %p468 = por %p466, %p467
      %s470 = sadd.s32 %s469, 1
      %p473 = scmp.eq.s32.totalorder %s31, 1
      %p474 = scmp.ne.s32.totalorder %s469, %s471
      %p475 = scmp.eq.s32.totalorder %s31, 0
      %p476 = por %p474, %p475
      %p477 = scmp.ne.s32.totalorder %s469, %s471
      %p478 = scmp.eq.s32.totalorder %s36, 1
      %p479 = por %p477, %p478
      %p480 = scmp.ne.s32.totalorder %s471, %s472
      %p481 = scmp.eq.s32.totalorder %s36, 0
      %p482 = por %p480, %p481
      %p483 = scmp.ne.s32.totalorder %s471, %s472
      %p484 = scmp.eq.s32.totalorder %s37, 1
      %p485 = por %p483, %p484
      %p487 = scmp.ne.s32.totalorder %s472, %s486
      %p488 = scmp.eq.s32.totalorder %s37, 0
      %p489 = por %p487, %p488
      %s491 = sadd.s32 %s490, 1
      %p494 = scmp.eq.s32.totalorder %s31, 1
      %p495 = scmp.ne.s32.totalorder %s490, %s492
      %p496 = scmp.eq.s32.totalorder %s31, 0
      %p497 = por %p495, %p496
      %p498 = scmp.ne.s32.totalorder %s490, %s492
      %p499 = scmp.eq.s32.totalorder %s36, 1
      %p500 = por %p498, %p499
      %p501 = scmp.ne.s32.totalorder %s492, %s493
      %p502 = scmp.eq.s32.totalorder %s36, 0
      %p503 = por %p501, %p502
      %p504 = scmp.ne.s32.totalorder %s492, %s493
      %p505 = scmp.eq.s32.totalorder %s37, 1
      %p506 = por %p504, %p505
      %p508 = scmp.ne.s32.totalorder %s493, %s507
      %p509 = scmp.eq.s32.totalorder %s37, 0
      %p510 = por %p508, %p509
      %s511 = ssub.s32 %s31, %s38
      %p512 = scmp.eq.s32.totalorder %s511, 0
      %s514 = sadd.s32 %s513, 1
      %s515 = scalar_select %p512, %s513, %s514
      %p518 = pneg %p512
      %p519 = scmp.eq.s32.totalorder %s31, 1
      %p520 = por %p518, %p519
      %p521 = scmp.ne.s32.totalorder %s513, %s516
      %p522 = scmp.eq.s32.totalorder %s31, 0
      %p523 = por %p521, %p522
      %p524 = scmp.ne.s32.totalorder %s513, %s516
      %p525 = scmp.eq.s32.totalorder %s36, 1
      %p526 = por %p524, %p525
      %p527 = scmp.ne.s32.totalorder %s516, %s517
      %p528 = scmp.eq.s32.totalorder %s36, 0
      %p529 = por %p527, %p528
      %p530 = scmp.ne.s32.totalorder %s516, %s517
      %p531 = scmp.eq.s32.totalorder %s37, 1
      %p532 = por %p530, %p531
      %p534 = scmp.ne.s32.totalorder %s517, %s533
      %p535 = scmp.eq.s32.totalorder %s37, 0
      %p536 = por %p534, %p535
      %p537 = scmp.le.s32.totalorder 1, %s31
      %p538 = scmp.lt.s32.totalorder %s31, 3
      %p539 = pnand %p537, %p538
      %p540 = pneg %p539
      // Predicated region
      $region9: #{tpu_custom_call.1} parent=5 // pred_check
        _
      $region10: #{tpu_custom_call.1} parent=5 // pred_check_branch
        %542 = sbr.rel (%p539) target = $region12
      $region11: #{tpu_custom_call.1} parent=5 // pred_region
        %s543 = ssub.s32 %s31, 1
        // Predicated region
        $region13: #{tpu_custom_call.1} parent=11 // pred_check
          %p544 = pneg %p104
        $region14: #{tpu_custom_call.1} parent=11 // pred_check_branch
          %546 = sbr.rel (%p544) target = $region16
        $region15: #{tpu_custom_call.1} parent=11 // pred_region
          _
        $region16: #{tpu_custom_call.1} parent=11 // pred_fallthru
          _
        // Predicated region
        $region17: #{tpu_custom_call.1} parent=11 // pred_check
          %p547 = pneg %p125
        $region18: #{tpu_custom_call.1} parent=11 // pred_check_branch
          %549 = sbr.rel (%p547) target = $region20
        $region19: #{tpu_custom_call.1} parent=11 // pred_region
          _
        $region20: #{tpu_custom_call.1} parent=11 // pred_fallthru
          _
        // Predicated region
        $region21: #{tpu_custom_call.1} parent=11 // pred_check
          %p550 = pneg %p146
        $region22: #{tpu_custom_call.1} parent=11 // pred_check_branch
          %552 = sbr.rel (%p550) target = $region24
        $region23: #{tpu_custom_call.1} parent=11 // pred_region
          _
        $region24: #{tpu_custom_call.1} parent=11 // pred_fallthru
          _
        // Predicated region
        $region25: #{tpu_custom_call.1} parent=11 // pred_check
          %p553 = pneg %p167
        $region26: #{tpu_custom_call.1} parent=11 // pred_check_branch
          %555 = sbr.rel (%p553) target = $region28
        $region27: #{tpu_custom_call.1} parent=11 // pred_region
          _
        $region28: #{tpu_custom_call.1} parent=11 // pred_fallthru
          _
        // Predicated region
        $region29: #{tpu_custom_call.1} parent=11 // pred_check
          %p556 = pneg %p188
        $region30: #{tpu_custom_call.1} parent=11 // pred_check_branch
          %558 = sbr.rel (%p556) target = $region32
        $region31: #{tpu_custom_call.1} parent=11 // pred_region
          _
        $region32: #{tpu_custom_call.1} parent=11 // pred_fallthru
          _
        // Predicated region
        $region33: #{tpu_custom_call.1} parent=11 // pred_check
          %p559 = pneg %p209
        $region34: #{tpu_custom_call.1} parent=11 // pred_check_branch
          %561 = sbr.rel (%p559) target = $region36
        $region35: #{tpu_custom_call.1} parent=11 // pred_region
          _
        $region36: #{tpu_custom_call.1} parent=11 // pred_fallthru
          _
        // Predicated region
        $region37: #{tpu_custom_call.1} parent=11 // pred_check
          %p562 = pneg %p230
        $region38: #{tpu_custom_call.1} parent=11 // pred_check_branch
          %564 = sbr.rel (%p562) target = $region40
        $region39: #{tpu_custom_call.1} parent=11 // pred_region
          _
        $region40: #{tpu_custom_call.1} parent=11 // pred_fallthru
          _
        // Predicated region
        $region41: #{tpu_custom_call.1} parent=11 // pred_check
          %p565 = pneg %p251
        $region42: #{tpu_custom_call.1} parent=11 // pred_check_branch
          %567 = sbr.rel (%p565) target = $region44
        $region43: #{tpu_custom_call.1} parent=11 // pred_region
          _
        $region44: #{tpu_custom_call.1} parent=11 // pred_fallthru
          _
        // Predicated region
        $region45: #{tpu_custom_call.1} parent=11 // pred_check
          %p568 = pneg %p272
        $region46: #{tpu_custom_call.1} parent=11 // pred_check_branch
          %570 = sbr.rel (%p568) target = $region48
        $region47: #{tpu_custom_call.1} parent=11 // pred_region
          _
        $region48: #{tpu_custom_call.1} parent=11 // pred_fallthru
          _
        // Predicated region
        $region49: #{tpu_custom_call.1} parent=11 // pred_check
          %p571 = pneg %p293
        $region50: #{tpu_custom_call.1} parent=11 // pred_check_branch
          %573 = sbr.rel (%p571) target = $region52
        $region51: #{tpu_custom_call.1} parent=11 // pred_region
          _
        $region52: #{tpu_custom_call.1} parent=11 // pred_fallthru
          _
        // Predicated region
        $region53: #{tpu_custom_call.1} parent=11 // pred_check
          %p574 = pneg %p314
        $region54: #{tpu_custom_call.1} parent=11 // pred_check_branch
          %576 = sbr.rel (%p574) target = $region56
        $region55: #{tpu_custom_call.1} parent=11 // pred_region
          _
        $region56: #{tpu_custom_call.1} parent=11 // pred_fallthru
          _
        // Predicated region
        $region57: #{tpu_custom_call.1} parent=11 // pred_check
          %p577 = pneg %p335
        $region58: #{tpu_custom_call.1} parent=11 // pred_check_branch
          %579 = sbr.rel (%p577) target = $region60
        $region59: #{tpu_custom_call.1} parent=11 // pred_region
          _
        $region60: #{tpu_custom_call.1} parent=11 // pred_fallthru
          _
        // Predicated region
        $region61: #{tpu_custom_call.1} parent=11 // pred_check
          %p580 = pneg %p356
        $region62: #{tpu_custom_call.1} parent=11 // pred_check_branch
          %582 = sbr.rel (%p580) target = $region64
        $region63: #{tpu_custom_call.1} parent=11 // pred_region
          _
        $region64: #{tpu_custom_call.1} parent=11 // pred_fallthru
          _
        // Predicated region
        $region65: #{tpu_custom_call.1} parent=11 // pred_check
          %p583 = pneg %p377
        $region66: #{tpu_custom_call.1} parent=11 // pred_check_branch
          %585 = sbr.rel (%p583) target = $region68
        $region67: #{tpu_custom_call.1} parent=11 // pred_region
          _
        $region68: #{tpu_custom_call.1} parent=11 // pred_fallthru
          _
        // Predicated region
        $region69: #{tpu_custom_call.1} parent=11 // pred_check
          %p586 = pneg %p398
        $region70: #{tpu_custom_call.1} parent=11 // pred_check_branch
          %588 = sbr.rel (%p586) target = $region72
        $region71: #{tpu_custom_call.1} parent=11 // pred_region
          _
        $region72: #{tpu_custom_call.1} parent=11 // pred_fallthru
          _
        // Predicated region
        $region73: #{tpu_custom_call.1} parent=11 // pred_check
          %p589 = pneg %p419
        $region74: #{tpu_custom_call.1} parent=11 // pred_check_branch
          %591 = sbr.rel (%p589) target = $region76
        $region75: #{tpu_custom_call.1} parent=11 // pred_region
          _
        $region76: #{tpu_custom_call.1} parent=11 // pred_fallthru
          _
        // Predicated region
        $region77: #{tpu_custom_call.1} parent=11 // pred_check
          %p592 = pneg %p440
        $region78: #{tpu_custom_call.1} parent=11 // pred_check_branch
          %594 = sbr.rel (%p592) target = $region80
        $region79: #{tpu_custom_call.1} parent=11 // pred_region
          _
        $region80: #{tpu_custom_call.1} parent=11 // pred_fallthru
          _
        // Predicated region
        $region81: #{tpu_custom_call.1} parent=11 // pred_check
          %p595 = pneg %p461
        $region82: #{tpu_custom_call.1} parent=11 // pred_check_branch
          %597 = sbr.rel (%p595) target = $region84
        $region83: #{tpu_custom_call.1} parent=11 // pred_region
          _
        $region84: #{tpu_custom_call.1} parent=11 // pred_fallthru
          _
        // Predicated region
        $region85: #{tpu_custom_call.1} parent=11 // pred_check
          %p598 = pneg %p482
        $region86: #{tpu_custom_call.1} parent=11 // pred_check_branch
          %600 = sbr.rel (%p598) target = $region88
        $region87: #{tpu_custom_call.1} parent=11 // pred_region
          _
        $region88: #{tpu_custom_call.1} parent=11 // pred_fallthru
          _
        // Predicated region
        $region89: #{tpu_custom_call.1} parent=11 // pred_check
          %p601 = pneg %p503
        $region90: #{tpu_custom_call.1} parent=11 // pred_check_branch
          %603 = sbr.rel (%p601) target = $region92
        $region91: #{tpu_custom_call.1} parent=11 // pred_region
          _
        $region92: #{tpu_custom_call.1} parent=11 // pred_fallthru
          _
      $region12: #{tpu_custom_call.1} parent=5 // pred_fallthru
        _
      %p604 = scmp.lt.s32.totalorder %s31, 2
      // Predicated region
      $region93: #{tpu_custom_call.1} parent=5 // pred_check
        %p605 = pneg %p604
      $region94: #{tpu_custom_call.1} parent=5 // pred_check_branch
        %607 = sbr.rel (%p605) target = $region96
      $region95: #{tpu_custom_call.1} parent=5 // pred_region
        // Predicated region
        $region97: #{tpu_custom_call.1} parent=95 // pred_check
          %p608 = pneg %p51
        $region98: #{tpu_custom_call.1} parent=95 // pred_check_branch
          %610 = sbr.rel (%p608) target = $region100
        $region99: #{tpu_custom_call.1} parent=95 // pred_region
          %p611 = scmp.lt.s32.totalorder %s31, 1
          %s612 = scalar_select %p611, %s31, 1
          %s613 = smul.addr %s612, 8
          %s614 = scalar_lea.vmem %s0, %s613
        $region100: #{tpu_custom_call.1} parent=95 // pred_fallthru
          _
        // Predicated region
        $region101: #{tpu_custom_call.1} parent=95 // pred_check
          %p615 = pneg %p77
        $region102: #{tpu_custom_call.1} parent=95 // pred_check_branch
          %617 = sbr.rel (%p615) target = $region104
        $region103: #{tpu_custom_call.1} parent=95 // pred_region
          %p618 = scmp.lt.s32.totalorder %s31, 1
          %s619 = scalar_select %p618, %s31, 1
          %s620 = smul.addr %s619, 8
          %s621 = scalar_lea.vmem %s1, %s620
        $region104: #{tpu_custom_call.1} parent=95 // pred_fallthru
          _
      $region96: #{tpu_custom_call.1} parent=5 // pred_fallthru
        _
      %p622 = scmp.le.s32.totalorder 1, %s31
      %p623 = scmp.lt.s32.totalorder %s31, 3
      %p624 = pnand %p622, %p623
      %p625 = pneg %p624
      // Predicated region
      $region105: #{tpu_custom_call.1} parent=5 // pred_check
        _
      $region106: #{tpu_custom_call.1} parent=5 // pred_check_branch
        %627 = sbr.rel (%p624) target = $region108
      $region107: #{tpu_custom_call.1} parent=5 // pred_region
        %s628 = ssub.s32 %s31, 1
        %p629 = scmp.lt.s32.totalorder %s36, 1
        %s630 = scalar_select %p629, %s36, 1
        %s631 = smul.addr %s630, 8
        %s632 = scalar_lea.vmem %s0, %s631
        %p633 = pneg %p57
        %p634 = pneg %p54
        %p635 = scmp.lt.s32.totalorder %s36, 1
        %s636 = scalar_select %p635, %s36, 1
        %s637 = smul.addr %s636, 8
        %s638 = scalar_lea.vmem %s1, %s637
        %p639 = pneg %p83
        %p640 = pneg %p80
        %p641 = pneg %p104
        %p642 = pneg %p101
        %p643 = pneg %p125
        %p644 = pneg %p122
        %p645 = pneg %p146
        %p646 = pneg %p143
        %p647 = pneg %p167
        %p648 = pneg %p164
        %p649 = pneg %p188
        %p650 = pneg %p185
        %p651 = pneg %p209
        %p652 = pneg %p206
        %p653 = pneg %p230
        %p654 = pneg %p227
        %p655 = pneg %p251
        %p656 = pneg %p248
        %p657 = pneg %p272
        %p658 = pneg %p269
        %p659 = pneg %p293
        %p660 = pneg %p290
        %p661 = pneg %p314
        %p662 = pneg %p311
        %p663 = pneg %p335
        %p664 = pneg %p332
        %p665 = pneg %p356
        %p666 = pneg %p353
        %p667 = pneg %p377
        %p668 = pneg %p374
        %p669 = pneg %p398
        %p670 = pneg %p395
        %p671 = pneg %p419
        %p672 = pneg %p416
        %p673 = pneg %p440
        %p674 = pneg %p437
        %p675 = pneg %p461
        %p676 = pneg %p458
        %p677 = pneg %p482
        %p678 = pneg %p479
        %p679 = pneg %p503
        %p680 = pneg %p500
        %p681 = pneg %p529
        %p682 = pneg %p526
        %s683 = sand.u32 %s516, 1
        %s684 = scalar_lea.sflag [#allocation3], %s683
        %s685 = sand.u32 %s516, 1
        %s686 = smul.addr %s685, 8
        %s687 = scalar_lea.vmem [#allocation2], %s686
        %p688 = scmp.lt.s32.totalorder %s36, 1
        %s689 = scalar_select %p688, %s36, 1
        %s690 = smul.addr %s689, 8
        %s691 = scalar_lea.vmem %s0, %s690
        %p692 = scmp.lt.s32.totalorder %s36, 1
        %s693 = scalar_select %p692, %s36, 1
        %s694 = smul.addr %s693, 8
        %s695 = scalar_lea.vmem %s1, %s694
        %v696 = vld [vmem:[%s691] sm:$0xff]
        %697 = vxpose.xlu0.b32.start [1/16] %v696, 128
        %698 = vxpose.xlu0.b32.cont [2/16] 0.0, 128
        %699 = vxpose.xlu0.b32.cont [3/16] 0.0, 128
        %700 = vxpose.xlu0.b32.cont [4/16] 0.0, 128
        %701 = vxpose.xlu0.b32.cont [5/16] 0.0, 128
        %702 = vxpose.xlu0.b32.cont [6/16] 0.0, 128
        %703 = vxpose.xlu0.b32.cont [7/16] 0.0, 128
        %704 = vxpose.xlu0.b32.cont [8/16] 0.0, 128
        %705 = vxpose.xlu0.b32.cont [9/16] 0.0, 128
        %706 = vxpose.xlu0.b32.cont [10/16] 0.0, 128
        %707 = vxpose.xlu0.b32.cont [11/16] 0.0, 128
        %708 = vxpose.xlu0.b32.cont [12/16] 0.0, 128
        %709 = vxpose.xlu0.b32.cont [13/16] 0.0, 128
        %710 = vxpose.xlu0.b32.cont [14/16] 0.0, 128
        %711 = vxpose.xlu0.b32.cont [15/16] 0.0, 128
        %712 = vxpose.xlu0.b32.end [16/16] 0.0, 128
        %v713 = vpop.trf.xlu0
        %v714 = vpop.trf.xlu0
        %v715 = vpop.trf.xlu0
        %v716 = vpop.trf.xlu0
        %v717 = vpop.trf.xlu0
        %v718 = vpop.trf.xlu0
        %v719 = vpop.trf.xlu0
        %v720 = vpop.trf.xlu0
        %v721 = vpop.trf.xlu0
        %v722 = vpop.trf.xlu0
        %v723 = vpop.trf.xlu0
        %v724 = vpop.trf.xlu0
        %v725 = vpop.trf.xlu0
        %v726 = vpop.trf.xlu0
        %v727 = vpop.trf.xlu0
        %v728 = vpop.trf.xlu0
        %v729 = vld [vmem:[%s695] sm:$0xff]
        %v730 = vld [vmem:[%s2] sm:$0xff]
        %v731 = vld [vmem:[%s2 + $0x8] sm:$0xff]
        %v732 = vld [vmem:[%s2 + $0x10] sm:$0xff]
        %v733 = vld [vmem:[%s2 + $0x18] sm:$0xff]
        %v734 = vld [vmem:[%s3] sm:$0xff]
        %v735 = vld [vmem:[%s3 + $0x8] sm:$0xff]
        %v736 = vld [vmem:[%s3 + $0x10] sm:$0xff]
        %v737 = vld [vmem:[%s3 + $0x18] sm:$0xff]
        %vm738 = vcmask 64512
        %v739 = vsel %vm738, %v713, 0.0
        %v740 = vsel %vm738, %v714, 0.0
        %v741 = vadd.f32 %v739, %v740
        %v742 = vsel %vm738, %v715, 0.0
        %v743 = vadd.f32 %v741, %v742
        %v744 = vsel %vm738, %v716, 0.0
        %v745 = vadd.f32 %v743, %v744
        %v746 = vrot.slane %v745, 4
        %v747 = vadd.f32 %v745, %v746
        %v748 = vrot.slane %v747, 2
        %v749 = vadd.f32 %v747, %v748
        %v750 = vrot.slane %v749, 1
        %v751 = vadd.f32 %v749, %v750
        %v752 = vrcp.pop 32.0
        %v753 = vmul.f32 %v751, %v752
        %v754 = vsub.f32 %v713, %v753
        %v755 = vsub.f32 %v714, %v753
        %v756 = vsub.f32 %v715, %v753
        %v757 = vsub.f32 %v716, %v753
        %v758 = vmul.f32 %v754, %v754
        %v759 = vmul.f32 %v755, %v755
        %v760 = vmul.f32 %v756, %v756
        %v761 = vmul.f32 %v757, %v757
        %v762 = vsel %vm738, %v758, 0.0
        %v763 = vsel %vm738, %v759, 0.0
        %v764 = vadd.f32 %v762, %v763
        %v765 = vsel %vm738, %v760, 0.0
        %v766 = vadd.f32 %v764, %v765
        %v767 = vsel %vm738, %v761, 0.0
        %v768 = vadd.f32 %v766, %v767
        %v769 = vrot.slane %v768, 4
        %v770 = vadd.f32 %v768, %v769
        %v771 = vrot.slane %v770, 2
        %v772 = vadd.f32 %v770, %v771
        %v773 = vrot.slane %v772, 1
        %v774 = vadd.f32 %v772, %v773
        %v775 = vmul.f32 %v774, %v752
        %v776 = vadd.f32 %v775, 1e-05
        %v777 = vrsqrt.pop %v776
        %v778 = vmul.f32 %v754, %v777
        %v779 = vmul.f32 %v755, %v777
        %v780 = vmul.f32 %v756, %v777
        %v781 = vmul.f32 %v757, %v777
        %783 = vset.pattern.permute.xlu0 0
        %784 = vperm.xlu0 %783, %v730
        %v785 = vpop.permute.xlu0 %784
        %788 = vset.pattern.permute.xlu0 0
        %789 = vperm.xlu0 %788, %v731
        %v790 = vpop.permute.xlu0 %789
        %793 = vset.pattern.permute.xlu0 0
        %794 = vperm.xlu0 %793, %v732
        %v795 = vpop.permute.xlu0 %794
        %798 = vset.pattern.permute.xlu0 0
        %799 = vperm.xlu0 %798, %v733
        %v800 = vpop.permute.xlu0 %799
        %v802 = vmul.f32 %v778, %v785
        %v803 = vmul.f32 %v779, %v790
        %v804 = vmul.f32 %v780, %v795
        %v805 = vmul.f32 %v781, %v800
        %807 = vset.pattern.permute.xlu0 0
        %808 = vperm.xlu0 %807, %v734
        %v809 = vpop.permute.xlu0 %808
        %812 = vset.pattern.permute.xlu0 0
        %813 = vperm.xlu0 %812, %v735
        %v814 = vpop.permute.xlu0 %813
        %817 = vset.pattern.permute.xlu0 0
        %818 = vperm.xlu0 %817, %v736
        %v819 = vpop.permute.xlu0 %818
        %822 = vset.pattern.permute.xlu0 0
        %823 = vperm.xlu0 %822, %v737
        %v824 = vpop.permute.xlu0 %823
        %v826 = vadd.f32 %v802, %v809
        %v827 = vadd.f32 %v803, %v814
        %v828 = vadd.f32 %v804, %v819
        %v829 = vadd.f32 %v805, %v824
        %v830 = vld [vmem:[%s4] sm:$0xff]
        %v831 = vld [vmem:[%s4 + $0x8] sm:$0xff]
        %v832 = vld [vmem:[%s4 + $0x10] sm:$0xff]
        %v833 = vld [vmem:[%s4 + $0x18] sm:$0xff]
        %v834 = vld [vmem:[%s4 + $0x20] sm:$0xff]
        %v835 = vld [vmem:[%s4 + $0x28] sm:$0xff]
        %v836 = vld [vmem:[%s4 + $0x30] sm:$0xff]
        %v837 = vld [vmem:[%s4 + $0x38] sm:$0xff]
        %v838 = vld [vmem:[%s4 + $0x40] sm:$0xff]
        %v839 = vld [vmem:[%s4 + $0x48] sm:$0xff]
        %v840 = vld [vmem:[%s4 + $0x50] sm:$0xff]
        %v841 = vld [vmem:[%s4 + $0x58] sm:$0xff]
        %v842 = vld [vmem:[%s5] sm:$0xff]
        %v843 = vld [vmem:[%s5 + $0x8] sm:$0xff]
        %v844 = vld [vmem:[%s5 + $0x10] sm:$0xff]
        %v845 = vld [vmem:[%s5 + $0x18] sm:$0xff]
        %v846 = vld [vmem:[%s5 + $0x20] sm:$0xff]
        %v847 = vld [vmem:[%s5 + $0x28] sm:$0xff]
        %v848 = vld [vmem:[%s5 + $0x30] sm:$0xff]
        %v849 = vld [vmem:[%s5 + $0x38] sm:$0xff]
        %v850 = vld [vmem:[%s5 + $0x40] sm:$0xff]
        %v851 = vld [vmem:[%s5 + $0x48] sm:$0xff]
        %v852 = vld [vmem:[%s5 + $0x50] sm:$0xff]
        %v853 = vld [vmem:[%s5 + $0x58] sm:$0xff]
        %855 = vset.pattern.permute.xlu0 0
        %856 = vperm.xlu0 %855, %v842
        %v857 = vpop.permute.xlu0 %856
        %860 = vset.pattern.permute.xlu0 0
        %861 = vperm.xlu0 %860, %v843
        %v862 = vpop.permute.xlu0 %861
        %865 = vset.pattern.permute.xlu0 0
        %866 = vperm.xlu0 %865, %v844
        %v867 = vpop.permute.xlu0 %866
        %870 = vset.pattern.permute.xlu0 0
        %871 = vperm.xlu0 %870, %v845
        %v872 = vpop.permute.xlu0 %871
        %875 = vset.pattern.permute.xlu0 0
        %876 = vperm.xlu0 %875, %v846
        %v877 = vpop.permute.xlu0 %876
        %880 = vset.pattern.permute.xlu0 0
        %881 = vperm.xlu0 %880, %v847
        %v882 = vpop.permute.xlu0 %881
        %885 = vset.pattern.permute.xlu0 0
        %886 = vperm.xlu0 %885, %v848
        %v887 = vpop.permute.xlu0 %886
        %890 = vset.pattern.permute.xlu0 0
        %891 = vperm.xlu0 %890, %v849
        %v892 = vpop.permute.xlu0 %891
        %895 = vset.pattern.permute.xlu0 0
        %896 = vperm.xlu0 %895, %v850
        %v897 = vpop.permute.xlu0 %896
        %900 = vset.pattern.permute.xlu0 0
        %901 = vperm.xlu0 %900, %v851
        %v902 = vpop.permute.xlu0 %901
        %905 = vset.pattern.permute.xlu0 0
        %906 = vperm.xlu0 %905, %v852
        %v907 = vpop.permute.xlu0 %906
        %910 = vset.pattern.permute.xlu0 0
        %911 = vperm.xlu0 %910, %v853
        %v912 = vpop.permute.xlu0 %911
        %vm914 = vcmask 261120
        %v916 = vsel %vm914, %v830, 0
        %v919 = vsel %vm914, %v831, 0
        %v922 = vsel %vm914, %v832, 0
        %v925 = vsel %vm914, %v833, 0
        %v928 = vsel %vm914, %v834, 0
        %v931 = vsel %vm914, %v835, 0
        %v934 = vsel %vm914, %v836, 0
        %v937 = vsel %vm914, %v837, 0
        %v940 = vsel %vm914, %v838, 0
        %v943 = vsel %vm914, %v839, 0
        %v946 = vsel %vm914, %v840, 0
        %v949 = vsel %vm914, %v841, 0
        %951 = vmatprep.subr.mxu0 0.0
        %952 = vmatpush1.msra.mxu0 %v826
        %953 = vmatprep.subr.mxu0 0.0
        %954 = vmatpush1.msra.mxu0 %v827
        %955 = vmatprep.subr.mxu0 0.0
        %956 = vmatpush1.msra.mxu0 %v828
        %957 = vmatprep.subr.mxu0 0.0
        %958 = vmatpush1.msra.mxu0 %v829
        %959 = vmatprep.subr.mxu0 0.0
        %960 = vmatpush1.msra.mxu0 0.0
        %961 = vmatprep.subr.mxu0 0.0
        %962 = vmatpush1.msra.mxu0 0.0
        %963 = vmatprep.subr.mxu0 0.0
        %964 = vmatpush1.msra.mxu0 0.0
        %965 = vmatprep.subr.mxu0 0.0
        %966 = vmatpush1.msra.mxu0 0.0
        %967 = vmatprep.subr.mxu0 0.0
        %968 = vmatpush1.msra.mxu0 0.0
        %969 = vmatprep.subr.mxu0 0.0
        %970 = vmatpush1.msra.mxu0 0.0
        %971 = vmatprep.subr.mxu0 0.0
        %972 = vmatpush1.msra.mxu0 0.0
        %973 = vmatprep.subr.mxu0 0.0
        %974 = vmatpush1.msra.mxu0 0.0
        %975 = vmatprep.subr.mxu0 0.0
        %976 = vmatpush1.msra.mxu0 0.0
        %977 = vmatprep.subr.mxu0 0.0
        %978 = vmatpush1.msra.mxu0 0.0
        %979 = vmatprep.subr.mxu0 0.0
        %980 = vmatpush1.msra.mxu0 0.0
        %981 = vmatprep.subr.mxu0 0.0
        %982 = vmatpush1.msra.mxu0 0.0
        %983 = vmatprep.subr.mxu0 0.0
        %984 = vmatpush1.msra.mxu0 0.0
        %985 = vmatprep.subr.mxu0 0.0
        %986 = vmatpush1.msra.mxu0 0.0
        %987 = vmatprep.subr.mxu0 0.0
        %988 = vmatpush1.msra.mxu0 0.0
        %989 = vmatprep.subr.mxu0 0.0
        %990 = vmatpush1.msra.mxu0 0.0
        %991 = vmatprep.subr.mxu0 0.0
        %992 = vmatpush1.msra.mxu0 0.0
        %993 = vmatprep.subr.mxu0 0.0
        %994 = vmatpush1.msra.mxu0 0.0
        %995 = vmatprep.subr.mxu0 0.0
        %996 = vmatpush1.msra.mxu0 0.0
        %997 = vmatprep.subr.mxu0 0.0
        %998 = vmatpush1.msra.mxu0 0.0
        %999 = vmatprep.subr.mxu0 0.0
        %1000 = vmatpush1.msra.mxu0 0.0
        %1001 = vmatprep.subr.mxu0 0.0
        %1002 = vmatpush1.msra.mxu0 0.0
        %1003 = vmatprep.subr.mxu0 0.0
        %1004 = vmatpush1.msra.mxu0 0.0
        %1005 = vmatprep.subr.mxu0 0.0
        %1006 = vmatpush1.msra.mxu0 0.0
        %1007 = vmatprep.subr.mxu0 0.0
        %1008 = vmatpush1.msra.mxu0 0.0
        %1009 = vmatprep.subr.mxu0 0.0
        %1010 = vmatpush1.msra.mxu0 0.0
        %1011 = vmatprep.subr.mxu0 0.0
        %1012 = vmatpush1.msra.mxu0 0.0
        %1013 = vmatprep.subr.mxu0 0.0
        %1014 = vmatpush1.msra.mxu0 0.0
        %1015 = vmatprep.mubr.f32.mxu0 0.0
        %1016 = vmatmul.mubr.f32.gmra.mrb[0].mxu0 %v916
        %v1017 = vpop.f32.mrb[0].mxu0
        %v1018 = vadd.f32 %v857, %v1017
        %v1019 = vpop.f32.mrb[0].mxu0
        %1020 = vmatprep.mubr.f32.mxu0 0.0
        %1021 = vmatmul.mubr.f32.gmra.mrb[0].mxu0 %v919
        %v1022 = vpop.f32.mrb[0].mxu0
        %v1023 = vadd.f32 %v862, %v1022
        %v1024 = vpop.f32.mrb[0].mxu0
        %1025 = vmatprep.mubr.f32.mxu0 0.0
        %1026 = vmatmul.mubr.f32.gmra.mrb[0].mxu0 %v922
        %v1027 = vpop.f32.mrb[0].mxu0
        %v1028 = vadd.f32 %v867, %v1027
        %v1029 = vpop.f32.mrb[0].mxu0
        %1030 = vmatprep.mubr.f32.mxu0 0.0
        %1031 = vmatmul.mubr.f32.gmra.mrb[0].mxu0 %v925
        %v1032 = vpop.f32.mrb[0].mxu0
        %v1033 = vadd.f32 %v872, %v1032
        %v1034 = vpop.f32.mrb[0].mxu0
        %1035 = vmatprep.mubr.f32.mxu0 0.0
        %1036 = vmatmul.mubr.f32.gmra.mrb[0].mxu0 %v928
        %v1037 = vpop.f32.mrb[0].mxu0
        %v1038 = vadd.f32 %v877, %v1037
        %v1039 = vpop.f32.mrb[0].mxu0
        %1040 = vmatprep.mubr.f32.mxu0 0.0
        %1041 = vmatmul.mubr.f32.gmra.mrb[0].mxu0 %v931
        %v1042 = vpop.f32.mrb[0].mxu0
        %v1043 = vadd.f32 %v882, %v1042
        %v1044 = vpop.f32.mrb[0].mxu0
        %1045 = vmatprep.mubr.f32.mxu0 0.0
        %1046 = vmatmul.mubr.f32.gmra.mrb[0].mxu0 %v934
        %v1047 = vpop.f32.mrb[0].mxu0
        %v1048 = vadd.f32 %v887, %v1047
        %v1049 = vpop.f32.mrb[0].mxu0
        %1050 = vmatprep.mubr.f32.mxu0 0.0
        %1051 = vmatmul.mubr.f32.gmra.mrb[0].mxu0 %v937
        %v1052 = vpop.f32.mrb[0].mxu0
        %v1053 = vadd.f32 %v892, %v1052
        %v1054 = vpop.f32.mrb[0].mxu0
        %1055 = vmatprep.mubr.f32.mxu0 0.0
        %1056 = vmatmul.mubr.f32.gmra.mrb[0].mxu0 %v940
        %v1057 = vpop.f32.mrb[0].mxu0
        %v1058 = vadd.f32 %v897, %v1057
        %v1059 = vpop.f32.mrb[0].mxu0
        %1060 = vmatprep.mubr.f32.mxu0 0.0
        %1061 = vmatmul.mubr.f32.gmra.mrb[0].mxu0 %v943
        %v1062 = vpop.f32.mrb[0].mxu0
        %v1063 = vadd.f32 %v902, %v1062
        %v1064 = vpop.f32.mrb[0].mxu0
        %1065 = vmatprep.mubr.f32.mxu0 0.0
        %1066 = vmatmul.mubr.f32.gmra.mrb[0].mxu0 %v946
        %v1067 = vpop.f32.mrb[0].mxu0
        %v1068 = vadd.f32 %v907, %v1067
        %v1069 = vpop.f32.mrb[0].mxu0
        %1070 = vmatprep.mubr.f32.mxu0 0.0
        %1071 = vmatmul.mubr.f32.gmra.mrb[0].mxu0 %v949
        %v1072 = vpop.f32.mrb[0].mxu0
        %v1073 = vadd.f32 %v912, %v1072
        %v1074 = vpop.f32.mrb[0].mxu0
        %1075 = vdwg.mxu0
        %1076 = vxpose.xlu0.b32.start [1/16] %v1018, 128
        %1077 = vxpose.xlu0.b32.cont [2/16] 0.0, 128
        %1078 = vxpose.xlu0.b32.cont [3/16] 0.0, 128
        %1079 = vxpose.xlu0.b32.cont [4/16] 0.0, 128
        %1080 = vxpose.xlu0.b32.cont [5/16] 0.0, 128
        %1081 = vxpose.xlu0.b32.cont [6/16] 0.0, 128
        %1082 = vxpose.xlu0.b32.cont [7/16] 0.0, 128
        %1083 = vxpose.xlu0.b32.cont [8/16] 0.0, 128
        %1084 = vxpose.xlu0.b32.cont [9/16] 0.0, 128
        %1085 = vxpose.xlu0.b32.cont [10/16] 0.0, 128
        %1086 = vxpose.xlu0.b32.cont [11/16] 0.0, 128
        %1087 = vxpose.xlu0.b32.cont [12/16] 0.0, 128
        %1088 = vxpose.xlu0.b32.cont [13/16] 0.0, 128
        %1089 = vxpose.xlu0.b32.cont [14/16] 0.0, 128
        %1090 = vxpose.xlu0.b32.cont [15/16] 0.0, 128
        %1091 = vxpose.xlu0.b32.end [16/16] 0.0, 128
        %v1092 = vpop.trf.xlu0
        %v1093 = vpop.trf.xlu0
        %v1094 = vpop.trf.xlu0
        %v1095 = vpop.trf.xlu0
        %v1096 = vpop.trf.xlu0
        %v1097 = vpop.trf.xlu0
        %v1098 = vpop.trf.xlu0
        %v1099 = vpop.trf.xlu0
        %v1100 = vpop.trf.xlu0
        %v1101 = vpop.trf.xlu0
        %v1102 = vpop.trf.xlu0
        %v1103 = vpop.trf.xlu0
        %v1104 = vpop.trf.xlu0
        %v1105 = vpop.trf.xlu0
        %v1106 = vpop.trf.xlu0
        %v1107 = vpop.trf.xlu0
        %1108 = vxpose.xlu0.b32.start [1/16] %v1023, 128
        %1109 = vxpose.xlu0.b32.cont [2/16] 0.0, 128
        %1110 = vxpose.xlu0.b32.cont [3/16] 0.0, 128
        %1111 = vxpose.xlu0.b32.cont [4/16] 0.0, 128
        %1112 = vxpose.xlu0.b32.cont [5/16] 0.0, 128
        %1113 = vxpose.xlu0.b32.cont [6/16] 0.0, 128
        %1114 = vxpose.xlu0.b32.cont [7/16] 0.0, 128
        %1115 = vxpose.xlu0.b32.cont [8/16] 0.0, 128
        %1116 = vxpose.xlu0.b32.cont [9/16] 0.0, 128
        %1117 = vxpose.xlu0.b32.cont [10/16] 0.0, 128
        %1118 = vxpose.xlu0.b32.cont [11/16] 0.0, 128
        %1119 = vxpose.xlu0.b32.cont [12/16] 0.0, 128
        %1120 = vxpose.xlu0.b32.cont [13/16] 0.0, 128
        %1121 = vxpose.xlu0.b32.cont [14/16] 0.0, 128
        %1122 = vxpose.xlu0.b32.cont [15/16] 0.0, 128
        %1123 = vxpose.xlu0.b32.end [16/16] 0.0, 128
        %v1124 = vpop.trf.xlu0
        %v1125 = vpop.trf.xlu0
        %v1126 = vpop.trf.xlu0
        %v1127 = vpop.trf.xlu0
        %v1128 = vpop.trf.xlu0
        %v1129 = vpop.trf.xlu0
        %v1130 = vpop.trf.xlu0
        %v1131 = vpop.trf.xlu0
        %v1132 = vpop.trf.xlu0
        %v1133 = vpop.trf.xlu0
        %v1134 = vpop.trf.xlu0
        %v1135 = vpop.trf.xlu0
        %v1136 = vpop.trf.xlu0
        %v1137 = vpop.trf.xlu0
        %v1138 = vpop.trf.xlu0
        %v1139 = vpop.trf.xlu0
        %1140 = vxpose.xlu0.b32.start [1/16] %v1028, 128
        %1141 = vxpose.xlu0.b32.cont [2/16] 0.0, 128
        %1142 = vxpose.xlu0.b32.cont [3/16] 0.0, 128
        %1143 = vxpose.xlu0.b32.cont [4/16] 0.0, 128
        %1144 = vxpose.xlu0.b32.cont [5/16] 0.0, 128
        %1145 = vxpose.xlu0.b32.cont [6/16] 0.0, 128
        %1146 = vxpose.xlu0.b32.cont [7/16] 0.0, 128
        %1147 = vxpose.xlu0.b32.cont [8/16] 0.0, 128
        %1148 = vxpose.xlu0.b32.cont [9/16] 0.0, 128
        %1149 = vxpose.xlu0.b32.cont [10/16] 0.0, 128
        %1150 = vxpose.xlu0.b32.cont [11/16] 0.0, 128
        %1151 = vxpose.xlu0.b32.cont [12/16] 0.0, 128
        %1152 = vxpose.xlu0.b32.cont [13/16] 0.0, 128
        %1153 = vxpose.xlu0.b32.cont [14/16] 0.0, 128
        %1154 = vxpose.xlu0.b32.cont [15/16] 0.0, 128
        %1155 = vxpose.xlu0.b32.end [16/16] 0.0, 128
        %v1156 = vpop.trf.xlu0
        %v1157 = vpop.trf.xlu0
        %v1158 = vpop.trf.xlu0
        %v1159 = vpop.trf.xlu0
        %v1160 = vpop.trf.xlu0
        %v1161 = vpop.trf.xlu0
        %v1162 = vpop.trf.xlu0
        %v1163 = vpop.trf.xlu0
        %v1164 = vpop.trf.xlu0
        %v1165 = vpop.trf.xlu0
        %v1166 = vpop.trf.xlu0
        %v1167 = vpop.trf.xlu0
        %v1168 = vpop.trf.xlu0
        %v1169 = vpop.trf.xlu0
        %v1170 = vpop.trf.xlu0
        %v1171 = vpop.trf.xlu0
        %1172 = vxpose.xlu0.b32.start [1/16] %v1033, 128
        %1173 = vxpose.xlu0.b32.cont [2/16] 0.0, 128
        %1174 = vxpose.xlu0.b32.cont [3/16] 0.0, 128
        %1175 = vxpose.xlu0.b32.cont [4/16] 0.0, 128
        %1176 = vxpose.xlu0.b32.cont [5/16] 0.0, 128
        %1177 = vxpose.xlu0.b32.cont [6/16] 0.0, 128
        %1178 = vxpose.xlu0.b32.cont [7/16] 0.0, 128
        %1179 = vxpose.xlu0.b32.cont [8/16] 0.0, 128
        %1180 = vxpose.xlu0.b32.cont [9/16] 0.0, 128
        %1181 = vxpose.xlu0.b32.cont [10/16] 0.0, 128
        %1182 = vxpose.xlu0.b32.cont [11/16] 0.0, 128
        %1183 = vxpose.xlu0.b32.cont [12/16] 0.0, 128
        %1184 = vxpose.xlu0.b32.cont [13/16] 0.0, 128
        %1185 = vxpose.xlu0.b32.cont [14/16] 0.0, 128
        %1186 = vxpose.xlu0.b32.cont [15/16] 0.0, 128
        %1187 = vxpose.xlu0.b32.end [16/16] 0.0, 128
        %v1188 = vpop.trf.xlu0
        %v1189 = vpop.trf.xlu0
        %v1190 = vpop.trf.xlu0
        %v1191 = vpop.trf.xlu0
        %v1192 = vpop.trf.xlu0
        %v1193 = vpop.trf.xlu0
        %v1194 = vpop.trf.xlu0
        %v1195 = vpop.trf.xlu0
        %v1196 = vpop.trf.xlu0
        %v1197 = vpop.trf.xlu0
        %v1198 = vpop.trf.xlu0
        %v1199 = vpop.trf.xlu0
        %v1200 = vpop.trf.xlu0
        %v1201 = vpop.trf.xlu0
        %v1202 = vpop.trf.xlu0
        %v1203 = vpop.trf.xlu0
        %v1205 = vsel %vm738, %v1092, 0
        %1207 = vmatprep.subr.mxu0 0.0
        %1208 = vmatpush1.msra.mxu0 %v1038
        %1209 = vmatprep.subr.mxu0 0.0
        %1210 = vmatpush1.msra.mxu0 0.0
        %1211 = vmatprep.subr.mxu0 0.0
        %1212 = vmatpush1.msra.mxu0 0.0
        %1213 = vmatprep.subr.mxu0 0.0
        %1214 = vmatpush1.msra.mxu0 0.0
        %1215 = vmatprep.subr.mxu0 0.0
        %1216 = vmatpush1.msra.mxu0 0.0
        %1217 = vmatprep.subr.mxu0 0.0
        %1218 = vmatpush1.msra.mxu0 0.0
        %1219 = vmatprep.subr.mxu0 0.0
        %1220 = vmatpush1.msra.mxu0 0.0
        %1221 = vmatprep.subr.mxu0 0.0
        %1222 = vmatpush1.msra.mxu0 0.0
        %1223 = vmatprep.subr.mxu0 0.0
        %1224 = vmatpush1.msra.mxu0 0.0
        %1225 = vmatprep.subr.mxu0 0.0
        %1226 = vmatpush1.msra.mxu0 0.0
        %1227 = vmatprep.subr.mxu0 0.0
        %1228 = vmatpush1.msra.mxu0 0.0
        %1229 = vmatprep.subr.mxu0 0.0
        %1230 = vmatpush1.msra.mxu0 0.0
        %1231 = vmatprep.subr.mxu0 0.0
        %1232 = vmatpush1.msra.mxu0 0.0
        %1233 = vmatprep.subr.mxu0 0.0
        %1234 = vmatpush1.msra.mxu0 0.0
        %1235 = vmatprep.subr.mxu0 0.0
        %1236 = vmatpush1.msra.mxu0 0.0
        %1237 = vmatprep.subr.mxu0 0.0
        %1238 = vmatpush1.msra.mxu0 0.0
        %1239 = vmatprep.subr.mxu0 0.0
        %1240 = vmatpush1.msra.mxu0 0.0
        %1241 = vmatprep.subr.mxu0 0.0
        %1242 = vmatpush1.msra.mxu0 0.0
        %1243 = vmatprep.subr.mxu0 0.0
        %1244 = vmatpush1.msra.mxu0 0.0
        %1245 = vmatprep.subr.mxu0 0.0
        %1246 = vmatpush1.msra.mxu0 0.0
        %1247 = vmatprep.subr.mxu0 0.0
        %1248 = vmatpush1.msra.mxu0 0.0
        %1249 = vmatprep.subr.mxu0 0.0
        %1250 = vmatpush1.msra.mxu0 0.0
        %1251 = vmatprep.subr.mxu0 0.0
        %1252 = vmatpush1.msra.mxu0 0.0
        %1253 = vmatprep.subr.mxu0 0.0
        %1254 = vmatpush1.msra.mxu0 0.0
        %1255 = vmatprep.subr.mxu0 0.0
        %1256 = vmatpush1.msra.mxu0 0.0
        %1257 = vmatprep.subr.mxu0 0.0
        %1258 = vmatpush1.msra.mxu0 0.0
        %1259 = vmatprep.subr.mxu0 0.0
        %1260 = vmatpush1.msra.mxu0 0.0
        %1261 = vmatprep.subr.mxu0 0.0
        %1262 = vmatpush1.msra.mxu0 0.0
        %1263 = vmatprep.subr.mxu0 0.0
        %1264 = vmatpush1.msra.mxu0 0.0
        %1265 = vmatprep.subr.mxu0 0.0
        %1266 = vmatpush1.msra.mxu0 0.0
        %1267 = vmatprep.subr.mxu0 0.0
        %1268 = vmatpush1.msra.mxu0 0.0
        %1269 = vmatprep.subr.mxu0 0.0
        %1270 = vmatpush1.msra.mxu0 0.0
        %1271 = vmatprep.mubr.f32.mxu0 0.0
        %1272 = vmatmul.mubr.f32.gmra.mrb[0].mxu0 %v1205
        %v1273 = vpop.f32.mrb[0].mxu0
        %v1274 = vadd.f32 0.0, %v1273
        %v1275 = vpop.f32.mrb[0].mxu0
        %1276 = vdwg.mxu0
        %v1278 = vsel %vm738, %v1124, 0
        %1280 = vmatprep.subr.mxu0 0.0
        %1281 = vmatpush1.msra.mxu0 %v1043
        %1282 = vmatprep.subr.mxu0 0.0
        %1283 = vmatpush1.msra.mxu0 0.0
        %1284 = vmatprep.subr.mxu0 0.0
        %1285 = vmatpush1.msra.mxu0 0.0
        %1286 = vmatprep.subr.mxu0 0.0
        %1287 = vmatpush1.msra.mxu0 0.0
        %1288 = vmatprep.subr.mxu0 0.0
        %1289 = vmatpush1.msra.mxu0 0.0
        %1290 = vmatprep.subr.mxu0 0.0
        %1291 = vmatpush1.msra.mxu0 0.0
        %1292 = vmatprep.subr.mxu0 0.0
        %1293 = vmatpush1.msra.mxu0 0.0
        %1294 = vmatprep.subr.mxu0 0.0
        %1295 = vmatpush1.msra.mxu0 0.0
        %1296 = vmatprep.subr.mxu0 0.0
        %1297 = vmatpush1.msra.mxu0 0.0
        %1298 = vmatprep.subr.mxu0 0.0
        %1299 = vmatpush1.msra.mxu0 0.0
        %1300 = vmatprep.subr.mxu0 0.0
        %1301 = vmatpush1.msra.mxu0 0.0
        %1302 = vmatprep.subr.mxu0 0.0
        %1303 = vmatpush1.msra.mxu0 0.0
        %1304 = vmatprep.subr.mxu0 0.0
        %1305 = vmatpush1.msra.mxu0 0.0
        %1306 = vmatprep.subr.mxu0 0.0
        %1307 = vmatpush1.msra.mxu0 0.0
        %1308 = vmatprep.subr.mxu0 0.0
        %1309 = vmatpush1.msra.mxu0 0.0
        %1310 = vmatprep.subr.mxu0 0.0
        %1311 = vmatpush1.msra.mxu0 0.0
        %1312 = vmatprep.subr.mxu0 0.0
        %1313 = vmatpush1.msra.mxu0 0.0
        %1314 = vmatprep.subr.mxu0 0.0
        %1315 = vmatpush1.msra.mxu0 0.0
        %1316 = vmatprep.subr.mxu0 0.0
        %1317 = vmatpush1.msra.mxu0 0.0
        %1318 = vmatprep.subr.mxu0 0.0
        %1319 = vmatpush1.msra.mxu0 0.0
        %1320 = vmatprep.subr.mxu0 0.0
        %1321 = vmatpush1.msra.mxu0 0.0
        %1322 = vmatprep.subr.mxu0 0.0
        %1323 = vmatpush1.msra.mxu0 0.0
        %1324 = vmatprep.subr.mxu0 0.0
        %1325 = vmatpush1.msra.mxu0 0.0
        %1326 = vmatprep.subr.mxu0 0.0
        %1327 = vmatpush1.msra.mxu0 0.0
        %1328 = vmatprep.subr.mxu0 0.0
        %1329 = vmatpush1.msra.mxu0 0.0
        %1330 = vmatprep.subr.mxu0 0.0
        %1331 = vmatpush1.msra.mxu0 0.0
        %1332 = vmatprep.subr.mxu0 0.0
        %1333 = vmatpush1.msra.mxu0 0.0
        %1334 = vmatprep.subr.mxu0 0.0
        %1335 = vmatpush1.msra.mxu0 0.0
        %1336 = vmatprep.subr.mxu0 0.0
        %1337 = vmatpush1.msra.mxu0 0.0
        %1338 = vmatprep.subr.mxu0 0.0
        %1339 = vmatpush1.msra.mxu0 0.0
        %1340 = vmatprep.subr.mxu0 0.0
        %1341 = vmatpush1.msra.mxu0 0.0
        %1342 = vmatprep.subr.mxu0 0.0
        %1343 = vmatpush1.msra.mxu0 0.0
        %1344 = vmatprep.mubr.f32.mxu0 0.0
        %1345 = vmatmul.mubr.f32.gmra.mrb[0].mxu0 %v1278
        %v1346 = vpop.f32.mrb[0].mxu0
        %v1347 = vadd.f32 0.0, %v1346
        %v1348 = vpop.f32.mrb[0].mxu0
        %1349 = vdwg.mxu0
        %v1351 = vsel %vm738, %v1156, 0
        %1353 = vmatprep.subr.mxu0 0.0
        %1354 = vmatpush1.msra.mxu0 %v1048
        %1355 = vmatprep.subr.mxu0 0.0
        %1356 = vmatpush1.msra.mxu0 0.0
        %1357 = vmatprep.subr.mxu0 0.0
        %1358 = vmatpush1.msra.mxu0 0.0
        %1359 = vmatprep.subr.mxu0 0.0
        %1360 = vmatpush1.msra.mxu0 0.0
        %1361 = vmatprep.subr.mxu0 0.0
        %1362 = vmatpush1.msra.mxu0 0.0
        %1363 = vmatprep.subr.mxu0 0.0
        %1364 = vmatpush1.msra.mxu0 0.0
        %1365 = vmatprep.subr.mxu0 0.0
        %1366 = vmatpush1.msra.mxu0 0.0
        %1367 = vmatprep.subr.mxu0 0.0
        %1368 = vmatpush1.msra.mxu0 0.0
        %1369 = vmatprep.subr.mxu0 0.0
        %1370 = vmatpush1.msra.mxu0 0.0
        %1371 = vmatprep.subr.mxu0 0.0
        %1372 = vmatpush1.msra.mxu0 0.0
        %1373 = vmatprep.subr.mxu0 0.0
        %1374 = vmatpush1.msra.mxu0 0.0
        %1375 = vmatprep.subr.mxu0 0.0
        %1376 = vmatpush1.msra.mxu0 0.0
        %1377 = vmatprep.subr.mxu0 0.0
        %1378 = vmatpush1.msra.mxu0 0.0
        %1379 = vmatprep.subr.mxu0 0.0
        %1380 = vmatpush1.msra.mxu0 0.0
        %1381 = vmatprep.subr.mxu0 0.0
        %1382 = vmatpush1.msra.mxu0 0.0
        %1383 = vmatprep.subr.mxu0 0.0
        %1384 = vmatpush1.msra.mxu0 0.0
        %1385 = vmatprep.subr.mxu0 0.0
        %1386 = vmatpush1.msra.mxu0 0.0
        %1387 = vmatprep.subr.mxu0 0.0
        %1388 = vmatpush1.msra.mxu0 0.0
        %1389 = vmatprep.subr.mxu0 0.0
        %1390 = vmatpush1.msra.mxu0 0.0
        %1391 = vmatprep.subr.mxu0 0.0
        %1392 = vmatpush1.msra.mxu0 0.0
        %1393 = vmatprep.subr.mxu0 0.0
        %1394 = vmatpush1.msra.mxu0 0.0
        %1395 = vmatprep.subr.mxu0 0.0
        %1396 = vmatpush1.msra.mxu0 0.0
        %1397 = vmatprep.subr.mxu0 0.0
        %1398 = vmatpush1.msra.mxu0 0.0
        %1399 = vmatprep.subr.mxu0 0.0
        %1400 = vmatpush1.msra.mxu0 0.0
        %1401 = vmatprep.subr.mxu0 0.0
        %1402 = vmatpush1.msra.mxu0 0.0
        %1403 = vmatprep.subr.mxu0 0.0
        %1404 = vmatpush1.msra.mxu0 0.0
        %1405 = vmatprep.subr.mxu0 0.0
        %1406 = vmatpush1.msra.mxu0 0.0
        %1407 = vmatprep.subr.mxu0 0.0
        %1408 = vmatpush1.msra.mxu0 0.0
        %1409 = vmatprep.subr.mxu0 0.0
        %1410 = vmatpush1.msra.mxu0 0.0
        %1411 = vmatprep.subr.mxu0 0.0
        %1412 = vmatpush1.msra.mxu0 0.0
        %1413 = vmatprep.subr.mxu0 0.0
        %1414 = vmatpush1.msra.mxu0 0.0
        %1415 = vmatprep.subr.mxu0 0.0
        %1416 = vmatpush1.msra.mxu0 0.0
        %1417 = vmatprep.mubr.f32.mxu0 0.0
        %1418 = vmatmul.mubr.f32.gmra.mrb[0].mxu0 %v1351
        %v1419 = vpop.f32.mrb[0].mxu0
        %v1420 = vadd.f32 0.0, %v1419
        %v1421 = vpop.f32.mrb[0].mxu0
        %1422 = vdwg.mxu0
        %v1424 = vsel %vm738, %v1188, 0
        %1426 = vmatprep.subr.mxu0 0.0
        %1427 = vmatpush1.msra.mxu0 %v1053
        %1428 = vmatprep.subr.mxu0 0.0
        %1429 = vmatpush1.msra.mxu0 0.0
        %1430 = vmatprep.subr.mxu0 0.0
        %1431 = vmatpush1.msra.mxu0 0.0
        %1432 = vmatprep.subr.mxu0 0.0
        %1433 = vmatpush1.msra.mxu0 0.0
        %1434 = vmatprep.subr.mxu0 0.0
        %1435 = vmatpush1.msra.mxu0 0.0
        %1436 = vmatprep.subr.mxu0 0.0
        %1437 = vmatpush1.msra.mxu0 0.0
        %1438 = vmatprep.subr.mxu0 0.0
        %1439 = vmatpush1.msra.mxu0 0.0
        %1440 = vmatprep.subr.mxu0 0.0
        %1441 = vmatpush1.msra.mxu0 0.0
        %1442 = vmatprep.subr.mxu0 0.0
        %1443 = vmatpush1.msra.mxu0 0.0
        %1444 = vmatprep.subr.mxu0 0.0
        %1445 = vmatpush1.msra.mxu0 0.0
        %1446 = vmatprep.subr.mxu0 0.0
        %1447 = vmatpush1.msra.mxu0 0.0
        %1448 = vmatprep.subr.mxu0 0.0
        %1449 = vmatpush1.msra.mxu0 0.0
        %1450 = vmatprep.subr.mxu0 0.0
        %1451 = vmatpush1.msra.mxu0 0.0
        %1452 = vmatprep.subr.mxu0 0.0
        %1453 = vmatpush1.msra.mxu0 0.0
        %1454 = vmatprep.subr.mxu0 0.0
        %1455 = vmatpush1.msra.mxu0 0.0
        %1456 = vmatprep.subr.mxu0 0.0
        %1457 = vmatpush1.msra.mxu0 0.0
        %1458 = vmatprep.subr.mxu0 0.0
        %1459 = vmatpush1.msra.mxu0 0.0
        %1460 = vmatprep.subr.mxu0 0.0
        %1461 = vmatpush1.msra.mxu0 0.0
        %1462 = vmatprep.subr.mxu0 0.0
        %1463 = vmatpush1.msra.mxu0 0.0
        %1464 = vmatprep.subr.mxu0 0.0
        %1465 = vmatpush1.msra.mxu0 0.0
        %1466 = vmatprep.subr.mxu0 0.0
        %1467 = vmatpush1.msra.mxu0 0.0
        %1468 = vmatprep.subr.mxu0 0.0
        %1469 = vmatpush1.msra.mxu0 0.0
        %1470 = vmatprep.subr.mxu0 0.0
        %1471 = vmatpush1.msra.mxu0 0.0
        %1472 = vmatprep.subr.mxu0 0.0
        %1473 = vmatpush1.msra.mxu0 0.0
        %1474 = vmatprep.subr.mxu0 0.0
        %1475 = vmatpush1.msra.mxu0 0.0
        %1476 = vmatprep.subr.mxu0 0.0
        %1477 = vmatpush1.msra.mxu0 0.0
        %1478 = vmatprep.subr.mxu0 0.0
        %1479 = vmatpush1.msra.mxu0 0.0
        %1480 = vmatprep.subr.mxu0 0.0
        %1481 = vmatpush1.msra.mxu0 0.0
        %1482 = vmatprep.subr.mxu0 0.0
        %1483 = vmatpush1.msra.mxu0 0.0
        %1484 = vmatprep.subr.mxu0 0.0
        %1485 = vmatpush1.msra.mxu0 0.0
        %1486 = vmatprep.subr.mxu0 0.0
        %1487 = vmatpush1.msra.mxu0 0.0
        %1488 = vmatprep.subr.mxu0 0.0
        %1489 = vmatpush1.msra.mxu0 0.0
        %1490 = vmatprep.mubr.f32.mxu0 0.0
        %1491 = vmatmul.mubr.f32.gmra.mrb[0].mxu0 %v1424
        %v1492 = vpop.f32.mrb[0].mxu0
        %v1493 = vadd.f32 0.0, %v1492
        %v1494 = vpop.f32.mrb[0].mxu0
        %1495 = vdwg.mxu0
        %v1496 = vmul.f32 %v1274, 0.35355338
        %v1497 = vmul.f32 %v1347, 0.35355338
        %v1498 = vmul.f32 %v1420, 0.35355338
        %v1499 = vmul.f32 %v1493, 0.35355338
        %v1500 = vlaneseq
        %v1501 = vshrl.u32 %v1500, 7
        %v1502 = vlaneseq
        %v1503 = vand.u32 %v1502, 127
        %vm1504 = vcmp.ge.s32.totalorder %v1501, %v1503
        %v1505 = vsel %vm1504, 1, 0
        %vm1506 = vcmp.eq.s32.totalorder %v1505, 1
        %v1507 = vsel %vm1506, %v1496, -inf
        %v1508 = vsel %vm1506, %v1497, -inf
        %v1509 = vsel %vm1506, %v1498, -inf
        %v1510 = vsel %vm1506, %v1499, -inf
        %v1511 = vsel %vm738, %v1507, -inf
        %1512 = vmax.xlane.f32.xlu0 %v1511
        %v1513 = vpop.xlane.xlu0 %1512
        %v1514 = vsel %vm738, %v1508, -inf
        %1515 = vmax.xlane.f32.xlu0 %v1514
        %v1516 = vpop.xlane.xlu0 %1515
        %v1517 = vsel %vm738, %v1509, -inf
        %1518 = vmax.xlane.f32.xlu0 %v1517
        %v1519 = vpop.xlane.xlu0 %1518
        %v1520 = vsel %vm738, %v1510, -inf
        %1521 = vmax.xlane.f32.xlu0 %v1520
        %v1522 = vpop.xlane.xlu0 %1521
        %v1523 = vsub.f32 %v1507, %v1513
        %v1524 = vsub.f32 %v1508, %v1516
        %v1525 = vsub.f32 %v1509, %v1519
        %v1526 = vsub.f32 %v1510, %v1522
        %v1527 = vmul.f32 %v1523, 1.442695
        %v1528 = vpow.pop %v1527
        %v1529 = vmul.f32 %v1524, 1.442695
        %v1530 = vpow.pop %v1529
        %v1531 = vmul.f32 %v1525, 1.442695
        %v1532 = vpow.pop %v1531
        %v1533 = vmul.f32 %v1526, 1.442695
        %v1534 = vpow.pop %v1533
        %v1535 = vsel %vm738, %v1528, 0.0
        %1536 = vadd.xlane.f32.xlu0 %v1535
        %v1537 = vpop.xlane.xlu0 %1536
        %v1538 = vsel %vm738, %v1530, 0.0
        %1539 = vadd.xlane.f32.xlu0 %v1538
        %v1540 = vpop.xlane.xlu0 %1539
        %v1541 = vsel %vm738, %v1532, 0.0
        %1542 = vadd.xlane.f32.xlu0 %v1541
        %v1543 = vpop.xlane.xlu0 %1542
        %v1544 = vsel %vm738, %v1534, 0.0
        %1545 = vadd.xlane.f32.xlu0 %v1544
        %v1546 = vpop.xlane.xlu0 %1545
        %v1547 = vrcp.pop %v1537
        %v1548 = vmul.f32 %v1528, %v1547
        %v1549 = vrcp.pop %v1540
        %v1550 = vmul.f32 %v1530, %v1549
        %v1551 = vrcp.pop %v1543
        %v1552 = vmul.f32 %v1532, %v1551
        %v1553 = vrcp.pop %v1546
        %v1554 = vmul.f32 %v1534, %v1553
        %v1556 = vsel %vm738, %v1058, 0
        %v1559 = vsel %vm738, %v1548, 0
        %1561 = vmatprep.subr.mxu0 0.0
        %1562 = vmatpush1.xpose.msra.mxu0 %v1559
        %1563 = vmatprep.subr.mxu0 0.0
        %1564 = vmatpush1.xpose.msra.mxu0 0.0
        %1565 = vmatprep.subr.mxu0 0.0
        %1566 = vmatpush1.xpose.msra.mxu0 0.0
        %1567 = vmatprep.subr.mxu0 0.0
        %1568 = vmatpush1.xpose.msra.mxu0 0.0
        %1569 = vmatprep.subr.mxu0 0.0
        %1570 = vmatpush1.xpose.msra.mxu0 0.0
        %1571 = vmatprep.subr.mxu0 0.0
        %1572 = vmatpush1.xpose.msra.mxu0 0.0
        %1573 = vmatprep.subr.mxu0 0.0
        %1574 = vmatpush1.xpose.msra.mxu0 0.0
        %1575 = vmatprep.subr.mxu0 0.0
        %1576 = vmatpush1.xpose.msra.mxu0 0.0
        %1577 = vmatprep.subr.mxu0 0.0
        %1578 = vmatpush1.xpose.msra.mxu0 0.0
        %1579 = vmatprep.subr.mxu0 0.0
        %1580 = vmatpush1.xpose.msra.mxu0 0.0
        %1581 = vmatprep.subr.mxu0 0.0
        %1582 = vmatpush1.xpose.msra.mxu0 0.0
        %1583 = vmatprep.subr.mxu0 0.0
        %1584 = vmatpush1.xpose.msra.mxu0 0.0
        %1585 = vmatprep.subr.mxu0 0.0
        %1586 = vmatpush1.xpose.msra.mxu0 0.0
        %1587 = vmatprep.subr.mxu0 0.0
        %1588 = vmatpush1.xpose.msra.mxu0 0.0
        %1589 = vmatprep.subr.mxu0 0.0
        %1590 = vmatpush1.xpose.msra.mxu0 0.0
        %1591 = vmatprep.subr.mxu0 0.0
        %1592 = vmatpush1.xpose.msra.mxu0 0.0
        %1593 = vmatprep.subr.mxu0 0.0
        %1594 = vmatpush1.xpose.msra.mxu0 0.0
        %1595 = vmatprep.subr.mxu0 0.0
        %1596 = vmatpush1.xpose.msra.mxu0 0.0
        %1597 = vmatprep.subr.mxu0 0.0
        %1598 = vmatpush1.xpose.msra.mxu0 0.0
        %1599 = vmatprep.subr.mxu0 0.0
        %1600 = vmatpush1.xpose.msra.mxu0 0.0
        %1601 = vmatprep.subr.mxu0 0.0
        %1602 = vmatpush1.xpose.msra.mxu0 0.0
        %1603 = vmatprep.subr.mxu0 0.0
        %1604 = vmatpush1.xpose.msra.mxu0 0.0
        %1605 = vmatprep.subr.mxu0 0.0
        %1606 = vmatpush1.xpose.msra.mxu0 0.0
        %1607 = vmatprep.subr.mxu0 0.0
        %1608 = vmatpush1.xpose.msra.mxu0 0.0
        %1609 = vmatprep.subr.mxu0 0.0
        %1610 = vmatpush1.xpose.msra.mxu0 0.0
        %1611 = vmatprep.subr.mxu0 0.0
        %1612 = vmatpush1.xpose.msra.mxu0 0.0
        %1613 = vmatprep.subr.mxu0 0.0
        %1614 = vmatpush1.xpose.msra.mxu0 0.0
        %1615 = vmatprep.subr.mxu0 0.0
        %1616 = vmatpush1.xpose.msra.mxu0 0.0
        %1617 = vmatprep.subr.mxu0 0.0
        %1618 = vmatpush1.xpose.msra.mxu0 0.0
        %1619 = vmatprep.subr.mxu0 0.0
        %1620 = vmatpush1.xpose.msra.mxu0 0.0
        %1621 = vmatprep.subr.mxu0 0.0
        %1622 = vmatpush1.xpose.msra.mxu0 0.0
        %1623 = vmatprep.subr.mxu0 0.0
        %1624 = vmatpush1.xpose.msra.mxu0 0.0
        %1625 = vmatprep.mubr.f32.mxu0 0.0
        %1626 = vmatmul.mubr.f32.gmra.mrb[0].mxu0 %v1556
        %v1627 = vpop.f32.mrb[0].mxu0
        %v1628 = vadd.f32 0.0, %v1627
        %v1629 = vpop.f32.mrb[0].mxu0
        %1630 = vdwg.mxu0
        %v1632 = vsel %vm738, %v1063, 0
        %v1635 = vsel %vm738, %v1550, 0
        %1637 = vmatprep.subr.mxu0 0.0
        %1638 = vmatpush1.xpose.msra.mxu0 %v1635
        %1639 = vmatprep.subr.mxu0 0.0
        %1640 = vmatpush1.xpose.msra.mxu0 0.0
        %1641 = vmatprep.subr.mxu0 0.0
        %1642 = vmatpush1.xpose.msra.mxu0 0.0
        %1643 = vmatprep.subr.mxu0 0.0
        %1644 = vmatpush1.xpose.msra.mxu0 0.0
        %1645 = vmatprep.subr.mxu0 0.0
        %1646 = vmatpush1.xpose.msra.mxu0 0.0
        %1647 = vmatprep.subr.mxu0 0.0
        %1648 = vmatpush1.xpose.msra.mxu0 0.0
        %1649 = vmatprep.subr.mxu0 0.0
        %1650 = vmatpush1.xpose.msra.mxu0 0.0
        %1651 = vmatprep.subr.mxu0 0.0
        %1652 = vmatpush1.xpose.msra.mxu0 0.0
        %1653 = vmatprep.subr.mxu0 0.0
        %1654 = vmatpush1.xpose.msra.mxu0 0.0
        %1655 = vmatprep.subr.mxu0 0.0
        %1656 = vmatpush1.xpose.msra.mxu0 0.0
        %1657 = vmatprep.subr.mxu0 0.0
        %1658 = vmatpush1.xpose.msra.mxu0 0.0
        %1659 = vmatprep.subr.mxu0 0.0
        %1660 = vmatpush1.xpose.msra.mxu0 0.0
        %1661 = vmatprep.subr.mxu0 0.0
        %1662 = vmatpush1.xpose.msra.mxu0 0.0
        %1663 = vmatprep.subr.mxu0 0.0
        %1664 = vmatpush1.xpose.msra.mxu0 0.0
        %1665 = vmatprep.subr.mxu0 0.0
        %1666 = vmatpush1.xpose.msra.mxu0 0.0
        %1667 = vmatprep.subr.mxu0 0.0
        %1668 = vmatpush1.xpose.msra.mxu0 0.0
        %1669 = vmatprep.subr.mxu0 0.0
        %1670 = vmatpush1.xpose.msra.mxu0 0.0
        %1671 = vmatprep.subr.mxu0 0.0
        %1672 = vmatpush1.xpose.msra.mxu0 0.0
        %1673 = vmatprep.subr.mxu0 0.0
        %1674 = vmatpush1.xpose.msra.mxu0 0.0
        %1675 = vmatprep.subr.mxu0 0.0
        %1676 = vmatpush1.xpose.msra.mxu0 0.0
        %1677 = vmatprep.subr.mxu0 0.0
        %1678 = vmatpush1.xpose.msra.mxu0 0.0
        %1679 = vmatprep.subr.mxu0 0.0
        %1680 = vmatpush1.xpose.msra.mxu0 0.0
        %1681 = vmatprep.subr.mxu0 0.0
        %1682 = vmatpush1.xpose.msra.mxu0 0.0
        %1683 = vmatprep.subr.mxu0 0.0
        %1684 = vmatpush1.xpose.msra.mxu0 0.0
        %1685 = vmatprep.subr.mxu0 0.0
        %1686 = vmatpush1.xpose.msra.mxu0 0.0
        %1687 = vmatprep.subr.mxu0 0.0
        %1688 = vmatpush1.xpose.msra.mxu0 0.0
        %1689 = vmatprep.subr.mxu0 0.0
        %1690 = vmatpush1.xpose.msra.mxu0 0.0
        %1691 = vmatprep.subr.mxu0 0.0
        %1692 = vmatpush1.xpose.msra.mxu0 0.0
        %1693 = vmatprep.subr.mxu0 0.0
        %1694 = vmatpush1.xpose.msra.mxu0 0.0
        %1695 = vmatprep.subr.mxu0 0.0
        %1696 = vmatpush1.xpose.msra.mxu0 0.0
        %1697 = vmatprep.subr.mxu0 0.0
        %1698 = vmatpush1.xpose.msra.mxu0 0.0
        %1699 = vmatprep.subr.mxu0 0.0
        %1700 = vmatpush1.xpose.msra.mxu0 0.0
        %1701 = vmatprep.mubr.f32.mxu0 0.0
        %1702 = vmatmul.mubr.f32.gmra.mrb[0].mxu0 %v1632
        %v1703 = vpop.f32.mrb[0].mxu0
        %v1704 = vadd.f32 0.0, %v1703
        %v1705 = vpop.f32.mrb[0].mxu0
        %1706 = vdwg.mxu0
        %v1708 = vsel %vm738, %v1068, 0
        %v1711 = vsel %vm738, %v1552, 0
        %1713 = vmatprep.subr.mxu0 0.0
        %1714 = vmatpush1.xpose.msra.mxu0 %v1711
        %1715 = vmatprep.subr.mxu0 0.0
        %1716 = vmatpush1.xpose.msra.mxu0 0.0
        %1717 = vmatprep.subr.mxu0 0.0
        %1718 = vmatpush1.xpose.msra.mxu0 0.0
        %1719 = vmatprep.subr.mxu0 0.0
        %1720 = vmatpush1.xpose.msra.mxu0 0.0
        %1721 = vmatprep.subr.mxu0 0.0
        %1722 = vmatpush1.xpose.msra.mxu0 0.0
        %1723 = vmatprep.subr.mxu0 0.0
        %1724 = vmatpush1.xpose.msra.mxu0 0.0
        %1725 = vmatprep.subr.mxu0 0.0
        %1726 = vmatpush1.xpose.msra.mxu0 0.0
        %1727 = vmatprep.subr.mxu0 0.0
        %1728 = vmatpush1.xpose.msra.mxu0 0.0
        %1729 = vmatprep.subr.mxu0 0.0
        %1730 = vmatpush1.xpose.msra.mxu0 0.0
        %1731 = vmatprep.subr.mxu0 0.0
        %1732 = vmatpush1.xpose.msra.mxu0 0.0
        %1733 = vmatprep.subr.mxu0 0.0
        %1734 = vmatpush1.xpose.msra.mxu0 0.0
        %1735 = vmatprep.subr.mxu0 0.0
        %1736 = vmatpush1.xpose.msra.mxu0 0.0
        %1737 = vmatprep.subr.mxu0 0.0
        %1738 = vmatpush1.xpose.msra.mxu0 0.0
        %1739 = vmatprep.subr.mxu0 0.0
        %1740 = vmatpush1.xpose.msra.mxu0 0.0
        %1741 = vmatprep.subr.mxu0 0.0
        %1742 = vmatpush1.xpose.msra.mxu0 0.0
        %1743 = vmatprep.subr.mxu0 0.0
        %1744 = vmatpush1.xpose.msra.mxu0 0.0
        %1745 = vmatprep.subr.mxu0 0.0
        %1746 = vmatpush1.xpose.msra.mxu0 0.0
        %1747 = vmatprep.subr.mxu0 0.0
        %1748 = vmatpush1.xpose.msra.mxu0 0.0
        %1749 = vmatprep.subr.mxu0 0.0
        %1750 = vmatpush1.xpose.msra.mxu0 0.0
        %1751 = vmatprep.subr.mxu0 0.0
        %1752 = vmatpush1.xpose.msra.mxu0 0.0
        %1753 = vmatprep.subr.mxu0 0.0
        %1754 = vmatpush1.xpose.msra.mxu0 0.0
        %1755 = vmatprep.subr.mxu0 0.0
        %1756 = vmatpush1.xpose.msra.mxu0 0.0
        %1757 = vmatprep.subr.mxu0 0.0
        %1758 = vmatpush1.xpose.msra.mxu0 0.0
        %1759 = vmatprep.subr.mxu0 0.0
        %1760 = vmatpush1.xpose.msra.mxu0 0.0
        %1761 = vmatprep.subr.mxu0 0.0
        %1762 = vmatpush1.xpose.msra.mxu0 0.0
        %1763 = vmatprep.subr.mxu0 0.0
        %1764 = vmatpush1.xpose.msra.mxu0 0.0
        %1765 = vmatprep.subr.mxu0 0.0
        %1766 = vmatpush1.xpose.msra.mxu0 0.0
        %1767 = vmatprep.subr.mxu0 0.0
        %1768 = vmatpush1.xpose.msra.mxu0 0.0
        %1769 = vmatprep.subr.mxu0 0.0
        %1770 = vmatpush1.xpose.msra.mxu0 0.0
        %1771 = vmatprep.subr.mxu0 0.0
        %1772 = vmatpush1.xpose.msra.mxu0 0.0
        %1773 = vmatprep.subr.mxu0 0.0
        %1774 = vmatpush1.xpose.msra.mxu0 0.0
        %1775 = vmatprep.subr.mxu0 0.0
        %1776 = vmatpush1.xpose.msra.mxu0 0.0
        %1777 = vmatprep.mubr.f32.mxu0 0.0
        %1778 = vmatmul.mubr.f32.gmra.mrb[0].mxu0 %v1708
        %v1779 = vpop.f32.mrb[0].mxu0
        %v1780 = vadd.f32 0.0, %v1779
        %v1781 = vpop.f32.mrb[0].mxu0
        %1782 = vdwg.mxu0
        %v1784 = vsel %vm738, %v1073, 0
        %v1787 = vsel %vm738, %v1554, 0
        %1789 = vmatprep.subr.mxu0 0.0
        %1790 = vmatpush1.xpose.msra.mxu0 %v1787
        %1791 = vmatprep.subr.mxu0 0.0
        %1792 = vmatpush1.xpose.msra.mxu0 0.0
        %1793 = vmatprep.subr.mxu0 0.0
        %1794 = vmatpush1.xpose.msra.mxu0 0.0
        %1795 = vmatprep.subr.mxu0 0.0
        %1796 = vmatpush1.xpose.msra.mxu0 0.0
        %1797 = vmatprep.subr.mxu0 0.0
        %1798 = vmatpush1.xpose.msra.mxu0 0.0
        %1799 = vmatprep.subr.mxu0 0.0
        %1800 = vmatpush1.xpose.msra.mxu0 0.0
        %1801 = vmatprep.subr.mxu0 0.0
        %1802 = vmatpush1.xpose.msra.mxu0 0.0
        %1803 = vmatprep.subr.mxu0 0.0
        %1804 = vmatpush1.xpose.msra.mxu0 0.0
        %1805 = vmatprep.subr.mxu0 0.0
        %1806 = vmatpush1.xpose.msra.mxu0 0.0
        %1807 = vmatprep.subr.mxu0 0.0
        %1808 = vmatpush1.xpose.msra.mxu0 0.0
        %1809 = vmatprep.subr.mxu0 0.0
        %1810 = vmatpush1.xpose.msra.mxu0 0.0
        %1811 = vmatprep.subr.mxu0 0.0
        %1812 = vmatpush1.xpose.msra.mxu0 0.0
        %1813 = vmatprep.subr.mxu0 0.0
        %1814 = vmatpush1.xpose.msra.mxu0 0.0
        %1815 = vmatprep.subr.mxu0 0.0
        %1816 = vmatpush1.xpose.msra.mxu0 0.0
        %1817 = vmatprep.subr.mxu0 0.0
        %1818 = vmatpush1.xpose.msra.mxu0 0.0
        %1819 = vmatprep.subr.mxu0 0.0
        %1820 = vmatpush1.xpose.msra.mxu0 0.0
        %1821 = vmatprep.subr.mxu0 0.0
        %1822 = vmatpush1.xpose.msra.mxu0 0.0
        %1823 = vmatprep.subr.mxu0 0.0
        %1824 = vmatpush1.xpose.msra.mxu0 0.0
        %1825 = vmatprep.subr.mxu0 0.0
        %1826 = vmatpush1.xpose.msra.mxu0 0.0
        %1827 = vmatprep.subr.mxu0 0.0
        %1828 = vmatpush1.xpose.msra.mxu0 0.0
        %1829 = vmatprep.subr.mxu0 0.0
        %1830 = vmatpush1.xpose.msra.mxu0 0.0
        %1831 = vmatprep.subr.mxu0 0.0
        %1832 = vmatpush1.xpose.msra.mxu0 0.0
        %1833 = vmatprep.subr.mxu0 0.0
        %1834 = vmatpush1.xpose.msra.mxu0 0.0
        %1835 = vmatprep.subr.mxu0 0.0
        %1836 = vmatpush1.xpose.msra.mxu0 0.0
        %1837 = vmatprep.subr.mxu0 0.0
        %1838 = vmatpush1.xpose.msra.mxu0 0.0
        %1839 = vmatprep.subr.mxu0 0.0
        %1840 = vmatpush1.xpose.msra.mxu0 0.0
        %1841 = vmatprep.subr.mxu0 0.0
        %1842 = vmatpush1.xpose.msra.mxu0 0.0
        %1843 = vmatprep.subr.mxu0 0.0
        %1844 = vmatpush1.xpose.msra.mxu0 0.0
        %1845 = vmatprep.subr.mxu0 0.0
        %1846 = vmatpush1.xpose.msra.mxu0 0.0
        %1847 = vmatprep.subr.mxu0 0.0
        %1848 = vmatpush1.xpose.msra.mxu0 0.0
        %1849 = vmatprep.subr.mxu0 0.0
        %1850 = vmatpush1.xpose.msra.mxu0 0.0
        %1851 = vmatprep.subr.mxu0 0.0
        %1852 = vmatpush1.xpose.msra.mxu0 0.0
        %1853 = vmatprep.mubr.f32.mxu0 0.0
        %1854 = vmatmul.mubr.f32.gmra.mrb[0].mxu0 %v1784
        %v1855 = vpop.f32.mrb[0].mxu0
        %v1856 = vadd.f32 0.0, %v1855
        %v1857 = vpop.f32.mrb[0].mxu0
        %1858 = vdwg.mxu0
        %v1859 = vld [vmem:[%s6] sm:$0xff]
        %v1860 = vld [vmem:[%s6 + $0x8] sm:$0xff]
        %v1861 = vld [vmem:[%s6 + $0x10] sm:$0xff]
        %v1862 = vld [vmem:[%s6 + $0x18] sm:$0xff]
        %v1863 = vld [vmem:[%s7] sm:$0xff]
        %v1864 = vld [vmem:[%s7 + $0x8] sm:$0xff]
        %v1865 = vld [vmem:[%s7 + $0x10] sm:$0xff]
        %v1866 = vld [vmem:[%s7 + $0x18] sm:$0xff]
        %1868 = vset.pattern.permute.xlu0 0
        %1869 = vperm.xlu0 %1868, %v1863
        %v1870 = vpop.permute.xlu0 %1869
        %1873 = vset.pattern.permute.xlu0 0
        %1874 = vperm.xlu0 %1873, %v1864
        %v1875 = vpop.permute.xlu0 %1874
        %1878 = vset.pattern.permute.xlu0 0
        %1879 = vperm.xlu0 %1878, %v1865
        %v1880 = vpop.permute.xlu0 %1879
        %1883 = vset.pattern.permute.xlu0 0
        %1884 = vperm.xlu0 %1883, %v1866
        %v1885 = vpop.permute.xlu0 %1884
        %v1888 = vsel %vm914, %v1859, 0
        %v1891 = vsel %vm914, %v1860, 0
        %v1894 = vsel %vm914, %v1861, 0
        %v1897 = vsel %vm914, %v1862, 0
        %1899 = vmatprep.subr.mxu0 0.0
        %1900 = vmatpush1.msra.mxu0 %v1628
        %1901 = vmatprep.subr.mxu0 0.0
        %1902 = vmatpush1.msra.mxu0 %v1704
        %1903 = vmatprep.subr.mxu0 0.0
        %1904 = vmatpush1.msra.mxu0 %v1780
        %1905 = vmatprep.subr.mxu0 0.0
        %1906 = vmatpush1.msra.mxu0 %v1856
        %1907 = vmatprep.subr.mxu0 0.0
        %1908 = vmatpush1.msra.mxu0 0.0
        %1909 = vmatprep.subr.mxu0 0.0
        %1910 = vmatpush1.msra.mxu0 0.0
        %1911 = vmatprep.subr.mxu0 0.0
        %1912 = vmatpush1.msra.mxu0 0.0
        %1913 = vmatprep.subr.mxu0 0.0
        %1914 = vmatpush1.msra.mxu0 0.0
        %1915 = vmatprep.subr.mxu0 0.0
        %1916 = vmatpush1.msra.mxu0 0.0
        %1917 = vmatprep.subr.mxu0 0.0
        %1918 = vmatpush1.msra.mxu0 0.0
        %1919 = vmatprep.subr.mxu0 0.0
        %1920 = vmatpush1.msra.mxu0 0.0
        %1921 = vmatprep.subr.mxu0 0.0
        %1922 = vmatpush1.msra.mxu0 0.0
        %1923 = vmatprep.subr.mxu0 0.0
        %1924 = vmatpush1.msra.mxu0 0.0
        %1925 = vmatprep.subr.mxu0 0.0
        %1926 = vmatpush1.msra.mxu0 0.0
        %1927 = vmatprep.subr.mxu0 0.0
        %1928 = vmatpush1.msra.mxu0 0.0
        %1929 = vmatprep.subr.mxu0 0.0
        %1930 = vmatpush1.msra.mxu0 0.0
        %1931 = vmatprep.subr.mxu0 0.0
        %1932 = vmatpush1.msra.mxu0 0.0
        %1933 = vmatprep.subr.mxu0 0.0
        %1934 = vmatpush1.msra.mxu0 0.0
        %1935 = vmatprep.subr.mxu0 0.0
        %1936 = vmatpush1.msra.mxu0 0.0
        %1937 = vmatprep.subr.mxu0 0.0
        %1938 = vmatpush1.msra.mxu0 0.0
        %1939 = vmatprep.subr.mxu0 0.0
        %1940 = vmatpush1.msra.mxu0 0.0
        %1941 = vmatprep.subr.mxu0 0.0
        %1942 = vmatpush1.msra.mxu0 0.0
        %1943 = vmatprep.subr.mxu0 0.0
        %1944 = vmatpush1.msra.mxu0 0.0
        %1945 = vmatprep.subr.mxu0 0.0
        %1946 = vmatpush1.msra.mxu0 0.0
        %1947 = vmatprep.subr.mxu0 0.0
        %1948 = vmatpush1.msra.mxu0 0.0
        %1949 = vmatprep.subr.mxu0 0.0
        %1950 = vmatpush1.msra.mxu0 0.0
        %1951 = vmatprep.subr.mxu0 0.0
        %1952 = vmatpush1.msra.mxu0 0.0
        %1953 = vmatprep.subr.mxu0 0.0
        %1954 = vmatpush1.msra.mxu0 0.0
        %1955 = vmatprep.subr.mxu0 0.0
        %1956 = vmatpush1.msra.mxu0 0.0
        %1957 = vmatprep.subr.mxu0 0.0
        %1958 = vmatpush1.msra.mxu0 0.0
        %1959 = vmatprep.subr.mxu0 0.0
        %1960 = vmatpush1.msra.mxu0 0.0
        %1961 = vmatprep.subr.mxu0 0.0
        %1962 = vmatpush1.msra.mxu0 0.0
        %1963 = vmatprep.mubr.f32.mxu0 0.0
        %1964 = vmatmul.mubr.f32.gmra.mrb[0].mxu0 %v1888
        %v1965 = vpop.f32.mrb[0].mxu0
        %v1966 = vadd.f32 %v1870, %v1965
        %v1967 = vpop.f32.mrb[0].mxu0
        %1968 = vmatprep.mubr.f32.mxu0 0.0
        %1969 = vmatmul.mubr.f32.gmra.mrb[0].mxu0 %v1891
        %v1970 = vpop.f32.mrb[0].mxu0
        %v1971 = vadd.f32 %v1875, %v1970
        %v1972 = vpop.f32.mrb[0].mxu0
        %1973 = vmatprep.mubr.f32.mxu0 0.0
        %1974 = vmatmul.mubr.f32.gmra.mrb[0].mxu0 %v1894
        %v1975 = vpop.f32.mrb[0].mxu0
        %v1976 = vadd.f32 %v1880, %v1975
        %v1977 = vpop.f32.mrb[0].mxu0
        %1978 = vmatprep.mubr.f32.mxu0 0.0
        %1979 = vmatmul.mubr.f32.gmra.mrb[0].mxu0 %v1897
        %v1980 = vpop.f32.mrb[0].mxu0
        %v1981 = vadd.f32 %v1885, %v1980
        %v1982 = vpop.f32.mrb[0].mxu0
        %1983 = vdwg.mxu0
        %v1984 = vadd.f32 %v713, %v1966
        %v1985 = vadd.f32 %v714, %v1971
        %v1986 = vadd.f32 %v715, %v1976
        %v1987 = vadd.f32 %v716, %v1981
        %v1988 = vld [vmem:[%s8] sm:$0xff]
        %v1989 = vld [vmem:[%s8 + $0x8] sm:$0xff]
        %v1990 = vld [vmem:[%s8 + $0x10] sm:$0xff]
        %v1991 = vld [vmem:[%s8 + $0x18] sm:$0xff]
        %v1992 = vld [vmem:[%s9] sm:$0xff]
        %v1993 = vld [vmem:[%s9 + $0x8] sm:$0xff]
        %v1994 = vld [vmem:[%s9 + $0x10] sm:$0xff]
        %v1995 = vld [vmem:[%s9 + $0x18] sm:$0xff]
        %v1996 = vsel %vm738, %v1984, 0.0
        %v1997 = vsel %vm738, %v1985, 0.0
        %v1998 = vadd.f32 %v1996, %v1997
        %v1999 = vsel %vm738, %v1986, 0.0
        %v2000 = vadd.f32 %v1998, %v1999
        %v2001 = vsel %vm738, %v1987, 0.0
        %v2002 = vadd.f32 %v2000, %v2001
        %v2003 = vrot.slane %v2002, 4
        %v2004 = vadd.f32 %v2002, %v2003
        %v2005 = vrot.slane %v2004, 2
        %v2006 = vadd.f32 %v2004, %v2005
        %v2007 = vrot.slane %v2006, 1
        %v2008 = vadd.f32 %v2006, %v2007
        %v2009 = vmul.f32 %v2008, %v752
        %v2010 = vsub.f32 %v1984, %v2009
        %v2011 = vsub.f32 %v1985, %v2009
        %v2012 = vsub.f32 %v1986, %v2009
        %v2013 = vsub.f32 %v1987, %v2009
        %v2014 = vmul.f32 %v2010, %v2010
        %v2015 = vmul.f32 %v2011, %v2011
        %v2016 = vmul.f32 %v2012, %v2012
        %v2017 = vmul.f32 %v2013, %v2013
        %v2018 = vsel %vm738, %v2014, 0.0
        %v2019 = vsel %vm738, %v2015, 0.0
        %v2020 = vadd.f32 %v2018, %v2019
        %v2021 = vsel %vm738, %v2016, 0.0
        %v2022 = vadd.f32 %v2020, %v2021
        %v2023 = vsel %vm738, %v2017, 0.0
        %v2024 = vadd.f32 %v2022, %v2023
        %v2025 = vrot.slane %v2024, 4
        %v2026 = vadd.f32 %v2024, %v2025
        %v2027 = vrot.slane %v2026, 2
        %v2028 = vadd.f32 %v2026, %v2027
        %v2029 = vrot.slane %v2028, 1
        %v2030 = vadd.f32 %v2028, %v2029
        %v2031 = vmul.f32 %v2030, %v752
        %v2032 = vadd.f32 %v2031, 1e-05
        %v2033 = vrsqrt.pop %v2032
        %v2034 = vmul.f32 %v2010, %v2033
        %v2035 = vmul.f32 %v2011, %v2033
        %v2036 = vmul.f32 %v2012, %v2033
        %v2037 = vmul.f32 %v2013, %v2033
        %2039 = vset.pattern.permute.xlu0 0
        %2040 = vperm.xlu0 %2039, %v1988
        %v2041 = vpop.permute.xlu0 %2040
        %2044 = vset.pattern.permute.xlu0 0
        %2045 = vperm.xlu0 %2044, %v1989
        %v2046 = vpop.permute.xlu0 %2045
        %2049 = vset.pattern.permute.xlu0 0
        %2050 = vperm.xlu0 %2049, %v1990
        %v2051 = vpop.permute.xlu0 %2050
        %2054 = vset.pattern.permute.xlu0 0
        %2055 = vperm.xlu0 %2054, %v1991
        %v2056 = vpop.permute.xlu0 %2055
        %v2058 = vmul.f32 %v2034, %v2041
        %v2059 = vmul.f32 %v2035, %v2046
        %v2060 = vmul.f32 %v2036, %v2051
        %v2061 = vmul.f32 %v2037, %v2056
        %2063 = vset.pattern.permute.xlu0 0
        %2064 = vperm.xlu0 %2063, %v1992
        %v2065 = vpop.permute.xlu0 %2064
        %2068 = vset.pattern.permute.xlu0 0
        %2069 = vperm.xlu0 %2068, %v1993
        %v2070 = vpop.permute.xlu0 %2069
        %2073 = vset.pattern.permute.xlu0 0
        %2074 = vperm.xlu0 %2073, %v1994
        %v2075 = vpop.permute.xlu0 %2074
        %2078 = vset.pattern.permute.xlu0 0
        %2079 = vperm.xlu0 %2078, %v1995
        %v2080 = vpop.permute.xlu0 %2079
        %v2082 = vadd.f32 %v2058, %v2065
        %v2083 = vadd.f32 %v2059, %v2070
        %v2084 = vadd.f32 %v2060, %v2075
        %v2085 = vadd.f32 %v2061, %v2080
        %v2086 = vld [vmem:[%s10] sm:$0xff]
        %v2087 = vld [vmem:[%s10 + $0x8] sm:$0xff]
        %v2088 = vld [vmem:[%s10 + $0x10] sm:$0xff]
        %v2089 = vld [vmem:[%s10 + $0x18] sm:$0xff]
        %v2090 = vld [vmem:[%s11] sm:$0xff]
        %v2091 = vld [vmem:[%s11 + $0x8] sm:$0xff]
        %v2092 = vld [vmem:[%s11 + $0x10] sm:$0xff]
        %v2093 = vld [vmem:[%s11 + $0x18] sm:$0xff]
        %2095 = vset.pattern.permute.xlu0 0
        %2096 = vperm.xlu0 %2095, %v2090
        %v2097 = vpop.permute.xlu0 %2096
        %2100 = vset.pattern.permute.xlu0 0
        %2101 = vperm.xlu0 %2100, %v2091
        %v2102 = vpop.permute.xlu0 %2101
        %2105 = vset.pattern.permute.xlu0 0
        %2106 = vperm.xlu0 %2105, %v2092
        %v2107 = vpop.permute.xlu0 %2106
        %2110 = vset.pattern.permute.xlu0 0
        %2111 = vperm.xlu0 %2110, %v2093
        %v2112 = vpop.permute.xlu0 %2111
        %v2115 = vsel %vm914, %v2086, 0
        %v2118 = vsel %vm914, %v2087, 0
        %v2121 = vsel %vm914, %v2088, 0
        %v2124 = vsel %vm914, %v2089, 0
        %2126 = vmatprep.subr.mxu0 0.0
        %2127 = vmatpush1.msra.mxu0 %v2082
        %2128 = vmatprep.subr.mxu0 0.0
        %2129 = vmatpush1.msra.mxu0 %v2083
        %2130 = vmatprep.subr.mxu0 0.0
        %2131 = vmatpush1.msra.mxu0 %v2084
        %2132 = vmatprep.subr.mxu0 0.0
        %2133 = vmatpush1.msra.mxu0 %v2085
        %2134 = vmatprep.subr.mxu0 0.0
        %2135 = vmatpush1.msra.mxu0 0.0
        %2136 = vmatprep.subr.mxu0 0.0
        %2137 = vmatpush1.msra.mxu0 0.0
        %2138 = vmatprep.subr.mxu0 0.0
        %2139 = vmatpush1.msra.mxu0 0.0
        %2140 = vmatprep.subr.mxu0 0.0
        %2141 = vmatpush1.msra.mxu0 0.0
        %2142 = vmatprep.subr.mxu0 0.0
        %2143 = vmatpush1.msra.mxu0 0.0
        %2144 = vmatprep.subr.mxu0 0.0
        %2145 = vmatpush1.msra.mxu0 0.0
        %2146 = vmatprep.subr.mxu0 0.0
        %2147 = vmatpush1.msra.mxu0 0.0
        %2148 = vmatprep.subr.mxu0 0.0
        %2149 = vmatpush1.msra.mxu0 0.0
        %2150 = vmatprep.subr.mxu0 0.0
        %2151 = vmatpush1.msra.mxu0 0.0
        %2152 = vmatprep.subr.mxu0 0.0
        %2153 = vmatpush1.msra.mxu0 0.0
        %2154 = vmatprep.subr.mxu0 0.0
        %2155 = vmatpush1.msra.mxu0 0.0
        %2156 = vmatprep.subr.mxu0 0.0
        %2157 = vmatpush1.msra.mxu0 0.0
        %2158 = vmatprep.subr.mxu0 0.0
        %2159 = vmatpush1.msra.mxu0 0.0
        %2160 = vmatprep.subr.mxu0 0.0
        %2161 = vmatpush1.msra.mxu0 0.0
        %2162 = vmatprep.subr.mxu0 0.0
        %2163 = vmatpush1.msra.mxu0 0.0
        %2164 = vmatprep.subr.mxu0 0.0
        %2165 = vmatpush1.msra.mxu0 0.0
        %2166 = vmatprep.subr.mxu0 0.0
        %2167 = vmatpush1.msra.mxu0 0.0
        %2168 = vmatprep.subr.mxu0 0.0
        %2169 = vmatpush1.msra.mxu0 0.0
        %2170 = vmatprep.subr.mxu0 0.0
        %2171 = vmatpush1.msra.mxu0 0.0
        %2172 = vmatprep.subr.mxu0 0.0
        %2173 = vmatpush1.msra.mxu0 0.0
        %2174 = vmatprep.subr.mxu0 0.0
        %2175 = vmatpush1.msra.mxu0 0.0
        %2176 = vmatprep.subr.mxu0 0.0
        %2177 = vmatpush1.msra.mxu0 0.0
        %2178 = vmatprep.subr.mxu0 0.0
        %2179 = vmatpush1.msra.mxu0 0.0
        %2180 = vmatprep.subr.mxu0 0.0
        %2181 = vmatpush1.msra.mxu0 0.0
        %2182 = vmatprep.subr.mxu0 0.0
        %2183 = vmatpush1.msra.mxu0 0.0
        %2184 = vmatprep.subr.mxu0 0.0
        %2185 = vmatpush1.msra.mxu0 0.0
        %2186 = vmatprep.subr.mxu0 0.0
        %2187 = vmatpush1.msra.mxu0 0.0
        %2188 = vmatprep.subr.mxu0 0.0
        %2189 = vmatpush1.msra.mxu0 0.0
        %2190 = vmatprep.mubr.f32.mxu0 0.0
        %2191 = vmatmul.mubr.f32.gmra.mrb[0].mxu0 %v2115
        %v2192 = vpop.f32.mrb[0].mxu0
        %v2193 = vadd.f32 %v2097, %v2192
        %v2194 = vpop.f32.mrb[0].mxu0
        %2195 = vmatprep.mubr.f32.mxu0 0.0
        %2196 = vmatmul.mubr.f32.gmra.mrb[0].mxu0 %v2118
        %v2197 = vpop.f32.mrb[0].mxu0
        %v2198 = vadd.f32 %v2102, %v2197
        %v2199 = vpop.f32.mrb[0].mxu0
        %2200 = vmatprep.mubr.f32.mxu0 0.0
        %2201 = vmatmul.mubr.f32.gmra.mrb[0].mxu0 %v2121
        %v2202 = vpop.f32.mrb[0].mxu0
        %v2203 = vadd.f32 %v2107, %v2202
        %v2204 = vpop.f32.mrb[0].mxu0
        %2205 = vmatprep.mubr.f32.mxu0 0.0
        %2206 = vmatmul.mubr.f32.gmra.mrb[0].mxu0 %v2124
        %v2207 = vpop.f32.mrb[0].mxu0
        %v2208 = vadd.f32 %v2112, %v2207
        %v2209 = vpop.f32.mrb[0].mxu0
        %2210 = vdwg.mxu0
        %2211 = vxpose.xlu0.b32.start [1/16] %v2193, 128
        %2212 = vxpose.xlu0.b32.cont [2/16] 0.0, 128
        %2213 = vxpose.xlu0.b32.cont [3/16] 0.0, 128
        %2214 = vxpose.xlu0.b32.cont [4/16] 0.0, 128
        %2215 = vxpose.xlu0.b32.cont [5/16] 0.0, 128
        %2216 = vxpose.xlu0.b32.cont [6/16] 0.0, 128
        %2217 = vxpose.xlu0.b32.cont [7/16] 0.0, 128
        %2218 = vxpose.xlu0.b32.cont [8/16] 0.0, 128
        %2219 = vxpose.xlu0.b32.cont [9/16] 0.0, 128
        %2220 = vxpose.xlu0.b32.cont [10/16] 0.0, 128
        %2221 = vxpose.xlu0.b32.cont [11/16] 0.0, 128
        %2222 = vxpose.xlu0.b32.cont [12/16] 0.0, 128
        %2223 = vxpose.xlu0.b32.cont [13/16] 0.0, 128
        %2224 = vxpose.xlu0.b32.cont [14/16] 0.0, 128
        %2225 = vxpose.xlu0.b32.cont [15/16] 0.0, 128
        %2226 = vxpose.xlu0.b32.end [16/16] 0.0, 128
        %v2227 = vpop.trf.xlu0
        %v2228 = vpop.trf.xlu0
        %v2229 = vpop.trf.xlu0
        %v2230 = vpop.trf.xlu0
        %v2231 = vpop.trf.xlu0
        %v2232 = vpop.trf.xlu0
        %v2233 = vpop.trf.xlu0
        %v2234 = vpop.trf.xlu0
        %v2235 = vpop.trf.xlu0
        %v2236 = vpop.trf.xlu0
        %v2237 = vpop.trf.xlu0
        %v2238 = vpop.trf.xlu0
        %v2239 = vpop.trf.xlu0
        %v2240 = vpop.trf.xlu0
        %v2241 = vpop.trf.xlu0
        %v2242 = vpop.trf.xlu0
        %2243 = vxpose.xlu0.b32.start [1/16] %v2198, 128
        %2244 = vxpose.xlu0.b32.cont [2/16] 0.0, 128
        %2245 = vxpose.xlu0.b32.cont [3/16] 0.0, 128
        %2246 = vxpose.xlu0.b32.cont [4/16] 0.0, 128
        %2247 = vxpose.xlu0.b32.cont [5/16] 0.0, 128
        %2248 = vxpose.xlu0.b32.cont [6/16] 0.0, 128
        %2249 = vxpose.xlu0.b32.cont [7/16] 0.0, 128
        %2250 = vxpose.xlu0.b32.cont [8/16] 0.0, 128
        %2251 = vxpose.xlu0.b32.cont [9/16] 0.0, 128
        %2252 = vxpose.xlu0.b32.cont [10/16] 0.0, 128
        %2253 = vxpose.xlu0.b32.cont [11/16] 0.0, 128
        %2254 = vxpose.xlu0.b32.cont [12/16] 0.0, 128
        %2255 = vxpose.xlu0.b32.cont [13/16] 0.0, 128
        %2256 = vxpose.xlu0.b32.cont [14/16] 0.0, 128
        %2257 = vxpose.xlu0.b32.cont [15/16] 0.0, 128
        %2258 = vxpose.xlu0.b32.end [16/16] 0.0, 128
        %v2259 = vpop.trf.xlu0
        %v2260 = vpop.trf.xlu0
        %v2261 = vpop.trf.xlu0
        %v2262 = vpop.trf.xlu0
        %v2263 = vpop.trf.xlu0
        %v2264 = vpop.trf.xlu0
        %v2265 = vpop.trf.xlu0
        %v2266 = vpop.trf.xlu0
        %v2267 = vpop.trf.xlu0
        %v2268 = vpop.trf.xlu0
        %v2269 = vpop.trf.xlu0
        %v2270 = vpop.trf.xlu0
        %v2271 = vpop.trf.xlu0
        %v2272 = vpop.trf.xlu0
        %v2273 = vpop.trf.xlu0
        %v2274 = vpop.trf.xlu0
        %2275 = vxpose.xlu0.b32.start [1/16] %v2203, 128
        %2276 = vxpose.xlu0.b32.cont [2/16] 0.0, 128
        %2277 = vxpose.xlu0.b32.cont [3/16] 0.0, 128
        %2278 = vxpose.xlu0.b32.cont [4/16] 0.0, 128
        %2279 = vxpose.xlu0.b32.cont [5/16] 0.0, 128
        %2280 = vxpose.xlu0.b32.cont [6/16] 0.0, 128
        %2281 = vxpose.xlu0.b32.cont [7/16] 0.0, 128
        %2282 = vxpose.xlu0.b32.cont [8/16] 0.0, 128
        %2283 = vxpose.xlu0.b32.cont [9/16] 0.0, 128
        %2284 = vxpose.xlu0.b32.cont [10/16] 0.0, 128
        %2285 = vxpose.xlu0.b32.cont [11/16] 0.0, 128
        %2286 = vxpose.xlu0.b32.cont [12/16] 0.0, 128
        %2287 = vxpose.xlu0.b32.cont [13/16] 0.0, 128
        %2288 = vxpose.xlu0.b32.cont [14/16] 0.0, 128
        %2289 = vxpose.xlu0.b32.cont [15/16] 0.0, 128
        %2290 = vxpose.xlu0.b32.end [16/16] 0.0, 128
        %v2291 = vpop.trf.xlu0
        %v2292 = vpop.trf.xlu0
        %v2293 = vpop.trf.xlu0
        %v2294 = vpop.trf.xlu0
        %v2295 = vpop.trf.xlu0
        %v2296 = vpop.trf.xlu0
        %v2297 = vpop.trf.xlu0
        %v2298 = vpop.trf.xlu0
        %v2299 = vpop.trf.xlu0
        %v2300 = vpop.trf.xlu0
        %v2301 = vpop.trf.xlu0
        %v2302 = vpop.trf.xlu0
        %v2303 = vpop.trf.xlu0
        %v2304 = vpop.trf.xlu0
        %v2305 = vpop.trf.xlu0
        %v2306 = vpop.trf.xlu0
        %2307 = vxpose.xlu0.b32.start [1/16] %v2208, 128
        %2308 = vxpose.xlu0.b32.cont [2/16] 0.0, 128
        %2309 = vxpose.xlu0.b32.cont [3/16] 0.0, 128
        %2310 = vxpose.xlu0.b32.cont [4/16] 0.0, 128
        %2311 = vxpose.xlu0.b32.cont [5/16] 0.0, 128
        %2312 = vxpose.xlu0.b32.cont [6/16] 0.0, 128
        %2313 = vxpose.xlu0.b32.cont [7/16] 0.0, 128
        %2314 = vxpose.xlu0.b32.cont [8/16] 0.0, 128
        %2315 = vxpose.xlu0.b32.cont [9/16] 0.0, 128
        %2316 = vxpose.xlu0.b32.cont [10/16] 0.0, 128
        %2317 = vxpose.xlu0.b32.cont [11/16] 0.0, 128
        %2318 = vxpose.xlu0.b32.cont [12/16] 0.0, 128
        %2319 = vxpose.xlu0.b32.cont [13/16] 0.0, 128
        %2320 = vxpose.xlu0.b32.cont [14/16] 0.0, 128
        %2321 = vxpose.xlu0.b32.cont [15/16] 0.0, 128
        %2322 = vxpose.xlu0.b32.end [16/16] 0.0, 128
        %v2323 = vpop.trf.xlu0
        %v2324 = vpop.trf.xlu0
        %v2325 = vpop.trf.xlu0
        %v2326 = vpop.trf.xlu0
        %v2327 = vpop.trf.xlu0
        %v2328 = vpop.trf.xlu0
        %v2329 = vpop.trf.xlu0
        %v2330 = vpop.trf.xlu0
        %v2331 = vpop.trf.xlu0
        %v2332 = vpop.trf.xlu0
        %v2333 = vpop.trf.xlu0
        %v2334 = vpop.trf.xlu0
        %v2335 = vpop.trf.xlu0
        %v2336 = vpop.trf.xlu0
        %v2337 = vpop.trf.xlu0
        %v2338 = vpop.trf.xlu0
        %v2339 = vld [vmem:[%s12] sm:$0xff]
        %v2340 = vld [vmem:[%s12 + $0x8] sm:$0xff]
        %v2341 = vld [vmem:[%s12 + $0x10] sm:$0xff]
        %v2342 = vld [vmem:[%s12 + $0x18] sm:$0xff]
        %v2343 = vld [vmem:[%s12 + $0x20] sm:$0xff]
        %v2344 = vld [vmem:[%s12 + $0x28] sm:$0xff]
        %v2345 = vld [vmem:[%s12 + $0x30] sm:$0xff]
        %v2346 = vld [vmem:[%s12 + $0x38] sm:$0xff]
        %v2347 = vld [vmem:[%s13] sm:$0xff]
        %v2348 = vld [vmem:[%s13 + $0x8] sm:$0xff]
        %v2349 = vld [vmem:[%s13 + $0x10] sm:$0xff]
        %v2350 = vld [vmem:[%s13 + $0x18] sm:$0xff]
        %v2351 = vld [vmem:[%s13 + $0x20] sm:$0xff]
        %v2352 = vld [vmem:[%s13 + $0x28] sm:$0xff]
        %v2353 = vld [vmem:[%s13 + $0x30] sm:$0xff]
        %v2354 = vld [vmem:[%s13 + $0x38] sm:$0xff]
        %2356 = vset.pattern.permute.xlu0 0
        %2357 = vperm.xlu0 %2356, %v2347
        %v2358 = vpop.permute.xlu0 %2357
        %2361 = vset.pattern.permute.xlu0 0
        %2362 = vperm.xlu0 %2361, %v2348
        %v2363 = vpop.permute.xlu0 %2362
        %2366 = vset.pattern.permute.xlu0 0
        %2367 = vperm.xlu0 %2366, %v2349
        %v2368 = vpop.permute.xlu0 %2367
        %2371 = vset.pattern.permute.xlu0 0
        %2372 = vperm.xlu0 %2371, %v2350
        %v2373 = vpop.permute.xlu0 %2372
        %2376 = vset.pattern.permute.xlu0 0
        %2377 = vperm.xlu0 %2376, %v2351
        %v2378 = vpop.permute.xlu0 %2377
        %2381 = vset.pattern.permute.xlu0 0
        %2382 = vperm.xlu0 %2381, %v2352
        %v2383 = vpop.permute.xlu0 %2382
        %2386 = vset.pattern.permute.xlu0 0
        %2387 = vperm.xlu0 %2386, %v2353
        %v2388 = vpop.permute.xlu0 %2387
        %2391 = vset.pattern.permute.xlu0 0
        %2392 = vperm.xlu0 %2391, %v2354
        %v2393 = vpop.permute.xlu0 %2392
        %v2396 = vsel %vm914, %v2339, 0
        %v2399 = vsel %vm914, %v2340, 0
        %v2402 = vsel %vm914, %v2341, 0
        %v2405 = vsel %vm914, %v2342, 0
        %v2408 = vsel %vm914, %v2343, 0
        %v2411 = vsel %vm914, %v2344, 0
        %v2414 = vsel %vm914, %v2345, 0
        %v2417 = vsel %vm914, %v2346, 0
        %v2420 = vsel %vm914, %v729, 0
        %2422 = vmatprep.subr.mxu0 0.0
        %2423 = vmatpush1.xpose.msra.mxu0 %v2420
        %2424 = vmatprep.subr.mxu0 0.0
        %2425 = vmatpush1.xpose.msra.mxu0 0.0
        %2426 = vmatprep.subr.mxu0 0.0
        %2427 = vmatpush1.xpose.msra.mxu0 0.0
        %2428 = vmatprep.subr.mxu0 0.0
        %2429 = vmatpush1.xpose.msra.mxu0 0.0
        %2430 = vmatprep.subr.mxu0 0.0
        %2431 = vmatpush1.xpose.msra.mxu0 0.0
        %2432 = vmatprep.subr.mxu0 0.0
        %2433 = vmatpush1.xpose.msra.mxu0 0.0
        %2434 = vmatprep.subr.mxu0 0.0
        %2435 = vmatpush1.xpose.msra.mxu0 0.0
        %2436 = vmatprep.subr.mxu0 0.0
        %2437 = vmatpush1.xpose.msra.mxu0 0.0
        %2438 = vmatprep.subr.mxu0 0.0
        %2439 = vmatpush1.xpose.msra.mxu0 0.0
        %2440 = vmatprep.subr.mxu0 0.0
        %2441 = vmatpush1.xpose.msra.mxu0 0.0
        %2442 = vmatprep.subr.mxu0 0.0
        %2443 = vmatpush1.xpose.msra.mxu0 0.0
        %2444 = vmatprep.subr.mxu0 0.0
        %2445 = vmatpush1.xpose.msra.mxu0 0.0
        %2446 = vmatprep.subr.mxu0 0.0
        %2447 = vmatpush1.xpose.msra.mxu0 0.0
        %2448 = vmatprep.subr.mxu0 0.0
        %2449 = vmatpush1.xpose.msra.mxu0 0.0
        %2450 = vmatprep.subr.mxu0 0.0
        %2451 = vmatpush1.xpose.msra.mxu0 0.0
        %2452 = vmatprep.subr.mxu0 0.0
        %2453 = vmatpush1.xpose.msra.mxu0 0.0
        %2454 = vmatprep.subr.mxu0 0.0
        %2455 = vmatpush1.xpose.msra.mxu0 0.0
        %2456 = vmatprep.subr.mxu0 0.0
        %2457 = vmatpush1.xpose.msra.mxu0 0.0
        %2458 = vmatprep.subr.mxu0 0.0
        %2459 = vmatpush1.xpose.msra.mxu0 0.0
        %2460 = vmatprep.subr.mxu0 0.0
        %2461 = vmatpush1.xpose.msra.mxu0 0.0
        %2462 = vmatprep.subr.mxu0 0.0
        %2463 = vmatpush1.xpose.msra.mxu0 0.0
        %2464 = vmatprep.subr.mxu0 0.0
        %2465 = vmatpush1.xpose.msra.mxu0 0.0
        %2466 = vmatprep.subr.mxu0 0.0
        %2467 = vmatpush1.xpose.msra.mxu0 0.0
        %2468 = vmatprep.subr.mxu0 0.0
        %2469 = vmatpush1.xpose.msra.mxu0 0.0
        %2470 = vmatprep.subr.mxu0 0.0
        %2471 = vmatpush1.xpose.msra.mxu0 0.0
        %2472 = vmatprep.subr.mxu0 0.0
        %2473 = vmatpush1.xpose.msra.mxu0 0.0
        %2474 = vmatprep.subr.mxu0 0.0
        %2475 = vmatpush1.xpose.msra.mxu0 0.0
        %2476 = vmatprep.subr.mxu0 0.0
        %2477 = vmatpush1.xpose.msra.mxu0 0.0
        %2478 = vmatprep.subr.mxu0 0.0
        %2479 = vmatpush1.xpose.msra.mxu0 0.0
        %2480 = vmatprep.subr.mxu0 0.0
        %2481 = vmatpush1.xpose.msra.mxu0 0.0
        %2482 = vmatprep.subr.mxu0 0.0
        %2483 = vmatpush1.xpose.msra.mxu0 0.0
        %2484 = vmatprep.subr.mxu0 0.0
        %2485 = vmatpush1.xpose.msra.mxu0 0.0
        %2486 = vmatprep.mubr.f32.mxu0 0.0
        %2487 = vmatmul.mubr.f32.gmra.mrb[0].mxu0 %v2396
        %v2488 = vpop.f32.mrb[0].mxu0
        %v2489 = vadd.f32 %v2358, %v2488
        %v2490 = vpop.f32.mrb[0].mxu0
        %2491 = vmatprep.mubr.f32.mxu0 0.0
        %2492 = vmatmul.mubr.f32.gmra.mrb[0].mxu0 %v2399
        %v2493 = vpop.f32.mrb[0].mxu0
        %v2494 = vadd.f32 %v2363, %v2493
        %v2495 = vpop.f32.mrb[0].mxu0
        %2496 = vmatprep.mubr.f32.mxu0 0.0
        %2497 = vmatmul.mubr.f32.gmra.mrb[0].mxu0 %v2402
        %v2498 = vpop.f32.mrb[0].mxu0
        %v2499 = vadd.f32 %v2368, %v2498
        %v2500 = vpop.f32.mrb[0].mxu0
        %2501 = vmatprep.mubr.f32.mxu0 0.0
        %2502 = vmatmul.mubr.f32.gmra.mrb[0].mxu0 %v2405
        %v2503 = vpop.f32.mrb[0].mxu0
        %v2504 = vadd.f32 %v2373, %v2503
        %v2505 = vpop.f32.mrb[0].mxu0
        %2506 = vmatprep.mubr.f32.mxu0 0.0
        %2507 = vmatmul.mubr.f32.gmra.mrb[0].mxu0 %v2408
        %v2508 = vpop.f32.mrb[0].mxu0
        %v2509 = vadd.f32 %v2378, %v2508
        %v2510 = vpop.f32.mrb[0].mxu0
        %2511 = vmatprep.mubr.f32.mxu0 0.0
        %2512 = vmatmul.mubr.f32.gmra.mrb[0].mxu0 %v2411
        %v2513 = vpop.f32.mrb[0].mxu0
        %v2514 = vadd.f32 %v2383, %v2513
        %v2515 = vpop.f32.mrb[0].mxu0
        %2516 = vmatprep.mubr.f32.mxu0 0.0
        %2517 = vmatmul.mubr.f32.gmra.mrb[0].mxu0 %v2414
        %v2518 = vpop.f32.mrb[0].mxu0
        %v2519 = vadd.f32 %v2388, %v2518
        %v2520 = vpop.f32.mrb[0].mxu0
        %2521 = vmatprep.mubr.f32.mxu0 0.0
        %2522 = vmatmul.mubr.f32.gmra.mrb[0].mxu0 %v2417
        %v2523 = vpop.f32.mrb[0].mxu0
        %v2524 = vadd.f32 %v2393, %v2523
        %v2525 = vpop.f32.mrb[0].mxu0
        %2526 = vdwg.mxu0
        %v2528 = vsel %vm738, %v2227, 0
        %2530 = vmatprep.subr.mxu0 0.0
        %2531 = vmatpush1.msra.mxu0 %v2489
        %2532 = vmatprep.subr.mxu0 0.0
        %2533 = vmatpush1.msra.mxu0 0.0
        %2534 = vmatprep.subr.mxu0 0.0
        %2535 = vmatpush1.msra.mxu0 0.0
        %2536 = vmatprep.subr.mxu0 0.0
        %2537 = vmatpush1.msra.mxu0 0.0
        %2538 = vmatprep.subr.mxu0 0.0
        %2539 = vmatpush1.msra.mxu0 0.0
        %2540 = vmatprep.subr.mxu0 0.0
        %2541 = vmatpush1.msra.mxu0 0.0
        %2542 = vmatprep.subr.mxu0 0.0
        %2543 = vmatpush1.msra.mxu0 0.0
        %2544 = vmatprep.subr.mxu0 0.0
        %2545 = vmatpush1.msra.mxu0 0.0
        %2546 = vmatprep.subr.mxu0 0.0
        %2547 = vmatpush1.msra.mxu0 0.0
        %2548 = vmatprep.subr.mxu0 0.0
        %2549 = vmatpush1.msra.mxu0 0.0
        %2550 = vmatprep.subr.mxu0 0.0
        %2551 = vmatpush1.msra.mxu0 0.0
        %2552 = vmatprep.subr.mxu0 0.0
        %2553 = vmatpush1.msra.mxu0 0.0
        %2554 = vmatprep.subr.mxu0 0.0
        %2555 = vmatpush1.msra.mxu0 0.0
        %2556 = vmatprep.subr.mxu0 0.0
        %2557 = vmatpush1.msra.mxu0 0.0
        %2558 = vmatprep.subr.mxu0 0.0
        %2559 = vmatpush1.msra.mxu0 0.0
        %2560 = vmatprep.subr.mxu0 0.0
        %2561 = vmatpush1.msra.mxu0 0.0
        %2562 = vmatprep.subr.mxu0 0.0
        %2563 = vmatpush1.msra.mxu0 0.0
        %2564 = vmatprep.subr.mxu0 0.0
        %2565 = vmatpush1.msra.mxu0 0.0
        %2566 = vmatprep.subr.mxu0 0.0
        %2567 = vmatpush1.msra.mxu0 0.0
        %2568 = vmatprep.subr.mxu0 0.0
        %2569 = vmatpush1.msra.mxu0 0.0
        %2570 = vmatprep.subr.mxu0 0.0
        %2571 = vmatpush1.msra.mxu0 0.0
        %2572 = vmatprep.subr.mxu0 0.0
        %2573 = vmatpush1.msra.mxu0 0.0
        %2574 = vmatprep.subr.mxu0 0.0
        %2575 = vmatpush1.msra.mxu0 0.0
        %2576 = vmatprep.subr.mxu0 0.0
        %2577 = vmatpush1.msra.mxu0 0.0
        %2578 = vmatprep.subr.mxu0 0.0
        %2579 = vmatpush1.msra.mxu0 0.0
        %2580 = vmatprep.subr.mxu0 0.0
        %2581 = vmatpush1.msra.mxu0 0.0
        %2582 = vmatprep.subr.mxu0 0.0
        %2583 = vmatpush1.msra.mxu0 0.0
        %2584 = vmatprep.subr.mxu0 0.0
        %2585 = vmatpush1.msra.mxu0 0.0
        %2586 = vmatprep.subr.mxu0 0.0
        %2587 = vmatpush1.msra.mxu0 0.0
        %2588 = vmatprep.subr.mxu0 0.0
        %2589 = vmatpush1.msra.mxu0 0.0
        %2590 = vmatprep.subr.mxu0 0.0
        %2591 = vmatpush1.msra.mxu0 0.0
        %2592 = vmatprep.subr.mxu0 0.0
        %2593 = vmatpush1.msra.mxu0 0.0
        %2594 = vmatprep.mubr.f32.mxu0 0.0
        %2595 = vmatmul.mubr.f32.gmra.mrb[0].mxu0 %v2528
        %v2596 = vpop.f32.mrb[0].mxu0
        %v2597 = vadd.f32 0.0, %v2596
        %v2598 = vpop.f32.mrb[0].mxu0
        %2599 = vdwg.mxu0
        %v2601 = vsel %vm738, %v2259, 0
        %2603 = vmatprep.subr.mxu0 0.0
        %2604 = vmatpush1.msra.mxu0 %v2494
        %2605 = vmatprep.subr.mxu0 0.0
        %2606 = vmatpush1.msra.mxu0 0.0
        %2607 = vmatprep.subr.mxu0 0.0
        %2608 = vmatpush1.msra.mxu0 0.0
        %2609 = vmatprep.subr.mxu0 0.0
        %2610 = vmatpush1.msra.mxu0 0.0
        %2611 = vmatprep.subr.mxu0 0.0
        %2612 = vmatpush1.msra.mxu0 0.0
        %2613 = vmatprep.subr.mxu0 0.0
        %2614 = vmatpush1.msra.mxu0 0.0
        %2615 = vmatprep.subr.mxu0 0.0
        %2616 = vmatpush1.msra.mxu0 0.0
        %2617 = vmatprep.subr.mxu0 0.0
        %2618 = vmatpush1.msra.mxu0 0.0
        %2619 = vmatprep.subr.mxu0 0.0
        %2620 = vmatpush1.msra.mxu0 0.0
        %2621 = vmatprep.subr.mxu0 0.0
        %2622 = vmatpush1.msra.mxu0 0.0
        %2623 = vmatprep.subr.mxu0 0.0
        %2624 = vmatpush1.msra.mxu0 0.0
        %2625 = vmatprep.subr.mxu0 0.0
        %2626 = vmatpush1.msra.mxu0 0.0
        %2627 = vmatprep.subr.mxu0 0.0
        %2628 = vmatpush1.msra.mxu0 0.0
        %2629 = vmatprep.subr.mxu0 0.0
        %2630 = vmatpush1.msra.mxu0 0.0
        %2631 = vmatprep.subr.mxu0 0.0
        %2632 = vmatpush1.msra.mxu0 0.0
        %2633 = vmatprep.subr.mxu0 0.0
        %2634 = vmatpush1.msra.mxu0 0.0
        %2635 = vmatprep.subr.mxu0 0.0
        %2636 = vmatpush1.msra.mxu0 0.0
        %2637 = vmatprep.subr.mxu0 0.0
        %2638 = vmatpush1.msra.mxu0 0.0
        %2639 = vmatprep.subr.mxu0 0.0
        %2640 = vmatpush1.msra.mxu0 0.0
        %2641 = vmatprep.subr.mxu0 0.0
        %2642 = vmatpush1.msra.mxu0 0.0
        %2643 = vmatprep.subr.mxu0 0.0
        %2644 = vmatpush1.msra.mxu0 0.0
        %2645 = vmatprep.subr.mxu0 0.0
        %2646 = vmatpush1.msra.mxu0 0.0
        %2647 = vmatprep.subr.mxu0 0.0
        %2648 = vmatpush1.msra.mxu0 0.0
        %2649 = vmatprep.subr.mxu0 0.0
        %2650 = vmatpush1.msra.mxu0 0.0
        %2651 = vmatprep.subr.mxu0 0.0
        %2652 = vmatpush1.msra.mxu0 0.0
        %2653 = vmatprep.subr.mxu0 0.0
        %2654 = vmatpush1.msra.mxu0 0.0
        %2655 = vmatprep.subr.mxu0 0.0
        %2656 = vmatpush1.msra.mxu0 0.0
        %2657 = vmatprep.subr.mxu0 0.0
        %2658 = vmatpush1.msra.mxu0 0.0
        %2659 = vmatprep.subr.mxu0 0.0
        %2660 = vmatpush1.msra.mxu0 0.0
        %2661 = vmatprep.subr.mxu0 0.0
        %2662 = vmatpush1.msra.mxu0 0.0
        %2663 = vmatprep.subr.mxu0 0.0
        %2664 = vmatpush1.msra.mxu0 0.0
        %2665 = vmatprep.subr.mxu0 0.0
        %2666 = vmatpush1.msra.mxu0 0.0
        %2667 = vmatprep.mubr.f32.mxu0 0.0
        %2668 = vmatmul.mubr.f32.gmra.mrb[0].mxu0 %v2601
        %v2669 = vpop.f32.mrb[0].mxu0
        %v2670 = vadd.f32 0.0, %v2669
        %v2671 = vpop.f32.mrb[0].mxu0
        %2672 = vdwg.mxu0
        %v2674 = vsel %vm738, %v2291, 0
        %2676 = vmatprep.subr.mxu0 0.0
        %2677 = vmatpush1.msra.mxu0 %v2499
        %2678 = vmatprep.subr.mxu0 0.0
        %2679 = vmatpush1.msra.mxu0 0.0
        %2680 = vmatprep.subr.mxu0 0.0
        %2681 = vmatpush1.msra.mxu0 0.0
        %2682 = vmatprep.subr.mxu0 0.0
        %2683 = vmatpush1.msra.mxu0 0.0
        %2684 = vmatprep.subr.mxu0 0.0
        %2685 = vmatpush1.msra.mxu0 0.0
        %2686 = vmatprep.subr.mxu0 0.0
        %2687 = vmatpush1.msra.mxu0 0.0
        %2688 = vmatprep.subr.mxu0 0.0
        %2689 = vmatpush1.msra.mxu0 0.0
        %2690 = vmatprep.subr.mxu0 0.0
        %2691 = vmatpush1.msra.mxu0 0.0
        %2692 = vmatprep.subr.mxu0 0.0
        %2693 = vmatpush1.msra.mxu0 0.0
        %2694 = vmatprep.subr.mxu0 0.0
        %2695 = vmatpush1.msra.mxu0 0.0
        %2696 = vmatprep.subr.mxu0 0.0
        %2697 = vmatpush1.msra.mxu0 0.0
        %2698 = vmatprep.subr.mxu0 0.0
        %2699 = vmatpush1.msra.mxu0 0.0
        %2700 = vmatprep.subr.mxu0 0.0
        %2701 = vmatpush1.msra.mxu0 0.0
        %2702 = vmatprep.subr.mxu0 0.0
        %2703 = vmatpush1.msra.mxu0 0.0
        %2704 = vmatprep.subr.mxu0 0.0
        %2705 = vmatpush1.msra.mxu0 0.0
        %2706 = vmatprep.subr.mxu0 0.0
        %2707 = vmatpush1.msra.mxu0 0.0
        %2708 = vmatprep.subr.mxu0 0.0
        %2709 = vmatpush1.msra.mxu0 0.0
        %2710 = vmatprep.subr.mxu0 0.0
        %2711 = vmatpush1.msra.mxu0 0.0
        %2712 = vmatprep.subr.mxu0 0.0
        %2713 = vmatpush1.msra.mxu0 0.0
        %2714 = vmatprep.subr.mxu0 0.0
        %2715 = vmatpush1.msra.mxu0 0.0
        %2716 = vmatprep.subr.mxu0 0.0
        %2717 = vmatpush1.msra.mxu0 0.0
        %2718 = vmatprep.subr.mxu0 0.0
        %2719 = vmatpush1.msra.mxu0 0.0
        %2720 = vmatprep.subr.mxu0 0.0
        %2721 = vmatpush1.msra.mxu0 0.0
        %2722 = vmatprep.subr.mxu0 0.0
        %2723 = vmatpush1.msra.mxu0 0.0
        %2724 = vmatprep.subr.mxu0 0.0
        %2725 = vmatpush1.msra.mxu0 0.0
        %2726 = vmatprep.subr.mxu0 0.0
        %2727 = vmatpush1.msra.mxu0 0.0
        %2728 = vmatprep.subr.mxu0 0.0
        %2729 = vmatpush1.msra.mxu0 0.0
        %2730 = vmatprep.subr.mxu0 0.0
        %2731 = vmatpush1.msra.mxu0 0.0
        %2732 = vmatprep.subr.mxu0 0.0
        %2733 = vmatpush1.msra.mxu0 0.0
        %2734 = vmatprep.subr.mxu0 0.0
        %2735 = vmatpush1.msra.mxu0 0.0
        %2736 = vmatprep.subr.mxu0 0.0
        %2737 = vmatpush1.msra.mxu0 0.0
        %2738 = vmatprep.subr.mxu0 0.0
        %2739 = vmatpush1.msra.mxu0 0.0
        %2740 = vmatprep.mubr.f32.mxu0 0.0
        %2741 = vmatmul.mubr.f32.gmra.mrb[0].mxu0 %v2674
        %v2742 = vpop.f32.mrb[0].mxu0
        %v2743 = vadd.f32 0.0, %v2742
        %v2744 = vpop.f32.mrb[0].mxu0
        %2745 = vdwg.mxu0
        %v2747 = vsel %vm738, %v2323, 0
        %2749 = vmatprep.subr.mxu0 0.0
        %2750 = vmatpush1.msra.mxu0 %v2504
        %2751 = vmatprep.subr.mxu0 0.0
        %2752 = vmatpush1.msra.mxu0 0.0
        %2753 = vmatprep.subr.mxu0 0.0
        %2754 = vmatpush1.msra.mxu0 0.0
        %2755 = vmatprep.subr.mxu0 0.0
        %2756 = vmatpush1.msra.mxu0 0.0
        %2757 = vmatprep.subr.mxu0 0.0
        %2758 = vmatpush1.msra.mxu0 0.0
        %2759 = vmatprep.subr.mxu0 0.0
        %2760 = vmatpush1.msra.mxu0 0.0
        %2761 = vmatprep.subr.mxu0 0.0
        %2762 = vmatpush1.msra.mxu0 0.0
        %2763 = vmatprep.subr.mxu0 0.0
        %2764 = vmatpush1.msra.mxu0 0.0
        %2765 = vmatprep.subr.mxu0 0.0
        %2766 = vmatpush1.msra.mxu0 0.0
        %2767 = vmatprep.subr.mxu0 0.0
        %2768 = vmatpush1.msra.mxu0 0.0
        %2769 = vmatprep.subr.mxu0 0.0
        %2770 = vmatpush1.msra.mxu0 0.0
        %2771 = vmatprep.subr.mxu0 0.0
        %2772 = vmatpush1.msra.mxu0 0.0
        %2773 = vmatprep.subr.mxu0 0.0
        %2774 = vmatpush1.msra.mxu0 0.0
        %2775 = vmatprep.subr.mxu0 0.0
        %2776 = vmatpush1.msra.mxu0 0.0
        %2777 = vmatprep.subr.mxu0 0.0
        %2778 = vmatpush1.msra.mxu0 0.0
        %2779 = vmatprep.subr.mxu0 0.0
        %2780 = vmatpush1.msra.mxu0 0.0
        %2781 = vmatprep.subr.mxu0 0.0
        %2782 = vmatpush1.msra.mxu0 0.0
        %2783 = vmatprep.subr.mxu0 0.0
        %2784 = vmatpush1.msra.mxu0 0.0
        %2785 = vmatprep.subr.mxu0 0.0
        %2786 = vmatpush1.msra.mxu0 0.0
        %2787 = vmatprep.subr.mxu0 0.0
        %2788 = vmatpush1.msra.mxu0 0.0
        %2789 = vmatprep.subr.mxu0 0.0
        %2790 = vmatpush1.msra.mxu0 0.0
        %2791 = vmatprep.subr.mxu0 0.0
        %2792 = vmatpush1.msra.mxu0 0.0
        %2793 = vmatprep.subr.mxu0 0.0
        %2794 = vmatpush1.msra.mxu0 0.0
        %2795 = vmatprep.subr.mxu0 0.0
        %2796 = vmatpush1.msra.mxu0 0.0
        %2797 = vmatprep.subr.mxu0 0.0
        %2798 = vmatpush1.msra.mxu0 0.0
        %2799 = vmatprep.subr.mxu0 0.0
        %2800 = vmatpush1.msra.mxu0 0.0
        %2801 = vmatprep.subr.mxu0 0.0
        %2802 = vmatpush1.msra.mxu0 0.0
        %2803 = vmatprep.subr.mxu0 0.0
        %2804 = vmatpush1.msra.mxu0 0.0
        %2805 = vmatprep.subr.mxu0 0.0
        %2806 = vmatpush1.msra.mxu0 0.0
        %2807 = vmatprep.subr.mxu0 0.0
        %2808 = vmatpush1.msra.mxu0 0.0
        %2809 = vmatprep.subr.mxu0 0.0
        %2810 = vmatpush1.msra.mxu0 0.0
        %2811 = vmatprep.subr.mxu0 0.0
        %2812 = vmatpush1.msra.mxu0 0.0
        %2813 = vmatprep.mubr.f32.mxu0 0.0
        %2814 = vmatmul.mubr.f32.gmra.mrb[0].mxu0 %v2747
        %v2815 = vpop.f32.mrb[0].mxu0
        %v2816 = vadd.f32 0.0, %v2815
        %v2817 = vpop.f32.mrb[0].mxu0
        %2818 = vdwg.mxu0
        %v2819 = vmul.f32 %v2597, 0.35355338
        %v2820 = vmul.f32 %v2670, 0.35355338
        %v2821 = vmul.f32 %v2743, 0.35355338
        %v2822 = vmul.f32 %v2816, 0.35355338
        %v2823 = vsel %vm738, %v2819, -inf
        %2824 = vmax.xlane.f32.xlu0 %v2823
        %v2825 = vpop.xlane.xlu0 %2824
        %v2826 = vsel %vm738, %v2820, -inf
        %2827 = vmax.xlane.f32.xlu0 %v2826
        %v2828 = vpop.xlane.xlu0 %2827
        %v2829 = vsel %vm738, %v2821, -inf
        %2830 = vmax.xlane.f32.xlu0 %v2829
        %v2831 = vpop.xlane.xlu0 %2830
        %v2832 = vsel %vm738, %v2822, -inf
        %2833 = vmax.xlane.f32.xlu0 %v2832
        %v2834 = vpop.xlane.xlu0 %2833
        %v2835 = vsub.f32 %v2819, %v2825
        %v2836 = vsub.f32 %v2820, %v2828
        %v2837 = vsub.f32 %v2821, %v2831
        %v2838 = vsub.f32 %v2822, %v2834
        %v2839 = vmul.f32 %v2835, 1.442695
        %v2840 = vpow.pop %v2839
        %v2841 = vmul.f32 %v2836, 1.442695
        %v2842 = vpow.pop %v2841
        %v2843 = vmul.f32 %v2837, 1.442695
        %v2844 = vpow.pop %v2843
        %v2845 = vmul.f32 %v2838, 1.442695
        %v2846 = vpow.pop %v2845
        %v2847 = vsel %vm738, %v2840, 0.0
        %2848 = vadd.xlane.f32.xlu0 %v2847
        %v2849 = vpop.xlane.xlu0 %2848
        %v2850 = vsel %vm738, %v2842, 0.0
        %2851 = vadd.xlane.f32.xlu0 %v2850
        %v2852 = vpop.xlane.xlu0 %2851
        %v2853 = vsel %vm738, %v2844, 0.0
        %2854 = vadd.xlane.f32.xlu0 %v2853
        %v2855 = vpop.xlane.xlu0 %2854
        %v2856 = vsel %vm738, %v2846, 0.0
        %2857 = vadd.xlane.f32.xlu0 %v2856
        %v2858 = vpop.xlane.xlu0 %2857
        %v2859 = vrcp.pop %v2849
        %v2860 = vmul.f32 %v2840, %v2859
        %v2861 = vrcp.pop %v2852
        %v2862 = vmul.f32 %v2842, %v2861
        %v2863 = vrcp.pop %v2855
        %v2864 = vmul.f32 %v2844, %v2863
        %v2865 = vrcp.pop %v2858
        %v2866 = vmul.f32 %v2846, %v2865
        %v2868 = vsel %vm738, %v2509, 0
        %v2871 = vsel %vm738, %v2860, 0
        %2873 = vmatprep.subr.mxu0 0.0
        %2874 = vmatpush1.xpose.msra.mxu0 %v2871
        %2875 = vmatprep.subr.mxu0 0.0
        %2876 = vmatpush1.xpose.msra.mxu0 0.0
        %2877 = vmatprep.subr.mxu0 0.0
        %2878 = vmatpush1.xpose.msra.mxu0 0.0
        %2879 = vmatprep.subr.mxu0 0.0
        %2880 = vmatpush1.xpose.msra.mxu0 0.0
        %2881 = vmatprep.subr.mxu0 0.0
        %2882 = vmatpush1.xpose.msra.mxu0 0.0
        %2883 = vmatprep.subr.mxu0 0.0
        %2884 = vmatpush1.xpose.msra.mxu0 0.0
        %2885 = vmatprep.subr.mxu0 0.0
        %2886 = vmatpush1.xpose.msra.mxu0 0.0
        %2887 = vmatprep.subr.mxu0 0.0
        %2888 = vmatpush1.xpose.msra.mxu0 0.0
        %2889 = vmatprep.subr.mxu0 0.0
        %2890 = vmatpush1.xpose.msra.mxu0 0.0
        %2891 = vmatprep.subr.mxu0 0.0
        %2892 = vmatpush1.xpose.msra.mxu0 0.0
        %2893 = vmatprep.subr.mxu0 0.0
        %2894 = vmatpush1.xpose.msra.mxu0 0.0
        %2895 = vmatprep.subr.mxu0 0.0
        %2896 = vmatpush1.xpose.msra.mxu0 0.0
        %2897 = vmatprep.subr.mxu0 0.0
        %2898 = vmatpush1.xpose.msra.mxu0 0.0
        %2899 = vmatprep.subr.mxu0 0.0
        %2900 = vmatpush1.xpose.msra.mxu0 0.0
        %2901 = vmatprep.subr.mxu0 0.0
        %2902 = vmatpush1.xpose.msra.mxu0 0.0
        %2903 = vmatprep.subr.mxu0 0.0
        %2904 = vmatpush1.xpose.msra.mxu0 0.0
        %2905 = vmatprep.subr.mxu0 0.0
        %2906 = vmatpush1.xpose.msra.mxu0 0.0
        %2907 = vmatprep.subr.mxu0 0.0
        %2908 = vmatpush1.xpose.msra.mxu0 0.0
        %2909 = vmatprep.subr.mxu0 0.0
        %2910 = vmatpush1.xpose.msra.mxu0 0.0
        %2911 = vmatprep.subr.mxu0 0.0
        %2912 = vmatpush1.xpose.msra.mxu0 0.0
        %2913 = vmatprep.subr.mxu0 0.0
        %2914 = vmatpush1.xpose.msra.mxu0 0.0
        %2915 = vmatprep.subr.mxu0 0.0
        %2916 = vmatpush1.xpose.msra.mxu0 0.0
        %2917 = vmatprep.subr.mxu0 0.0
        %2918 = vmatpush1.xpose.msra.mxu0 0.0
        %2919 = vmatprep.subr.mxu0 0.0
        %2920 = vmatpush1.xpose.msra.mxu0 0.0
        %2921 = vmatprep.subr.mxu0 0.0
        %2922 = vmatpush1.xpose.msra.mxu0 0.0
        %2923 = vmatprep.subr.mxu0 0.0
        %2924 = vmatpush1.xpose.msra.mxu0 0.0
        %2925 = vmatprep.subr.mxu0 0.0
        %2926 = vmatpush1.xpose.msra.mxu0 0.0
        %2927 = vmatprep.subr.mxu0 0.0
        %2928 = vmatpush1.xpose.msra.mxu0 0.0
        %2929 = vmatprep.subr.mxu0 0.0
        %2930 = vmatpush1.xpose.msra.mxu0 0.0
        %2931 = vmatprep.subr.mxu0 0.0
        %2932 = vmatpush1.xpose.msra.mxu0 0.0
        %2933 = vmatprep.subr.mxu0 0.0
        %2934 = vmatpush1.xpose.msra.mxu0 0.0
        %2935 = vmatprep.subr.mxu0 0.0
        %2936 = vmatpush1.xpose.msra.mxu0 0.0
        %2937 = vmatprep.mubr.f32.mxu0 0.0
        %2938 = vmatmul.mubr.f32.gmra.mrb[0].mxu0 %v2868
        %v2939 = vpop.f32.mrb[0].mxu0
        %v2940 = vadd.f32 0.0, %v2939
        %v2941 = vpop.f32.mrb[0].mxu0
        %2942 = vdwg.mxu0
        %v2944 = vsel %vm738, %v2514, 0
        %v2947 = vsel %vm738, %v2862, 0
        %2949 = vmatprep.subr.mxu0 0.0
        %2950 = vmatpush1.xpose.msra.mxu0 %v2947
        %2951 = vmatprep.subr.mxu0 0.0
        %2952 = vmatpush1.xpose.msra.mxu0 0.0
        %2953 = vmatprep.subr.mxu0 0.0
        %2954 = vmatpush1.xpose.msra.mxu0 0.0
        %2955 = vmatprep.subr.mxu0 0.0
        %2956 = vmatpush1.xpose.msra.mxu0 0.0
        %2957 = vmatprep.subr.mxu0 0.0
        %2958 = vmatpush1.xpose.msra.mxu0 0.0
        %2959 = vmatprep.subr.mxu0 0.0
        %2960 = vmatpush1.xpose.msra.mxu0 0.0
        %2961 = vmatprep.subr.mxu0 0.0
        %2962 = vmatpush1.xpose.msra.mxu0 0.0
        %2963 = vmatprep.subr.mxu0 0.0
        %2964 = vmatpush1.xpose.msra.mxu0 0.0
        %2965 = vmatprep.subr.mxu0 0.0
        %2966 = vmatpush1.xpose.msra.mxu0 0.0
        %2967 = vmatprep.subr.mxu0 0.0
        %2968 = vmatpush1.xpose.msra.mxu0 0.0
        %2969 = vmatprep.subr.mxu0 0.0
        %2970 = vmatpush1.xpose.msra.mxu0 0.0
        %2971 = vmatprep.subr.mxu0 0.0
        %2972 = vmatpush1.xpose.msra.mxu0 0.0
        %2973 = vmatprep.subr.mxu0 0.0
        %2974 = vmatpush1.xpose.msra.mxu0 0.0
        %2975 = vmatprep.subr.mxu0 0.0
        %2976 = vmatpush1.xpose.msra.mxu0 0.0
        %2977 = vmatprep.subr.mxu0 0.0
        %2978 = vmatpush1.xpose.msra.mxu0 0.0
        %2979 = vmatprep.subr.mxu0 0.0
        %2980 = vmatpush1.xpose.msra.mxu0 0.0
        %2981 = vmatprep.subr.mxu0 0.0
        %2982 = vmatpush1.xpose.msra.mxu0 0.0
        %2983 = vmatprep.subr.mxu0 0.0
        %2984 = vmatpush1.xpose.msra.mxu0 0.0
        %2985 = vmatprep.subr.mxu0 0.0
        %2986 = vmatpush1.xpose.msra.mxu0 0.0
        %2987 = vmatprep.subr.mxu0 0.0
        %2988 = vmatpush1.xpose.msra.mxu0 0.0
        %2989 = vmatprep.subr.mxu0 0.0
        %2990 = vmatpush1.xpose.msra.mxu0 0.0
        %2991 = vmatprep.subr.mxu0 0.0
        %2992 = vmatpush1.xpose.msra.mxu0 0.0
        %2993 = vmatprep.subr.mxu0 0.0
        %2994 = vmatpush1.xpose.msra.mxu0 0.0
        %2995 = vmatprep.subr.mxu0 0.0
        %2996 = vmatpush1.xpose.msra.mxu0 0.0
        %2997 = vmatprep.subr.mxu0 0.0
        %2998 = vmatpush1.xpose.msra.mxu0 0.0
        %2999 = vmatprep.subr.mxu0 0.0
        %3000 = vmatpush1.xpose.msra.mxu0 0.0
        %3001 = vmatprep.subr.mxu0 0.0
        %3002 = vmatpush1.xpose.msra.mxu0 0.0
        %3003 = vmatprep.subr.mxu0 0.0
        %3004 = vmatpush1.xpose.msra.mxu0 0.0
        %3005 = vmatprep.subr.mxu0 0.0
        %3006 = vmatpush1.xpose.msra.mxu0 0.0
        %3007 = vmatprep.subr.mxu0 0.0
        %3008 = vmatpush1.xpose.msra.mxu0 0.0
        %3009 = vmatprep.subr.mxu0 0.0
        %3010 = vmatpush1.xpose.msra.mxu0 0.0
        %3011 = vmatprep.subr.mxu0 0.0
        %3012 = vmatpush1.xpose.msra.mxu0 0.0
        %3013 = vmatprep.mubr.f32.mxu0 0.0
        %3014 = vmatmul.mubr.f32.gmra.mrb[0].mxu0 %v2944
        %v3015 = vpop.f32.mrb[0].mxu0
        %v3016 = vadd.f32 0.0, %v3015
        %v3017 = vpop.f32.mrb[0].mxu0
        %3018 = vdwg.mxu0
        %v3020 = vsel %vm738, %v2519, 0
        %v3023 = vsel %vm738, %v2864, 0
        %3025 = vmatprep.subr.mxu0 0.0
        %3026 = vmatpush1.xpose.msra.mxu0 %v3023
        %3027 = vmatprep.subr.mxu0 0.0
        %3028 = vmatpush1.xpose.msra.mxu0 0.0
        %3029 = vmatprep.subr.mxu0 0.0
        %3030 = vmatpush1.xpose.msra.mxu0 0.0
        %3031 = vmatprep.subr.mxu0 0.0
        %3032 = vmatpush1.xpose.msra.mxu0 0.0
        %3033 = vmatprep.subr.mxu0 0.0
        %3034 = vmatpush1.xpose.msra.mxu0 0.0
        %3035 = vmatprep.subr.mxu0 0.0
        %3036 = vmatpush1.xpose.msra.mxu0 0.0
        %3037 = vmatprep.subr.mxu0 0.0
        %3038 = vmatpush1.xpose.msra.mxu0 0.0
        %3039 = vmatprep.subr.mxu0 0.0
        %3040 = vmatpush1.xpose.msra.mxu0 0.0
        %3041 = vmatprep.subr.mxu0 0.0
        %3042 = vmatpush1.xpose.msra.mxu0 0.0
        %3043 = vmatprep.subr.mxu0 0.0
        %3044 = vmatpush1.xpose.msra.mxu0 0.0
        %3045 = vmatprep.subr.mxu0 0.0
        %3046 = vmatpush1.xpose.msra.mxu0 0.0
        %3047 = vmatprep.subr.mxu0 0.0
        %3048 = vmatpush1.xpose.msra.mxu0 0.0
        %3049 = vmatprep.subr.mxu0 0.0
        %3050 = vmatpush1.xpose.msra.mxu0 0.0
        %3051 = vmatprep.subr.mxu0 0.0
        %3052 = vmatpush1.xpose.msra.mxu0 0.0
        %3053 = vmatprep.subr.mxu0 0.0
        %3054 = vmatpush1.xpose.msra.mxu0 0.0
        %3055 = vmatprep.subr.mxu0 0.0
        %3056 = vmatpush1.xpose.msra.mxu0 0.0
        %3057 = vmatprep.subr.mxu0 0.0
        %3058 = vmatpush1.xpose.msra.mxu0 0.0
        %3059 = vmatprep.subr.mxu0 0.0
        %3060 = vmatpush1.xpose.msra.mxu0 0.0
        %3061 = vmatprep.subr.mxu0 0.0
        %3062 = vmatpush1.xpose.msra.mxu0 0.0
        %3063 = vmatprep.subr.mxu0 0.0
        %3064 = vmatpush1.xpose.msra.mxu0 0.0
        %3065 = vmatprep.subr.mxu0 0.0
        %3066 = vmatpush1.xpose.msra.mxu0 0.0
        %3067 = vmatprep.subr.mxu0 0.0
        %3068 = vmatpush1.xpose.msra.mxu0 0.0
        %3069 = vmatprep.subr.mxu0 0.0
        %3070 = vmatpush1.xpose.msra.mxu0 0.0
        %3071 = vmatprep.subr.mxu0 0.0
        %3072 = vmatpush1.xpose.msra.mxu0 0.0
        %3073 = vmatprep.subr.mxu0 0.0
        %3074 = vmatpush1.xpose.msra.mxu0 0.0
        %3075 = vmatprep.subr.mxu0 0.0
        %3076 = vmatpush1.xpose.msra.mxu0 0.0
        %3077 = vmatprep.subr.mxu0 0.0
        %3078 = vmatpush1.xpose.msra.mxu0 0.0
        %3079 = vmatprep.subr.mxu0 0.0
        %3080 = vmatpush1.xpose.msra.mxu0 0.0
        %3081 = vmatprep.subr.mxu0 0.0
        %3082 = vmatpush1.xpose.msra.mxu0 0.0
        %3083 = vmatprep.subr.mxu0 0.0
        %3084 = vmatpush1.xpose.msra.mxu0 0.0
        %3085 = vmatprep.subr.mxu0 0.0
        %3086 = vmatpush1.xpose.msra.mxu0 0.0
        %3087 = vmatprep.subr.mxu0 0.0
        %3088 = vmatpush1.xpose.msra.mxu0 0.0
        %3089 = vmatprep.mubr.f32.mxu0 0.0
        %3090 = vmatmul.mubr.f32.gmra.mrb[0].mxu0 %v3020
        %v3091 = vpop.f32.mrb[0].mxu0
        %v3092 = vadd.f32 0.0, %v3091
        %v3093 = vpop.f32.mrb[0].mxu0
        %3094 = vdwg.mxu0
        %v3096 = vsel %vm738, %v2524, 0
        %v3099 = vsel %vm738, %v2866, 0
        %3101 = vmatprep.subr.mxu0 0.0
        %3102 = vmatpush1.xpose.msra.mxu0 %v3099
        %3103 = vmatprep.subr.mxu0 0.0
        %3104 = vmatpush1.xpose.msra.mxu0 0.0
        %3105 = vmatprep.subr.mxu0 0.0
        %3106 = vmatpush1.xpose.msra.mxu0 0.0
        %3107 = vmatprep.subr.mxu0 0.0
        %3108 = vmatpush1.xpose.msra.mxu0 0.0
        %3109 = vmatprep.subr.mxu0 0.0
        %3110 = vmatpush1.xpose.msra.mxu0 0.0
        %3111 = vmatprep.subr.mxu0 0.0
        %3112 = vmatpush1.xpose.msra.mxu0 0.0
        %3113 = vmatprep.subr.mxu0 0.0
        %3114 = vmatpush1.xpose.msra.mxu0 0.0
        %3115 = vmatprep.subr.mxu0 0.0
        %3116 = vmatpush1.xpose.msra.mxu0 0.0
        %3117 = vmatprep.subr.mxu0 0.0
        %3118 = vmatpush1.xpose.msra.mxu0 0.0
        %3119 = vmatprep.subr.mxu0 0.0
        %3120 = vmatpush1.xpose.msra.mxu0 0.0
        %3121 = vmatprep.subr.mxu0 0.0
        %3122 = vmatpush1.xpose.msra.mxu0 0.0
        %3123 = vmatprep.subr.mxu0 0.0
        %3124 = vmatpush1.xpose.msra.mxu0 0.0
        %3125 = vmatprep.subr.mxu0 0.0
        %3126 = vmatpush1.xpose.msra.mxu0 0.0
        %3127 = vmatprep.subr.mxu0 0.0
        %3128 = vmatpush1.xpose.msra.mxu0 0.0
        %3129 = vmatprep.subr.mxu0 0.0
        %3130 = vmatpush1.xpose.msra.mxu0 0.0
        %3131 = vmatprep.subr.mxu0 0.0
        %3132 = vmatpush1.xpose.msra.mxu0 0.0
        %3133 = vmatprep.subr.mxu0 0.0
        %3134 = vmatpush1.xpose.msra.mxu0 0.0
        %3135 = vmatprep.subr.mxu0 0.0
        %3136 = vmatpush1.xpose.msra.mxu0 0.0
        %3137 = vmatprep.subr.mxu0 0.0
        %3138 = vmatpush1.xpose.msra.mxu0 0.0
        %3139 = vmatprep.subr.mxu0 0.0
        %3140 = vmatpush1.xpose.msra.mxu0 0.0
        %3141 = vmatprep.subr.mxu0 0.0
        %3142 = vmatpush1.xpose.msra.mxu0 0.0
        %3143 = vmatprep.subr.mxu0 0.0
        %3144 = vmatpush1.xpose.msra.mxu0 0.0
        %3145 = vmatprep.subr.mxu0 0.0
        %3146 = vmatpush1.xpose.msra.mxu0 0.0
        %3147 = vmatprep.subr.mxu0 0.0
        %3148 = vmatpush1.xpose.msra.mxu0 0.0
        %3149 = vmatprep.subr.mxu0 0.0
        %3150 = vmatpush1.xpose.msra.mxu0 0.0
        %3151 = vmatprep.subr.mxu0 0.0
        %3152 = vmatpush1.xpose.msra.mxu0 0.0
        %3153 = vmatprep.subr.mxu0 0.0
        %3154 = vmatpush1.xpose.msra.mxu0 0.0
        %3155 = vmatprep.subr.mxu0 0.0
        %3156 = vmatpush1.xpose.msra.mxu0 0.0
        %3157 = vmatprep.subr.mxu0 0.0
        %3158 = vmatpush1.xpose.msra.mxu0 0.0
        %3159 = vmatprep.subr.mxu0 0.0
        %3160 = vmatpush1.xpose.msra.mxu0 0.0
        %3161 = vmatprep.subr.mxu0 0.0
        %3162 = vmatpush1.xpose.msra.mxu0 0.0
        %3163 = vmatprep.subr.mxu0 0.0
        %3164 = vmatpush1.xpose.msra.mxu0 0.0
        %3165 = vmatprep.mubr.f32.mxu0 0.0
        %3166 = vmatmul.mubr.f32.gmra.mrb[0].mxu0 %v3096
        %v3167 = vpop.f32.mrb[0].mxu0
        %v3168 = vadd.f32 0.0, %v3167
        %v3169 = vpop.f32.mrb[0].mxu0
        %3170 = vdwg.mxu0
        %v3171 = vld [vmem:[%s14] sm:$0xff]
        %v3172 = vld [vmem:[%s14 + $0x8] sm:$0xff]
        %v3173 = vld [vmem:[%s14 + $0x10] sm:$0xff]
        %v3174 = vld [vmem:[%s14 + $0x18] sm:$0xff]
        %v3175 = vld [vmem:[%s15] sm:$0xff]
        %v3176 = vld [vmem:[%s15 + $0x8] sm:$0xff]
        %v3177 = vld [vmem:[%s15 + $0x10] sm:$0xff]
        %v3178 = vld [vmem:[%s15 + $0x18] sm:$0xff]
        %3180 = vset.pattern.permute.xlu0 0
        %3181 = vperm.xlu0 %3180, %v3175
        %v3182 = vpop.permute.xlu0 %3181
        %3185 = vset.pattern.permute.xlu0 0
        %3186 = vperm.xlu0 %3185, %v3176
        %v3187 = vpop.permute.xlu0 %3186
        %3190 = vset.pattern.permute.xlu0 0
        %3191 = vperm.xlu0 %3190, %v3177
        %v3192 = vpop.permute.xlu0 %3191
        %3195 = vset.pattern.permute.xlu0 0
        %3196 = vperm.xlu0 %3195, %v3178
        %v3197 = vpop.permute.xlu0 %3196
        %v3200 = vsel %vm914, %v3171, 0
        %v3203 = vsel %vm914, %v3172, 0
        %v3206 = vsel %vm914, %v3173, 0
        %v3209 = vsel %vm914, %v3174, 0
        %3211 = vmatprep.subr.mxu0 0.0
        %3212 = vmatpush1.msra.mxu0 %v2940
        %3213 = vmatprep.subr.mxu0 0.0
        %3214 = vmatpush1.msra.mxu0 %v3016
        %3215 = vmatprep.subr.mxu0 0.0
        %3216 = vmatpush1.msra.mxu0 %v3092
        %3217 = vmatprep.subr.mxu0 0.0
        %3218 = vmatpush1.msra.mxu0 %v3168
        %3219 = vmatprep.subr.mxu0 0.0
        %3220 = vmatpush1.msra.mxu0 0.0
        %3221 = vmatprep.subr.mxu0 0.0
        %3222 = vmatpush1.msra.mxu0 0.0
        %3223 = vmatprep.subr.mxu0 0.0
        %3224 = vmatpush1.msra.mxu0 0.0
        %3225 = vmatprep.subr.mxu0 0.0
        %3226 = vmatpush1.msra.mxu0 0.0
        %3227 = vmatprep.subr.mxu0 0.0
        %3228 = vmatpush1.msra.mxu0 0.0
        %3229 = vmatprep.subr.mxu0 0.0
        %3230 = vmatpush1.msra.mxu0 0.0
        %3231 = vmatprep.subr.mxu0 0.0
        %3232 = vmatpush1.msra.mxu0 0.0
        %3233 = vmatprep.subr.mxu0 0.0
        %3234 = vmatpush1.msra.mxu0 0.0
        %3235 = vmatprep.subr.mxu0 0.0
        %3236 = vmatpush1.msra.mxu0 0.0
        %3237 = vmatprep.subr.mxu0 0.0
        %3238 = vmatpush1.msra.mxu0 0.0
        %3239 = vmatprep.subr.mxu0 0.0
        %3240 = vmatpush1.msra.mxu0 0.0
        %3241 = vmatprep.subr.mxu0 0.0
        %3242 = vmatpush1.msra.mxu0 0.0
        %3243 = vmatprep.subr.mxu0 0.0
        %3244 = vmatpush1.msra.mxu0 0.0
        %3245 = vmatprep.subr.mxu0 0.0
        %3246 = vmatpush1.msra.mxu0 0.0
        %3247 = vmatprep.subr.mxu0 0.0
        %3248 = vmatpush1.msra.mxu0 0.0
        %3249 = vmatprep.subr.mxu0 0.0
        %3250 = vmatpush1.msra.mxu0 0.0
        %3251 = vmatprep.subr.mxu0 0.0
        %3252 = vmatpush1.msra.mxu0 0.0
        %3253 = vmatprep.subr.mxu0 0.0
        %3254 = vmatpush1.msra.mxu0 0.0
        %3255 = vmatprep.subr.mxu0 0.0
        %3256 = vmatpush1.msra.mxu0 0.0
        %3257 = vmatprep.subr.mxu0 0.0
        %3258 = vmatpush1.msra.mxu0 0.0
        %3259 = vmatprep.subr.mxu0 0.0
        %3260 = vmatpush1.msra.mxu0 0.0
        %3261 = vmatprep.subr.mxu0 0.0
        %3262 = vmatpush1.msra.mxu0 0.0
        %3263 = vmatprep.subr.mxu0 0.0
        %3264 = vmatpush1.msra.mxu0 0.0
        %3265 = vmatprep.subr.mxu0 0.0
        %3266 = vmatpush1.msra.mxu0 0.0
        %3267 = vmatprep.subr.mxu0 0.0
        %3268 = vmatpush1.msra.mxu0 0.0
        %3269 = vmatprep.subr.mxu0 0.0
        %3270 = vmatpush1.msra.mxu0 0.0
        %3271 = vmatprep.subr.mxu0 0.0
        %3272 = vmatpush1.msra.mxu0 0.0
        %3273 = vmatprep.subr.mxu0 0.0
        %3274 = vmatpush1.msra.mxu0 0.0
        %3275 = vmatprep.mubr.f32.mxu0 0.0
        %3276 = vmatmul.mubr.f32.gmra.mrb[0].mxu0 %v3200
        %v3277 = vpop.f32.mrb[0].mxu0
        %v3278 = vadd.f32 %v3182, %v3277
        %v3279 = vpop.f32.mrb[0].mxu0
        %3280 = vmatprep.mubr.f32.mxu0 0.0
        %3281 = vmatmul.mubr.f32.gmra.mrb[0].mxu0 %v3203
        %v3282 = vpop.f32.mrb[0].mxu0
        %v3283 = vadd.f32 %v3187, %v3282
        %v3284 = vpop.f32.mrb[0].mxu0
        %3285 = vmatprep.mubr.f32.mxu0 0.0
        %3286 = vmatmul.mubr.f32.gmra.mrb[0].mxu0 %v3206
        %v3287 = vpop.f32.mrb[0].mxu0
        %v3288 = vadd.f32 %v3192, %v3287
        %v3289 = vpop.f32.mrb[0].mxu0
        %3290 = vmatprep.mubr.f32.mxu0 0.0
        %3291 = vmatmul.mubr.f32.gmra.mrb[0].mxu0 %v3209
        %v3292 = vpop.f32.mrb[0].mxu0
        %v3293 = vadd.f32 %v3197, %v3292
        %v3294 = vpop.f32.mrb[0].mxu0
        %3295 = vdwg.mxu0
        %v3296 = vadd.f32 %v1984, %v3278
        %v3297 = vadd.f32 %v1985, %v3283
        %v3298 = vadd.f32 %v1986, %v3288
        %v3299 = vadd.f32 %v1987, %v3293
        %v3300 = vld [vmem:[%s16] sm:$0xff]
        %v3301 = vld [vmem:[%s16 + $0x8] sm:$0xff]
        %v3302 = vld [vmem:[%s16 + $0x10] sm:$0xff]
        %v3303 = vld [vmem:[%s16 + $0x18] sm:$0xff]
        %v3304 = vld [vmem:[%s17] sm:$0xff]
        %v3305 = vld [vmem:[%s17 + $0x8] sm:$0xff]
        %v3306 = vld [vmem:[%s17 + $0x10] sm:$0xff]
        %v3307 = vld [vmem:[%s17 + $0x18] sm:$0xff]
        %v3308 = vsel %vm738, %v3296, 0.0
        %v3309 = vsel %vm738, %v3297, 0.0
        %v3310 = vadd.f32 %v3308, %v3309
        %v3311 = vsel %vm738, %v3298, 0.0
        %v3312 = vadd.f32 %v3310, %v3311
        %v3313 = vsel %vm738, %v3299, 0.0
        %v3314 = vadd.f32 %v3312, %v3313
        %v3315 = vrot.slane %v3314, 4
        %v3316 = vadd.f32 %v3314, %v3315
        %v3317 = vrot.slane %v3316, 2
        %v3318 = vadd.f32 %v3316, %v3317
        %v3319 = vrot.slane %v3318, 1
        %v3320 = vadd.f32 %v3318, %v3319
        %v3321 = vmul.f32 %v3320, %v752
        %v3322 = vsub.f32 %v3296, %v3321
        %v3323 = vsub.f32 %v3297, %v3321
        %v3324 = vsub.f32 %v3298, %v3321
        %v3325 = vsub.f32 %v3299, %v3321
        %v3326 = vmul.f32 %v3322, %v3322
        %v3327 = vmul.f32 %v3323, %v3323
        %v3328 = vmul.f32 %v3324, %v3324
        %v3329 = vmul.f32 %v3325, %v3325
        %v3330 = vsel %vm738, %v3326, 0.0
        %v3331 = vsel %vm738, %v3327, 0.0
        %v3332 = vadd.f32 %v3330, %v3331
        %v3333 = vsel %vm738, %v3328, 0.0
        %v3334 = vadd.f32 %v3332, %v3333
        %v3335 = vsel %vm738, %v3329, 0.0
        %v3336 = vadd.f32 %v3334, %v3335
        %v3337 = vrot.slane %v3336, 4
        %v3338 = vadd.f32 %v3336, %v3337
        %v3339 = vrot.slane %v3338, 2
        %v3340 = vadd.f32 %v3338, %v3339
        %v3341 = vrot.slane %v3340, 1
        %v3342 = vadd.f32 %v3340, %v3341
        %v3343 = vmul.f32 %v3342, %v752
        %v3344 = vadd.f32 %v3343, 1e-05
        %v3345 = vrsqrt.pop %v3344
        %v3346 = vmul.f32 %v3322, %v3345
        %v3347 = vmul.f32 %v3323, %v3345
        %v3348 = vmul.f32 %v3324, %v3345
        %v3349 = vmul.f32 %v3325, %v3345
        %3351 = vset.pattern.permute.xlu0 0
        %3352 = vperm.xlu0 %3351, %v3300
        %v3353 = vpop.permute.xlu0 %3352
        %3356 = vset.pattern.permute.xlu0 0
        %3357 = vperm.xlu0 %3356, %v3301
        %v3358 = vpop.permute.xlu0 %3357
        %3361 = vset.pattern.permute.xlu0 0
        %3362 = vperm.xlu0 %3361, %v3302
        %v3363 = vpop.permute.xlu0 %3362
        %3366 = vset.pattern.permute.xlu0 0
        %3367 = vperm.xlu0 %3366, %v3303
        %v3368 = vpop.permute.xlu0 %3367
        %v3370 = vmul.f32 %v3346, %v3353
        %v3371 = vmul.f32 %v3347, %v3358
        %v3372 = vmul.f32 %v3348, %v3363
        %v3373 = vmul.f32 %v3349, %v3368
        %3375 = vset.pattern.permute.xlu0 0
        %3376 = vperm.xlu0 %3375, %v3304
        %v3377 = vpop.permute.xlu0 %3376
        %3380 = vset.pattern.permute.xlu0 0
        %3381 = vperm.xlu0 %3380, %v3305
        %v3382 = vpop.permute.xlu0 %3381
        %3385 = vset.pattern.permute.xlu0 0
        %3386 = vperm.xlu0 %3385, %v3306
        %v3387 = vpop.permute.xlu0 %3386
        %3390 = vset.pattern.permute.xlu0 0
        %3391 = vperm.xlu0 %3390, %v3307
        %v3392 = vpop.permute.xlu0 %3391
        %v3394 = vadd.f32 %v3370, %v3377
        %v3395 = vadd.f32 %v3371, %v3382
        %v3396 = vadd.f32 %v3372, %v3387
        %v3397 = vadd.f32 %v3373, %v3392
        %v3398 = vld [vmem:[%s18] sm:$0xff]
        %v3399 = vld [vmem:[%s18 + $0x8] sm:$0xff]
        %v3400 = vld [vmem:[%s18 + $0x10] sm:$0xff]
        %v3401 = vld [vmem:[%s18 + $0x18] sm:$0xff]
        %v3402 = vld [vmem:[%s18 + $0x20] sm:$0xff]
        %v3403 = vld [vmem:[%s18 + $0x28] sm:$0xff]
        %v3404 = vld [vmem:[%s18 + $0x30] sm:$0xff]
        %v3405 = vld [vmem:[%s18 + $0x38] sm:$0xff]
        %v3406 = vld [vmem:[%s18 + $0x40] sm:$0xff]
        %v3407 = vld [vmem:[%s18 + $0x48] sm:$0xff]
        %v3408 = vld [vmem:[%s18 + $0x50] sm:$0xff]
        %v3409 = vld [vmem:[%s18 + $0x58] sm:$0xff]
        %v3410 = vld [vmem:[%s18 + $0x60] sm:$0xff]
        %v3411 = vld [vmem:[%s18 + $0x68] sm:$0xff]
        %v3412 = vld [vmem:[%s18 + $0x70] sm:$0xff]
        %v3413 = vld [vmem:[%s18 + $0x78] sm:$0xff]
        %v3414 = vld [vmem:[%s19] sm:$0xff]
        %v3415 = vld [vmem:[%s19 + $0x8] sm:$0xff]
        %v3416 = vld [vmem:[%s19 + $0x10] sm:$0xff]
        %v3417 = vld [vmem:[%s19 + $0x18] sm:$0xff]
        %v3418 = vld [vmem:[%s19 + $0x20] sm:$0xff]
        %v3419 = vld [vmem:[%s19 + $0x28] sm:$0xff]
        %v3420 = vld [vmem:[%s19 + $0x30] sm:$0xff]
        %v3421 = vld [vmem:[%s19 + $0x38] sm:$0xff]
        %v3422 = vld [vmem:[%s19 + $0x40] sm:$0xff]
        %v3423 = vld [vmem:[%s19 + $0x48] sm:$0xff]
        %v3424 = vld [vmem:[%s19 + $0x50] sm:$0xff]
        %v3425 = vld [vmem:[%s19 + $0x58] sm:$0xff]
        %v3426 = vld [vmem:[%s19 + $0x60] sm:$0xff]
        %v3427 = vld [vmem:[%s19 + $0x68] sm:$0xff]
        %v3428 = vld [vmem:[%s19 + $0x70] sm:$0xff]
        %v3429 = vld [vmem:[%s19 + $0x78] sm:$0xff]
        %3431 = vset.pattern.permute.xlu0 0
        %3432 = vperm.xlu0 %3431, %v3414
        %v3433 = vpop.permute.xlu0 %3432
        %3436 = vset.pattern.permute.xlu0 0
        %3437 = vperm.xlu0 %3436, %v3415
        %v3438 = vpop.permute.xlu0 %3437
        %3441 = vset.pattern.permute.xlu0 0
        %3442 = vperm.xlu0 %3441, %v3416
        %v3443 = vpop.permute.xlu0 %3442
        %3446 = vset.pattern.permute.xlu0 0
        %3447 = vperm.xlu0 %3446, %v3417
        %v3448 = vpop.permute.xlu0 %3447
        %3451 = vset.pattern.permute.xlu0 0
        %3452 = vperm.xlu0 %3451, %v3418
        %v3453 = vpop.permute.xlu0 %3452
        %3456 = vset.pattern.permute.xlu0 0
        %3457 = vperm.xlu0 %3456, %v3419
        %v3458 = vpop.permute.xlu0 %3457
        %3461 = vset.pattern.permute.xlu0 0
        %3462 = vperm.xlu0 %3461, %v3420
        %v3463 = vpop.permute.xlu0 %3462
        %3466 = vset.pattern.permute.xlu0 0
        %3467 = vperm.xlu0 %3466, %v3421
        %v3468 = vpop.permute.xlu0 %3467
        %3471 = vset.pattern.permute.xlu0 0
        %3472 = vperm.xlu0 %3471, %v3422
        %v3473 = vpop.permute.xlu0 %3472
        %3476 = vset.pattern.permute.xlu0 0
        %3477 = vperm.xlu0 %3476, %v3423
        %v3478 = vpop.permute.xlu0 %3477
        %3481 = vset.pattern.permute.xlu0 0
        %3482 = vperm.xlu0 %3481, %v3424
        %v3483 = vpop.permute.xlu0 %3482
        %3486 = vset.pattern.permute.xlu0 0
        %3487 = vperm.xlu0 %3486, %v3425
        %v3488 = vpop.permute.xlu0 %3487
        %3491 = vset.pattern.permute.xlu0 0
        %3492 = vperm.xlu0 %3491, %v3426
        %v3493 = vpop.permute.xlu0 %3492
        %3496 = vset.pattern.permute.xlu0 0
        %3497 = vperm.xlu0 %3496, %v3427
        %v3498 = vpop.permute.xlu0 %3497
        %3501 = vset.pattern.permute.xlu0 0
        %3502 = vperm.xlu0 %3501, %v3428
        %v3503 = vpop.permute.xlu0 %3502
        %3506 = vset.pattern.permute.xlu0 0
        %3507 = vperm.xlu0 %3506, %v3429
        %v3508 = vpop.permute.xlu0 %3507
        %v3511 = vsel %vm914, %v3398, 0
        %v3514 = vsel %vm914, %v3399, 0
        %v3517 = vsel %vm914, %v3400, 0
        %v3520 = vsel %vm914, %v3401, 0
        %v3523 = vsel %vm914, %v3402, 0
        %v3526 = vsel %vm914, %v3403, 0
        %v3529 = vsel %vm914, %v3404, 0
        %v3532 = vsel %vm914, %v3405, 0
        %v3535 = vsel %vm914, %v3406, 0
        %v3538 = vsel %vm914, %v3407, 0
        %v3541 = vsel %vm914, %v3408, 0
        %v3544 = vsel %vm914, %v3409, 0
        %v3547 = vsel %vm914, %v3410, 0
        %v3550 = vsel %vm914, %v3411, 0
        %v3553 = vsel %vm914, %v3412, 0
        %v3556 = vsel %vm914, %v3413, 0
        %3558 = vmatprep.subr.mxu0 0.0
        %3559 = vmatpush1.msra.mxu0 %v3394
        %3560 = vmatprep.subr.mxu0 0.0
        %3561 = vmatpush1.msra.mxu0 %v3395
        %3562 = vmatprep.subr.mxu0 0.0
        %3563 = vmatpush1.msra.mxu0 %v3396
        %3564 = vmatprep.subr.mxu0 0.0
        %3565 = vmatpush1.msra.mxu0 %v3397
        %3566 = vmatprep.subr.mxu0 0.0
        %3567 = vmatpush1.msra.mxu0 0.0
        %3568 = vmatprep.subr.mxu0 0.0
        %3569 = vmatpush1.msra.mxu0 0.0
        %3570 = vmatprep.subr.mxu0 0.0
        %3571 = vmatpush1.msra.mxu0 0.0
        %3572 = vmatprep.subr.mxu0 0.0
        %3573 = vmatpush1.msra.mxu0 0.0
        %3574 = vmatprep.subr.mxu0 0.0
        %3575 = vmatpush1.msra.mxu0 0.0
        %3576 = vmatprep.subr.mxu0 0.0
        %3577 = vmatpush1.msra.mxu0 0.0
        %3578 = vmatprep.subr.mxu0 0.0
        %3579 = vmatpush1.msra.mxu0 0.0
        %3580 = vmatprep.subr.mxu0 0.0
        %3581 = vmatpush1.msra.mxu0 0.0
        %3582 = vmatprep.subr.mxu0 0.0
        %3583 = vmatpush1.msra.mxu0 0.0
        %3584 = vmatprep.subr.mxu0 0.0
        %3585 = vmatpush1.msra.mxu0 0.0
        %3586 = vmatprep.subr.mxu0 0.0
        %3587 = vmatpush1.msra.mxu0 0.0
        %3588 = vmatprep.subr.mxu0 0.0
        %3589 = vmatpush1.msra.mxu0 0.0
        %3590 = vmatprep.subr.mxu0 0.0
        %3591 = vmatpush1.msra.mxu0 0.0
        %3592 = vmatprep.subr.mxu0 0.0
        %3593 = vmatpush1.msra.mxu0 0.0
        %3594 = vmatprep.subr.mxu0 0.0
        %3595 = vmatpush1.msra.mxu0 0.0
        %3596 = vmatprep.subr.mxu0 0.0
        %3597 = vmatpush1.msra.mxu0 0.0
        %3598 = vmatprep.subr.mxu0 0.0
        %3599 = vmatpush1.msra.mxu0 0.0
        %3600 = vmatprep.subr.mxu0 0.0
        %3601 = vmatpush1.msra.mxu0 0.0
        %3602 = vmatprep.subr.mxu0 0.0
        %3603 = vmatpush1.msra.mxu0 0.0
        %3604 = vmatprep.subr.mxu0 0.0
        %3605 = vmatpush1.msra.mxu0 0.0
        %3606 = vmatprep.subr.mxu0 0.0
        %3607 = vmatpush1.msra.mxu0 0.0
        %3608 = vmatprep.subr.mxu0 0.0
        %3609 = vmatpush1.msra.mxu0 0.0
        %3610 = vmatprep.subr.mxu0 0.0
        %3611 = vmatpush1.msra.mxu0 0.0
        %3612 = vmatprep.subr.mxu0 0.0
        %3613 = vmatpush1.msra.mxu0 0.0
        %3614 = vmatprep.subr.mxu0 0.0
        %3615 = vmatpush1.msra.mxu0 0.0
        %3616 = vmatprep.subr.mxu0 0.0
        %3617 = vmatpush1.msra.mxu0 0.0
        %3618 = vmatprep.subr.mxu0 0.0
        %3619 = vmatpush1.msra.mxu0 0.0
        %3620 = vmatprep.subr.mxu0 0.0
        %3621 = vmatpush1.msra.mxu0 0.0
        %3622 = vmatprep.mubr.f32.mxu0 0.0
        %3623 = vmatmul.mubr.f32.gmra.mrb[0].mxu0 %v3511
        %v3624 = vpop.f32.mrb[0].mxu0
        %v3625 = vadd.f32 %v3433, %v3624
        %v3626 = vpop.f32.mrb[0].mxu0
        %3627 = vmatprep.mubr.f32.mxu0 0.0
        %3628 = vmatmul.mubr.f32.gmra.mrb[0].mxu0 %v3514
        %v3629 = vpop.f32.mrb[0].mxu0
        %v3630 = vadd.f32 %v3438, %v3629
        %v3631 = vpop.f32.mrb[0].mxu0
        %3632 = vmatprep.mubr.f32.mxu0 0.0
        %3633 = vmatmul.mubr.f32.gmra.mrb[0].mxu0 %v3517
        %v3634 = vpop.f32.mrb[0].mxu0
        %v3635 = vadd.f32 %v3443, %v3634
        %v3636 = vpop.f32.mrb[0].mxu0
        %3637 = vmatprep.mubr.f32.mxu0 0.0
        %3638 = vmatmul.mubr.f32.gmra.mrb[0].mxu0 %v3520
        %v3639 = vpop.f32.mrb[0].mxu0
        %v3640 = vadd.f32 %v3448, %v3639
        %v3641 = vpop.f32.mrb[0].mxu0
        %3642 = vmatprep.mubr.f32.mxu0 0.0
        %3643 = vmatmul.mubr.f32.gmra.mrb[0].mxu0 %v3523
        %v3644 = vpop.f32.mrb[0].mxu0
        %v3645 = vadd.f32 %v3453, %v3644
        %v3646 = vpop.f32.mrb[0].mxu0
        %3647 = vmatprep.mubr.f32.mxu0 0.0
        %3648 = vmatmul.mubr.f32.gmra.mrb[0].mxu0 %v3526
        %v3649 = vpop.f32.mrb[0].mxu0
        %v3650 = vadd.f32 %v3458, %v3649
        %v3651 = vpop.f32.mrb[0].mxu0
        %3652 = vmatprep.mubr.f32.mxu0 0.0
        %3653 = vmatmul.mubr.f32.gmra.mrb[0].mxu0 %v3529
        %v3654 = vpop.f32.mrb[0].mxu0
        %v3655 = vadd.f32 %v3463, %v3654
        %v3656 = vpop.f32.mrb[0].mxu0
        %3657 = vmatprep.mubr.f32.mxu0 0.0
        %3658 = vmatmul.mubr.f32.gmra.mrb[0].mxu0 %v3532
        %v3659 = vpop.f32.mrb[0].mxu0
        %v3660 = vadd.f32 %v3468, %v3659
        %v3661 = vpop.f32.mrb[0].mxu0
        %3662 = vmatprep.mubr.f32.mxu0 0.0
        %3663 = vmatmul.mubr.f32.gmra.mrb[0].mxu0 %v3535
        %v3664 = vpop.f32.mrb[0].mxu0
        %v3665 = vadd.f32 %v3473, %v3664
        %v3666 = vpop.f32.mrb[0].mxu0
        %3667 = vmatprep.mubr.f32.mxu0 0.0
        %3668 = vmatmul.mubr.f32.gmra.mrb[0].mxu0 %v3538
        %v3669 = vpop.f32.mrb[0].mxu0
        %v3670 = vadd.f32 %v3478, %v3669
        %v3671 = vpop.f32.mrb[0].mxu0
        %3672 = vmatprep.mubr.f32.mxu0 0.0
        %3673 = vmatmul.mubr.f32.gmra.mrb[0].mxu0 %v3541
        %v3674 = vpop.f32.mrb[0].mxu0
        %v3675 = vadd.f32 %v3483, %v3674
        %v3676 = vpop.f32.mrb[0].mxu0
        %3677 = vmatprep.mubr.f32.mxu0 0.0
        %3678 = vmatmul.mubr.f32.gmra.mrb[0].mxu0 %v3544
        %v3679 = vpop.f32.mrb[0].mxu0
        %v3680 = vadd.f32 %v3488, %v3679
        %v3681 = vpop.f32.mrb[0].mxu0
        %3682 = vmatprep.mubr.f32.mxu0 0.0
        %3683 = vmatmul.mubr.f32.gmra.mrb[0].mxu0 %v3547
        %v3684 = vpop.f32.mrb[0].mxu0
        %v3685 = vadd.f32 %v3493, %v3684
        %v3686 = vpop.f32.mrb[0].mxu0
        %3687 = vmatprep.mubr.f32.mxu0 0.0
        %3688 = vmatmul.mubr.f32.gmra.mrb[0].mxu0 %v3550
        %v3689 = vpop.f32.mrb[0].mxu0
        %v3690 = vadd.f32 %v3498, %v3689
        %v3691 = vpop.f32.mrb[0].mxu0
        %3692 = vmatprep.mubr.f32.mxu0 0.0
        %3693 = vmatmul.mubr.f32.gmra.mrb[0].mxu0 %v3553
        %v3694 = vpop.f32.mrb[0].mxu0
        %v3695 = vadd.f32 %v3503, %v3694
        %v3696 = vpop.f32.mrb[0].mxu0
        %3697 = vmatprep.mubr.f32.mxu0 0.0
        %3698 = vmatmul.mubr.f32.gmra.mrb[0].mxu0 %v3556
        %v3699 = vpop.f32.mrb[0].mxu0
        %v3700 = vadd.f32 %v3508, %v3699
        %v3701 = vpop.f32.mrb[0].mxu0
        %3702 = vdwg.mxu0
        %v3703 = vmul.f32 %v3625, 0.5
        %v3704 = vmul.f32 %v3630, 0.5
        %v3705 = vmul.f32 %v3635, 0.5
        %v3706 = vmul.f32 %v3640, 0.5
        %v3707 = vmul.f32 %v3645, 0.5
        %v3708 = vmul.f32 %v3650, 0.5
        %v3709 = vmul.f32 %v3655, 0.5
        %v3710 = vmul.f32 %v3660, 0.5
        %v3711 = vmul.f32 %v3665, 0.5
        %v3712 = vmul.f32 %v3670, 0.5
        %v3713 = vmul.f32 %v3675, 0.5
        %v3714 = vmul.f32 %v3680, 0.5
        %v3715 = vmul.f32 %v3685, 0.5
        %v3716 = vmul.f32 %v3690, 0.5
        %v3717 = vmul.f32 %v3695, 0.5
        %v3718 = vmul.f32 %v3700, 0.5
        %v3719 = vmul.f32 %v3625, 0.044715
        %v3720 = vmul.f32 %v3630, 0.044715
        %v3721 = vmul.f32 %v3635, 0.044715
        %v3722 = vmul.f32 %v3640, 0.044715
        %v3723 = vmul.f32 %v3645, 0.044715
        %v3724 = vmul.f32 %v3650, 0.044715
        %v3725 = vmul.f32 %v3655, 0.044715
        %v3726 = vmul.f32 %v3660, 0.044715
        %v3727 = vmul.f32 %v3665, 0.044715
        %v3728 = vmul.f32 %v3670, 0.044715
        %v3729 = vmul.f32 %v3675, 0.044715
        %v3730 = vmul.f32 %v3680, 0.044715
        %v3731 = vmul.f32 %v3685, 0.044715
        %v3732 = vmul.f32 %v3690, 0.044715
        %v3733 = vmul.f32 %v3695, 0.044715
        %v3734 = vmul.f32 %v3700, 0.044715
        %v3735 = vmul.f32 %v3719, %v3625
        %v3736 = vmul.f32 %v3720, %v3630
        %v3737 = vmul.f32 %v3721, %v3635
        %v3738 = vmul.f32 %v3722, %v3640
        %v3739 = vmul.f32 %v3723, %v3645
        %v3740 = vmul.f32 %v3724, %v3650
        %v3741 = vmul.f32 %v3725, %v3655
        %v3742 = vmul.f32 %v3726, %v3660
        %v3743 = vmul.f32 %v3727, %v3665
        %v3744 = vmul.f32 %v3728, %v3670
        %v3745 = vmul.f32 %v3729, %v3675
        %v3746 = vmul.f32 %v3730, %v3680
        %v3747 = vmul.f32 %v3731, %v3685
        %v3748 = vmul.f32 %v3732, %v3690
        %v3749 = vmul.f32 %v3733, %v3695
        %v3750 = vmul.f32 %v3734, %v3700
        %v3751 = vmul.f32 %v3735, %v3625
        %v3752 = vmul.f32 %v3736, %v3630
        %v3753 = vmul.f32 %v3737, %v3635
        %v3754 = vmul.f32 %v3738, %v3640
        %v3755 = vmul.f32 %v3739, %v3645
        %v3756 = vmul.f32 %v3740, %v3650
        %v3757 = vmul.f32 %v3741, %v3655
        %v3758 = vmul.f32 %v3742, %v3660
        %v3759 = vmul.f32 %v3743, %v3665
        %v3760 = vmul.f32 %v3744, %v3670
        %v3761 = vmul.f32 %v3745, %v3675
        %v3762 = vmul.f32 %v3746, %v3680
        %v3763 = vmul.f32 %v3747, %v3685
        %v3764 = vmul.f32 %v3748, %v3690
        %v3765 = vmul.f32 %v3749, %v3695
        %v3766 = vmul.f32 %v3750, %v3700
        %v3767 = vadd.f32 %v3625, %v3751
        %v3768 = vadd.f32 %v3630, %v3752
        %v3769 = vadd.f32 %v3635, %v3753
        %v3770 = vadd.f32 %v3640, %v3754
        %v3771 = vadd.f32 %v3645, %v3755
        %v3772 = vadd.f32 %v3650, %v3756
        %v3773 = vadd.f32 %v3655, %v3757
        %v3774 = vadd.f32 %v3660, %v3758
        %v3775 = vadd.f32 %v3665, %v3759
        %v3776 = vadd.f32 %v3670, %v3760
        %v3777 = vadd.f32 %v3675, %v3761
        %v3778 = vadd.f32 %v3680, %v3762
        %v3779 = vadd.f32 %v3685, %v3763
        %v3780 = vadd.f32 %v3690, %v3764
        %v3781 = vadd.f32 %v3695, %v3765
        %v3782 = vadd.f32 %v3700, %v3766
        %v3783 = vmul.f32 %v3767, 0.7978846
        %v3784 = vmul.f32 %v3768, 0.7978846
        %v3785 = vmul.f32 %v3769, 0.7978846
        %v3786 = vmul.f32 %v3770, 0.7978846
        %v3787 = vmul.f32 %v3771, 0.7978846
        %v3788 = vmul.f32 %v3772, 0.7978846
        %v3789 = vmul.f32 %v3773, 0.7978846
        %v3790 = vmul.f32 %v3774, 0.7978846
        %v3791 = vmul.f32 %v3775, 0.7978846
        %v3792 = vmul.f32 %v3776, 0.7978846
        %v3793 = vmul.f32 %v3777, 0.7978846
        %v3794 = vmul.f32 %v3778, 0.7978846
        %v3795 = vmul.f32 %v3779, 0.7978846
        %v3796 = vmul.f32 %v3780, 0.7978846
        %v3797 = vmul.f32 %v3781, 0.7978846
        %v3798 = vmul.f32 %v3782, 0.7978846
        %v3799 = vtanh.pop %v3783
        %v3800 = vtanh.pop %v3784
        %v3801 = vtanh.pop %v3785
        %v3802 = vtanh.pop %v3786
        %v3803 = vtanh.pop %v3787
        %v3804 = vtanh.pop %v3788
        %v3805 = vtanh.pop %v3789
        %v3806 = vtanh.pop %v3790
        %v3807 = vtanh.pop %v3791
        %v3808 = vtanh.pop %v3792
        %v3809 = vtanh.pop %v3793
        %v3810 = vtanh.pop %v3794
        %v3811 = vtanh.pop %v3795
        %v3812 = vtanh.pop %v3796
        %v3813 = vtanh.pop %v3797
        %v3814 = vtanh.pop %v3798
        %v3815 = vadd.f32 %v3799, 1.0
        %v3816 = vadd.f32 %v3800, 1.0
        %v3817 = vadd.f32 %v3801, 1.0
        %v3818 = vadd.f32 %v3802, 1.0
        %v3819 = vadd.f32 %v3803, 1.0
        %v3820 = vadd.f32 %v3804, 1.0
        %v3821 = vadd.f32 %v3805, 1.0
        %v3822 = vadd.f32 %v3806, 1.0
        %v3823 = vadd.f32 %v3807, 1.0
        %v3824 = vadd.f32 %v3808, 1.0
        %v3825 = vadd.f32 %v3809, 1.0
        %v3826 = vadd.f32 %v3810, 1.0
        %v3827 = vadd.f32 %v3811, 1.0
        %v3828 = vadd.f32 %v3812, 1.0
        %v3829 = vadd.f32 %v3813, 1.0
        %v3830 = vadd.f32 %v3814, 1.0
        %v3831 = vmul.f32 %v3703, %v3815
        %v3832 = vmul.f32 %v3704, %v3816
        %v3833 = vmul.f32 %v3705, %v3817
        %v3834 = vmul.f32 %v3706, %v3818
        %v3835 = vmul.f32 %v3707, %v3819
        %v3836 = vmul.f32 %v3708, %v3820
        %v3837 = vmul.f32 %v3709, %v3821
        %v3838 = vmul.f32 %v3710, %v3822
        %v3839 = vmul.f32 %v3711, %v3823
        %v3840 = vmul.f32 %v3712, %v3824
        %v3841 = vmul.f32 %v3713, %v3825
        %v3842 = vmul.f32 %v3714, %v3826
        %v3843 = vmul.f32 %v3715, %v3827
        %v3844 = vmul.f32 %v3716, %v3828
        %v3845 = vmul.f32 %v3717, %v3829
        %v3846 = vmul.f32 %v3718, %v3830
        %v3847 = vld [vmem:[%s20] sm:$0xff]
        %v3848 = vld [vmem:[%s20 + $0x8] sm:$0xff]
        %v3849 = vld [vmem:[%s20 + $0x10] sm:$0xff]
        %v3850 = vld [vmem:[%s20 + $0x18] sm:$0xff]
        %v3851 = vld [vmem:[%s21] sm:$0xff]
        %v3852 = vld [vmem:[%s21 + $0x8] sm:$0xff]
        %v3853 = vld [vmem:[%s21 + $0x10] sm:$0xff]
        %v3854 = vld [vmem:[%s21 + $0x18] sm:$0xff]
        %3856 = vset.pattern.permute.xlu0 0
        %3857 = vperm.xlu0 %3856, %v3851
        %v3858 = vpop.permute.xlu0 %3857
        %3861 = vset.pattern.permute.xlu0 0
        %3862 = vperm.xlu0 %3861, %v3852
        %v3863 = vpop.permute.xlu0 %3862
        %3866 = vset.pattern.permute.xlu0 0
        %3867 = vperm.xlu0 %3866, %v3853
        %v3868 = vpop.permute.xlu0 %3867
        %3871 = vset.pattern.permute.xlu0 0
        %3872 = vperm.xlu0 %3871, %v3854
        %v3873 = vpop.permute.xlu0 %3872
        %3875 = vmatprep.subr.mxu0 0.0
        %3876 = vmatpush1.msra.mxu0 %v3831
        %3877 = vmatprep.subr.mxu0 0.0
        %3878 = vmatpush1.msra.mxu0 %v3832
        %3879 = vmatprep.subr.mxu0 0.0
        %3880 = vmatpush1.msra.mxu0 %v3833
        %3881 = vmatprep.subr.mxu0 0.0
        %3882 = vmatpush1.msra.mxu0 %v3834
        %3883 = vmatprep.subr.mxu0 0.0
        %3884 = vmatpush1.msra.mxu0 %v3835
        %3885 = vmatprep.subr.mxu0 0.0
        %3886 = vmatpush1.msra.mxu0 %v3836
        %3887 = vmatprep.subr.mxu0 0.0
        %3888 = vmatpush1.msra.mxu0 %v3837
        %3889 = vmatprep.subr.mxu0 0.0
        %3890 = vmatpush1.msra.mxu0 %v3838
        %3891 = vmatprep.subr.mxu0 0.0
        %3892 = vmatpush1.msra.mxu0 %v3839
        %3893 = vmatprep.subr.mxu0 0.0
        %3894 = vmatpush1.msra.mxu0 %v3840
        %3895 = vmatprep.subr.mxu0 0.0
        %3896 = vmatpush1.msra.mxu0 %v3841
        %3897 = vmatprep.subr.mxu0 0.0
        %3898 = vmatpush1.msra.mxu0 %v3842
        %3899 = vmatprep.subr.mxu0 0.0
        %3900 = vmatpush1.msra.mxu0 %v3843
        %3901 = vmatprep.subr.mxu0 0.0
        %3902 = vmatpush1.msra.mxu0 %v3844
        %3903 = vmatprep.subr.mxu0 0.0
        %3904 = vmatpush1.msra.mxu0 %v3845
        %3905 = vmatprep.subr.mxu0 0.0
        %3906 = vmatpush1.msra.mxu0 %v3846
        %3907 = vmatprep.subr.mxu0 0.0
        %3908 = vmatpush1.msra.mxu0 0.0
        %3909 = vmatprep.subr.mxu0 0.0
        %3910 = vmatpush1.msra.mxu0 0.0
        %3911 = vmatprep.subr.mxu0 0.0
        %3912 = vmatpush1.msra.mxu0 0.0
        %3913 = vmatprep.subr.mxu0 0.0
        %3914 = vmatpush1.msra.mxu0 0.0
        %3915 = vmatprep.subr.mxu0 0.0
        %3916 = vmatpush1.msra.mxu0 0.0
        %3917 = vmatprep.subr.mxu0 0.0
        %3918 = vmatpush1.msra.mxu0 0.0
        %3919 = vmatprep.subr.mxu0 0.0
        %3920 = vmatpush1.msra.mxu0 0.0
        %3921 = vmatprep.subr.mxu0 0.0
        %3922 = vmatpush1.msra.mxu0 0.0
        %3923 = vmatprep.subr.mxu0 0.0
        %3924 = vmatpush1.msra.mxu0 0.0
        %3925 = vmatprep.subr.mxu0 0.0
        %3926 = vmatpush1.msra.mxu0 0.0
        %3927 = vmatprep.subr.mxu0 0.0
        %3928 = vmatpush1.msra.mxu0 0.0
        %3929 = vmatprep.subr.mxu0 0.0
        %3930 = vmatpush1.msra.mxu0 0.0
        %3931 = vmatprep.subr.mxu0 0.0
        %3932 = vmatpush1.msra.mxu0 0.0
        %3933 = vmatprep.subr.mxu0 0.0
        %3934 = vmatpush1.msra.mxu0 0.0
        %3935 = vmatprep.subr.mxu0 0.0
        %3936 = vmatpush1.msra.mxu0 0.0
        %3937 = vmatprep.subr.mxu0 0.0
        %3938 = vmatpush1.msra.mxu0 0.0
        %3939 = vmatprep.mubr.f32.mxu0 0.0
        %3940 = vmatmul.mubr.f32.gmra.mrb[0].mxu0 %v3847
        %v3941 = vpop.f32.mrb[0].mxu0
        %v3942 = vadd.f32 %v3858, %v3941
        %v3943 = vpop.f32.mrb[0].mxu0
        %3944 = vmatprep.mubr.f32.mxu0 0.0
        %3945 = vmatmul.mubr.f32.gmra.mrb[0].mxu0 %v3848
        %v3946 = vpop.f32.mrb[0].mxu0
        %v3947 = vadd.f32 %v3863, %v3946
        %v3948 = vpop.f32.mrb[0].mxu0
        %3949 = vmatprep.mubr.f32.mxu0 0.0
        %3950 = vmatmul.mubr.f32.gmra.mrb[0].mxu0 %v3849
        %v3951 = vpop.f32.mrb[0].mxu0
        %v3952 = vadd.f32 %v3868, %v3951
        %v3953 = vpop.f32.mrb[0].mxu0
        %3954 = vmatprep.mubr.f32.mxu0 0.0
        %3955 = vmatmul.mubr.f32.gmra.mrb[0].mxu0 %v3850
        %v3956 = vpop.f32.mrb[0].mxu0
        %v3957 = vadd.f32 %v3873, %v3956
        %v3958 = vpop.f32.mrb[0].mxu0
        %3959 = vdwg.mxu0
        %v3960 = vadd.f32 %v3296, %v3942
        %v3961 = vadd.f32 %v3297, %v3947
        %v3962 = vadd.f32 %v3298, %v3952
        %v3963 = vadd.f32 %v3299, %v3957
        %3964 = vxpose.xlu0.b32.start [1/16] %v3960, 128
        %3965 = vxpose.xlu0.b32.cont [2/16] %v3961, 128
        %3966 = vxpose.xlu0.b32.cont [3/16] %v3962, 128
        %3967 = vxpose.xlu0.b32.cont [4/16] %v3963, 128
        %3968 = vxpose.xlu0.b32.cont [5/16] 0.0, 128
        %3969 = vxpose.xlu0.b32.cont [6/16] 0.0, 128
        %3970 = vxpose.xlu0.b32.cont [7/16] 0.0, 128
        %3971 = vxpose.xlu0.b32.cont [8/16] 0.0, 128
        %3972 = vxpose.xlu0.b32.cont [9/16] 0.0, 128
        %3973 = vxpose.xlu0.b32.cont [10/16] 0.0, 128
        %3974 = vxpose.xlu0.b32.cont [11/16] 0.0, 128
        %3975 = vxpose.xlu0.b32.cont [12/16] 0.0, 128
        %3976 = vxpose.xlu0.b32.cont [13/16] 0.0, 128
        %3977 = vxpose.xlu0.b32.cont [14/16] 0.0, 128
        %3978 = vxpose.xlu0.b32.cont [15/16] 0.0, 128
        %3979 = vxpose.xlu0.b32.end [16/16] 0.0, 128
        %v3980 = vpop.trf.xlu0
        %v3981 = vpop.trf.xlu0
        %v3982 = vpop.trf.xlu0
        %v3983 = vpop.trf.xlu0
        %v3984 = vpop.trf.xlu0
        %v3985 = vpop.trf.xlu0
        %v3986 = vpop.trf.xlu0
        %v3987 = vpop.trf.xlu0
        %v3988 = vpop.trf.xlu0
        %v3989 = vpop.trf.xlu0
        %v3990 = vpop.trf.xlu0
        %v3991 = vpop.trf.xlu0
        %v3992 = vpop.trf.xlu0
        %v3993 = vpop.trf.xlu0
        %v3994 = vpop.trf.xlu0
        %v3995 = vpop.trf.xlu0
        %3996 = vst.msk [vmem:[%s687] sm:$0xff] %vm914, %v3980
        %s3997 = sand.u32 %s516, 1
        %s3998 = scalar_lea.sflag [#allocation3], %s3997
        %s3999 = sand.u32 %s516, 1
        %s4000 = smul.addr %s3999, 8
        %s4001 = scalar_lea.vmem [#allocation2], %s4000
        // Predicated region
        $region109: #{tpu_custom_call.1} parent=107 // pred_check
          %p4002 = pneg %p526
        $region110: #{tpu_custom_call.1} parent=107 // pred_check_branch
          %4004 = sbr.rel (%p4002) target = $region112
        $region111: #{tpu_custom_call.1} parent=107 // pred_region
          %s4006 = ssub.s32 128, 128
          %4007 = vsyncadd %s3998, %s4006
          %s4008 = smul.addr %s36, 128
          %s4009 = scalar_lea.hbm %s22, %s4008
          %s4011 = sshll.u32 %s4001, 4
          %s4012 = int_to_ptr.vmem [resolvable:$true] %s4011
          %4014 = dma.vmem_to_hbm [thread:$0]  %s4012, 128, %s4009, %s3998
        $region112: #{tpu_custom_call.1} parent=107 // pred_fallthru
          _
      $region108: #{tpu_custom_call.1} parent=5 // pred_fallthru
        _
      %p4015 = scmp.le.s32.totalorder 2, %s31
      // Predicated region
      $region113: #{tpu_custom_call.1} parent=5 // pred_check
        %p4016 = pneg %p4015
      $region114: #{tpu_custom_call.1} parent=5 // pred_check_branch
        %4018 = sbr.rel (%p4016) target = $region116
      $region115: #{tpu_custom_call.1} parent=5 // pred_region
        %s4019 = ssub.s32 %s31, 2
        // Predicated region
        $region117: #{tpu_custom_call.1} parent=115 // pred_check
          %p4020 = pneg %p532
        $region118: #{tpu_custom_call.1} parent=115 // pred_check_branch
          %4022 = sbr.rel (%p4020) target = $region120
        $region119: #{tpu_custom_call.1} parent=115 // pred_region
          %s4023 = sand.u32 %s517, 1
          %s4024 = scalar_lea.sflag [#allocation3], %s4023
          %s4025 = sand.u32 %s517, 1
          %s4026 = smul.addr %s4025, 8
          %s4027 = scalar_lea.vmem [#allocation2], %s4026
          %4028 = dma.done %s4024, 128
        $region120: #{tpu_custom_call.1} parent=115 // pred_fallthru
          _
      $region116: #{tpu_custom_call.1} parent=5 // pred_fallthru
        _
    $region6: #{tpu_custom_call.1} parent=1 // loop_footer
      %s35 = sadd.s32 1, %s31
    $region7: #{tpu_custom_call.1} parent=1 // loop_footer_branch
      %30 = sbr.rel target = $region3
    $region8: #{tpu_custom_call.1} parent=1 // loop_exit
      _
    %4029 = vsyncpa [#allocation3], 1
    %s4030 = scalar_lea.sflag [#allocation3], 1
    %4031 = vsyncpa %s4030, 1

</llo_original>
